<compile_context>
chip_gen: v7x
topology: tpu7x:2x2x1
jax: 0.10.0
libtpu: 0.0.40
codegen_flags: <defaults>
</compile_context>

<pallas_src>
import functools

import jax
import jax.numpy as jnp
from jax import lax
from jax.experimental import pallas as pl
from jax.experimental.pallas import tpu as pltpu


# ---------------- module hyper-parameters (small shapes, consistent with spec)
N_EMBD = 384            # n_embd
N_HEAD = 6              # n_head
HEAD_SIZE = N_EMBD // N_HEAD
BLOCK_SIZE = 256        # block_size (max T)
SEQ_LEN = 16            # T (<= block_size), kept small
BATCH = 2
HIDDEN = 4 * N_EMBD     # FeedForward hidden width
LN_EPS = 1e-5
NEG_BIG = -1e30         # additive mask value (finite, exp underflows to 0)


# ---------------- fused Block kernel (single invocation, whole problem) -------
def _block_kernel(x_ref,                      # (N, C) f32, N = B*T
                  bias_ref,                   # (N, N) f32 additive causal/batch mask
                  ln1w_ref, ln1b_ref,         # (1, C) f32
                  wqkv_ref,                   # (C, 3C) bf16, wq pre-scaled by C**-0.5
                  wproj_ref, bproj_ref,       # (C, C) bf16, (1, C) f32
                  ln2w_ref, ln2b_ref,         # (1, C) f32
                  w1_ref, b1_ref,             # (C, 4C) bf16, (1, 4C) f32
                  w2_ref, b2_ref,             # (4C, C) bf16, (1, C) f32
                  o_ref,                      # (N, C) f32
                  *, n_head):
    f32 = jnp.float32
    bf16 = jnp.bfloat16

    x = x_ref[...]                            # (N, C) f32
    N, C = x.shape
    H = n_head
    hs = C // H

    # ---- LayerNorm 1 (f32) --------------------------------------------------
    mu = jnp.mean(x, axis=-1, keepdims=True)
    var = jnp.mean((x - mu) ** 2, axis=-1, keepdims=True)
    h1 = (x - mu) * lax.rsqrt(var + LN_EPS) * ln1w_ref[...] + ln1b_ref[...]

    # ---- fused QKV projection: one (N,C)x(C,3C) bf16 matmul, f32 accumulate --
    qkv = jnp.dot(h1.astype(bf16), wqkv_ref[...],
                  preferred_element_type=f32)                     # (N, 3C) f32
    qkv_bf = qkv.astype(bf16)

    bias = bias_ref[...]                                          # (N, N) f32

    # ---- per-head causal attention (heads = contiguous 64-lane chunks) -------
    attn_parts = []
    for h in range(H):                                            # static unroll
        q_h = qkv_bf[:, h * hs:(h + 1) * hs]                      # (N, hs) bf16
        k_h = qkv_bf[:, C + h * hs:C + (h + 1) * hs]
        v_h = qkv_bf[:, 2 * C + h * hs:2 * C + (h + 1) * hs]
        # scale already folded into wq; additive mask instead of where(-inf)
        wei = jnp.einsum('nd,md->nm', q_h, k_h,
                         preferred_element_type=f32) + bias       # (N, N) f32
        wei = wei - jnp.max(wei, axis=-1, keepdims=True)
        p = jnp.exp(wei)
        p = p / jnp.sum(p, axis=-1, keepdims=True)                # exact softmax
        # attention dropout == identity in eval mode
        attn_parts.append(jnp.dot(p.astype(bf16), v_h,
                                  preferred_element_type=f32))    # (N, hs) f32
    attn = jnp.concatenate(attn_parts, axis=-1)                   # (N, C), heads lane-concat

    # ---- single output projection (K = C = 384) + residual -------------------
    sa = jnp.dot(attn.astype(bf16), wproj_ref[...],
                 preferred_element_type=f32) + bproj_ref[...]
    # projection dropout == identity in eval mode
    x2 = x + sa                                                   # residual 1 (f32)

    # ---- LayerNorm 2 + FeedForward -------------------------------------------
    mu2 = jnp.mean(x2, axis=-1, keepdims=True)
    var2 = jnp.mean((x2 - mu2) ** 2, axis=-1, keepdims=True)
    h2 = (x2 - mu2) * lax.rsqrt(var2 + LN_EPS) * ln2w_ref[...] + ln2b_ref[...]

    hid = jnp.dot(h2.astype(bf16), w1_ref[...],
                  preferred_element_type=f32) + b1_ref[...]       # (N, 4C)
    hid = jnp.maximum(hid, 0.0)
    ff = jnp.dot(hid.astype(bf16), w2_ref[...],
                 preferred_element_type=f32) + b2_ref[...]        # (N, C)
    # FFN dropout == identity in eval mode

    o_ref[...] = x2 + ff                                          # residual 2


# ---------------- host-side one-time parameter preparation --------------------
def prepare_params(params):
    """Hoisted out of the per-call path: fused+pre-scaled QKV weight and bf16
    casts are computed once and reused for every forward call."""
    (ln1w, ln1b, wq, wk, wv, wproj, bproj,
     ln2w, ln2b, w1, b1, w2, b2) = params
    C = wq.shape[0]
    scale = C ** -0.5                         # n_embd**-0.5, as in Head.forward
    wqkv = jnp.concatenate([wq * scale, wk, wv], axis=1).astype(jnp.bfloat16)
    return (ln1w, ln1b, wqkv, wproj.astype(jnp.bfloat16), bproj,
            ln2w, ln2b, w1.astype(jnp.bfloat16), b1,
            w2.astype(jnp.bfloat16), b2)


def make_attn_bias(B, T):
    """Block-diagonal (per-batch) causal mask as an additive f32 bias over the
    flattened B*T axis: 0 where attention allowed, -1e30 where masked."""
    N = B * T
    qpos = jnp.arange(N)[:, None]
    kpos = jnp.arange(N)[None, :]
    allowed = (kpos <= qpos) & ((qpos // T) == (kpos // T))
    return jnp.where(allowed, 0.0, NEG_BIG).astype(jnp.float32)


# ---------------- wrapper ------------------------------------------------------
@jax.jit
def block_forward(x, bias, prepared):
    (ln1w, ln1b, wqkv, wproj_b, bproj,
     ln2w, ln2b, w1_b, b1, w2_b, b2) = prepared
    B, T, C = x.shape
    N = B * T

    vmem = pl.BlockSpec(memory_space=pltpu.MemorySpace.VMEM)      # whole array resident
    out_flat = pl.pallas_call(
        functools.partial(_block_kernel, n_head=N_HEAD),
        out_shape=jax.ShapeDtypeStruct((N, C), jnp.float32),
        in_specs=[vmem] * 13,
        out_specs=vmem,
    )(x.reshape(N, C), bias, ln1w, ln1b, wqkv, wproj_b, bproj,
      ln2w, ln2b, w1_b, b1, w2_b, b2)
    return out_flat.reshape(B, T, C)


# ---------------- references ---------------------------------------------------
def _ln(y, w, b):
    mu = jnp.mean(y, axis=-1, keepdims=True)
    var = jnp.mean((y - mu) ** 2, axis=-1, keepdims=True)
    return (y - mu) * lax.rsqrt(var + LN_EPS) * w + b


def block_reference_f32(x, params):
    """Pure-f32 module semantics (PyTorch Block forward in eval mode)."""
    (ln1w, ln1b, wq, wk, wv, wproj, bproj,
     ln2w, ln2b, w1, b1, w2, b2) = params
    B, T, C = x.shape
    H, hs = N_HEAD, C // N_HEAD

    h1 = _ln(x, ln1w, ln1b)
    q = (h1 @ wq).reshape(B, T, H, hs).transpose(0, 2, 1, 3)
    k = (h1 @ wk).reshape(B, T, H, hs).transpose(0, 2, 1, 3)
    v = (h1 @ wv).reshape(B, T, H, hs).transpose(0, 2, 1, 3)
    wei = jnp.einsum('bhqd,bhkd->bhqk', q, k) * (C ** -0.5)
    tril = jnp.tril(jnp.ones((T, T), dtype=bool))
    wei = jnp.where(tril, wei, -jnp.inf)
    p = jax.nn.softmax(wei, axis=-1)
    sa = jnp.einsum('bhqk,bhkd->bhqd', p, v).transpose(0, 2, 1, 3).reshape(B, T, C)
    sa = sa @ wproj + bproj
    x2 = x + sa
    h2 = _ln(x2, ln2w, ln2b)
    ff = jnp.maximum(h2 @ w1 + b1, 0.0) @ w2 + b2
    return x2 + ff


def block_reference_bf16(x, prepared, bias):
    """Op-for-op mirror of the kernel math (same fused bf16 weights, same cast
    points, same additive mask, same exact softmax) in plain JAX."""
    (ln1w, ln1b, wqkv, wproj_b, bproj,
     ln2w, ln2b, w1_b, b1, w2_b, b2) = prepared
    f32, bf16 = jnp.float32, jnp.bfloat16
    B, T, C = x.shape
    N = B * T
    H, hs = N_HEAD, C // N_HEAD

    xf = x.reshape(N, C)
    h1 = _ln(xf, ln1w, ln1b)
    qkv = jnp.dot(h1.astype(bf16), wqkv, preferred_element_type=f32)
    qkv_bf = qkv.astype(bf16)
    parts = []
    for h in range(H):
        q_h = qkv_bf[:, h * hs:(h + 1) * hs]
        k_h = qkv_bf[:, C + h * hs:C + (h + 1) * hs]
        v_h = qkv_bf[:, 2 * C + h * hs:2 * C + (h + 1) * hs]
        wei = jnp.einsum('nd,md->nm', q_h, k_h, preferred_element_type=f32) + bias
        wei = wei - jnp.max(wei, axis=-1, keepdims=True)
        p = jnp.exp(wei)
        p = p / jnp.sum(p, axis=-1, keepdims=True)
        parts.append(jnp.dot(p.astype(bf16), v_h, preferred_element_type=f32))
    attn = jnp.concatenate(parts, axis=-1)
    sa = jnp.dot(attn.astype(bf16), wproj_b, preferred_element_type=f32) + bproj
    x2 = xf + sa
    h2 = _ln(x2, ln2w, ln2b)
    hid = jnp.maximum(jnp.dot(h2.astype(bf16), w1_b, preferred_element_type=f32) + b1, 0.0)
    ff = jnp.dot(hid.astype(bf16), w2_b, preferred_element_type=f32) + b2
    return (x2 + ff).reshape(B, T, C)


# ---------------- deterministic parameter init ---------------------------------
def init_params(key):
    C, Hd = N_EMBD, HIDDEN
    ks = jax.random.split(key, 13)
    s = 0.05
    ln1w = 1.0 + s * jax.random.normal(ks[0], (1, C), jnp.float32)
    ln1b = s * jax.random.normal(ks[1], (1, C), jnp.float32)
    wq = s * jax.random.normal(ks[2], (C, C), jnp.float32)
    wk = s * jax.random.normal(ks[3], (C, C), jnp.float32)
    wv = s * jax.random.normal(ks[4], (C, C), jnp.float32)
    wproj = s * jax.random.normal(ks[5], (C, C), jnp.float32)
    bproj = s * jax.random.normal(ks[6], (1, C), jnp.float32)
    ln2w = 1.0 + s * jax.random.normal(ks[7], (1, C), jnp.float32)
    ln2b = s * jax.random.normal(ks[8], (1, C), jnp.float32)
    w1 = s * jax.random.normal(ks[9], (C, Hd), jnp.float32)
    b1 = s * jax.random.normal(ks[10], (1, Hd), jnp.float32)
    w2 = s * jax.random.normal(ks[11], (Hd, C), jnp.float32)
    b2 = s * jax.random.normal(ks[12], (1, C), jnp.float32)
    return (ln1w, ln1b, wq, wk, wv, wproj, bproj,
            ln2w, ln2b, w1, b1, w2, b2)


if __name__ == "__main__":
    key = jax.random.PRNGKey(0)
    kx, kp = jax.random.split(key)
    x = jax.random.normal(kx, (BATCH, SEQ_LEN, N_EMBD), jnp.float32)
    params = init_params(kp)

    prepared = prepare_params(params)        # once (feedback: hoist weight prep)
    bias = make_attn_bias(BATCH, SEQ_LEN)    # once (feedback: precomputed mask bias)

    out = jax.block_until_ready(block_forward(x, bias, prepared))
    assert out.shape == (BATCH, SEQ_LEN, N_EMBD)

    # tight check vs an op-for-op bf16-matched reference
    ref_bf16 = block_reference_bf16(x, prepared, bias)
    err_b = float(jnp.max(jnp.abs(out - ref_bf16)))
    assert jnp.allclose(out, ref_bf16, atol=2e-2, rtol=2e-2), (
        f"mismatch vs bf16-matched reference, max abs err = {err_b}")

    # loose end-to-end semantic check vs the pure-f32 module math
    ref_f32 = block_reference_f32(x, params)
    err_f = float(jnp.max(jnp.abs(out - ref_f32)))
    assert jnp.allclose(out, ref_f32, atol=0.15, rtol=0.15), (
        f"mismatch vs f32 reference, max abs err = {err_f}")

    print("KERNEL_OK")
</pallas_src>

<mosaic_0001>
module attributes {stable_mosaic.version = 11 : i64} {
  func.func @_block_kernel(%arg0: memref<32x384xf32, #tpu.memory_space<vmem>>, %arg1: memref<32x32xf32, #tpu.memory_space<vmem>>, %arg2: memref<1x384xf32, #tpu.memory_space<vmem>>, %arg3: memref<1x384xf32, #tpu.memory_space<vmem>>, %arg4: memref<384x1152xbf16, #tpu.memory_space<vmem>>, %arg5: memref<384x384xbf16, #tpu.memory_space<vmem>>, %arg6: memref<1x384xf32, #tpu.memory_space<vmem>>, %arg7: memref<1x384xf32, #tpu.memory_space<vmem>>, %arg8: memref<1x384xf32, #tpu.memory_space<vmem>>, %arg9: memref<384x1536xbf16, #tpu.memory_space<vmem>>, %arg10: memref<1x1536xf32, #tpu.memory_space<vmem>>, %arg11: memref<1536x384xbf16, #tpu.memory_space<vmem>>, %arg12: memref<1x384xf32, #tpu.memory_space<vmem>>, %arg13: memref<32x384xf32, #tpu.memory_space<vmem>>) attributes {dimension_semantics = [], scalar_prefetch = 0 : i64, scratch_operands = 0 : i64, tpu.core_type = #tpu.core_type<tc>} {
    %c0 = arith.constant 0 : index
    %c0_0 = arith.constant 0 : index
    %0 = vector.load %arg0[%c0, %c0_0] : memref<32x384xf32, #tpu.memory_space<vmem>>, vector<32x384xf32>
    %cst = arith.constant dense<0.000000e+00> : vector<32xf32>
    %1 = vector.multi_reduction <add>, %0, %cst [1] : vector<32x384xf32> to vector<32xf32>
    %2 = vector.shape_cast %1 : vector<32xf32> to vector<32x1xf32>
    %cst_1 = arith.constant 3.840000e+02 : f32
    %3 = vector.broadcast %cst_1 : f32 to vector<32x1xf32>
    %4 = arith.divf %2, %3 : vector<32x1xf32>
    %5 = vector.broadcast %4 : vector<32x1xf32> to vector<32x384xf32>
    %6 = arith.subf %0, %5 : vector<32x384xf32>
    %7 = arith.mulf %6, %6 : vector<32x384xf32>
    %cst_2 = arith.constant dense<0.000000e+00> : vector<32xf32>
    %8 = vector.multi_reduction <add>, %7, %cst_2 [1] : vector<32x384xf32> to vector<32xf32>
    %9 = vector.shape_cast %8 : vector<32xf32> to vector<32x1xf32>
    %cst_3 = arith.constant 3.840000e+02 : f32
    %10 = vector.broadcast %cst_3 : f32 to vector<32x1xf32>
    %11 = arith.divf %9, %10 : vector<32x1xf32>
    %12 = vector.broadcast %4 : vector<32x1xf32> to vector<32x384xf32>
    %13 = arith.subf %0, %12 : vector<32x384xf32>
    %cst_4 = arith.constant 9.99999974E-6 : f32
    %14 = vector.broadcast %cst_4 : f32 to vector<32x1xf32>
    %15 = arith.addf %11, %14 : vector<32x1xf32>
    %16 = math.rsqrt %15 : vector<32x1xf32>
    %17 = vector.broadcast %16 : vector<32x1xf32> to vector<32x384xf32>
    %18 = arith.mulf %13, %17 : vector<32x384xf32>
    %c0_5 = arith.constant 0 : index
    %c0_6 = arith.constant 0 : index
    %19 = vector.load %arg2[%c0_5, %c0_6] : memref<1x384xf32, #tpu.memory_space<vmem>>, vector<1x384xf32>
    %20 = vector.broadcast %19 : vector<1x384xf32> to vector<32x384xf32>
    %21 = arith.mulf %18, %20 : vector<32x384xf32>
    %c0_7 = arith.constant 0 : index
    %c0_8 = arith.constant 0 : index
    %22 = vector.load %arg3[%c0_7, %c0_8] : memref<1x384xf32, #tpu.memory_space<vmem>>, vector<1x384xf32>
    %23 = vector.broadcast %22 : vector<1x384xf32> to vector<32x384xf32>
    %24 = arith.addf %21, %23 : vector<32x384xf32>
    %25 = arith.truncf %24 : vector<32x384xf32> to vector<32x384xbf16>
    %c0_9 = arith.constant 0 : index
    %c0_10 = arith.constant 0 : index
    %26 = vector.load %arg4[%c0_9, %c0_10] : memref<384x1152xbf16, #tpu.memory_space<vmem>>, vector<384x1152xbf16>
    %cst_11 = arith.constant dense<0.000000e+00> : vector<32x1152xf32>
    %27 = tpu.matmul %25, %26, %cst_11 {dimension_numbers = #tpu.dot_dimension_numbers<[1], [0], [0], [1], [0, 0, 1, 1], [], []>} : vector<32x384xbf16>, vector<384x1152xbf16>, vector<32x1152xf32> -> vector<32x1152xf32>
    %28 = arith.truncf %27 : vector<32x1152xf32> to vector<32x1152xbf16>
    %c0_12 = arith.constant 0 : index
    %c0_13 = arith.constant 0 : index
    %29 = vector.load %arg1[%c0_12, %c0_13] : memref<32x32xf32, #tpu.memory_space<vmem>>, vector<32x32xf32>
    %30 = vector.extract_strided_slice %28 {offsets = [0, 0], sizes = [32, 64], strides = [1, 1]} : vector<32x1152xbf16> to vector<32x64xbf16>
    %31 = vector.extract_strided_slice %28 {offsets = [0, 384], sizes = [32, 64], strides = [1, 1]} : vector<32x1152xbf16> to vector<32x64xbf16>
    %32 = vector.extract_strided_slice %28 {offsets = [0, 768], sizes = [32, 64], strides = [1, 1]} : vector<32x1152xbf16> to vector<32x64xbf16>
    "tpu.trace_start"() <{level = 10 : i32, message = "nd,md->nm"}> : () -> ()
    %cst_14 = arith.constant dense<0.000000e+00> : vector<32x32xf32>
    %33 = tpu.matmul %30, %31, %cst_14 {dimension_numbers = #tpu.dot_dimension_numbers<[1], [1], [0], [0], [0, 0, 1, 0], [], []>} : vector<32x64xbf16>, vector<32x64xbf16>, vector<32x32xf32> -> vector<32x32xf32>
    "tpu.trace_stop"() : () -> ()
    %34 = arith.addf %33, %29 : vector<32x32xf32>
    %cst_15 = arith.constant dense<0xFF800000> : vector<32xf32>
    %35 = vector.multi_reduction <maximumf>, %34, %cst_15 [1] : vector<32x32xf32> to vector<32xf32>
    %36 = vector.shape_cast %35 : vector<32xf32> to vector<32x1xf32>
    %37 = vector.broadcast %36 : vector<32x1xf32> to vector<32x32xf32>
    %38 = arith.subf %34, %37 : vector<32x32xf32>
    %39 = math.exp %38 : vector<32x32xf32>
    %cst_16 = arith.constant dense<0.000000e+00> : vector<32xf32>
    %40 = vector.multi_reduction <add>, %39, %cst_16 [1] : vector<32x32xf32> to vector<32xf32>
    %41 = vector.shape_cast %40 : vector<32xf32> to vector<32x1xf32>
    %42 = vector.broadcast %41 : vector<32x1xf32> to vector<32x32xf32>
    %43 = arith.divf %39, %42 : vector<32x32xf32>
    %44 = arith.truncf %43 : vector<32x32xf32> to vector<32x32xbf16>
    %cst_17 = arith.constant dense<0.000000e+00> : vector<32x64xf32>
    %45 = tpu.matmul %44, %32, %cst_17 {dimension_numbers = #tpu.dot_dimension_numbers<[1], [0], [0], [1], [0, 0, 1, 1], [], []>} : vector<32x32xbf16>, vector<32x64xbf16>, vector<32x64xf32> -> vector<32x64xf32>
    %46 = vector.extract_strided_slice %28 {offsets = [0, 64], sizes = [32, 64], strides = [1, 1]} : vector<32x1152xbf16> to vector<32x64xbf16>
    %47 = vector.extract_strided_slice %28 {offsets = [0, 448], sizes = [32, 64], strides = [1, 1]} : vector<32x1152xbf16> to vector<32x64xbf16>
    %48 = vector.extract_strided_slice %28 {offsets = [0, 832], sizes = [32, 64], strides = [1, 1]} : vector<32x1152xbf16> to vector<32x64xbf16>
    "tpu.trace_start"() <{level = 10 : i32, message = "nd,md->nm"}> : () -> ()
    %cst_18 = arith.constant dense<0.000000e+00> : vector<32x32xf32>
    %49 = tpu.matmul %46, %47, %cst_18 {dimension_numbers = #tpu.dot_dimension_numbers<[1], [1], [0], [0], [0, 0, 1, 0], [], []>} : vector<32x64xbf16>, vector<32x64xbf16>, vector<32x32xf32> -> vector<32x32xf32>
    "tpu.trace_stop"() : () -> ()
    %50 = arith.addf %49, %29 : vector<32x32xf32>
    %cst_19 = arith.constant dense<0xFF800000> : vector<32xf32>
    %51 = vector.multi_reduction <maximumf>, %50, %cst_19 [1] : vector<32x32xf32> to vector<32xf32>
    %52 = vector.shape_cast %51 : vector<32xf32> to vector<32x1xf32>
    %53 = vector.broadcast %52 : vector<32x1xf32> to vector<32x32xf32>
    %54 = arith.subf %50, %53 : vector<32x32xf32>
    %55 = math.exp %54 : vector<32x32xf32>
    %cst_20 = arith.constant dense<0.000000e+00> : vector<32xf32>
    %56 = vector.multi_reduction <add>, %55, %cst_20 [1] : vector<32x32xf32> to vector<32xf32>
    %57 = vector.shape_cast %56 : vector<32xf32> to vector<32x1xf32>
    %58 = vector.broadcast %57 : vector<32x1xf32> to vector<32x32xf32>
    %59 = arith.divf %55, %58 : vector<32x32xf32>
    %60 = arith.truncf %59 : vector<32x32xf32> to vector<32x32xbf16>
    %cst_21 = arith.constant dense<0.000000e+00> : vector<32x64xf32>
    %61 = tpu.matmul %60, %48, %cst_21 {dimension_numbers = #tpu.dot_dimension_numbers<[1], [0], [0], [1], [0, 0, 1, 1], [], []>} : vector<32x32xbf16>, vector<32x64xbf16>, vector<32x64xf32> -> vector<32x64xf32>
    %62 = vector.extract_strided_slice %28 {offsets = [0, 128], sizes = [32, 64], strides = [1, 1]} : vector<32x1152xbf16> to vector<32x64xbf16>
    %63 = vector.extract_strided_slice %28 {offsets = [0, 512], sizes = [32, 64], strides = [1, 1]} : vector<32x1152xbf16> to vector<32x64xbf16>
    %64 = vector.extract_strided_slice %28 {offsets = [0, 896], sizes = [32, 64], strides = [1, 1]} : vector<32x1152xbf16> to vector<32x64xbf16>
    "tpu.trace_start"() <{level = 10 : i32, message = "nd,md->nm"}> : () -> ()
    %cst_22 = arith.constant dense<0.000000e+00> : vector<32x32xf32>
    %65 = tpu.matmul %62, %63, %cst_22 {dimension_numbers = #tpu.dot_dimension_numbers<[1], [1], [0], [0], [0, 0, 1, 0], [], []>} : vector<32x64xbf16>, vector<32x64xbf16>, vector<32x32xf32> -> vector<32x32xf32>
    "tpu.trace_stop"() : () -> ()
    %66 = arith.addf %65, %29 : vector<32x32xf32>
    %cst_23 = arith.constant dense<0xFF800000> : vector<32xf32>
    %67 = vector.multi_reduction <maximumf>, %66, %cst_23 [1] : vector<32x32xf32> to vector<32xf32>
    %68 = vector.shape_cast %67 : vector<32xf32> to vector<32x1xf32>
    %69 = vector.broadcast %68 : vector<32x1xf32> to vector<32x32xf32>
    %70 = arith.subf %66, %69 : vector<32x32xf32>
    %71 = math.exp %70 : vector<32x32xf32>
    %cst_24 = arith.constant dense<0.000000e+00> : vector<32xf32>
    %72 = vector.multi_reduction <add>, %71, %cst_24 [1] : vector<32x32xf32> to vector<32xf32>
    %73 = vector.shape_cast %72 : vector<32xf32> to vector<32x1xf32>
    %74 = vector.broadcast %73 : vector<32x1xf32> to vector<32x32xf32>
    %75 = arith.divf %71, %74 : vector<32x32xf32>
    %76 = arith.truncf %75 : vector<32x32xf32> to vector<32x32xbf16>
    %cst_25 = arith.constant dense<0.000000e+00> : vector<32x64xf32>
    %77 = tpu.matmul %76, %64, %cst_25 {dimension_numbers = #tpu.dot_dimension_numbers<[1], [0], [0], [1], [0, 0, 1, 1], [], []>} : vector<32x32xbf16>, vector<32x64xbf16>, vector<32x64xf32> -> vector<32x64xf32>
    %78 = vector.extract_strided_slice %28 {offsets = [0, 192], sizes = [32, 64], strides = [1, 1]} : vector<32x1152xbf16> to vector<32x64xbf16>
    %79 = vector.extract_strided_slice %28 {offsets = [0, 576], sizes = [32, 64], strides = [1, 1]} : vector<32x1152xbf16> to vector<32x64xbf16>
    %80 = vector.extract_strided_slice %28 {offsets = [0, 960], sizes = [32, 64], strides = [1, 1]} : vector<32x1152xbf16> to vector<32x64xbf16>
    "tpu.trace_start"() <{level = 10 : i32, message = "nd,md->nm"}> : () -> ()
    %cst_26 = arith.constant dense<0.000000e+00> : vector<32x32xf32>
    %81 = tpu.matmul %78, %79, %cst_26 {dimension_numbers = #tpu.dot_dimension_numbers<[1], [1], [0], [0], [0, 0, 1, 0], [], []>} : vector<32x64xbf16>, vector<32x64xbf16>, vector<32x32xf32> -> vector<32x32xf32>
    "tpu.trace_stop"() : () -> ()
    %82 = arith.addf %81, %29 : vector<32x32xf32>
    %cst_27 = arith.constant dense<0xFF800000> : vector<32xf32>
    %83 = vector.multi_reduction <maximumf>, %82, %cst_27 [1] : vector<32x32xf32> to vector<32xf32>
    %84 = vector.shape_cast %83 : vector<32xf32> to vector<32x1xf32>
    %85 = vector.broadcast %84 : vector<32x1xf32> to vector<32x32xf32>
    %86 = arith.subf %82, %85 : vector<32x32xf32>
    %87 = math.exp %86 : vector<32x32xf32>
    %cst_28 = arith.constant dense<0.000000e+00> : vector<32xf32>
    %88 = vector.multi_reduction <add>, %87, %cst_28 [1] : vector<32x32xf32> to vector<32xf32>
    %89 = vector.shape_cast %88 : vector<32xf32> to vector<32x1xf32>
    %90 = vector.broadcast %89 : vector<32x1xf32> to vector<32x32xf32>
    %91 = arith.divf %87, %90 : vector<32x32xf32>
    %92 = arith.truncf %91 : vector<32x32xf32> to vector<32x32xbf16>
    %cst_29 = arith.constant dense<0.000000e+00> : vector<32x64xf32>
    %93 = tpu.matmul %92, %80, %cst_29 {dimension_numbers = #tpu.dot_dimension_numbers<[1], [0], [0], [1], [0, 0, 1, 1], [], []>} : vector<32x32xbf16>, vector<32x64xbf16>, vector<32x64xf32> -> vector<32x64xf32>
    %94 = vector.extract_strided_slice %28 {offsets = [0, 256], sizes = [32, 64], strides = [1, 1]} : vector<32x1152xbf16> to vector<32x64xbf16>
    %95 = vector.extract_strided_slice %28 {offsets = [0, 640], sizes = [32, 64], strides = [1, 1]} : vector<32x1152xbf16> to vector<32x64xbf16>
    %96 = vector.extract_strided_slice %28 {offsets = [0, 1024], sizes = [32, 64], strides = [1, 1]} : vector<32x1152xbf16> to vector<32x64xbf16>
    "tpu.trace_start"() <{level = 10 : i32, message = "nd,md->nm"}> : () -> ()
    %cst_30 = arith.constant dense<0.000000e+00> : vector<32x32xf32>
    %97 = tpu.matmul %94, %95, %cst_30 {dimension_numbers = #tpu.dot_dimension_numbers<[1], [1], [0], [0], [0, 0, 1, 0], [], []>} : vector<32x64xbf16>, vector<32x64xbf16>, vector<32x32xf32> -> vector<32x32xf32>
    "tpu.trace_stop"() : () -> ()
    %98 = arith.addf %97, %29 : vector<32x32xf32>
    %cst_31 = arith.constant dense<0xFF800000> : vector<32xf32>
    %99 = vector.multi_reduction <maximumf>, %98, %cst_31 [1] : vector<32x32xf32> to vector<32xf32>
    %100 = vector.shape_cast %99 : vector<32xf32> to vector<32x1xf32>
    %101 = vector.broadcast %100 : vector<32x1xf32> to vector<32x32xf32>
    %102 = arith.subf %98, %101 : vector<32x32xf32>
    %103 = math.exp %102 : vector<32x32xf32>
    %cst_32 = arith.constant dense<0.000000e+00> : vector<32xf32>
    %104 = vector.multi_reduction <add>, %103, %cst_32 [1] : vector<32x32xf32> to vector<32xf32>
    %105 = vector.shape_cast %104 : vector<32xf32> to vector<32x1xf32>
    %106 = vector.broadcast %105 : vector<32x1xf32> to vector<32x32xf32>
    %107 = arith.divf %103, %106 : vector<32x32xf32>
    %108 = arith.truncf %107 : vector<32x32xf32> to vector<32x32xbf16>
    %cst_33 = arith.constant dense<0.000000e+00> : vector<32x64xf32>
    %109 = tpu.matmul %108, %96, %cst_33 {dimension_numbers = #tpu.dot_dimension_numbers<[1], [0], [0], [1], [0, 0, 1, 1], [], []>} : vector<32x32xbf16>, vector<32x64xbf16>, vector<32x64xf32> -> vector<32x64xf32>
    %110 = vector.extract_strided_slice %28 {offsets = [0, 320], sizes = [32, 64], strides = [1, 1]} : vector<32x1152xbf16> to vector<32x64xbf16>
    %111 = vector.extract_strided_slice %28 {offsets = [0, 704], sizes = [32, 64], strides = [1, 1]} : vector<32x1152xbf16> to vector<32x64xbf16>
    %112 = vector.extract_strided_slice %28 {offsets = [0, 1088], sizes = [32, 64], strides = [1, 1]} : vector<32x1152xbf16> to vector<32x64xbf16>
    "tpu.trace_start"() <{level = 10 : i32, message = "nd,md->nm"}> : () -> ()
    %cst_34 = arith.constant dense<0.000000e+00> : vector<32x32xf32>
    %113 = tpu.matmul %110, %111, %cst_34 {dimension_numbers = #tpu.dot_dimension_numbers<[1], [1], [0], [0], [0, 0, 1, 0], [], []>} : vector<32x64xbf16>, vector<32x64xbf16>, vector<32x32xf32> -> vector<32x32xf32>
    "tpu.trace_stop"() : () -> ()
    %114 = arith.addf %113, %29 : vector<32x32xf32>
    %cst_35 = arith.constant dense<0xFF800000> : vector<32xf32>
    %115 = vector.multi_reduction <maximumf>, %114, %cst_35 [1] : vector<32x32xf32> to vector<32xf32>
    %116 = vector.shape_cast %115 : vector<32xf32> to vector<32x1xf32>
    %117 = vector.broadcast %116 : vector<32x1xf32> to vector<32x32xf32>
    %118 = arith.subf %114, %117 : vector<32x32xf32>
    %119 = math.exp %118 : vector<32x32xf32>
    %cst_36 = arith.constant dense<0.000000e+00> : vector<32xf32>
    %120 = vector.multi_reduction <add>, %119, %cst_36 [1] : vector<32x32xf32> to vector<32xf32>
    %121 = vector.shape_cast %120 : vector<32xf32> to vector<32x1xf32>
    %122 = vector.broadcast %121 : vector<32x1xf32> to vector<32x32xf32>
    %123 = arith.divf %119, %122 : vector<32x32xf32>
    %124 = arith.truncf %123 : vector<32x32xf32> to vector<32x32xbf16>
    %cst_37 = arith.constant dense<0.000000e+00> : vector<32x64xf32>
    %125 = tpu.matmul %124, %112, %cst_37 {dimension_numbers = #tpu.dot_dimension_numbers<[1], [0], [0], [1], [0, 0, 1, 1], [], []>} : vector<32x32xbf16>, vector<32x64xbf16>, vector<32x64xf32> -> vector<32x64xf32>
    %126 = tpu.concatenate %45, %61, %77, %93, %109, %125 in 1 : vector<32x64xf32>, vector<32x64xf32>, vector<32x64xf32>, vector<32x64xf32>, vector<32x64xf32>, vector<32x64xf32> -> vector<32x384xf32>
    %127 = arith.truncf %126 : vector<32x384xf32> to vector<32x384xbf16>
    %c0_38 = arith.constant 0 : index
    %c0_39 = arith.constant 0 : index
    %128 = vector.load %arg5[%c0_38, %c0_39] : memref<384x384xbf16, #tpu.memory_space<vmem>>, vector<384x384xbf16>
    %cst_40 = arith.constant dense<0.000000e+00> : vector<32x384xf32>
    %129 = tpu.matmul %127, %128, %cst_40 {dimension_numbers = #tpu.dot_dimension_numbers<[1], [0], [0], [1], [0, 0, 1, 1], [], []>} : vector<32x384xbf16>, vector<384x384xbf16>, vector<32x384xf32> -> vector<32x384xf32>
    %c0_41 = arith.constant 0 : index
    %c0_42 = arith.constant 0 : index
    %130 = vector.load %arg6[%c0_41, %c0_42] : memref<1x384xf32, #tpu.memory_space<vmem>>, vector<1x384xf32>
    %131 = vector.broadcast %130 : vector<1x384xf32> to vector<32x384xf32>
    %132 = arith.addf %129, %131 : vector<32x384xf32>
    %133 = arith.addf %0, %132 : vector<32x384xf32>
    %cst_43 = arith.constant dense<0.000000e+00> : vector<32xf32>
    %134 = vector.multi_reduction <add>, %133, %cst_43 [1] : vector<32x384xf32> to vector<32xf32>
    %135 = vector.shape_cast %134 : vector<32xf32> to vector<32x1xf32>
    %cst_44 = arith.constant 3.840000e+02 : f32
    %136 = vector.broadcast %cst_44 : f32 to vector<32x1xf32>
    %137 = arith.divf %135, %136 : vector<32x1xf32>
    %138 = vector.broadcast %137 : vector<32x1xf32> to vector<32x384xf32>
    %139 = arith.subf %133, %138 : vector<32x384xf32>
    %140 = arith.mulf %139, %139 : vector<32x384xf32>
    %cst_45 = arith.constant dense<0.000000e+00> : vector<32xf32>
    %141 = vector.multi_reduction <add>, %140, %cst_45 [1] : vector<32x384xf32> to vector<32xf32>
    %142 = vector.shape_cast %141 : vector<32xf32> to vector<32x1xf32>
    %cst_46 = arith.constant 3.840000e+02 : f32
    %143 = vector.broadcast %cst_46 : f32 to vector<32x1xf32>
    %144 = arith.divf %142, %143 : vector<32x1xf32>
    %145 = vector.broadcast %137 : vector<32x1xf32> to vector<32x384xf32>
    %146 = arith.subf %133, %145 : vector<32x384xf32>
    %cst_47 = arith.constant 9.99999974E-6 : f32
    %147 = vector.broadcast %cst_47 : f32 to vector<32x1xf32>
    %148 = arith.addf %144, %147 : vector<32x1xf32>
    %149 = math.rsqrt %148 : vector<32x1xf32>
    %150 = vector.broadcast %149 : vector<32x1xf32> to vector<32x384xf32>
    %151 = arith.mulf %146, %150 : vector<32x384xf32>
    %c0_48 = arith.constant 0 : index
    %c0_49 = arith.constant 0 : index
    %152 = vector.load %arg7[%c0_48, %c0_49] : memref<1x384xf32, #tpu.memory_space<vmem>>, vector<1x384xf32>
    %153 = vector.broadcast %152 : vector<1x384xf32> to vector<32x384xf32>
    %154 = arith.mulf %151, %153 : vector<32x384xf32>
    %c0_50 = arith.constant 0 : index
    %c0_51 = arith.constant 0 : index
    %155 = vector.load %arg8[%c0_50, %c0_51] : memref<1x384xf32, #tpu.memory_space<vmem>>, vector<1x384xf32>
    %156 = vector.broadcast %155 : vector<1x384xf32> to vector<32x384xf32>
    %157 = arith.addf %154, %156 : vector<32x384xf32>
    %158 = arith.truncf %157 : vector<32x384xf32> to vector<32x384xbf16>
    %c0_52 = arith.constant 0 : index
    %c0_53 = arith.constant 0 : index
    %159 = vector.load %arg9[%c0_52, %c0_53] : memref<384x1536xbf16, #tpu.memory_space<vmem>>, vector<384x1536xbf16>
    %cst_54 = arith.constant dense<0.000000e+00> : vector<32x1536xf32>
    %160 = tpu.matmul %158, %159, %cst_54 {dimension_numbers = #tpu.dot_dimension_numbers<[1], [0], [0], [1], [0, 0, 1, 1], [], []>} : vector<32x384xbf16>, vector<384x1536xbf16>, vector<32x1536xf32> -> vector<32x1536xf32>
    %c0_55 = arith.constant 0 : index
    %c0_56 = arith.constant 0 : index
    %161 = vector.load %arg10[%c0_55, %c0_56] : memref<1x1536xf32, #tpu.memory_space<vmem>>, vector<1x1536xf32>
    %162 = vector.broadcast %161 : vector<1x1536xf32> to vector<32x1536xf32>
    %163 = arith.addf %160, %162 : vector<32x1536xf32>
    %cst_57 = arith.constant 0.000000e+00 : f32
    %164 = vector.broadcast %cst_57 : f32 to vector<32x1536xf32>
    %165 = arith.maximumf %163, %164 : vector<32x1536xf32>
    %166 = arith.truncf %165 : vector<32x1536xf32> to vector<32x1536xbf16>
    %c0_58 = arith.constant 0 : index
    %c0_59 = arith.constant 0 : index
    %167 = vector.load %arg11[%c0_58, %c0_59] : memref<1536x384xbf16, #tpu.memory_space<vmem>>, vector<1536x384xbf16>
    %cst_60 = arith.constant dense<0.000000e+00> : vector<32x384xf32>
    %168 = tpu.matmul %166, %167, %cst_60 {dimension_numbers = #tpu.dot_dimension_numbers<[1], [0], [0], [1], [0, 0, 1, 1], [], []>} : vector<32x1536xbf16>, vector<1536x384xbf16>, vector<32x384xf32> -> vector<32x384xf32>
    %c0_61 = arith.constant 0 : index
    %c0_62 = arith.constant 0 : index
    %169 = vector.load %arg12[%c0_61, %c0_62] : memref<1x384xf32, #tpu.memory_space<vmem>>, vector<1x384xf32>
    %170 = vector.broadcast %169 : vector<1x384xf32> to vector<32x384xf32>
    %171 = arith.addf %168, %170 : vector<32x384xf32>
    %172 = arith.addf %133, %171 : vector<32x384xf32>
    %c0_63 = arith.constant 0 : index
    %c0_64 = arith.constant 0 : index
    %173 = vector.load %arg13[%c0_63, %c0_64] : memref<32x384xf32, #tpu.memory_space<vmem>>, vector<32x384xf32>
    tpu.vector_store %arg13[%c0_63, %c0_64], %172 {strides = array<i32>} : memref<32x384xf32, #tpu.memory_space<vmem>>, vector<32x384xf32>,
    return
  }
}

</mosaic_0001>

<llo_original>
// kernel: block_forward.1
$region0: #{block_forward.1}
  #allocation0 [shape = 'u32[]', space=smem, size = 0x4, offset = 0x4, fixed_abs, tag = 'smem constant byte address 0x4 - core index']
  #allocation1 [shape = 'u32[144,128]{1,0:T(1,128)}', space=vmem, size = 0x12000, scoped, tag = 'internal scratch']
  %s0 = inlined_call_operand.hbm [shape: f32[32,384], index: 0, kind: input, shape index: {}]
  %s1 = inlined_call_operand.hbm [shape: f32[32,32], index: 1, kind: input, shape index: {}]
  %s2 = inlined_call_operand.hbm [shape: f32[1,384], index: 2, kind: input, shape index: {}]
  %s3 = inlined_call_operand.hbm [shape: f32[1,384], index: 3, kind: input, shape index: {}]
  %s4 = inlined_call_operand.hbm [shape: bf16[384,1152], index: 4, kind: input, shape index: {}]
  %s5 = inlined_call_operand.hbm [shape: bf16[384,384], index: 5, kind: input, shape index: {}]
  %s6 = inlined_call_operand.hbm [shape: f32[1,384], index: 6, kind: input, shape index: {}]
  %s7 = inlined_call_operand.hbm [shape: f32[1,384], index: 7, kind: input, shape index: {}]
  %s8 = inlined_call_operand.hbm [shape: f32[1,384], index: 8, kind: input, shape index: {}]
  %s9 = inlined_call_operand.hbm [shape: bf16[384,1536], index: 9, kind: input, shape index: {}]
  %s10 = inlined_call_operand.hbm [shape: f32[1,1536], index: 10, kind: input, shape index: {}]
  %s11 = inlined_call_operand.hbm [shape: bf16[1536,384], index: 11, kind: input, shape index: {}]
  %s12 = inlined_call_operand.hbm [shape: f32[1,384], index: 12, kind: input, shape index: {}]
  %s13 = inlined_call_operand.hbm [shape: f32[32,384], index: 13, kind: output, shape index: {}]
  %s14 = sld [smem:[#allocation0]]
  $region114: #{block_forward.1} parent=0
    _
  %s16 = ssub.s32 1, %s14
  %s17 = scalar_select 0, %s16, %s14
  $region1: #{block_forward.1} parent=0
    #allocation2 [shape = 'u8[49152]{0}', space=vmem, size = 0xc000, scoped, tag = 'input window, operand 0, single buffered']
    #allocation3 [shape = 's32[1]{0}', space=sflag, size = 0x4, scoped, tag = 'scoped memory for block_forward.1']
    #allocation4 [shape = 's32[1]{0}', space=sflag, size = 0x4, scoped, tag = 'scoped memory for block_forward.1']
    #allocation5 [shape = 'u8[16384]{0}', space=vmem, size = 0x4000, scoped, tag = 'input window, operand 1, single buffered']
    #allocation6 [shape = 's32[1]{0}', space=sflag, size = 0x4, scoped, tag = 'scoped memory for block_forward.1']
    #allocation7 [shape = 'u8[1536]{0}', space=vmem, size = 0x800, scoped, tag = 'input window, operand 2, single buffered']
    #allocation8 [shape = 'u8[1536]{0}', space=vmem, size = 0x800, scoped, tag = 'input window, operand 3, single buffered']
    #allocation9 [shape = 's32[1]{0}', space=sflag, size = 0x4, scoped, tag = 'scoped memory for block_forward.1']
    #allocation10 [shape = 'u8[884736]{0}', space=vmem, size = 0xd8000, scoped, tag = 'input window, operand 4, single buffered']
    #allocation11 [shape = 'u8[294912]{0}', space=vmem, size = 0x48000, scoped, tag = 'input window, operand 5, single buffered']
    #allocation12 [shape = 's32[1]{0}', space=sflag, size = 0x4, scoped, tag = 'scoped memory for block_forward.1']
    #allocation13 [shape = 'u8[1536]{0}', space=vmem, size = 0x800, scoped, tag = 'input window, operand 6, single buffered']
    #allocation14 [shape = 'u8[1536]{0}', space=vmem, size = 0x800, scoped, tag = 'input window, operand 7, single buffered']
    #allocation15 [shape = 's32[1]{0}', space=sflag, size = 0x4, scoped, tag = 'scoped memory for block_forward.1']
    #allocation16 [shape = 'u8[1536]{0}', space=vmem, size = 0x800, scoped, tag = 'input window, operand 8, single buffered']
    #allocation17 [shape = 'u8[1179648]{0}', space=vmem, size = 0x120000, scoped, tag = 'input window, operand 9, single buffered']
    #allocation18 [shape = 's32[1]{0}', space=sflag, size = 0x4, scoped, tag = 'scoped memory for block_forward.1']
    #allocation19 [shape = 'u8[6144]{0}', space=vmem, size = 0x1800, scoped, tag = 'input window, operand 10, single buffered']
    #allocation20 [shape = 'u8[1179648]{0}', space=vmem, size = 0x120000, scoped, tag = 'input window, operand 11, single buffered']
    #allocation21 [shape = 's32[1]{0}', space=sflag, size = 0x4, scoped, tag = 'scoped memory for block_forward.1']
    #allocation22 [shape = 'u8[1536]{0}', space=vmem, size = 0x800, scoped, tag = 'input window, operand 12, single buffered']
    #allocation23 [shape = 'u8[49152]{0}', space=vmem, size = 0xc000, scoped, tag = 'output window, operand 0, single buffered']
    %18 = vsyncpa [#allocation3], 0
    %19 = vsyncpa [#allocation6], 0
    %20 = vsyncpa [#allocation9], 0
    %21 = vsyncpa [#allocation12], 0
    %22 = vsyncpa [#allocation15], 0
    %23 = vsyncpa [#allocation18], 0
    %24 = vsyncpa [#allocation21], 0
    %25 = vsyncpa [#allocation4], 0
    // Predicated region
    $region2: #{block_forward.1} parent=1 // pred_check
      _
    $region3: #{block_forward.1} parent=1 // pred_check_branch
      %27 = sbr.rel (0) target = $region5
    $region4: #{block_forward.1} parent=1 // pred_region
      %s29 = ssub.s32 1536, 1536
      %30 = vsyncadd [#allocation3], %s29
      %s31 = sshll.u32 [#allocation2], 4
      %s32 = int_to_ptr.vmem [resolvable:$true] %s31
      %37 = dma.hbm_to_vmem [thread:$0]  %s0, 1536, %s32, [#allocation3], 384, 384, 24
    $region5: #{block_forward.1} parent=1 // pred_fallthru
      _
    // Predicated region
    $region6: #{block_forward.1} parent=1 // pred_check
      _
    $region7: #{block_forward.1} parent=1 // pred_check_branch
      %39 = sbr.rel (0) target = $region9
    $region8: #{block_forward.1} parent=1 // pred_region
      %s41 = ssub.s32 512, 512
      %42 = vsyncadd [#allocation6], %s41
      %s43 = sshll.u32 [#allocation5], 4
      %s44 = int_to_ptr.vmem [resolvable:$true] %s43
      %49 = dma.hbm_to_vmem [thread:$0]  %s1, 512, %s44, [#allocation6], 128, 128, 8
    $region9: #{block_forward.1} parent=1 // pred_fallthru
      _
    // Predicated region
    $region10: #{block_forward.1} parent=1 // pred_check
      _
    $region11: #{block_forward.1} parent=1 // pred_check_branch
      %51 = sbr.rel (0) target = $region13
    $region12: #{block_forward.1} parent=1 // pred_region
      %s53 = ssub.s32 48, 48
      %54 = vsyncadd [#allocation6], %s53
      %s56 = sshll.u32 [#allocation7], 4
      %s57 = int_to_ptr.vmem [resolvable:$true] %s56
      %59 = dma.hbm_to_vmem [thread:$0]  %s2, 48, %s57, [#allocation6]
    $region13: #{block_forward.1} parent=1 // pred_fallthru
      _
    // Predicated region
    $region14: #{block_forward.1} parent=1 // pred_check
      _
    $region15: #{block_forward.1} parent=1 // pred_check_branch
      %61 = sbr.rel (0) target = $region17
    $region16: #{block_forward.1} parent=1 // pred_region
      %s63 = ssub.s32 48, 48
      %64 = vsyncadd [#allocation9], %s63
      %s66 = sshll.u32 [#allocation8], 4
      %s67 = int_to_ptr.vmem [resolvable:$true] %s66
      %69 = dma.hbm_to_vmem [thread:$0]  %s3, 48, %s67, [#allocation9]
    $region17: #{block_forward.1} parent=1 // pred_fallthru
      _
    // Predicated region
    $region18: #{block_forward.1} parent=1 // pred_check
      _
    $region19: #{block_forward.1} parent=1 // pred_check_branch
      %71 = sbr.rel (0) target = $region21
    $region20: #{block_forward.1} parent=1 // pred_region
      %s73 = ssub.s32 27648, 27648
      %74 = vsyncadd [#allocation9], %s73
      %s75 = sshll.u32 [#allocation10], 4
      %s76 = int_to_ptr.vmem [resolvable:$true] %s75
      %81 = dma.hbm_to_vmem [thread:$0]  %s4, 27648, %s76, [#allocation9], 576, 576, 36
    $region21: #{block_forward.1} parent=1 // pred_fallthru
      _
    // Predicated region
    $region22: #{block_forward.1} parent=1 // pred_check
      _
    $region23: #{block_forward.1} parent=1 // pred_check_branch
      %83 = sbr.rel (0) target = $region25
    $region24: #{block_forward.1} parent=1 // pred_region
      %s85 = ssub.s32 9216, 9216
      %86 = vsyncadd [#allocation12], %s85
      %s87 = sshll.u32 [#allocation11], 4
      %s88 = int_to_ptr.vmem [resolvable:$true] %s87
      %93 = dma.hbm_to_vmem [thread:$0]  %s5, 9216, %s88, [#allocation12], 192, 192, 12
    $region25: #{block_forward.1} parent=1 // pred_fallthru
      _
    // Predicated region
    $region26: #{block_forward.1} parent=1 // pred_check
      _
    $region27: #{block_forward.1} parent=1 // pred_check_branch
      %95 = sbr.rel (0) target = $region29
    $region28: #{block_forward.1} parent=1 // pred_region
      %s97 = ssub.s32 48, 48
      %98 = vsyncadd [#allocation12], %s97
      %s100 = sshll.u32 [#allocation13], 4
      %s101 = int_to_ptr.vmem [resolvable:$true] %s100
      %103 = dma.hbm_to_vmem [thread:$0]  %s6, 48, %s101, [#allocation12]
    $region29: #{block_forward.1} parent=1 // pred_fallthru
      _
    // Predicated region
    $region30: #{block_forward.1} parent=1 // pred_check
      _
    $region31: #{block_forward.1} parent=1 // pred_check_branch
      %105 = sbr.rel (0) target = $region33
    $region32: #{block_forward.1} parent=1 // pred_region
      %s107 = ssub.s32 48, 48
      %108 = vsyncadd [#allocation15], %s107
      %s110 = sshll.u32 [#allocation14], 4
      %s111 = int_to_ptr.vmem [resolvable:$true] %s110
      %113 = dma.hbm_to_vmem [thread:$0]  %s7, 48, %s111, [#allocation15]
    $region33: #{block_forward.1} parent=1 // pred_fallthru
      _
    // Predicated region
    $region34: #{block_forward.1} parent=1 // pred_check
      _
    $region35: #{block_forward.1} parent=1 // pred_check_branch
      %115 = sbr.rel (0) target = $region37
    $region36: #{block_forward.1} parent=1 // pred_region
      %s117 = ssub.s32 48, 48
      %118 = vsyncadd [#allocation15], %s117
      %s120 = sshll.u32 [#allocation16], 4
      %s121 = int_to_ptr.vmem [resolvable:$true] %s120
      %123 = dma.hbm_to_vmem [thread:$0]  %s8, 48, %s121, [#allocation15]
    $region37: #{block_forward.1} parent=1 // pred_fallthru
      _
    // Predicated region
    $region38: #{block_forward.1} parent=1 // pred_check
      _
    $region39: #{block_forward.1} parent=1 // pred_check_branch
      %125 = sbr.rel (0) target = $region41
    $region40: #{block_forward.1} parent=1 // pred_region
      %s127 = ssub.s32 36864, 36864
      %128 = vsyncadd [#allocation18], %s127
      %s129 = sshll.u32 [#allocation17], 4
      %s130 = int_to_ptr.vmem [resolvable:$true] %s129
      %135 = dma.hbm_to_vmem [thread:$0]  %s9, 36864, %s130, [#allocation18], 768, 768, 48
    $region41: #{block_forward.1} parent=1 // pred_fallthru
      _
    // Predicated region
    $region42: #{block_forward.1} parent=1 // pred_check
      _
    $region43: #{block_forward.1} parent=1 // pred_check_branch
      %137 = sbr.rel (0) target = $region45
    $region44: #{block_forward.1} parent=1 // pred_region
      %s139 = ssub.s32 192, 192
      %140 = vsyncadd [#allocation18], %s139
      %s142 = sshll.u32 [#allocation19], 4
      %s143 = int_to_ptr.vmem [resolvable:$true] %s142
      %145 = dma.hbm_to_vmem [thread:$0]  %s10, 192, %s143, [#allocation18]
    $region45: #{block_forward.1} parent=1 // pred_fallthru
      _
    // Predicated region
    $region46: #{block_forward.1} parent=1 // pred_check
      _
    $region47: #{block_forward.1} parent=1 // pred_check_branch
      %147 = sbr.rel (0) target = $region49
    $region48: #{block_forward.1} parent=1 // pred_region
      %s149 = ssub.s32 36864, 36864
      %150 = vsyncadd [#allocation21], %s149
      %s151 = sshll.u32 [#allocation20], 4
      %s152 = int_to_ptr.vmem [resolvable:$true] %s151
      %157 = dma.hbm_to_vmem [thread:$0]  %s11, 36864, %s152, [#allocation21], 192, 192, 12
    $region49: #{block_forward.1} parent=1 // pred_fallthru
      _
    // Predicated region
    $region50: #{block_forward.1} parent=1 // pred_check
      _
    $region51: #{block_forward.1} parent=1 // pred_check_branch
      %159 = sbr.rel (0) target = $region53
    $region52: #{block_forward.1} parent=1 // pred_region
      %s161 = ssub.s32 48, 48
      %162 = vsyncadd [#allocation21], %s161
      %s164 = sshll.u32 [#allocation22], 4
      %s165 = int_to_ptr.vmem [resolvable:$true] %s164
      %167 = dma.hbm_to_vmem [thread:$0]  %s12, 48, %s165, [#allocation21]
    $region53: #{block_forward.1} parent=1 // pred_fallthru
      _
    // Predicated region
    $region54: #{block_forward.1} parent=1 // pred_check
      _
    $region55: #{block_forward.1} parent=1 // pred_check_branch
      %169 = sbr.rel (0) target = $region57
    $region56: #{block_forward.1} parent=1 // pred_region
      %170 = dma.done [#allocation3], 1536
    $region57: #{block_forward.1} parent=1 // pred_fallthru
      _
    // Predicated region
    $region58: #{block_forward.1} parent=1 // pred_check
      _
    $region59: #{block_forward.1} parent=1 // pred_check_branch
      %172 = sbr.rel (0) target = $region61
    $region60: #{block_forward.1} parent=1 // pred_region
      %173 = dma.done [#allocation6], 512
    $region61: #{block_forward.1} parent=1 // pred_fallthru
      _
    // Predicated region
    $region62: #{block_forward.1} parent=1 // pred_check
      _
    $region63: #{block_forward.1} parent=1 // pred_check_branch
      %175 = sbr.rel (0) target = $region65
    $region64: #{block_forward.1} parent=1 // pred_region
      %176 = dma.done [#allocation6], 48
    $region65: #{block_forward.1} parent=1 // pred_fallthru
      _
    // Predicated region
    $region66: #{block_forward.1} parent=1 // pred_check
      _
    $region67: #{block_forward.1} parent=1 // pred_check_branch
      %178 = sbr.rel (0) target = $region69
    $region68: #{block_forward.1} parent=1 // pred_region
      %179 = dma.done [#allocation9], 48
    $region69: #{block_forward.1} parent=1 // pred_fallthru
      _
    // Predicated region
    $region70: #{block_forward.1} parent=1 // pred_check
      _
    $region71: #{block_forward.1} parent=1 // pred_check_branch
      %181 = sbr.rel (0) target = $region73
    $region72: #{block_forward.1} parent=1 // pred_region
      %182 = dma.done [#allocation9], 27648
    $region73: #{block_forward.1} parent=1 // pred_fallthru
      _
    // Predicated region
    $region74: #{block_forward.1} parent=1 // pred_check
      _
    $region75: #{block_forward.1} parent=1 // pred_check_branch
      %184 = sbr.rel (0) target = $region77
    $region76: #{block_forward.1} parent=1 // pred_region
      %185 = dma.done [#allocation12], 9216
    $region77: #{block_forward.1} parent=1 // pred_fallthru
      _
    // Predicated region
    $region78: #{block_forward.1} parent=1 // pred_check
      _
    $region79: #{block_forward.1} parent=1 // pred_check_branch
      %187 = sbr.rel (0) target = $region81
    $region80: #{block_forward.1} parent=1 // pred_region
      %188 = dma.done [#allocation12], 48
    $region81: #{block_forward.1} parent=1 // pred_fallthru
      _
    // Predicated region
    $region82: #{block_forward.1} parent=1 // pred_check
      _
    $region83: #{block_forward.1} parent=1 // pred_check_branch
      %190 = sbr.rel (0) target = $region85
    $region84: #{block_forward.1} parent=1 // pred_region
      %191 = dma.done [#allocation15], 48
    $region85: #{block_forward.1} parent=1 // pred_fallthru
      _
    // Predicated region
    $region86: #{block_forward.1} parent=1 // pred_check
      _
    $region87: #{block_forward.1} parent=1 // pred_check_branch
      %193 = sbr.rel (0) target = $region89
    $region88: #{block_forward.1} parent=1 // pred_region
      %194 = dma.done [#allocation15], 48
    $region89: #{block_forward.1} parent=1 // pred_fallthru
      _
    // Predicated region
    $region90: #{block_forward.1} parent=1 // pred_check
      _
    $region91: #{block_forward.1} parent=1 // pred_check_branch
      %196 = sbr.rel (0) target = $region93
    $region92: #{block_forward.1} parent=1 // pred_region
      %197 = dma.done [#allocation18], 36864
    $region93: #{block_forward.1} parent=1 // pred_fallthru
      _
    // Predicated region
    $region94: #{block_forward.1} parent=1 // pred_check
      _
    $region95: #{block_forward.1} parent=1 // pred_check_branch
      %199 = sbr.rel (0) target = $region97
    $region96: #{block_forward.1} parent=1 // pred_region
      %200 = dma.done [#allocation18], 192
    $region97: #{block_forward.1} parent=1 // pred_fallthru
      _
    // Predicated region
    $region98: #{block_forward.1} parent=1 // pred_check
      _
    $region99: #{block_forward.1} parent=1 // pred_check_branch
      %202 = sbr.rel (0) target = $region101
    $region100: #{block_forward.1} parent=1 // pred_region
      %203 = dma.done [#allocation21], 36864
    $region101: #{block_forward.1} parent=1 // pred_fallthru
      _
    // Predicated region
    $region102: #{block_forward.1} parent=1 // pred_check
      _
    $region103: #{block_forward.1} parent=1 // pred_check_branch
      %205 = sbr.rel (0) target = $region105
    $region104: #{block_forward.1} parent=1 // pred_region
      %206 = dma.done [#allocation21], 48
    $region105: #{block_forward.1} parent=1 // pred_fallthru
      _
    %v208 = vld [vmem:[#allocation2] sm:$0xff]
    %v209 = vld [vmem:[#allocation2 + $0x8] sm:$0xff]
    %v210 = vld [vmem:[#allocation2 + $0x10] sm:$0xff]
    %v211 = vld [vmem:[#allocation2 + $0x18] sm:$0xff]
    %v212 = vld [vmem:[#allocation2 + $0x20] sm:$0xff]
    %v213 = vld [vmem:[#allocation2 + $0x28] sm:$0xff]
    %v214 = vld [vmem:[#allocation2 + $0x30] sm:$0xff]
    %v215 = vld [vmem:[#allocation2 + $0x38] sm:$0xff]
    %v216 = vld [vmem:[#allocation2 + $0x40] sm:$0xff]
    %v217 = vld [vmem:[#allocation2 + $0x48] sm:$0xff]
    %v218 = vld [vmem:[#allocation2 + $0x50] sm:$0xff]
    %v219 = vld [vmem:[#allocation2 + $0x58] sm:$0xff]
    %v220 = vadd.f32 %v208, %v209
    %v221 = vadd.f32 %v220, %v210
    %222 = vadd.xlane.f32.xlu0 %v221
    %v223 = vpop.xlane.xlu0 %222
    %v224 = vadd.f32 %v211, %v212
    %v225 = vadd.f32 %v224, %v213
    %226 = vadd.xlane.f32.xlu0 %v225
    %v227 = vpop.xlane.xlu0 %226
    %v228 = vadd.f32 %v214, %v215
    %v229 = vadd.f32 %v228, %v216
    %230 = vadd.xlane.f32.xlu0 %v229
    %v231 = vpop.xlane.xlu0 %230
    %v232 = vadd.f32 %v217, %v218
    %v233 = vadd.f32 %v232, %v219
    %234 = vadd.xlane.f32.xlu0 %v233
    %v235 = vpop.xlane.xlu0 %234
    %v236 = vrcp.pop 384.0
    %v237 = vmul.f32 %v223, %v236
    %v238 = vmul.f32 %v227, %v236
    %v239 = vmul.f32 %v231, %v236
    %v240 = vmul.f32 %v235, %v236
    %v241 = vsub.f32 %v208, %v237
    %v242 = vsub.f32 %v209, %v237
    %v243 = vsub.f32 %v210, %v237
    %v244 = vsub.f32 %v211, %v238
    %v245 = vsub.f32 %v212, %v238
    %v246 = vsub.f32 %v213, %v238
    %v247 = vsub.f32 %v214, %v239
    %v248 = vsub.f32 %v215, %v239
    %v249 = vsub.f32 %v216, %v239
    %v250 = vsub.f32 %v217, %v240
    %v251 = vsub.f32 %v218, %v240
    %v252 = vsub.f32 %v219, %v240
    %v253 = vmul.f32 %v241, %v241
    %v254 = vmul.f32 %v242, %v242
    %v255 = vmul.f32 %v243, %v243
    %v256 = vmul.f32 %v244, %v244
    %v257 = vmul.f32 %v245, %v245
    %v258 = vmul.f32 %v246, %v246
    %v259 = vmul.f32 %v247, %v247
    %v260 = vmul.f32 %v248, %v248
    %v261 = vmul.f32 %v249, %v249
    %v262 = vmul.f32 %v250, %v250
    %v263 = vmul.f32 %v251, %v251
    %v264 = vmul.f32 %v252, %v252
    %v265 = vadd.f32 %v253, %v254
    %v266 = vadd.f32 %v265, %v255
    %267 = vadd.xlane.f32.xlu0 %v266
    %v268 = vpop.xlane.xlu0 %267
    %v269 = vadd.f32 %v256, %v257
    %v270 = vadd.f32 %v269, %v258
    %271 = vadd.xlane.f32.xlu0 %v270
    %v272 = vpop.xlane.xlu0 %271
    %v273 = vadd.f32 %v259, %v260
    %v274 = vadd.f32 %v273, %v261
    %275 = vadd.xlane.f32.xlu0 %v274
    %v276 = vpop.xlane.xlu0 %275
    %v277 = vadd.f32 %v262, %v263
    %v278 = vadd.f32 %v277, %v264
    %279 = vadd.xlane.f32.xlu0 %v278
    %v280 = vpop.xlane.xlu0 %279
    %v281 = vmul.f32 %v268, %v236
    %v282 = vmul.f32 %v272, %v236
    %v283 = vmul.f32 %v276, %v236
    %v284 = vmul.f32 %v280, %v236
    %v285 = vadd.f32 %v281, 1e-05
    %v286 = vadd.f32 %v282, 1e-05
    %v287 = vadd.f32 %v283, 1e-05
    %v288 = vadd.f32 %v284, 1e-05
    %v289 = vrsqrt.pop %v285
    %v290 = vrsqrt.pop %v286
    %v291 = vrsqrt.pop %v287
    %v292 = vrsqrt.pop %v288
    %v293 = vmul.f32 %v241, %v289
    %v294 = vmul.f32 %v242, %v289
    %v295 = vmul.f32 %v243, %v289
    %v296 = vmul.f32 %v244, %v290
    %v297 = vmul.f32 %v245, %v290
    %v298 = vmul.f32 %v246, %v290
    %v299 = vmul.f32 %v247, %v291
    %v300 = vmul.f32 %v248, %v291
    %v301 = vmul.f32 %v249, %v291
    %v302 = vmul.f32 %v250, %v292
    %v303 = vmul.f32 %v251, %v292
    %v304 = vmul.f32 %v252, %v292
    %v305 = vld [vmem:[#allocation7] sm:$0x7]
    %v307 = vlaneseq
    %v308 = vshrl.u32 %v307, 7
    %v309 = vsub.s32 0, %v308
    %v310 = vrot.slane %v305, %v309
    %v311 = vlaneseq
    %v312 = vshrl.u32 %v311, 7
    %v313 = vsub.s32 1, %v312
    %v314 = vrot.slane %v305, %v313
    %v315 = vlaneseq
    %v316 = vshrl.u32 %v315, 7
    %v317 = vsub.s32 2, %v316
    %v318 = vrot.slane %v305, %v317
    %v322 = vmul.f32 %v293, %v310
    %v323 = vmul.f32 %v294, %v314
    %v324 = vmul.f32 %v295, %v318
    %v325 = vmul.f32 %v296, %v310
    %v326 = vmul.f32 %v297, %v314
    %v327 = vmul.f32 %v298, %v318
    %v328 = vmul.f32 %v299, %v310
    %v329 = vmul.f32 %v300, %v314
    %v330 = vmul.f32 %v301, %v318
    %v331 = vmul.f32 %v302, %v310
    %v332 = vmul.f32 %v303, %v314
    %v333 = vmul.f32 %v304, %v318
    %v334 = vld [vmem:[#allocation8] sm:$0x7]
    %v336 = vlaneseq
    %v337 = vshrl.u32 %v336, 7
    %v338 = vsub.s32 0, %v337
    %v339 = vrot.slane %v334, %v338
    %v340 = vlaneseq
    %v341 = vshrl.u32 %v340, 7
    %v342 = vsub.s32 1, %v341
    %v343 = vrot.slane %v334, %v342
    %v344 = vlaneseq
    %v345 = vshrl.u32 %v344, 7
    %v346 = vsub.s32 2, %v345
    %v347 = vrot.slane %v334, %v346
    %v351 = vadd.f32 %v322, %v339
    %v352 = vadd.f32 %v323, %v343
    %v353 = vadd.f32 %v324, %v347
    %v354 = vadd.f32 %v325, %v339
    %v355 = vadd.f32 %v326, %v343
    %v356 = vadd.f32 %v327, %v347
    %v357 = vadd.f32 %v328, %v339
    %v358 = vadd.f32 %v329, %v343
    %v359 = vadd.f32 %v330, %v347
    %v360 = vadd.f32 %v331, %v339
    %v361 = vadd.f32 %v332, %v343
    %v362 = vadd.f32 %v333, %v347
    %v363 = vpack.c.bf16 %v354, %v351
    %v364 = vpack.c.bf16 %v355, %v352
    %v365 = vpack.c.bf16 %v356, %v353
    %v366 = vpack.c.bf16 %v360, %v357
    %v367 = vpack.c.bf16 %v361, %v358
    %v368 = vpack.c.bf16 %v362, %v359
    %v369 = vld [vmem:[#allocation10] sm:$0xff]
    %v370 = vld [vmem:[#allocation10 + $0x8] sm:$0xff]
    %v371 = vld [vmem:[#allocation10 + $0x10] sm:$0xff]
    %v372 = vld [vmem:[#allocation10 + $0x18] sm:$0xff]
    %v373 = vld [vmem:[#allocation10 + $0x20] sm:$0xf]
    %v374 = vld [vmem:[#allocation10 + $0x24] sm:$0xff]
    %v375 = vld [vmem:[#allocation10 + $0x2c] sm:$0xff]
    %v376 = vld [vmem:[#allocation10 + $0x34] sm:$0xff]
    %v377 = vld [vmem:[#allocation10 + $0x3c] sm:$0xff]
    %v378 = vld [vmem:[#allocation10 + $0x44] sm:$0xf]
    %v379 = vld [vmem:[#allocation10 + $0x48] sm:$0xff]
    %v380 = vld [vmem:[#allocation10 + $0x50] sm:$0xff]
    %v381 = vld [vmem:[#allocation10 + $0x58] sm:$0xff]
    %v382 = vld [vmem:[#allocation10 + $0x60] sm:$0xff]
    %v383 = vld [vmem:[#allocation10 + $0x68] sm:$0xf]
    %v384 = vld [vmem:[#allocation10 + $0x6c] sm:$0xff]
    %v385 = vld [vmem:[#allocation10 + $0x74] sm:$0xff]
    %v386 = vld [vmem:[#allocation10 + $0x7c] sm:$0xff]
    %v387 = vld [vmem:[#allocation10 + $0x84] sm:$0xff]
    %v388 = vld [vmem:[#allocation10 + $0x8c] sm:$0xf]
    %v389 = vld [vmem:[#allocation10 + $0x90] sm:$0xff]
    %v390 = vld [vmem:[#allocation10 + $0x98] sm:$0xff]
    %v391 = vld [vmem:[#allocation10 + $0xa0] sm:$0xff]
    %v392 = vld [vmem:[#allocation10 + $0xa8] sm:$0xff]
    %v393 = vld [vmem:[#allocation10 + $0xb0] sm:$0xf]
    %v394 = vld [vmem:[#allocation10 + $0xb4] sm:$0xff]
    %v395 = vld [vmem:[#allocation10 + $0xbc] sm:$0xff]
    %v396 = vld [vmem:[#allocation10 + $0xc4] sm:$0xff]
    %v397 = vld [vmem:[#allocation10 + $0xcc] sm:$0xff]
    %v398 = vld [vmem:[#allocation10 + $0xd4] sm:$0xf]
    %v399 = vld [vmem:[#allocation10 + $0xd8] sm:$0xff]
    %v400 = vld [vmem:[#allocation10 + $0xe0] sm:$0xff]
    %v401 = vld [vmem:[#allocation10 + $0xe8] sm:$0xff]
    %v402 = vld [vmem:[#allocation10 + $0xf0] sm:$0xff]
    %v403 = vld [vmem:[#allocation10 + $0xf8] sm:$0xf]
    %v404 = vld [vmem:[#allocation10 + $0xfc] sm:$0xff]
    %v405 = vld [vmem:[#allocation10 + $0x104] sm:$0xff]
    %v406 = vld [vmem:[#allocation10 + $0x10c] sm:$0xff]
    %v407 = vld [vmem:[#allocation10 + $0x114] sm:$0xff]
    %v408 = vld [vmem:[#allocation10 + $0x11c] sm:$0xf]
    %v409 = vld [vmem:[#allocation10 + $0x120] sm:$0xff]
    %v410 = vld [vmem:[#allocation10 + $0x128] sm:$0xff]
    %v411 = vld [vmem:[#allocation10 + $0x130] sm:$0xff]
    %v412 = vld [vmem:[#allocation10 + $0x138] sm:$0xff]
    %v413 = vld [vmem:[#allocation10 + $0x140] sm:$0xf]
    %v414 = vld [vmem:[#allocation10 + $0x144] sm:$0xff]
    %v415 = vld [vmem:[#allocation10 + $0x14c] sm:$0xff]
    %v416 = vld [vmem:[#allocation10 + $0x154] sm:$0xff]
    %v417 = vld [vmem:[#allocation10 + $0x15c] sm:$0xff]
    %v418 = vld [vmem:[#allocation10 + $0x164] sm:$0xf]
    %v419 = vld [vmem:[#allocation10 + $0x168] sm:$0xff]
    %v420 = vld [vmem:[#allocation10 + $0x170] sm:$0xff]
    %v421 = vld [vmem:[#allocation10 + $0x178] sm:$0xff]
    %v422 = vld [vmem:[#allocation10 + $0x180] sm:$0xff]
    %v423 = vld [vmem:[#allocation10 + $0x188] sm:$0xf]
    %v424 = vld [vmem:[#allocation10 + $0x18c] sm:$0xff]
    %v425 = vld [vmem:[#allocation10 + $0x194] sm:$0xff]
    %v426 = vld [vmem:[#allocation10 + $0x19c] sm:$0xff]
    %v427 = vld [vmem:[#allocation10 + $0x1a4] sm:$0xff]
    %v428 = vld [vmem:[#allocation10 + $0x1ac] sm:$0xf]
    %v429 = vld [vmem:[#allocation10 + $0x1b0] sm:$0xff]
    %v430 = vld [vmem:[#allocation10 + $0x1b8] sm:$0xff]
    %v431 = vld [vmem:[#allocation10 + $0x1c0] sm:$0xff]
    %v432 = vld [vmem:[#allocation10 + $0x1c8] sm:$0xff]
    %v433 = vld [vmem:[#allocation10 + $0x1d0] sm:$0xf]
    %v434 = vld [vmem:[#allocation10 + $0x1d4] sm:$0xff]
    %v435 = vld [vmem:[#allocation10 + $0x1dc] sm:$0xff]
    %v436 = vld [vmem:[#allocation10 + $0x1e4] sm:$0xff]
    %v437 = vld [vmem:[#allocation10 + $0x1ec] sm:$0xff]
    %v438 = vld [vmem:[#allocation10 + $0x1f4] sm:$0xf]
    %v439 = vld [vmem:[#allocation10 + $0x1f8] sm:$0xff]
    %v440 = vld [vmem:[#allocation10 + $0x200] sm:$0xff]
    %v441 = vld [vmem:[#allocation10 + $0x208] sm:$0xff]
    %v442 = vld [vmem:[#allocation10 + $0x210] sm:$0xff]
    %v443 = vld [vmem:[#allocation10 + $0x218] sm:$0xf]
    %v444 = vld [vmem:[#allocation10 + $0x21c] sm:$0xff]
    %v445 = vld [vmem:[#allocation10 + $0x224] sm:$0xff]
    %v446 = vld [vmem:[#allocation10 + $0x22c] sm:$0xff]
    %v447 = vld [vmem:[#allocation10 + $0x234] sm:$0xff]
    %v448 = vld [vmem:[#allocation10 + $0x23c] sm:$0xf]
    %v449 = vld [vmem:[#allocation10 + $0x240] sm:$0xff]
    %v450 = vld [vmem:[#allocation10 + $0x248] sm:$0xff]
    %v451 = vld [vmem:[#allocation10 + $0x250] sm:$0xff]
    %v452 = vld [vmem:[#allocation10 + $0x258] sm:$0xff]
    %v453 = vld [vmem:[#allocation10 + $0x260] sm:$0xf]
    %v454 = vld [vmem:[#allocation10 + $0x264] sm:$0xff]
    %v455 = vld [vmem:[#allocation10 + $0x26c] sm:$0xff]
    %v456 = vld [vmem:[#allocation10 + $0x274] sm:$0xff]
    %v457 = vld [vmem:[#allocation10 + $0x27c] sm:$0xff]
    %v458 = vld [vmem:[#allocation10 + $0x284] sm:$0xf]
    %v459 = vld [vmem:[#allocation10 + $0x288] sm:$0xff]
    %v460 = vld [vmem:[#allocation10 + $0x290] sm:$0xff]
    %v461 = vld [vmem:[#allocation10 + $0x298] sm:$0xff]
    %v462 = vld [vmem:[#allocation10 + $0x2a0] sm:$0xff]
    %v463 = vld [vmem:[#allocation10 + $0x2a8] sm:$0xf]
    %v464 = vld [vmem:[#allocation10 + $0x2ac] sm:$0xff]
    %v465 = vld [vmem:[#allocation10 + $0x2b4] sm:$0xff]
    %v466 = vld [vmem:[#allocation10 + $0x2bc] sm:$0xff]
    %v467 = vld [vmem:[#allocation10 + $0x2c4] sm:$0xff]
    %v468 = vld [vmem:[#allocation10 + $0x2cc] sm:$0xf]
    %v469 = vld [vmem:[#allocation10 + $0x2d0] sm:$0xff]
    %v470 = vld [vmem:[#allocation10 + $0x2d8] sm:$0xff]
    %v471 = vld [vmem:[#allocation10 + $0x2e0] sm:$0xff]
    %v472 = vld [vmem:[#allocation10 + $0x2e8] sm:$0xff]
    %v473 = vld [vmem:[#allocation10 + $0x2f0] sm:$0xf]
    %v474 = vld [vmem:[#allocation10 + $0x2f4] sm:$0xff]
    %v475 = vld [vmem:[#allocation10 + $0x2fc] sm:$0xff]
    %v476 = vld [vmem:[#allocation10 + $0x304] sm:$0xff]
    %v477 = vld [vmem:[#allocation10 + $0x30c] sm:$0xff]
    %v478 = vld [vmem:[#allocation10 + $0x314] sm:$0xf]
    %v479 = vld [vmem:[#allocation10 + $0x318] sm:$0xff]
    %v480 = vld [vmem:[#allocation10 + $0x320] sm:$0xff]
    %v481 = vld [vmem:[#allocation10 + $0x328] sm:$0xff]
    %v482 = vld [vmem:[#allocation10 + $0x330] sm:$0xff]
    %v483 = vld [vmem:[#allocation10 + $0x338] sm:$0xf]
    %v484 = vld [vmem:[#allocation10 + $0x33c] sm:$0xff]
    %v485 = vld [vmem:[#allocation10 + $0x344] sm:$0xff]
    %v486 = vld [vmem:[#allocation10 + $0x34c] sm:$0xff]
    %v487 = vld [vmem:[#allocation10 + $0x354] sm:$0xff]
    %v488 = vld [vmem:[#allocation10 + $0x35c] sm:$0xf]
    %v489 = vld [vmem:[#allocation10 + $0x360] sm:$0xff]
    %v490 = vld [vmem:[#allocation10 + $0x368] sm:$0xff]
    %v491 = vld [vmem:[#allocation10 + $0x370] sm:$0xff]
    %v492 = vld [vmem:[#allocation10 + $0x378] sm:$0xff]
    %v493 = vld [vmem:[#allocation10 + $0x380] sm:$0xf]
    %v494 = vld [vmem:[#allocation10 + $0x384] sm:$0xff]
    %v495 = vld [vmem:[#allocation10 + $0x38c] sm:$0xff]
    %v496 = vld [vmem:[#allocation10 + $0x394] sm:$0xff]
    %v497 = vld [vmem:[#allocation10 + $0x39c] sm:$0xff]
    %v498 = vld [vmem:[#allocation10 + $0x3a4] sm:$0xf]
    %v499 = vld [vmem:[#allocation10 + $0x3a8] sm:$0xff]
    %v500 = vld [vmem:[#allocation10 + $0x3b0] sm:$0xff]
    %v501 = vld [vmem:[#allocation10 + $0x3b8] sm:$0xff]
    %v502 = vld [vmem:[#allocation10 + $0x3c0] sm:$0xff]
    %v503 = vld [vmem:[#allocation10 + $0x3c8] sm:$0xf]
    %v504 = vld [vmem:[#allocation10 + $0x3cc] sm:$0xff]
    %v505 = vld [vmem:[#allocation10 + $0x3d4] sm:$0xff]
    %v506 = vld [vmem:[#allocation10 + $0x3dc] sm:$0xff]
    %v507 = vld [vmem:[#allocation10 + $0x3e4] sm:$0xff]
    %v508 = vld [vmem:[#allocation10 + $0x3ec] sm:$0xf]
    %v509 = vld [vmem:[#allocation10 + $0x3f0] sm:$0xff]
    %v510 = vld [vmem:[#allocation10 + $0x3f8] sm:$0xff]
    %v511 = vld [vmem:[#allocation10 + $0x400] sm:$0xff]
    %v512 = vld [vmem:[#allocation10 + $0x408] sm:$0xff]
    %v513 = vld [vmem:[#allocation10 + $0x410] sm:$0xf]
    %v514 = vld [vmem:[#allocation10 + $0x414] sm:$0xff]
    %v515 = vld [vmem:[#allocation10 + $0x41c] sm:$0xff]
    %v516 = vld [vmem:[#allocation10 + $0x424] sm:$0xff]
    %v517 = vld [vmem:[#allocation10 + $0x42c] sm:$0xff]
    %v518 = vld [vmem:[#allocation10 + $0x434] sm:$0xf]
    %v519 = vld [vmem:[#allocation10 + $0x438] sm:$0xff]
    %v520 = vld [vmem:[#allocation10 + $0x440] sm:$0xff]
    %v521 = vld [vmem:[#allocation10 + $0x448] sm:$0xff]
    %v522 = vld [vmem:[#allocation10 + $0x450] sm:$0xff]
    %v523 = vld [vmem:[#allocation10 + $0x458] sm:$0xf]
    %v524 = vld [vmem:[#allocation10 + $0x45c] sm:$0xff]
    %v525 = vld [vmem:[#allocation10 + $0x464] sm:$0xff]
    %v526 = vld [vmem:[#allocation10 + $0x46c] sm:$0xff]
    %v527 = vld [vmem:[#allocation10 + $0x474] sm:$0xff]
    %v528 = vld [vmem:[#allocation10 + $0x47c] sm:$0xf]
    %v529 = vld [vmem:[#allocation10 + $0x480] sm:$0xff]
    %v530 = vld [vmem:[#allocation10 + $0x488] sm:$0xff]
    %v531 = vld [vmem:[#allocation10 + $0x490] sm:$0xff]
    %v532 = vld [vmem:[#allocation10 + $0x498] sm:$0xff]
    %v533 = vld [vmem:[#allocation10 + $0x4a0] sm:$0xf]
    %v534 = vld [vmem:[#allocation10 + $0x4a4] sm:$0xff]
    %v535 = vld [vmem:[#allocation10 + $0x4ac] sm:$0xff]
    %v536 = vld [vmem:[#allocation10 + $0x4b4] sm:$0xff]
    %v537 = vld [vmem:[#allocation10 + $0x4bc] sm:$0xff]
    %v538 = vld [vmem:[#allocation10 + $0x4c4] sm:$0xf]
    %v539 = vld [vmem:[#allocation10 + $0x4c8] sm:$0xff]
    %v540 = vld [vmem:[#allocation10 + $0x4d0] sm:$0xff]
    %v541 = vld [vmem:[#allocation10 + $0x4d8] sm:$0xff]
    %v542 = vld [vmem:[#allocation10 + $0x4e0] sm:$0xff]
    %v543 = vld [vmem:[#allocation10 + $0x4e8] sm:$0xf]
    %v544 = vld [vmem:[#allocation10 + $0x4ec] sm:$0xff]
    %v545 = vld [vmem:[#allocation10 + $0x4f4] sm:$0xff]
    %v546 = vld [vmem:[#allocation10 + $0x4fc] sm:$0xff]
    %v547 = vld [vmem:[#allocation10 + $0x504] sm:$0xff]
    %v548 = vld [vmem:[#allocation10 + $0x50c] sm:$0xf]
    %v549 = vld [vmem:[#allocation10 + $0x510] sm:$0xff]
    %v550 = vld [vmem:[#allocation10 + $0x518] sm:$0xff]
    %v551 = vld [vmem:[#allocation10 + $0x520] sm:$0xff]
    %v552 = vld [vmem:[#allocation10 + $0x528] sm:$0xff]
    %v553 = vld [vmem:[#allocation10 + $0x530] sm:$0xf]
    %v554 = vld [vmem:[#allocation10 + $0x534] sm:$0xff]
    %v555 = vld [vmem:[#allocation10 + $0x53c] sm:$0xff]
    %v556 = vld [vmem:[#allocation10 + $0x544] sm:$0xff]
    %v557 = vld [vmem:[#allocation10 + $0x54c] sm:$0xff]
    %v558 = vld [vmem:[#allocation10 + $0x554] sm:$0xf]
    %v559 = vld [vmem:[#allocation10 + $0x558] sm:$0xff]
    %v560 = vld [vmem:[#allocation10 + $0x560] sm:$0xff]
    %v561 = vld [vmem:[#allocation10 + $0x568] sm:$0xff]
    %v562 = vld [vmem:[#allocation10 + $0x570] sm:$0xff]
    %v563 = vld [vmem:[#allocation10 + $0x578] sm:$0xf]
    %v564 = vld [vmem:[#allocation10 + $0x57c] sm:$0xff]
    %v565 = vld [vmem:[#allocation10 + $0x584] sm:$0xff]
    %v566 = vld [vmem:[#allocation10 + $0x58c] sm:$0xff]
    %v567 = vld [vmem:[#allocation10 + $0x594] sm:$0xff]
    %v568 = vld [vmem:[#allocation10 + $0x59c] sm:$0xf]
    %v569 = vld [vmem:[#allocation10 + $0x5a0] sm:$0xff]
    %v570 = vld [vmem:[#allocation10 + $0x5a8] sm:$0xff]
    %v571 = vld [vmem:[#allocation10 + $0x5b0] sm:$0xff]
    %v572 = vld [vmem:[#allocation10 + $0x5b8] sm:$0xff]
    %v573 = vld [vmem:[#allocation10 + $0x5c0] sm:$0xf]
    %v574 = vld [vmem:[#allocation10 + $0x5c4] sm:$0xff]
    %v575 = vld [vmem:[#allocation10 + $0x5cc] sm:$0xff]
    %v576 = vld [vmem:[#allocation10 + $0x5d4] sm:$0xff]
    %v577 = vld [vmem:[#allocation10 + $0x5dc] sm:$0xff]
    %v578 = vld [vmem:[#allocation10 + $0x5e4] sm:$0xf]
    %v579 = vld [vmem:[#allocation10 + $0x5e8] sm:$0xff]
    %v580 = vld [vmem:[#allocation10 + $0x5f0] sm:$0xff]
    %v581 = vld [vmem:[#allocation10 + $0x5f8] sm:$0xff]
    %v582 = vld [vmem:[#allocation10 + $0x600] sm:$0xff]
    %v583 = vld [vmem:[#allocation10 + $0x608] sm:$0xf]
    %v584 = vld [vmem:[#allocation10 + $0x60c] sm:$0xff]
    %v585 = vld [vmem:[#allocation10 + $0x614] sm:$0xff]
    %v586 = vld [vmem:[#allocation10 + $0x61c] sm:$0xff]
    %v587 = vld [vmem:[#allocation10 + $0x624] sm:$0xff]
    %v588 = vld [vmem:[#allocation10 + $0x62c] sm:$0xf]
    %v589 = vld [vmem:[#allocation10 + $0x630] sm:$0xff]
    %v590 = vld [vmem:[#allocation10 + $0x638] sm:$0xff]
    %v591 = vld [vmem:[#allocation10 + $0x640] sm:$0xff]
    %v592 = vld [vmem:[#allocation10 + $0x648] sm:$0xff]
    %v593 = vld [vmem:[#allocation10 + $0x650] sm:$0xf]
    %v594 = vld [vmem:[#allocation10 + $0x654] sm:$0xff]
    %v595 = vld [vmem:[#allocation10 + $0x65c] sm:$0xff]
    %v596 = vld [vmem:[#allocation10 + $0x664] sm:$0xff]
    %v597 = vld [vmem:[#allocation10 + $0x66c] sm:$0xff]
    %v598 = vld [vmem:[#allocation10 + $0x674] sm:$0xf]
    %v599 = vld [vmem:[#allocation10 + $0x678] sm:$0xff]
    %v600 = vld [vmem:[#allocation10 + $0x680] sm:$0xff]
    %v601 = vld [vmem:[#allocation10 + $0x688] sm:$0xff]
    %v602 = vld [vmem:[#allocation10 + $0x690] sm:$0xff]
    %v603 = vld [vmem:[#allocation10 + $0x698] sm:$0xf]
    %v604 = vld [vmem:[#allocation10 + $0x69c] sm:$0xff]
    %v605 = vld [vmem:[#allocation10 + $0x6a4] sm:$0xff]
    %v606 = vld [vmem:[#allocation10 + $0x6ac] sm:$0xff]
    %v607 = vld [vmem:[#allocation10 + $0x6b4] sm:$0xff]
    %v608 = vld [vmem:[#allocation10 + $0x6bc] sm:$0xf]
    %v849 = vunpack.c.l.b16 %v369
    %v850 = vunpack.c.h.b16 %v369
    %v851 = vunpack.c.l.b16 %v370
    %v852 = vunpack.c.h.b16 %v370
    %v853 = vunpack.c.l.b16 %v371
    %v854 = vunpack.c.h.b16 %v371
    %v855 = vunpack.c.l.b16 %v372
    %v856 = vunpack.c.h.b16 %v372
    %v857 = vunpack.c.l.b16 %v373
    %v858 = vunpack.c.l.b16 %v374
    %v859 = vunpack.c.h.b16 %v374
    %v860 = vunpack.c.l.b16 %v375
    %v861 = vunpack.c.h.b16 %v375
    %v862 = vunpack.c.l.b16 %v376
    %v863 = vunpack.c.h.b16 %v376
    %v864 = vunpack.c.l.b16 %v377
    %v865 = vunpack.c.h.b16 %v377
    %v866 = vunpack.c.l.b16 %v378
    %v867 = vunpack.c.l.b16 %v379
    %v868 = vunpack.c.h.b16 %v379
    %v869 = vunpack.c.l.b16 %v380
    %v870 = vunpack.c.h.b16 %v380
    %v871 = vunpack.c.l.b16 %v381
    %v872 = vunpack.c.h.b16 %v381
    %v873 = vunpack.c.l.b16 %v382
    %v874 = vunpack.c.h.b16 %v382
    %v875 = vunpack.c.l.b16 %v383
    %v876 = vunpack.c.l.b16 %v384
    %v877 = vunpack.c.h.b16 %v384
    %v878 = vunpack.c.l.b16 %v385
    %v879 = vunpack.c.h.b16 %v385
    %v880 = vunpack.c.l.b16 %v386
    %v881 = vunpack.c.h.b16 %v386
    %v882 = vunpack.c.l.b16 %v387
    %v883 = vunpack.c.h.b16 %v387
    %v884 = vunpack.c.l.b16 %v388
    %v885 = vunpack.c.l.b16 %v389
    %v886 = vunpack.c.h.b16 %v389
    %v887 = vunpack.c.l.b16 %v390
    %v888 = vunpack.c.h.b16 %v390
    %v889 = vunpack.c.l.b16 %v391
    %v890 = vunpack.c.h.b16 %v391
    %v891 = vunpack.c.l.b16 %v392
    %v892 = vunpack.c.h.b16 %v392
    %v893 = vunpack.c.l.b16 %v393
    %v894 = vunpack.c.l.b16 %v394
    %v895 = vunpack.c.h.b16 %v394
    %v896 = vunpack.c.l.b16 %v395
    %v897 = vunpack.c.h.b16 %v395
    %v898 = vunpack.c.l.b16 %v396
    %v899 = vunpack.c.h.b16 %v396
    %v900 = vunpack.c.l.b16 %v397
    %v901 = vunpack.c.h.b16 %v397
    %v902 = vunpack.c.l.b16 %v398
    %v903 = vunpack.c.l.b16 %v399
    %v904 = vunpack.c.h.b16 %v399
    %v905 = vunpack.c.l.b16 %v400
    %v906 = vunpack.c.h.b16 %v400
    %v907 = vunpack.c.l.b16 %v401
    %v908 = vunpack.c.h.b16 %v401
    %v909 = vunpack.c.l.b16 %v402
    %v910 = vunpack.c.h.b16 %v402
    %v911 = vunpack.c.l.b16 %v403
    %v912 = vunpack.c.l.b16 %v404
    %v913 = vunpack.c.h.b16 %v404
    %v914 = vunpack.c.l.b16 %v405
    %v915 = vunpack.c.h.b16 %v405
    %v916 = vunpack.c.l.b16 %v406
    %v917 = vunpack.c.h.b16 %v406
    %v918 = vunpack.c.l.b16 %v407
    %v919 = vunpack.c.h.b16 %v407
    %v920 = vunpack.c.l.b16 %v408
    %v921 = vunpack.c.l.b16 %v409
    %v922 = vunpack.c.h.b16 %v409
    %v923 = vunpack.c.l.b16 %v410
    %v924 = vunpack.c.h.b16 %v410
    %v925 = vunpack.c.l.b16 %v411
    %v926 = vunpack.c.h.b16 %v411
    %v927 = vunpack.c.l.b16 %v412
    %v928 = vunpack.c.h.b16 %v412
    %v929 = vunpack.c.l.b16 %v413
    %v930 = vunpack.c.l.b16 %v414
    %v931 = vunpack.c.h.b16 %v414
    %v932 = vunpack.c.l.b16 %v415
    %v933 = vunpack.c.h.b16 %v415
    %v934 = vunpack.c.l.b16 %v416
    %v935 = vunpack.c.h.b16 %v416
    %v936 = vunpack.c.l.b16 %v417
    %v937 = vunpack.c.h.b16 %v417
    %v938 = vunpack.c.l.b16 %v418
    %v939 = vunpack.c.l.b16 %v419
    %v940 = vunpack.c.h.b16 %v419
    %v941 = vunpack.c.l.b16 %v420
    %v942 = vunpack.c.h.b16 %v420
    %v943 = vunpack.c.l.b16 %v421
    %v944 = vunpack.c.h.b16 %v421
    %v945 = vunpack.c.l.b16 %v422
    %v946 = vunpack.c.h.b16 %v422
    %v947 = vunpack.c.l.b16 %v423
    %v948 = vunpack.c.l.b16 %v424
    %v949 = vunpack.c.h.b16 %v424
    %v950 = vunpack.c.l.b16 %v425
    %v951 = vunpack.c.h.b16 %v425
    %v952 = vunpack.c.l.b16 %v426
    %v953 = vunpack.c.h.b16 %v426
    %v954 = vunpack.c.l.b16 %v427
    %v955 = vunpack.c.h.b16 %v427
    %v956 = vunpack.c.l.b16 %v428
    %v957 = vunpack.c.l.b16 %v429
    %v958 = vunpack.c.h.b16 %v429
    %v959 = vunpack.c.l.b16 %v430
    %v960 = vunpack.c.h.b16 %v430
    %v961 = vunpack.c.l.b16 %v431
    %v962 = vunpack.c.h.b16 %v431
    %v963 = vunpack.c.l.b16 %v432
    %v964 = vunpack.c.h.b16 %v432
    %v965 = vunpack.c.l.b16 %v433
    %v966 = vunpack.c.l.b16 %v434
    %v967 = vunpack.c.h.b16 %v434
    %v968 = vunpack.c.l.b16 %v435
    %v969 = vunpack.c.h.b16 %v435
    %v970 = vunpack.c.l.b16 %v436
    %v971 = vunpack.c.h.b16 %v436
    %v972 = vunpack.c.l.b16 %v437
    %v973 = vunpack.c.h.b16 %v437
    %v974 = vunpack.c.l.b16 %v438
    %v975 = vunpack.c.l.b16 %v439
    %v976 = vunpack.c.h.b16 %v439
    %v977 = vunpack.c.l.b16 %v440
    %v978 = vunpack.c.h.b16 %v440
    %v979 = vunpack.c.l.b16 %v441
    %v980 = vunpack.c.h.b16 %v441
    %v981 = vunpack.c.l.b16 %v442
    %v982 = vunpack.c.h.b16 %v442
    %v983 = vunpack.c.l.b16 %v443
    %v984 = vunpack.c.l.b16 %v444
    %v985 = vunpack.c.h.b16 %v444
    %v986 = vunpack.c.l.b16 %v445
    %v987 = vunpack.c.h.b16 %v445
    %v988 = vunpack.c.l.b16 %v446
    %v989 = vunpack.c.h.b16 %v446
    %v990 = vunpack.c.l.b16 %v447
    %v991 = vunpack.c.h.b16 %v447
    %v992 = vunpack.c.l.b16 %v448
    %v993 = vunpack.c.l.b16 %v449
    %v994 = vunpack.c.h.b16 %v449
    %v995 = vunpack.c.l.b16 %v450
    %v996 = vunpack.c.h.b16 %v450
    %v997 = vunpack.c.l.b16 %v451
    %v998 = vunpack.c.h.b16 %v451
    %v999 = vunpack.c.l.b16 %v452
    %v1000 = vunpack.c.h.b16 %v452
    %v1001 = vunpack.c.l.b16 %v453
    %v1002 = vunpack.c.l.b16 %v454
    %v1003 = vunpack.c.h.b16 %v454
    %v1004 = vunpack.c.l.b16 %v455
    %v1005 = vunpack.c.h.b16 %v455
    %v1006 = vunpack.c.l.b16 %v456
    %v1007 = vunpack.c.h.b16 %v456
    %v1008 = vunpack.c.l.b16 %v457
    %v1009 = vunpack.c.h.b16 %v457
    %v1010 = vunpack.c.l.b16 %v458
    %v1011 = vunpack.c.l.b16 %v459
    %v1012 = vunpack.c.h.b16 %v459
    %v1013 = vunpack.c.l.b16 %v460
    %v1014 = vunpack.c.h.b16 %v460
    %v1015 = vunpack.c.l.b16 %v461
    %v1016 = vunpack.c.h.b16 %v461
    %v1017 = vunpack.c.l.b16 %v462
    %v1018 = vunpack.c.h.b16 %v462
    %v1019 = vunpack.c.l.b16 %v463
    %v1020 = vunpack.c.l.b16 %v464
    %v1021 = vunpack.c.h.b16 %v464
    %v1022 = vunpack.c.l.b16 %v465
    %v1023 = vunpack.c.h.b16 %v465
    %v1024 = vunpack.c.l.b16 %v466
    %v1025 = vunpack.c.h.b16 %v466
    %v1026 = vunpack.c.l.b16 %v467
    %v1027 = vunpack.c.h.b16 %v467
    %v1028 = vunpack.c.l.b16 %v468
    %v1029 = vunpack.c.l.b16 %v469
    %v1030 = vunpack.c.h.b16 %v469
    %v1031 = vunpack.c.l.b16 %v470
    %v1032 = vunpack.c.h.b16 %v470
    %v1033 = vunpack.c.l.b16 %v471
    %v1034 = vunpack.c.h.b16 %v471
    %v1035 = vunpack.c.l.b16 %v472
    %v1036 = vunpack.c.h.b16 %v472
    %v1037 = vunpack.c.l.b16 %v473
    %v1038 = vunpack.c.l.b16 %v474
    %v1039 = vunpack.c.h.b16 %v474
    %v1040 = vunpack.c.l.b16 %v475
    %v1041 = vunpack.c.h.b16 %v475
    %v1042 = vunpack.c.l.b16 %v476
    %v1043 = vunpack.c.h.b16 %v476
    %v1044 = vunpack.c.l.b16 %v477
    %v1045 = vunpack.c.h.b16 %v477
    %v1046 = vunpack.c.l.b16 %v478
    %v1047 = vunpack.c.l.b16 %v479
    %v1048 = vunpack.c.h.b16 %v479
    %v1049 = vunpack.c.l.b16 %v480
    %v1050 = vunpack.c.h.b16 %v480
    %v1051 = vunpack.c.l.b16 %v481
    %v1052 = vunpack.c.h.b16 %v481
    %v1053 = vunpack.c.l.b16 %v482
    %v1054 = vunpack.c.h.b16 %v482
    %v1055 = vunpack.c.l.b16 %v483
    %v1056 = vunpack.c.l.b16 %v484
    %v1057 = vunpack.c.h.b16 %v484
    %v1058 = vunpack.c.l.b16 %v485
    %v1059 = vunpack.c.h.b16 %v485
    %v1060 = vunpack.c.l.b16 %v486
    %v1061 = vunpack.c.h.b16 %v486
    %v1062 = vunpack.c.l.b16 %v487
    %v1063 = vunpack.c.h.b16 %v487
    %v1064 = vunpack.c.l.b16 %v488
    %v1065 = vunpack.c.l.b16 %v489
    %v1066 = vunpack.c.h.b16 %v489
    %v1067 = vunpack.c.l.b16 %v490
    %v1068 = vunpack.c.h.b16 %v490
    %v1069 = vunpack.c.l.b16 %v491
    %v1070 = vunpack.c.h.b16 %v491
    %v1071 = vunpack.c.l.b16 %v492
    %v1072 = vunpack.c.h.b16 %v492
    %v1073 = vunpack.c.l.b16 %v493
    %v1074 = vunpack.c.l.b16 %v494
    %v1075 = vunpack.c.h.b16 %v494
    %v1076 = vunpack.c.l.b16 %v495
    %v1077 = vunpack.c.h.b16 %v495
    %v1078 = vunpack.c.l.b16 %v496
    %v1079 = vunpack.c.h.b16 %v496
    %v1080 = vunpack.c.l.b16 %v497
    %v1081 = vunpack.c.h.b16 %v497
    %v1082 = vunpack.c.l.b16 %v498
    %v1083 = vunpack.c.l.b16 %v499
    %v1084 = vunpack.c.h.b16 %v499
    %v1085 = vunpack.c.l.b16 %v500
    %v1086 = vunpack.c.h.b16 %v500
    %v1087 = vunpack.c.l.b16 %v501
    %v1088 = vunpack.c.h.b16 %v501
    %v1089 = vunpack.c.l.b16 %v502
    %v1090 = vunpack.c.h.b16 %v502
    %v1091 = vunpack.c.l.b16 %v503
    %v1092 = vunpack.c.l.b16 %v504
    %v1093 = vunpack.c.h.b16 %v504
    %v1094 = vunpack.c.l.b16 %v505
    %v1095 = vunpack.c.h.b16 %v505
    %v1096 = vunpack.c.l.b16 %v506
    %v1097 = vunpack.c.h.b16 %v506
    %v1098 = vunpack.c.l.b16 %v507
    %v1099 = vunpack.c.h.b16 %v507
    %v1100 = vunpack.c.l.b16 %v508
    %v1101 = vunpack.c.l.b16 %v509
    %v1102 = vunpack.c.h.b16 %v509
    %v1103 = vunpack.c.l.b16 %v510
    %v1104 = vunpack.c.h.b16 %v510
    %v1105 = vunpack.c.l.b16 %v511
    %v1106 = vunpack.c.h.b16 %v511
    %v1107 = vunpack.c.l.b16 %v512
    %v1108 = vunpack.c.h.b16 %v512
    %v1109 = vunpack.c.l.b16 %v513
    %v1110 = vunpack.c.l.b16 %v514
    %v1111 = vunpack.c.h.b16 %v514
    %v1112 = vunpack.c.l.b16 %v515
    %v1113 = vunpack.c.h.b16 %v515
    %v1114 = vunpack.c.l.b16 %v516
    %v1115 = vunpack.c.h.b16 %v516
    %v1116 = vunpack.c.l.b16 %v517
    %v1117 = vunpack.c.h.b16 %v517
    %v1118 = vunpack.c.l.b16 %v518
    %v1119 = vunpack.c.l.b16 %v519
    %v1120 = vunpack.c.h.b16 %v519
    %v1121 = vunpack.c.l.b16 %v520
    %v1122 = vunpack.c.h.b16 %v520
    %v1123 = vunpack.c.l.b16 %v521
    %v1124 = vunpack.c.h.b16 %v521
    %v1125 = vunpack.c.l.b16 %v522
    %v1126 = vunpack.c.h.b16 %v522
    %v1127 = vunpack.c.l.b16 %v523
    %v1128 = vunpack.c.l.b16 %v524
    %v1129 = vunpack.c.h.b16 %v524
    %v1130 = vunpack.c.l.b16 %v525
    %v1131 = vunpack.c.h.b16 %v525
    %v1132 = vunpack.c.l.b16 %v526
    %v1133 = vunpack.c.h.b16 %v526
    %v1134 = vunpack.c.l.b16 %v527
    %v1135 = vunpack.c.h.b16 %v527
    %v1136 = vunpack.c.l.b16 %v528
    %v1137 = vunpack.c.l.b16 %v529
    %v1138 = vunpack.c.h.b16 %v529
    %v1139 = vunpack.c.l.b16 %v530
    %v1140 = vunpack.c.h.b16 %v530
    %v1141 = vunpack.c.l.b16 %v531
    %v1142 = vunpack.c.h.b16 %v531
    %v1143 = vunpack.c.l.b16 %v532
    %v1144 = vunpack.c.h.b16 %v532
    %v1145 = vunpack.c.l.b16 %v533
    %v1146 = vunpack.c.l.b16 %v534
    %v1147 = vunpack.c.h.b16 %v534
    %v1148 = vunpack.c.l.b16 %v535
    %v1149 = vunpack.c.h.b16 %v535
    %v1150 = vunpack.c.l.b16 %v536
    %v1151 = vunpack.c.h.b16 %v536
    %v1152 = vunpack.c.l.b16 %v537
    %v1153 = vunpack.c.h.b16 %v537
    %v1154 = vunpack.c.l.b16 %v538
    %v1155 = vunpack.c.l.b16 %v539
    %v1156 = vunpack.c.h.b16 %v539
    %v1157 = vunpack.c.l.b16 %v540
    %v1158 = vunpack.c.h.b16 %v540
    %v1159 = vunpack.c.l.b16 %v541
    %v1160 = vunpack.c.h.b16 %v541
    %v1161 = vunpack.c.l.b16 %v542
    %v1162 = vunpack.c.h.b16 %v542
    %v1163 = vunpack.c.l.b16 %v543
    %v1164 = vunpack.c.l.b16 %v544
    %v1165 = vunpack.c.h.b16 %v544
    %v1166 = vunpack.c.l.b16 %v545
    %v1167 = vunpack.c.h.b16 %v545
    %v1168 = vunpack.c.l.b16 %v546
    %v1169 = vunpack.c.h.b16 %v546
    %v1170 = vunpack.c.l.b16 %v547
    %v1171 = vunpack.c.h.b16 %v547
    %v1172 = vunpack.c.l.b16 %v548
    %v1173 = vunpack.c.l.b16 %v549
    %v1174 = vunpack.c.h.b16 %v549
    %v1175 = vunpack.c.l.b16 %v550
    %v1176 = vunpack.c.h.b16 %v550
    %v1177 = vunpack.c.l.b16 %v551
    %v1178 = vunpack.c.h.b16 %v551
    %v1179 = vunpack.c.l.b16 %v552
    %v1180 = vunpack.c.h.b16 %v552
    %v1181 = vunpack.c.l.b16 %v553
    %v1182 = vunpack.c.l.b16 %v554
    %v1183 = vunpack.c.h.b16 %v554
    %v1184 = vunpack.c.l.b16 %v555
    %v1185 = vunpack.c.h.b16 %v555
    %v1186 = vunpack.c.l.b16 %v556
    %v1187 = vunpack.c.h.b16 %v556
    %v1188 = vunpack.c.l.b16 %v557
    %v1189 = vunpack.c.h.b16 %v557
    %v1190 = vunpack.c.l.b16 %v558
    %v1191 = vunpack.c.l.b16 %v559
    %v1192 = vunpack.c.h.b16 %v559
    %v1193 = vunpack.c.l.b16 %v560
    %v1194 = vunpack.c.h.b16 %v560
    %v1195 = vunpack.c.l.b16 %v561
    %v1196 = vunpack.c.h.b16 %v561
    %v1197 = vunpack.c.l.b16 %v562
    %v1198 = vunpack.c.h.b16 %v562
    %v1199 = vunpack.c.l.b16 %v563
    %v1200 = vunpack.c.l.b16 %v564
    %v1201 = vunpack.c.h.b16 %v564
    %v1202 = vunpack.c.l.b16 %v565
    %v1203 = vunpack.c.h.b16 %v565
    %v1204 = vunpack.c.l.b16 %v566
    %v1205 = vunpack.c.h.b16 %v566
    %v1206 = vunpack.c.l.b16 %v567
    %v1207 = vunpack.c.h.b16 %v567
    %v1208 = vunpack.c.l.b16 %v568
    %v1209 = vunpack.c.l.b16 %v569
    %v1210 = vunpack.c.h.b16 %v569
    %v1211 = vunpack.c.l.b16 %v570
    %v1212 = vunpack.c.h.b16 %v570
    %v1213 = vunpack.c.l.b16 %v571
    %v1214 = vunpack.c.h.b16 %v571
    %v1215 = vunpack.c.l.b16 %v572
    %v1216 = vunpack.c.h.b16 %v572
    %v1217 = vunpack.c.l.b16 %v573
    %v1218 = vunpack.c.l.b16 %v574
    %v1219 = vunpack.c.h.b16 %v574
    %v1220 = vunpack.c.l.b16 %v575
    %v1221 = vunpack.c.h.b16 %v575
    %v1222 = vunpack.c.l.b16 %v576
    %v1223 = vunpack.c.h.b16 %v576
    %v1224 = vunpack.c.l.b16 %v577
    %v1225 = vunpack.c.h.b16 %v577
    %v1226 = vunpack.c.l.b16 %v578
    %v1227 = vunpack.c.l.b16 %v579
    %v1228 = vunpack.c.h.b16 %v579
    %v1229 = vunpack.c.l.b16 %v580
    %v1230 = vunpack.c.h.b16 %v580
    %v1231 = vunpack.c.l.b16 %v581
    %v1232 = vunpack.c.h.b16 %v581
    %v1233 = vunpack.c.l.b16 %v582
    %v1234 = vunpack.c.h.b16 %v582
    %v1235 = vunpack.c.l.b16 %v583
    %v1236 = vunpack.c.l.b16 %v584
    %v1237 = vunpack.c.h.b16 %v584
    %v1238 = vunpack.c.l.b16 %v585
    %v1239 = vunpack.c.h.b16 %v585
    %v1240 = vunpack.c.l.b16 %v586
    %v1241 = vunpack.c.h.b16 %v586
    %v1242 = vunpack.c.l.b16 %v587
    %v1243 = vunpack.c.h.b16 %v587
    %v1244 = vunpack.c.l.b16 %v588
    %v1245 = vunpack.c.l.b16 %v589
    %v1246 = vunpack.c.h.b16 %v589
    %v1247 = vunpack.c.l.b16 %v590
    %v1248 = vunpack.c.h.b16 %v590
    %v1249 = vunpack.c.l.b16 %v591
    %v1250 = vunpack.c.h.b16 %v591
    %v1251 = vunpack.c.l.b16 %v592
    %v1252 = vunpack.c.h.b16 %v592
    %v1253 = vunpack.c.l.b16 %v593
    %v1254 = vunpack.c.l.b16 %v594
    %v1255 = vunpack.c.h.b16 %v594
    %v1256 = vunpack.c.l.b16 %v595
    %v1257 = vunpack.c.h.b16 %v595
    %v1258 = vunpack.c.l.b16 %v596
    %v1259 = vunpack.c.h.b16 %v596
    %v1260 = vunpack.c.l.b16 %v597
    %v1261 = vunpack.c.h.b16 %v597
    %v1262 = vunpack.c.l.b16 %v598
    %v1263 = vunpack.c.l.b16 %v599
    %v1264 = vunpack.c.h.b16 %v599
    %v1265 = vunpack.c.l.b16 %v600
    %v1266 = vunpack.c.h.b16 %v600
    %v1267 = vunpack.c.l.b16 %v601
    %v1268 = vunpack.c.h.b16 %v601
    %v1269 = vunpack.c.l.b16 %v602
    %v1270 = vunpack.c.h.b16 %v602
    %v1271 = vunpack.c.l.b16 %v603
    %v1272 = vunpack.c.l.b16 %v604
    %v1273 = vunpack.c.h.b16 %v604
    %v1274 = vunpack.c.l.b16 %v605
    %v1275 = vunpack.c.h.b16 %v605
    %v1276 = vunpack.c.l.b16 %v606
    %v1277 = vunpack.c.h.b16 %v606
    %v1278 = vunpack.c.l.b16 %v607
    %v1279 = vunpack.c.h.b16 %v607
    %v1280 = vunpack.c.l.b16 %v608
    %v1281 = vpack.c.b16 %v858, %v849
    %v1282 = vpack.c.b16 %v859, %v850
    %v1283 = vpack.c.b16 %v860, %v851
    %v1284 = vpack.c.b16 %v861, %v852
    %v1285 = vpack.c.b16 %v862, %v853
    %v1286 = vpack.c.b16 %v863, %v854
    %v1287 = vpack.c.b16 %v864, %v855
    %v1288 = vpack.c.b16 %v865, %v856
    %v1289 = vpack.c.b16 %v866, %v857
    %v1290 = vpack.c.b16 %v876, %v867
    %v1291 = vpack.c.b16 %v877, %v868
    %v1292 = vpack.c.b16 %v878, %v869
    %v1293 = vpack.c.b16 %v879, %v870
    %v1294 = vpack.c.b16 %v880, %v871
    %v1295 = vpack.c.b16 %v881, %v872
    %v1296 = vpack.c.b16 %v882, %v873
    %v1297 = vpack.c.b16 %v883, %v874
    %v1298 = vpack.c.b16 %v884, %v875
    %v1299 = vpack.c.b16 %v894, %v885
    %v1300 = vpack.c.b16 %v895, %v886
    %v1301 = vpack.c.b16 %v896, %v887
    %v1302 = vpack.c.b16 %v897, %v888
    %v1303 = vpack.c.b16 %v898, %v889
    %v1304 = vpack.c.b16 %v899, %v890
    %v1305 = vpack.c.b16 %v900, %v891
    %v1306 = vpack.c.b16 %v901, %v892
    %v1307 = vpack.c.b16 %v902, %v893
    %v1308 = vpack.c.b16 %v912, %v903
    %v1309 = vpack.c.b16 %v913, %v904
    %v1310 = vpack.c.b16 %v914, %v905
    %v1311 = vpack.c.b16 %v915, %v906
    %v1312 = vpack.c.b16 %v916, %v907
    %v1313 = vpack.c.b16 %v917, %v908
    %v1314 = vpack.c.b16 %v918, %v909
    %v1315 = vpack.c.b16 %v919, %v910
    %v1316 = vpack.c.b16 %v920, %v911
    %v1317 = vpack.c.b16 %v930, %v921
    %v1318 = vpack.c.b16 %v931, %v922
    %v1319 = vpack.c.b16 %v932, %v923
    %v1320 = vpack.c.b16 %v933, %v924
    %v1321 = vpack.c.b16 %v934, %v925
    %v1322 = vpack.c.b16 %v935, %v926
    %v1323 = vpack.c.b16 %v936, %v927
    %v1324 = vpack.c.b16 %v937, %v928
    %v1325 = vpack.c.b16 %v938, %v929
    %v1326 = vpack.c.b16 %v948, %v939
    %v1327 = vpack.c.b16 %v949, %v940
    %v1328 = vpack.c.b16 %v950, %v941
    %v1329 = vpack.c.b16 %v951, %v942
    %v1330 = vpack.c.b16 %v952, %v943
    %v1331 = vpack.c.b16 %v953, %v944
    %v1332 = vpack.c.b16 %v954, %v945
    %v1333 = vpack.c.b16 %v955, %v946
    %v1334 = vpack.c.b16 %v956, %v947
    %v1335 = vpack.c.b16 %v966, %v957
    %v1336 = vpack.c.b16 %v967, %v958
    %v1337 = vpack.c.b16 %v968, %v959
    %v1338 = vpack.c.b16 %v969, %v960
    %v1339 = vpack.c.b16 %v970, %v961
    %v1340 = vpack.c.b16 %v971, %v962
    %v1341 = vpack.c.b16 %v972, %v963
    %v1342 = vpack.c.b16 %v973, %v964
    %v1343 = vpack.c.b16 %v974, %v965
    %v1344 = vpack.c.b16 %v984, %v975
    %v1345 = vpack.c.b16 %v985, %v976
    %v1346 = vpack.c.b16 %v986, %v977
    %v1347 = vpack.c.b16 %v987, %v978
    %v1348 = vpack.c.b16 %v988, %v979
    %v1349 = vpack.c.b16 %v989, %v980
    %v1350 = vpack.c.b16 %v990, %v981
    %v1351 = vpack.c.b16 %v991, %v982
    %v1352 = vpack.c.b16 %v992, %v983
    %v1353 = vpack.c.b16 %v1002, %v993
    %v1354 = vpack.c.b16 %v1003, %v994
    %v1355 = vpack.c.b16 %v1004, %v995
    %v1356 = vpack.c.b16 %v1005, %v996
    %v1357 = vpack.c.b16 %v1006, %v997
    %v1358 = vpack.c.b16 %v1007, %v998
    %v1359 = vpack.c.b16 %v1008, %v999
    %v1360 = vpack.c.b16 %v1009, %v1000
    %v1361 = vpack.c.b16 %v1010, %v1001
    %v1362 = vpack.c.b16 %v1020, %v1011
    %v1363 = vpack.c.b16 %v1021, %v1012
    %v1364 = vpack.c.b16 %v1022, %v1013
    %v1365 = vpack.c.b16 %v1023, %v1014
    %v1366 = vpack.c.b16 %v1024, %v1015
    %v1367 = vpack.c.b16 %v1025, %v1016
    %v1368 = vpack.c.b16 %v1026, %v1017
    %v1369 = vpack.c.b16 %v1027, %v1018
    %v1370 = vpack.c.b16 %v1028, %v1019
    %v1371 = vpack.c.b16 %v1038, %v1029
    %v1372 = vpack.c.b16 %v1039, %v1030
    %v1373 = vpack.c.b16 %v1040, %v1031
    %v1374 = vpack.c.b16 %v1041, %v1032
    %v1375 = vpack.c.b16 %v1042, %v1033
    %v1376 = vpack.c.b16 %v1043, %v1034
    %v1377 = vpack.c.b16 %v1044, %v1035
    %v1378 = vpack.c.b16 %v1045, %v1036
    %v1379 = vpack.c.b16 %v1046, %v1037
    %v1380 = vpack.c.b16 %v1056, %v1047
    %v1381 = vpack.c.b16 %v1057, %v1048
    %v1382 = vpack.c.b16 %v1058, %v1049
    %v1383 = vpack.c.b16 %v1059, %v1050
    %v1384 = vpack.c.b16 %v1060, %v1051
    %v1385 = vpack.c.b16 %v1061, %v1052
    %v1386 = vpack.c.b16 %v1062, %v1053
    %v1387 = vpack.c.b16 %v1063, %v1054
    %v1388 = vpack.c.b16 %v1064, %v1055
    %v1389 = vpack.c.b16 %v1074, %v1065
    %v1390 = vpack.c.b16 %v1075, %v1066
    %v1391 = vpack.c.b16 %v1076, %v1067
    %v1392 = vpack.c.b16 %v1077, %v1068
    %v1393 = vpack.c.b16 %v1078, %v1069
    %v1394 = vpack.c.b16 %v1079, %v1070
    %v1395 = vpack.c.b16 %v1080, %v1071
    %v1396 = vpack.c.b16 %v1081, %v1072
    %v1397 = vpack.c.b16 %v1082, %v1073
    %v1398 = vpack.c.b16 %v1092, %v1083
    %v1399 = vpack.c.b16 %v1093, %v1084
    %v1400 = vpack.c.b16 %v1094, %v1085
    %v1401 = vpack.c.b16 %v1095, %v1086
    %v1402 = vpack.c.b16 %v1096, %v1087
    %v1403 = vpack.c.b16 %v1097, %v1088
    %v1404 = vpack.c.b16 %v1098, %v1089
    %v1405 = vpack.c.b16 %v1099, %v1090
    %v1406 = vpack.c.b16 %v1100, %v1091
    %v1407 = vpack.c.b16 %v1110, %v1101
    %v1408 = vpack.c.b16 %v1111, %v1102
    %v1409 = vpack.c.b16 %v1112, %v1103
    %v1410 = vpack.c.b16 %v1113, %v1104
    %v1411 = vpack.c.b16 %v1114, %v1105
    %v1412 = vpack.c.b16 %v1115, %v1106
    %v1413 = vpack.c.b16 %v1116, %v1107
    %v1414 = vpack.c.b16 %v1117, %v1108
    %v1415 = vpack.c.b16 %v1118, %v1109
    %v1416 = vpack.c.b16 %v1128, %v1119
    %v1417 = vpack.c.b16 %v1129, %v1120
    %v1418 = vpack.c.b16 %v1130, %v1121
    %v1419 = vpack.c.b16 %v1131, %v1122
    %v1420 = vpack.c.b16 %v1132, %v1123
    %v1421 = vpack.c.b16 %v1133, %v1124
    %v1422 = vpack.c.b16 %v1134, %v1125
    %v1423 = vpack.c.b16 %v1135, %v1126
    %v1424 = vpack.c.b16 %v1136, %v1127
    %v1425 = vpack.c.b16 %v1146, %v1137
    %v1426 = vpack.c.b16 %v1147, %v1138
    %v1427 = vpack.c.b16 %v1148, %v1139
    %v1428 = vpack.c.b16 %v1149, %v1140
    %v1429 = vpack.c.b16 %v1150, %v1141
    %v1430 = vpack.c.b16 %v1151, %v1142
    %v1431 = vpack.c.b16 %v1152, %v1143
    %v1432 = vpack.c.b16 %v1153, %v1144
    %v1433 = vpack.c.b16 %v1154, %v1145
    %v1434 = vpack.c.b16 %v1164, %v1155
    %v1435 = vpack.c.b16 %v1165, %v1156
    %v1436 = vpack.c.b16 %v1166, %v1157
    %v1437 = vpack.c.b16 %v1167, %v1158
    %v1438 = vpack.c.b16 %v1168, %v1159
    %v1439 = vpack.c.b16 %v1169, %v1160
    %v1440 = vpack.c.b16 %v1170, %v1161
    %v1441 = vpack.c.b16 %v1171, %v1162
    %v1442 = vpack.c.b16 %v1172, %v1163
    %v1443 = vpack.c.b16 %v1182, %v1173
    %v1444 = vpack.c.b16 %v1183, %v1174
    %v1445 = vpack.c.b16 %v1184, %v1175
    %v1446 = vpack.c.b16 %v1185, %v1176
    %v1447 = vpack.c.b16 %v1186, %v1177
    %v1448 = vpack.c.b16 %v1187, %v1178
    %v1449 = vpack.c.b16 %v1188, %v1179
    %v1450 = vpack.c.b16 %v1189, %v1180
    %v1451 = vpack.c.b16 %v1190, %v1181
    %v1452 = vpack.c.b16 %v1200, %v1191
    %v1453 = vpack.c.b16 %v1201, %v1192
    %v1454 = vpack.c.b16 %v1202, %v1193
    %v1455 = vpack.c.b16 %v1203, %v1194
    %v1456 = vpack.c.b16 %v1204, %v1195
    %v1457 = vpack.c.b16 %v1205, %v1196
    %v1458 = vpack.c.b16 %v1206, %v1197
    %v1459 = vpack.c.b16 %v1207, %v1198
    %v1460 = vpack.c.b16 %v1208, %v1199
    %v1461 = vpack.c.b16 %v1218, %v1209
    %v1462 = vpack.c.b16 %v1219, %v1210
    %v1463 = vpack.c.b16 %v1220, %v1211
    %v1464 = vpack.c.b16 %v1221, %v1212
    %v1465 = vpack.c.b16 %v1222, %v1213
    %v1466 = vpack.c.b16 %v1223, %v1214
    %v1467 = vpack.c.b16 %v1224, %v1215
    %v1468 = vpack.c.b16 %v1225, %v1216
    %v1469 = vpack.c.b16 %v1226, %v1217
    %v1470 = vpack.c.b16 %v1236, %v1227
    %v1471 = vpack.c.b16 %v1237, %v1228
    %v1472 = vpack.c.b16 %v1238, %v1229
    %v1473 = vpack.c.b16 %v1239, %v1230
    %v1474 = vpack.c.b16 %v1240, %v1231
    %v1475 = vpack.c.b16 %v1241, %v1232
    %v1476 = vpack.c.b16 %v1242, %v1233
    %v1477 = vpack.c.b16 %v1243, %v1234
    %v1478 = vpack.c.b16 %v1244, %v1235
    %v1479 = vpack.c.b16 %v1254, %v1245
    %v1480 = vpack.c.b16 %v1255, %v1246
    %v1481 = vpack.c.b16 %v1256, %v1247
    %v1482 = vpack.c.b16 %v1257, %v1248
    %v1483 = vpack.c.b16 %v1258, %v1249
    %v1484 = vpack.c.b16 %v1259, %v1250
    %v1485 = vpack.c.b16 %v1260, %v1251
    %v1486 = vpack.c.b16 %v1261, %v1252
    %v1487 = vpack.c.b16 %v1262, %v1253
    %v1488 = vpack.c.b16 %v1272, %v1263
    %v1489 = vpack.c.b16 %v1273, %v1264
    %v1490 = vpack.c.b16 %v1274, %v1265
    %v1491 = vpack.c.b16 %v1275, %v1266
    %v1492 = vpack.c.b16 %v1276, %v1267
    %v1493 = vpack.c.b16 %v1277, %v1268
    %v1494 = vpack.c.b16 %v1278, %v1269
    %v1495 = vpack.c.b16 %v1279, %v1270
    %v1496 = vpack.c.b16 %v1280, %v1271
    %1713 = vmatprep.subr.bf16.mxu0 %v1282
    %1714 = vmatpush1.bf16.msra.mxu0 %v1281
    %1715 = vmatprep.subr.bf16.mxu0 %v1291
    %1716 = vmatpush1.bf16.msra.mxu0 %v1290
    %1717 = vmatprep.subr.bf16.mxu0 %v1300
    %1718 = vmatpush1.bf16.msra.mxu0 %v1299
    %1719 = vmatprep.subr.bf16.mxu0 %v1309
    %1720 = vmatpush1.bf16.msra.mxu0 %v1308
    %1721 = vmatprep.subr.bf16.mxu0 %v1318
    %1722 = vmatpush1.bf16.msra.mxu0 %v1317
    %1723 = vmatprep.subr.bf16.mxu0 %v1327
    %1724 = vmatpush1.bf16.msra.mxu0 %v1326
    %1725 = vmatprep.subr.bf16.mxu0 %v1336
    %1726 = vmatpush1.bf16.msra.mxu0 %v1335
    %1727 = vmatprep.subr.bf16.mxu0 %v1345
    %1728 = vmatpush1.bf16.msra.mxu0 %v1344
    %1729 = vmatprep.subr.bf16.mxu0 %v1354
    %1730 = vmatpush1.bf16.msra.mxu0 %v1353
    %1731 = vmatprep.subr.bf16.mxu0 %v1363
    %1732 = vmatpush1.bf16.msra.mxu0 %v1362
    %1733 = vmatprep.subr.bf16.mxu0 %v1372
    %1734 = vmatpush1.bf16.msra.mxu0 %v1371
    %1735 = vmatprep.subr.bf16.mxu0 %v1381
    %1736 = vmatpush1.bf16.msra.mxu0 %v1380
    %1737 = vmatprep.subr.bf16.mxu0 %v1390
    %1738 = vmatpush1.bf16.msra.mxu0 %v1389
    %1739 = vmatprep.subr.bf16.mxu0 %v1399
    %1740 = vmatpush1.bf16.msra.mxu0 %v1398
    %1741 = vmatprep.subr.bf16.mxu0 %v1408
    %1742 = vmatpush1.bf16.msra.mxu0 %v1407
    %1743 = vmatprep.subr.bf16.mxu0 %v1417
    %1744 = vmatpush1.bf16.msra.mxu0 %v1416
    %1745 = vmatprep.mubr.bf16.mxu0 %v364
    %1746 = vmatmul.mubr.bf16.gmra.mrb[0].mxu0 %v363
    %v1747 = vpop.f32.mrb[0].mxu0
    %v1748 = vadd.f32 0.0, %v1747
    %v1749 = vpop.f32.mrb[0].mxu0
    %v1750 = vadd.f32 0.0, %v1749
    %v1751 = vpop.f32.mrb[0].mxu0
    %v1752 = vadd.f32 0.0, %v1751
    %v1753 = vpop.f32.mrb[0].mxu0
    %v1754 = vadd.f32 0.0, %v1753
    %1755 = vmatprep.mubr.bf16.mxu0 %v367
    %1756 = vmatmul.mubr.bf16.gmra.mrb[0].mxu0 %v366
    %v1757 = vpop.f32.mrb[0].mxu0
    %v1758 = vadd.f32 0.0, %v1757
    %v1759 = vpop.f32.mrb[0].mxu0
    %v1760 = vadd.f32 0.0, %v1759
    %v1761 = vpop.f32.mrb[0].mxu0
    %v1762 = vadd.f32 0.0, %v1761
    %v1763 = vpop.f32.mrb[0].mxu0
    %v1764 = vadd.f32 0.0, %v1763
    %1765 = vdwg.mxu0
    %1766 = vmatprep.subr.bf16.mxu0 %v1426
    %1767 = vmatpush1.bf16.msra.mxu0 %v1425
    %1768 = vmatprep.subr.bf16.mxu0 %v1435
    %1769 = vmatpush1.bf16.msra.mxu0 %v1434
    %1770 = vmatprep.subr.bf16.mxu0 %v1444
    %1771 = vmatpush1.bf16.msra.mxu0 %v1443
    %1772 = vmatprep.subr.bf16.mxu0 %v1453
    %1773 = vmatpush1.bf16.msra.mxu0 %v1452
    %1774 = vmatprep.subr.bf16.mxu0 %v1462
    %1775 = vmatpush1.bf16.msra.mxu0 %v1461
    %1776 = vmatprep.subr.bf16.mxu0 %v1471
    %1777 = vmatpush1.bf16.msra.mxu0 %v1470
    %1778 = vmatprep.subr.bf16.mxu0 %v1480
    %1779 = vmatpush1.bf16.msra.mxu0 %v1479
    %1780 = vmatprep.subr.bf16.mxu0 %v1489
    %1781 = vmatpush1.bf16.msra.mxu0 %v1488
    %1782 = vmatprep.subr.bf16.mxu0 0
    %1783 = vmatpush1.bf16.msra.mxu0 0
    %1784 = vmatprep.subr.bf16.mxu0 0
    %1785 = vmatpush1.bf16.msra.mxu0 0
    %1786 = vmatprep.subr.bf16.mxu0 0
    %1787 = vmatpush1.bf16.msra.mxu0 0
    %1788 = vmatprep.subr.bf16.mxu0 0
    %1789 = vmatpush1.bf16.msra.mxu0 0
    %1790 = vmatprep.subr.bf16.mxu0 0
    %1791 = vmatpush1.bf16.msra.mxu0 0
    %1792 = vmatprep.subr.bf16.mxu0 0
    %1793 = vmatpush1.bf16.msra.mxu0 0
    %1794 = vmatprep.subr.bf16.mxu0 0
    %1795 = vmatpush1.bf16.msra.mxu0 0
    %1796 = vmatprep.subr.bf16.mxu0 0
    %1797 = vmatpush1.bf16.msra.mxu0 0
    %1798 = vmatprep.mubr.bf16.mxu0 0
    %1799 = vmatmul.mubr.bf16.gmra.mrb[0].mxu0 %v365
    %v1800 = vpop.f32.mrb[0].mxu0
    %v1801 = vadd.f32 %v1748, %v1800
    %v1802 = vpop.f32.mrb[0].mxu0
    %v1803 = vadd.f32 %v1750, %v1802
    %v1804 = vpop.f32.mrb[0].mxu0
    %v1805 = vadd.f32 %v1752, %v1804
    %v1806 = vpop.f32.mrb[0].mxu0
    %v1807 = vadd.f32 %v1754, %v1806
    %1808 = vmatprep.mubr.bf16.mxu0 0
    %1809 = vmatmul.mubr.bf16.gmra.mrb[0].mxu0 %v368
    %v1810 = vpop.f32.mrb[0].mxu0
    %v1811 = vadd.f32 %v1758, %v1810
    %v1812 = vpop.f32.mrb[0].mxu0
    %v1813 = vadd.f32 %v1760, %v1812
    %v1814 = vpop.f32.mrb[0].mxu0
    %v1815 = vadd.f32 %v1762, %v1814
    %v1816 = vpop.f32.mrb[0].mxu0
    %v1817 = vadd.f32 %v1764, %v1816
    %1818 = vdwg.mxu0
    %1819 = vmatprep.subr.bf16.mxu0 %v1284
    %1820 = vmatpush1.bf16.msra.mxu0 %v1283
    %1821 = vmatprep.subr.bf16.mxu0 %v1293
    %1822 = vmatpush1.bf16.msra.mxu0 %v1292
    %1823 = vmatprep.subr.bf16.mxu0 %v1302
    %1824 = vmatpush1.bf16.msra.mxu0 %v1301
    %1825 = vmatprep.subr.bf16.mxu0 %v1311
    %1826 = vmatpush1.bf16.msra.mxu0 %v1310
    %1827 = vmatprep.subr.bf16.mxu0 %v1320
    %1828 = vmatpush1.bf16.msra.mxu0 %v1319
    %1829 = vmatprep.subr.bf16.mxu0 %v1329
    %1830 = vmatpush1.bf16.msra.mxu0 %v1328
    %1831 = vmatprep.subr.bf16.mxu0 %v1338
    %1832 = vmatpush1.bf16.msra.mxu0 %v1337
    %1833 = vmatprep.subr.bf16.mxu0 %v1347
    %1834 = vmatpush1.bf16.msra.mxu0 %v1346
    %1835 = vmatprep.subr.bf16.mxu0 %v1356
    %1836 = vmatpush1.bf16.msra.mxu0 %v1355
    %1837 = vmatprep.subr.bf16.mxu0 %v1365
    %1838 = vmatpush1.bf16.msra.mxu0 %v1364
    %1839 = vmatprep.subr.bf16.mxu0 %v1374
    %1840 = vmatpush1.bf16.msra.mxu0 %v1373
    %1841 = vmatprep.subr.bf16.mxu0 %v1383
    %1842 = vmatpush1.bf16.msra.mxu0 %v1382
    %1843 = vmatprep.subr.bf16.mxu0 %v1392
    %1844 = vmatpush1.bf16.msra.mxu0 %v1391
    %1845 = vmatprep.subr.bf16.mxu0 %v1401
    %1846 = vmatpush1.bf16.msra.mxu0 %v1400
    %1847 = vmatprep.subr.bf16.mxu0 %v1410
    %1848 = vmatpush1.bf16.msra.mxu0 %v1409
    %1849 = vmatprep.subr.bf16.mxu0 %v1419
    %1850 = vmatpush1.bf16.msra.mxu0 %v1418
    %1851 = vmatprep.mubr.bf16.mxu0 %v364
    %1852 = vmatmul.mubr.bf16.gmra.mrb[0].mxu0 %v363
    %v1853 = vpop.f32.mrb[0].mxu0
    %v1854 = vadd.f32 0.0, %v1853
    %v1855 = vpop.f32.mrb[0].mxu0
    %v1856 = vadd.f32 0.0, %v1855
    %v1857 = vpop.f32.mrb[0].mxu0
    %v1858 = vadd.f32 0.0, %v1857
    %v1859 = vpop.f32.mrb[0].mxu0
    %v1860 = vadd.f32 0.0, %v1859
    %1861 = vmatprep.mubr.bf16.mxu0 %v367
    %1862 = vmatmul.mubr.bf16.gmra.mrb[0].mxu0 %v366
    %v1863 = vpop.f32.mrb[0].mxu0
    %v1864 = vadd.f32 0.0, %v1863
    %v1865 = vpop.f32.mrb[0].mxu0
    %v1866 = vadd.f32 0.0, %v1865
    %v1867 = vpop.f32.mrb[0].mxu0
    %v1868 = vadd.f32 0.0, %v1867
    %v1869 = vpop.f32.mrb[0].mxu0
    %v1870 = vadd.f32 0.0, %v1869
    %1871 = vdwg.mxu0
    %1872 = vmatprep.subr.bf16.mxu0 %v1428
    %1873 = vmatpush1.bf16.msra.mxu0 %v1427
    %1874 = vmatprep.subr.bf16.mxu0 %v1437
    %1875 = vmatpush1.bf16.msra.mxu0 %v1436
    %1876 = vmatprep.subr.bf16.mxu0 %v1446
    %1877 = vmatpush1.bf16.msra.mxu0 %v1445
    %1878 = vmatprep.subr.bf16.mxu0 %v1455
    %1879 = vmatpush1.bf16.msra.mxu0 %v1454
    %1880 = vmatprep.subr.bf16.mxu0 %v1464
    %1881 = vmatpush1.bf16.msra.mxu0 %v1463
    %1882 = vmatprep.subr.bf16.mxu0 %v1473
    %1883 = vmatpush1.bf16.msra.mxu0 %v1472
    %1884 = vmatprep.subr.bf16.mxu0 %v1482
    %1885 = vmatpush1.bf16.msra.mxu0 %v1481
    %1886 = vmatprep.subr.bf16.mxu0 %v1491
    %1887 = vmatpush1.bf16.msra.mxu0 %v1490
    %1888 = vmatprep.subr.bf16.mxu0 0
    %1889 = vmatpush1.bf16.msra.mxu0 0
    %1890 = vmatprep.subr.bf16.mxu0 0
    %1891 = vmatpush1.bf16.msra.mxu0 0
    %1892 = vmatprep.subr.bf16.mxu0 0
    %1893 = vmatpush1.bf16.msra.mxu0 0
    %1894 = vmatprep.subr.bf16.mxu0 0
    %1895 = vmatpush1.bf16.msra.mxu0 0
    %1896 = vmatprep.subr.bf16.mxu0 0
    %1897 = vmatpush1.bf16.msra.mxu0 0
    %1898 = vmatprep.subr.bf16.mxu0 0
    %1899 = vmatpush1.bf16.msra.mxu0 0
    %1900 = vmatprep.subr.bf16.mxu0 0
    %1901 = vmatpush1.bf16.msra.mxu0 0
    %1902 = vmatprep.subr.bf16.mxu0 0
    %1903 = vmatpush1.bf16.msra.mxu0 0
    %1904 = vmatprep.mubr.bf16.mxu0 0
    %1905 = vmatmul.mubr.bf16.gmra.mrb[0].mxu0 %v365
    %v1906 = vpop.f32.mrb[0].mxu0
    %v1907 = vadd.f32 %v1854, %v1906
    %v1908 = vpop.f32.mrb[0].mxu0
    %v1909 = vadd.f32 %v1856, %v1908
    %v1910 = vpop.f32.mrb[0].mxu0
    %v1911 = vadd.f32 %v1858, %v1910
    %v1912 = vpop.f32.mrb[0].mxu0
    %v1913 = vadd.f32 %v1860, %v1912
    %1914 = vmatprep.mubr.bf16.mxu0 0
    %1915 = vmatmul.mubr.bf16.gmra.mrb[0].mxu0 %v368
    %v1916 = vpop.f32.mrb[0].mxu0
    %v1917 = vadd.f32 %v1864, %v1916
    %v1918 = vpop.f32.mrb[0].mxu0
    %v1919 = vadd.f32 %v1866, %v1918
    %v1920 = vpop.f32.mrb[0].mxu0
    %v1921 = vadd.f32 %v1868, %v1920
    %v1922 = vpop.f32.mrb[0].mxu0
    %v1923 = vadd.f32 %v1870, %v1922
    %1924 = vdwg.mxu0
    %1925 = vmatprep.subr.bf16.mxu0 %v1286
    %1926 = vmatpush1.bf16.msra.mxu0 %v1285
    %1927 = vmatprep.subr.bf16.mxu0 %v1295
    %1928 = vmatpush1.bf16.msra.mxu0 %v1294
    %1929 = vmatprep.subr.bf16.mxu0 %v1304
    %1930 = vmatpush1.bf16.msra.mxu0 %v1303
    %1931 = vmatprep.subr.bf16.mxu0 %v1313
    %1932 = vmatpush1.bf16.msra.mxu0 %v1312
    %1933 = vmatprep.subr.bf16.mxu0 %v1322
    %1934 = vmatpush1.bf16.msra.mxu0 %v1321
    %1935 = vmatprep.subr.bf16.mxu0 %v1331
    %1936 = vmatpush1.bf16.msra.mxu0 %v1330
    %1937 = vmatprep.subr.bf16.mxu0 %v1340
    %1938 = vmatpush1.bf16.msra.mxu0 %v1339
    %1939 = vmatprep.subr.bf16.mxu0 %v1349
    %1940 = vmatpush1.bf16.msra.mxu0 %v1348
    %1941 = vmatprep.subr.bf16.mxu0 %v1358
    %1942 = vmatpush1.bf16.msra.mxu0 %v1357
    %1943 = vmatprep.subr.bf16.mxu0 %v1367
    %1944 = vmatpush1.bf16.msra.mxu0 %v1366
    %1945 = vmatprep.subr.bf16.mxu0 %v1376
    %1946 = vmatpush1.bf16.msra.mxu0 %v1375
    %1947 = vmatprep.subr.bf16.mxu0 %v1385
    %1948 = vmatpush1.bf16.msra.mxu0 %v1384
    %1949 = vmatprep.subr.bf16.mxu0 %v1394
    %1950 = vmatpush1.bf16.msra.mxu0 %v1393
    %1951 = vmatprep.subr.bf16.mxu0 %v1403
    %1952 = vmatpush1.bf16.msra.mxu0 %v1402
    %1953 = vmatprep.subr.bf16.mxu0 %v1412
    %1954 = vmatpush1.bf16.msra.mxu0 %v1411
    %1955 = vmatprep.subr.bf16.mxu0 %v1421
    %1956 = vmatpush1.bf16.msra.mxu0 %v1420
    %1957 = vmatprep.mubr.bf16.mxu0 %v364
    %1958 = vmatmul.mubr.bf16.gmra.mrb[0].mxu0 %v363
    %v1959 = vpop.f32.mrb[0].mxu0
    %v1960 = vadd.f32 0.0, %v1959
    %v1961 = vpop.f32.mrb[0].mxu0
    %v1962 = vadd.f32 0.0, %v1961
    %v1963 = vpop.f32.mrb[0].mxu0
    %v1964 = vadd.f32 0.0, %v1963
    %v1965 = vpop.f32.mrb[0].mxu0
    %v1966 = vadd.f32 0.0, %v1965
    %1967 = vmatprep.mubr.bf16.mxu0 %v367
    %1968 = vmatmul.mubr.bf16.gmra.mrb[0].mxu0 %v366
    %v1969 = vpop.f32.mrb[0].mxu0
    %v1970 = vadd.f32 0.0, %v1969
    %v1971 = vpop.f32.mrb[0].mxu0
    %v1972 = vadd.f32 0.0, %v1971
    %v1973 = vpop.f32.mrb[0].mxu0
    %v1974 = vadd.f32 0.0, %v1973
    %v1975 = vpop.f32.mrb[0].mxu0
    %v1976 = vadd.f32 0.0, %v1975
    %1977 = vdwg.mxu0
    %1978 = vmatprep.subr.bf16.mxu0 %v1430
    %1979 = vmatpush1.bf16.msra.mxu0 %v1429
    %1980 = vmatprep.subr.bf16.mxu0 %v1439
    %1981 = vmatpush1.bf16.msra.mxu0 %v1438
    %1982 = vmatprep.subr.bf16.mxu0 %v1448
    %1983 = vmatpush1.bf16.msra.mxu0 %v1447
    %1984 = vmatprep.subr.bf16.mxu0 %v1457
    %1985 = vmatpush1.bf16.msra.mxu0 %v1456
    %1986 = vmatprep.subr.bf16.mxu0 %v1466
    %1987 = vmatpush1.bf16.msra.mxu0 %v1465
    %1988 = vmatprep.subr.bf16.mxu0 %v1475
    %1989 = vmatpush1.bf16.msra.mxu0 %v1474
    %1990 = vmatprep.subr.bf16.mxu0 %v1484
    %1991 = vmatpush1.bf16.msra.mxu0 %v1483
    %1992 = vmatprep.subr.bf16.mxu0 %v1493
    %1993 = vmatpush1.bf16.msra.mxu0 %v1492
    %1994 = vmatprep.subr.bf16.mxu0 0
    %1995 = vmatpush1.bf16.msra.mxu0 0
    %1996 = vmatprep.subr.bf16.mxu0 0
    %1997 = vmatpush1.bf16.msra.mxu0 0
    %1998 = vmatprep.subr.bf16.mxu0 0
    %1999 = vmatpush1.bf16.msra.mxu0 0
    %2000 = vmatprep.subr.bf16.mxu0 0
    %2001 = vmatpush1.bf16.msra.mxu0 0
    %2002 = vmatprep.subr.bf16.mxu0 0
    %2003 = vmatpush1.bf16.msra.mxu0 0
    %2004 = vmatprep.subr.bf16.mxu0 0
    %2005 = vmatpush1.bf16.msra.mxu0 0
    %2006 = vmatprep.subr.bf16.mxu0 0
    %2007 = vmatpush1.bf16.msra.mxu0 0
    %2008 = vmatprep.subr.bf16.mxu0 0
    %2009 = vmatpush1.bf16.msra.mxu0 0
    %2010 = vmatprep.mubr.bf16.mxu0 0
    %2011 = vmatmul.mubr.bf16.gmra.mrb[0].mxu0 %v365
    %v2012 = vpop.f32.mrb[0].mxu0
    %v2013 = vadd.f32 %v1960, %v2012
    %v2014 = vpop.f32.mrb[0].mxu0
    %v2015 = vadd.f32 %v1962, %v2014
    %v2016 = vpop.f32.mrb[0].mxu0
    %v2017 = vadd.f32 %v1964, %v2016
    %v2018 = vpop.f32.mrb[0].mxu0
    %v2019 = vadd.f32 %v1966, %v2018
    %2020 = vmatprep.mubr.bf16.mxu0 0
    %2021 = vmatmul.mubr.bf16.gmra.mrb[0].mxu0 %v368
    %v2022 = vpop.f32.mrb[0].mxu0
    %v2023 = vadd.f32 %v1970, %v2022
    %v2024 = vpop.f32.mrb[0].mxu0
    %v2025 = vadd.f32 %v1972, %v2024
    %v2026 = vpop.f32.mrb[0].mxu0
    %v2027 = vadd.f32 %v1974, %v2026
    %v2028 = vpop.f32.mrb[0].mxu0
    %v2029 = vadd.f32 %v1976, %v2028
    %2030 = vdwg.mxu0
    %2031 = vmatprep.subr.bf16.mxu0 %v1288
    %2032 = vmatpush1.bf16.msra.mxu0 %v1287
    %2033 = vmatprep.subr.bf16.mxu0 %v1297
    %2034 = vmatpush1.bf16.msra.mxu0 %v1296
    %2035 = vmatprep.subr.bf16.mxu0 %v1306
    %2036 = vmatpush1.bf16.msra.mxu0 %v1305
    %2037 = vmatprep.subr.bf16.mxu0 %v1315
    %2038 = vmatpush1.bf16.msra.mxu0 %v1314
    %2039 = vmatprep.subr.bf16.mxu0 %v1324
    %2040 = vmatpush1.bf16.msra.mxu0 %v1323
    %2041 = vmatprep.subr.bf16.mxu0 %v1333
    %2042 = vmatpush1.bf16.msra.mxu0 %v1332
    %2043 = vmatprep.subr.bf16.mxu0 %v1342
    %2044 = vmatpush1.bf16.msra.mxu0 %v1341
    %2045 = vmatprep.subr.bf16.mxu0 %v1351
    %2046 = vmatpush1.bf16.msra.mxu0 %v1350
    %2047 = vmatprep.subr.bf16.mxu0 %v1360
    %2048 = vmatpush1.bf16.msra.mxu0 %v1359
    %2049 = vmatprep.subr.bf16.mxu0 %v1369
    %2050 = vmatpush1.bf16.msra.mxu0 %v1368
    %2051 = vmatprep.subr.bf16.mxu0 %v1378
    %2052 = vmatpush1.bf16.msra.mxu0 %v1377
    %2053 = vmatprep.subr.bf16.mxu0 %v1387
    %2054 = vmatpush1.bf16.msra.mxu0 %v1386
    %2055 = vmatprep.subr.bf16.mxu0 %v1396
    %2056 = vmatpush1.bf16.msra.mxu0 %v1395
    %2057 = vmatprep.subr.bf16.mxu0 %v1405
    %2058 = vmatpush1.bf16.msra.mxu0 %v1404
    %2059 = vmatprep.subr.bf16.mxu0 %v1414
    %2060 = vmatpush1.bf16.msra.mxu0 %v1413
    %2061 = vmatprep.subr.bf16.mxu0 %v1423
    %2062 = vmatpush1.bf16.msra.mxu0 %v1422
    %2063 = vmatprep.mubr.bf16.mxu0 %v364
    %2064 = vmatmul.mubr.bf16.gmra.mrb[0].mxu0 %v363
    %v2065 = vpop.f32.mrb[0].mxu0
    %v2066 = vadd.f32 0.0, %v2065
    %v2067 = vpop.f32.mrb[0].mxu0
    %v2068 = vadd.f32 0.0, %v2067
    %v2069 = vpop.f32.mrb[0].mxu0
    %v2070 = vadd.f32 0.0, %v2069
    %v2071 = vpop.f32.mrb[0].mxu0
    %v2072 = vadd.f32 0.0, %v2071
    %2073 = vmatprep.mubr.bf16.mxu0 %v367
    %2074 = vmatmul.mubr.bf16.gmra.mrb[0].mxu0 %v366
    %v2075 = vpop.f32.mrb[0].mxu0
    %v2076 = vadd.f32 0.0, %v2075
    %v2077 = vpop.f32.mrb[0].mxu0
    %v2078 = vadd.f32 0.0, %v2077
    %v2079 = vpop.f32.mrb[0].mxu0
    %v2080 = vadd.f32 0.0, %v2079
    %v2081 = vpop.f32.mrb[0].mxu0
    %v2082 = vadd.f32 0.0, %v2081
    %2083 = vdwg.mxu0
    %2084 = vmatprep.subr.bf16.mxu0 %v1432
    %2085 = vmatpush1.bf16.msra.mxu0 %v1431
    %2086 = vmatprep.subr.bf16.mxu0 %v1441
    %2087 = vmatpush1.bf16.msra.mxu0 %v1440
    %2088 = vmatprep.subr.bf16.mxu0 %v1450
    %2089 = vmatpush1.bf16.msra.mxu0 %v1449
    %2090 = vmatprep.subr.bf16.mxu0 %v1459
    %2091 = vmatpush1.bf16.msra.mxu0 %v1458
    %2092 = vmatprep.subr.bf16.mxu0 %v1468
    %2093 = vmatpush1.bf16.msra.mxu0 %v1467
    %2094 = vmatprep.subr.bf16.mxu0 %v1477
    %2095 = vmatpush1.bf16.msra.mxu0 %v1476
    %2096 = vmatprep.subr.bf16.mxu0 %v1486
    %2097 = vmatpush1.bf16.msra.mxu0 %v1485
    %2098 = vmatprep.subr.bf16.mxu0 %v1495
    %2099 = vmatpush1.bf16.msra.mxu0 %v1494
    %2100 = vmatprep.subr.bf16.mxu0 0
    %2101 = vmatpush1.bf16.msra.mxu0 0
    %2102 = vmatprep.subr.bf16.mxu0 0
    %2103 = vmatpush1.bf16.msra.mxu0 0
    %2104 = vmatprep.subr.bf16.mxu0 0
    %2105 = vmatpush1.bf16.msra.mxu0 0
    %2106 = vmatprep.subr.bf16.mxu0 0
    %2107 = vmatpush1.bf16.msra.mxu0 0
    %2108 = vmatprep.subr.bf16.mxu0 0
    %2109 = vmatpush1.bf16.msra.mxu0 0
    %2110 = vmatprep.subr.bf16.mxu0 0
    %2111 = vmatpush1.bf16.msra.mxu0 0
    %2112 = vmatprep.subr.bf16.mxu0 0
    %2113 = vmatpush1.bf16.msra.mxu0 0
    %2114 = vmatprep.subr.bf16.mxu0 0
    %2115 = vmatpush1.bf16.msra.mxu0 0
    %2116 = vmatprep.mubr.bf16.mxu0 0
    %2117 = vmatmul.mubr.bf16.gmra.mrb[0].mxu0 %v365
    %v2118 = vpop.f32.mrb[0].mxu0
    %v2119 = vadd.f32 %v2066, %v2118
    %v2120 = vpop.f32.mrb[0].mxu0
    %v2121 = vadd.f32 %v2068, %v2120
    %v2122 = vpop.f32.mrb[0].mxu0
    %v2123 = vadd.f32 %v2070, %v2122
    %v2124 = vpop.f32.mrb[0].mxu0
    %v2125 = vadd.f32 %v2072, %v2124
    %2126 = vmatprep.mubr.bf16.mxu0 0
    %2127 = vmatmul.mubr.bf16.gmra.mrb[0].mxu0 %v368
    %v2128 = vpop.f32.mrb[0].mxu0
    %v2129 = vadd.f32 %v2076, %v2128
    %v2130 = vpop.f32.mrb[0].mxu0
    %v2131 = vadd.f32 %v2078, %v2130
    %v2132 = vpop.f32.mrb[0].mxu0
    %v2133 = vadd.f32 %v2080, %v2132
    %v2134 = vpop.f32.mrb[0].mxu0
    %v2135 = vadd.f32 %v2082, %v2134
    %2136 = vdwg.mxu0
    %2137 = vmatprep.subr.bf16.mxu0 0
    %2138 = vmatpush1.bf16.msra.mxu0 %v1289
    %2139 = vmatprep.subr.bf16.mxu0 0
    %2140 = vmatpush1.bf16.msra.mxu0 %v1298
    %2141 = vmatprep.subr.bf16.mxu0 0
    %2142 = vmatpush1.bf16.msra.mxu0 %v1307
    %2143 = vmatprep.subr.bf16.mxu0 0
    %2144 = vmatpush1.bf16.msra.mxu0 %v1316
    %2145 = vmatprep.subr.bf16.mxu0 0
    %2146 = vmatpush1.bf16.msra.mxu0 %v1325
    %2147 = vmatprep.subr.bf16.mxu0 0
    %2148 = vmatpush1.bf16.msra.mxu0 %v1334
    %2149 = vmatprep.subr.bf16.mxu0 0
    %2150 = vmatpush1.bf16.msra.mxu0 %v1343
    %2151 = vmatprep.subr.bf16.mxu0 0
    %2152 = vmatpush1.bf16.msra.mxu0 %v1352
    %2153 = vmatprep.subr.bf16.mxu0 0
    %2154 = vmatpush1.bf16.msra.mxu0 %v1361
    %2155 = vmatprep.subr.bf16.mxu0 0
    %2156 = vmatpush1.bf16.msra.mxu0 %v1370
    %2157 = vmatprep.subr.bf16.mxu0 0
    %2158 = vmatpush1.bf16.msra.mxu0 %v1379
    %2159 = vmatprep.subr.bf16.mxu0 0
    %2160 = vmatpush1.bf16.msra.mxu0 %v1388
    %2161 = vmatprep.subr.bf16.mxu0 0
    %2162 = vmatpush1.bf16.msra.mxu0 %v1397
    %2163 = vmatprep.subr.bf16.mxu0 0
    %2164 = vmatpush1.bf16.msra.mxu0 %v1406
    %2165 = vmatprep.subr.bf16.mxu0 0
    %2166 = vmatpush1.bf16.msra.mxu0 %v1415
    %2167 = vmatprep.subr.bf16.mxu0 0
    %2168 = vmatpush1.bf16.msra.mxu0 %v1424
    %2169 = vmatprep.mubr.bf16.mxu0 %v364
    %2170 = vmatmul.mubr.bf16.gmra.mrb[0].mxu0 %v363
    %v2171 = vpop.f32.mrb[0].mxu0
    %v2172 = vadd.f32 0.0, %v2171
    %v2173 = vpop.f32.mrb[0].mxu0
    %v2174 = vpop.f32.mrb[0].mxu0
    %v2175 = vadd.f32 0.0, %v2174
    %v2176 = vpop.f32.mrb[0].mxu0
    %2177 = vmatprep.mubr.bf16.mxu0 %v367
    %2178 = vmatmul.mubr.bf16.gmra.mrb[0].mxu0 %v366
    %v2179 = vpop.f32.mrb[0].mxu0
    %v2180 = vadd.f32 0.0, %v2179
    %v2181 = vpop.f32.mrb[0].mxu0
    %v2182 = vpop.f32.mrb[0].mxu0
    %v2183 = vadd.f32 0.0, %v2182
    %v2184 = vpop.f32.mrb[0].mxu0
    %2185 = vdwg.mxu0
    %2186 = vmatprep.subr.bf16.mxu0 0
    %2187 = vmatpush1.bf16.msra.mxu0 %v1433
    %2188 = vmatprep.subr.bf16.mxu0 0
    %2189 = vmatpush1.bf16.msra.mxu0 %v1442
    %2190 = vmatprep.subr.bf16.mxu0 0
    %2191 = vmatpush1.bf16.msra.mxu0 %v1451
    %2192 = vmatprep.subr.bf16.mxu0 0
    %2193 = vmatpush1.bf16.msra.mxu0 %v1460
    %2194 = vmatprep.subr.bf16.mxu0 0
    %2195 = vmatpush1.bf16.msra.mxu0 %v1469
    %2196 = vmatprep.subr.bf16.mxu0 0
    %2197 = vmatpush1.bf16.msra.mxu0 %v1478
    %2198 = vmatprep.subr.bf16.mxu0 0
    %2199 = vmatpush1.bf16.msra.mxu0 %v1487
    %2200 = vmatprep.subr.bf16.mxu0 0
    %2201 = vmatpush1.bf16.msra.mxu0 %v1496
    %2202 = vmatprep.subr.bf16.mxu0 0
    %2203 = vmatpush1.bf16.msra.mxu0 0
    %2204 = vmatprep.subr.bf16.mxu0 0
    %2205 = vmatpush1.bf16.msra.mxu0 0
    %2206 = vmatprep.subr.bf16.mxu0 0
    %2207 = vmatpush1.bf16.msra.mxu0 0
    %2208 = vmatprep.subr.bf16.mxu0 0
    %2209 = vmatpush1.bf16.msra.mxu0 0
    %2210 = vmatprep.subr.bf16.mxu0 0
    %2211 = vmatpush1.bf16.msra.mxu0 0
    %2212 = vmatprep.subr.bf16.mxu0 0
    %2213 = vmatpush1.bf16.msra.mxu0 0
    %2214 = vmatprep.subr.bf16.mxu0 0
    %2215 = vmatpush1.bf16.msra.mxu0 0
    %2216 = vmatprep.subr.bf16.mxu0 0
    %2217 = vmatpush1.bf16.msra.mxu0 0
    %2218 = vmatprep.mubr.bf16.mxu0 0
    %2219 = vmatmul.mubr.bf16.gmra.mrb[0].mxu0 %v365
    %v2220 = vpop.f32.mrb[0].mxu0
    %v2221 = vadd.f32 %v2172, %v2220
    %v2222 = vpop.f32.mrb[0].mxu0
    %v2223 = vpop.f32.mrb[0].mxu0
    %v2224 = vadd.f32 %v2175, %v2223
    %v2225 = vpop.f32.mrb[0].mxu0
    %2226 = vmatprep.mubr.bf16.mxu0 0
    %2227 = vmatmul.mubr.bf16.gmra.mrb[0].mxu0 %v368
    %v2228 = vpop.f32.mrb[0].mxu0
    %v2229 = vadd.f32 %v2180, %v2228
    %v2230 = vpop.f32.mrb[0].mxu0
    %v2231 = vpop.f32.mrb[0].mxu0
    %v2232 = vadd.f32 %v2183, %v2231
    %v2233 = vpop.f32.mrb[0].mxu0
    %2234 = vdwg.mxu0
    %v2235 = vpack.c.bf16 %v1805, %v1801
    %v2236 = vpack.c.bf16 %v1807, %v1803
    %v2237 = vpack.c.bf16 %v1911, %v1907
    %v2238 = vpack.c.bf16 %v1913, %v1909
    %v2239 = vpack.c.bf16 %v2017, %v2013
    %v2240 = vpack.c.bf16 %v2019, %v2015
    %v2241 = vpack.c.bf16 %v2123, %v2119
    %v2242 = vpack.c.bf16 %v2125, %v2121
    %v2243 = vpack.c.bf16 %v2224, %v2221
    %v2244 = vpack.c.bf16 %v1815, %v1811
    %v2245 = vpack.c.bf16 %v1817, %v1813
    %v2246 = vpack.c.bf16 %v1921, %v1917
    %v2247 = vpack.c.bf16 %v1923, %v1919
    %v2248 = vpack.c.bf16 %v2027, %v2023
    %v2249 = vpack.c.bf16 %v2029, %v2025
    %v2250 = vpack.c.bf16 %v2133, %v2129
    %v2251 = vpack.c.bf16 %v2135, %v2131
    %v2252 = vpack.c.bf16 %v2232, %v2229
    %v2253 = vld [vmem:[#allocation5] sm:$0xff]
    %v2254 = vld [vmem:[#allocation5 + $0x8] sm:$0xff]
    %v2255 = vld [vmem:[#allocation5 + $0x10] sm:$0xff]
    %v2256 = vld [vmem:[#allocation5 + $0x18] sm:$0xff]
    %vm2257 = vcmask 523264
    %v2259 = vsel %vm2257, %v2235, 0
    %v2262 = vsel %vm2257, %v2244, 0
    %v2265 = vsel %vm2257, %v2238, 0
    %v2268 = vsel %vm2257, %v2247, 0
    %2270 = vmatprep.subr.bf16.mxu0 0
    %2271 = vmatpush1.bf16.xpose.msra.mxu0 %v2265
    %2272 = vmatprep.subr.bf16.mxu0 0
    %2273 = vmatpush1.bf16.xpose.msra.mxu0 %v2268
    %2274 = vmatprep.subr.bf16.mxu0 0
    %2275 = vmatpush1.bf16.xpose.msra.mxu0 0
    %2276 = vmatprep.subr.bf16.mxu0 0
    %2277 = vmatpush1.bf16.xpose.msra.mxu0 0
    %2278 = vmatprep.subr.bf16.mxu0 0
    %2279 = vmatpush1.bf16.xpose.msra.mxu0 0
    %2280 = vmatprep.subr.bf16.mxu0 0
    %2281 = vmatpush1.bf16.xpose.msra.mxu0 0
    %2282 = vmatprep.subr.bf16.mxu0 0
    %2283 = vmatpush1.bf16.xpose.msra.mxu0 0
    %2284 = vmatprep.subr.bf16.mxu0 0
    %2285 = vmatpush1.bf16.xpose.msra.mxu0 0
    %2286 = vmatprep.subr.bf16.mxu0 0
    %2287 = vmatpush1.bf16.xpose.msra.mxu0 0
    %2288 = vmatprep.subr.bf16.mxu0 0
    %2289 = vmatpush1.bf16.xpose.msra.mxu0 0
    %2290 = vmatprep.subr.bf16.mxu0 0
    %2291 = vmatpush1.bf16.xpose.msra.mxu0 0
    %2292 = vmatprep.subr.bf16.mxu0 0
    %2293 = vmatpush1.bf16.xpose.msra.mxu0 0
    %2294 = vmatprep.subr.bf16.mxu0 0
    %2295 = vmatpush1.bf16.xpose.msra.mxu0 0
    %2296 = vmatprep.subr.bf16.mxu0 0
    %2297 = vmatpush1.bf16.xpose.msra.mxu0 0
    %2298 = vmatprep.subr.bf16.mxu0 0
    %2299 = vmatpush1.bf16.xpose.msra.mxu0 0
    %2300 = vmatprep.subr.bf16.mxu0 0
    %2301 = vmatpush1.bf16.xpose.msra.mxu0 0
    %2302 = vmatprep.mubr.bf16.mxu0 0
    %2303 = vmatmul.mubr.bf16.gmra.mrb[0].mxu0 %v2259
    %v2304 = vpop.f32.mrb[0].mxu0
    %v2305 = vadd.f32 %v2253, %v2304
    %v2306 = vpop.f32.mrb[0].mxu0
    %v2307 = vpop.f32.mrb[0].mxu0
    %v2308 = vadd.f32 %v2254, %v2307
    %v2309 = vpop.f32.mrb[0].mxu0
    %2310 = vmatprep.mubr.bf16.mxu0 0
    %2311 = vmatmul.mubr.bf16.gmra.mrb[0].mxu0 %v2262
    %v2312 = vpop.f32.mrb[0].mxu0
    %v2313 = vadd.f32 %v2255, %v2312
    %v2314 = vpop.f32.mrb[0].mxu0
    %v2315 = vpop.f32.mrb[0].mxu0
    %v2316 = vadd.f32 %v2256, %v2315
    %v2317 = vpop.f32.mrb[0].mxu0
    %2318 = vdwg.mxu0
    %vm2319 = vcmask 261120
    %v2320 = vsel %vm2319, %v2305, -inf
    %2321 = vmax.xlane.f32.xlu0 %v2320
    %v2322 = vpop.xlane.xlu0 %2321
    %v2323 = vsel %vm2319, %v2308, -inf
    %2324 = vmax.xlane.f32.xlu0 %v2323
    %v2325 = vpop.xlane.xlu0 %2324
    %v2326 = vsel %vm2319, %v2313, -inf
    %2327 = vmax.xlane.f32.xlu0 %v2326
    %v2328 = vpop.xlane.xlu0 %2327
    %v2329 = vsel %vm2319, %v2316, -inf
    %2330 = vmax.xlane.f32.xlu0 %v2329
    %v2331 = vpop.xlane.xlu0 %2330
    %v2332 = vsub.f32 %v2305, %v2322
    %v2333 = vsub.f32 %v2308, %v2325
    %v2334 = vsub.f32 %v2313, %v2328
    %v2335 = vsub.f32 %v2316, %v2331
    %v2336 = vmul.f32 %v2332, 1.442695
    %v2337 = vpow.pop %v2336
    %v2338 = vmul.f32 %v2333, 1.442695
    %v2339 = vpow.pop %v2338
    %v2340 = vmul.f32 %v2334, 1.442695
    %v2341 = vpow.pop %v2340
    %v2342 = vmul.f32 %v2335, 1.442695
    %v2343 = vpow.pop %v2342
    %v2344 = vsel %vm2319, %v2337, 0.0
    %2345 = vadd.xlane.f32.xlu0 %v2344
    %v2346 = vpop.xlane.xlu0 %2345
    %v2347 = vsel %vm2319, %v2339, 0.0
    %2348 = vadd.xlane.f32.xlu0 %v2347
    %v2349 = vpop.xlane.xlu0 %2348
    %v2350 = vsel %vm2319, %v2341, 0.0
    %2351 = vadd.xlane.f32.xlu0 %v2350
    %v2352 = vpop.xlane.xlu0 %2351
    %v2353 = vsel %vm2319, %v2343, 0.0
    %2354 = vadd.xlane.f32.xlu0 %v2353
    %v2355 = vpop.xlane.xlu0 %2354
    %v2356 = vrcp.pop %v2346
    %v2357 = vmul.f32 %v2337, %v2356
    %v2358 = vrcp.pop %v2349
    %v2359 = vmul.f32 %v2339, %v2358
    %v2360 = vrcp.pop %v2352
    %v2361 = vmul.f32 %v2341, %v2360
    %v2362 = vrcp.pop %v2355
    %v2363 = vmul.f32 %v2343, %v2362
    %v2364 = vpack.c.bf16 %v2359, %v2357
    %v2365 = vpack.c.bf16 %v2363, %v2361
    %v2367 = vsel %vm2319, %v2364, 0
    %v2370 = vsel %vm2319, %v2365, 0
    %2372 = vmatprep.subr.bf16.mxu0 0
    %2373 = vmatpush1.bf16.msra.mxu0 %v2241
    %2374 = vmatprep.subr.bf16.mxu0 0
    %2375 = vmatpush1.bf16.msra.mxu0 %v2250
    %2376 = vmatprep.subr.bf16.mxu0 0
    %2377 = vmatpush1.bf16.msra.mxu0 0
    %2378 = vmatprep.subr.bf16.mxu0 0
    %2379 = vmatpush1.bf16.msra.mxu0 0
    %2380 = vmatprep.subr.bf16.mxu0 0
    %2381 = vmatpush1.bf16.msra.mxu0 0
    %2382 = vmatprep.subr.bf16.mxu0 0
    %2383 = vmatpush1.bf16.msra.mxu0 0
    %2384 = vmatprep.subr.bf16.mxu0 0
    %2385 = vmatpush1.bf16.msra.mxu0 0
    %2386 = vmatprep.subr.bf16.mxu0 0
    %2387 = vmatpush1.bf16.msra.mxu0 0
    %2388 = vmatprep.subr.bf16.mxu0 0
    %2389 = vmatpush1.bf16.msra.mxu0 0
    %2390 = vmatprep.subr.bf16.mxu0 0
    %2391 = vmatpush1.bf16.msra.mxu0 0
    %2392 = vmatprep.subr.bf16.mxu0 0
    %2393 = vmatpush1.bf16.msra.mxu0 0
    %2394 = vmatprep.subr.bf16.mxu0 0
    %2395 = vmatpush1.bf16.msra.mxu0 0
    %2396 = vmatprep.subr.bf16.mxu0 0
    %2397 = vmatpush1.bf16.msra.mxu0 0
    %2398 = vmatprep.subr.bf16.mxu0 0
    %2399 = vmatpush1.bf16.msra.mxu0 0
    %2400 = vmatprep.subr.bf16.mxu0 0
    %2401 = vmatpush1.bf16.msra.mxu0 0
    %2402 = vmatprep.subr.bf16.mxu0 0
    %2403 = vmatpush1.bf16.msra.mxu0 0
    %2404 = vmatprep.mubr.bf16.mxu0 0
    %2405 = vmatmul.mubr.bf16.gmra.mrb[0].mxu0 %v2367
    %v2406 = vpop.f32.mrb[0].mxu0
    %v2407 = vadd.f32 0.0, %v2406
    %v2408 = vpop.f32.mrb[0].mxu0
    %v2409 = vpop.f32.mrb[0].mxu0
    %v2410 = vadd.f32 0.0, %v2409
    %v2411 = vpop.f32.mrb[0].mxu0
    %2412 = vmatprep.mubr.bf16.mxu0 0
    %2413 = vmatmul.mubr.bf16.gmra.mrb[0].mxu0 %v2370
    %v2414 = vpop.f32.mrb[0].mxu0
    %v2415 = vadd.f32 0.0, %v2414
    %v2416 = vpop.f32.mrb[0].mxu0
    %v2417 = vpop.f32.mrb[0].mxu0
    %v2418 = vadd.f32 0.0, %v2417
    %v2419 = vpop.f32.mrb[0].mxu0
    %2420 = vdwg.mxu0
    %2423 = vrot.lane.b32.xlu0 %v2235, 64
    %v2424 = vpop.permute.xlu0 %2423
    %2425 = vrot.lane.b32.xlu0 %v2244, 64
    %v2426 = vpop.permute.xlu0 %2425
    %2429 = vrot.lane.b32.xlu0 %v2238, 64
    %v2430 = vpop.permute.xlu0 %2429
    %2431 = vrot.lane.b32.xlu0 %v2247, 64
    %v2432 = vpop.permute.xlu0 %2431
    %v2434 = vsel %vm2257, %v2424, 0
    %v2437 = vsel %vm2257, %v2426, 0
    %v2440 = vsel %vm2257, %v2430, 0
    %v2443 = vsel %vm2257, %v2432, 0
    %2445 = vmatprep.subr.bf16.mxu0 0
    %2446 = vmatpush1.bf16.xpose.msra.mxu0 %v2440
    %2447 = vmatprep.subr.bf16.mxu0 0
    %2448 = vmatpush1.bf16.xpose.msra.mxu0 %v2443
    %2449 = vmatprep.subr.bf16.mxu0 0
    %2450 = vmatpush1.bf16.xpose.msra.mxu0 0
    %2451 = vmatprep.subr.bf16.mxu0 0
    %2452 = vmatpush1.bf16.xpose.msra.mxu0 0
    %2453 = vmatprep.subr.bf16.mxu0 0
    %2454 = vmatpush1.bf16.xpose.msra.mxu0 0
    %2455 = vmatprep.subr.bf16.mxu0 0
    %2456 = vmatpush1.bf16.xpose.msra.mxu0 0
    %2457 = vmatprep.subr.bf16.mxu0 0
    %2458 = vmatpush1.bf16.xpose.msra.mxu0 0
    %2459 = vmatprep.subr.bf16.mxu0 0
    %2460 = vmatpush1.bf16.xpose.msra.mxu0 0
    %2461 = vmatprep.subr.bf16.mxu0 0
    %2462 = vmatpush1.bf16.xpose.msra.mxu0 0
    %2463 = vmatprep.subr.bf16.mxu0 0
    %2464 = vmatpush1.bf16.xpose.msra.mxu0 0
    %2465 = vmatprep.subr.bf16.mxu0 0
    %2466 = vmatpush1.bf16.xpose.msra.mxu0 0
    %2467 = vmatprep.subr.bf16.mxu0 0
    %2468 = vmatpush1.bf16.xpose.msra.mxu0 0
    %2469 = vmatprep.subr.bf16.mxu0 0
    %2470 = vmatpush1.bf16.xpose.msra.mxu0 0
    %2471 = vmatprep.subr.bf16.mxu0 0
    %2472 = vmatpush1.bf16.xpose.msra.mxu0 0
    %2473 = vmatprep.subr.bf16.mxu0 0
    %2474 = vmatpush1.bf16.xpose.msra.mxu0 0
    %2475 = vmatprep.subr.bf16.mxu0 0
    %2476 = vmatpush1.bf16.xpose.msra.mxu0 0
    %2477 = vmatprep.mubr.bf16.mxu0 0
    %2478 = vmatmul.mubr.bf16.gmra.mrb[0].mxu0 %v2434
    %v2479 = vpop.f32.mrb[0].mxu0
    %v2480 = vadd.f32 %v2253, %v2479
    %v2481 = vpop.f32.mrb[0].mxu0
    %v2482 = vpop.f32.mrb[0].mxu0
    %v2483 = vadd.f32 %v2254, %v2482
    %v2484 = vpop.f32.mrb[0].mxu0
    %2485 = vmatprep.mubr.bf16.mxu0 0
    %2486 = vmatmul.mubr.bf16.gmra.mrb[0].mxu0 %v2437
    %v2487 = vpop.f32.mrb[0].mxu0
    %v2488 = vadd.f32 %v2255, %v2487
    %v2489 = vpop.f32.mrb[0].mxu0
    %v2490 = vpop.f32.mrb[0].mxu0
    %v2491 = vadd.f32 %v2256, %v2490
    %v2492 = vpop.f32.mrb[0].mxu0
    %2493 = vdwg.mxu0
    %v2494 = vsel %vm2319, %v2480, -inf
    %2495 = vmax.xlane.f32.xlu0 %v2494
    %v2496 = vpop.xlane.xlu0 %2495
    %v2497 = vsel %vm2319, %v2483, -inf
    %2498 = vmax.xlane.f32.xlu0 %v2497
    %v2499 = vpop.xlane.xlu0 %2498
    %v2500 = vsel %vm2319, %v2488, -inf
    %2501 = vmax.xlane.f32.xlu0 %v2500
    %v2502 = vpop.xlane.xlu0 %2501
    %v2503 = vsel %vm2319, %v2491, -inf
    %2504 = vmax.xlane.f32.xlu0 %v2503
    %v2505 = vpop.xlane.xlu0 %2504
    %v2506 = vsub.f32 %v2480, %v2496
    %v2507 = vsub.f32 %v2483, %v2499
    %v2508 = vsub.f32 %v2488, %v2502
    %v2509 = vsub.f32 %v2491, %v2505
    %v2510 = vmul.f32 %v2506, 1.442695
    %v2511 = vpow.pop %v2510
    %v2512 = vmul.f32 %v2507, 1.442695
    %v2513 = vpow.pop %v2512
    %v2514 = vmul.f32 %v2508, 1.442695
    %v2515 = vpow.pop %v2514
    %v2516 = vmul.f32 %v2509, 1.442695
    %v2517 = vpow.pop %v2516
    %v2518 = vsel %vm2319, %v2511, 0.0
    %2519 = vadd.xlane.f32.xlu0 %v2518
    %v2520 = vpop.xlane.xlu0 %2519
    %v2521 = vsel %vm2319, %v2513, 0.0
    %2522 = vadd.xlane.f32.xlu0 %v2521
    %v2523 = vpop.xlane.xlu0 %2522
    %v2524 = vsel %vm2319, %v2515, 0.0
    %2525 = vadd.xlane.f32.xlu0 %v2524
    %v2526 = vpop.xlane.xlu0 %2525
    %v2527 = vsel %vm2319, %v2517, 0.0
    %2528 = vadd.xlane.f32.xlu0 %v2527
    %v2529 = vpop.xlane.xlu0 %2528
    %v2530 = vrcp.pop %v2520
    %v2531 = vmul.f32 %v2511, %v2530
    %v2532 = vrcp.pop %v2523
    %v2533 = vmul.f32 %v2513, %v2532
    %v2534 = vrcp.pop %v2526
    %v2535 = vmul.f32 %v2515, %v2534
    %v2536 = vrcp.pop %v2529
    %v2537 = vmul.f32 %v2517, %v2536
    %v2538 = vpack.c.bf16 %v2533, %v2531
    %v2539 = vpack.c.bf16 %v2537, %v2535
    %2542 = vrot.lane.b32.xlu0 %v2241, 64
    %v2543 = vpop.permute.xlu0 %2542
    %2544 = vrot.lane.b32.xlu0 %v2250, 64
    %v2545 = vpop.permute.xlu0 %2544
    %v2549 = vsel %vm2319, %v2538, 0
    %v2552 = vsel %vm2319, %v2539, 0
    %2554 = vmatprep.subr.bf16.mxu0 0
    %2555 = vmatpush1.bf16.msra.mxu0 %v2543
    %2556 = vmatprep.subr.bf16.mxu0 0
    %2557 = vmatpush1.bf16.msra.mxu0 %v2545
    %2558 = vmatprep.subr.bf16.mxu0 0
    %2559 = vmatpush1.bf16.msra.mxu0 0
    %2560 = vmatprep.subr.bf16.mxu0 0
    %2561 = vmatpush1.bf16.msra.mxu0 0
    %2562 = vmatprep.subr.bf16.mxu0 0
    %2563 = vmatpush1.bf16.msra.mxu0 0
    %2564 = vmatprep.subr.bf16.mxu0 0
    %2565 = vmatpush1.bf16.msra.mxu0 0
    %2566 = vmatprep.subr.bf16.mxu0 0
    %2567 = vmatpush1.bf16.msra.mxu0 0
    %2568 = vmatprep.subr.bf16.mxu0 0
    %2569 = vmatpush1.bf16.msra.mxu0 0
    %2570 = vmatprep.subr.bf16.mxu0 0
    %2571 = vmatpush1.bf16.msra.mxu0 0
    %2572 = vmatprep.subr.bf16.mxu0 0
    %2573 = vmatpush1.bf16.msra.mxu0 0
    %2574 = vmatprep.subr.bf16.mxu0 0
    %2575 = vmatpush1.bf16.msra.mxu0 0
    %2576 = vmatprep.subr.bf16.mxu0 0
    %2577 = vmatpush1.bf16.msra.mxu0 0
    %2578 = vmatprep.subr.bf16.mxu0 0
    %2579 = vmatpush1.bf16.msra.mxu0 0
    %2580 = vmatprep.subr.bf16.mxu0 0
    %2581 = vmatpush1.bf16.msra.mxu0 0
    %2582 = vmatprep.subr.bf16.mxu0 0
    %2583 = vmatpush1.bf16.msra.mxu0 0
    %2584 = vmatprep.subr.bf16.mxu0 0
    %2585 = vmatpush1.bf16.msra.mxu0 0
    %2586 = vmatprep.mubr.bf16.mxu0 0
    %2587 = vmatmul.mubr.bf16.gmra.mrb[0].mxu0 %v2549
    %v2588 = vpop.f32.mrb[0].mxu0
    %v2589 = vadd.f32 0.0, %v2588
    %v2590 = vpop.f32.mrb[0].mxu0
    %v2591 = vpop.f32.mrb[0].mxu0
    %v2592 = vadd.f32 0.0, %v2591
    %v2593 = vpop.f32.mrb[0].mxu0
    %2594 = vmatprep.mubr.bf16.mxu0 0
    %2595 = vmatmul.mubr.bf16.gmra.mrb[0].mxu0 %v2552
    %v2596 = vpop.f32.mrb[0].mxu0
    %v2597 = vadd.f32 0.0, %v2596
    %v2598 = vpop.f32.mrb[0].mxu0
    %v2599 = vpop.f32.mrb[0].mxu0
    %v2600 = vadd.f32 0.0, %v2599
    %v2601 = vpop.f32.mrb[0].mxu0
    %2602 = vdwg.mxu0
    %v2604 = vsel %vm2257, %v2236, 0
    %v2607 = vsel %vm2257, %v2245, 0
    %v2610 = vsel %vm2257, %v2239, 0
    %v2613 = vsel %vm2257, %v2248, 0
    %2615 = vmatprep.subr.bf16.mxu0 0
    %2616 = vmatpush1.bf16.xpose.msra.mxu0 %v2610
    %2617 = vmatprep.subr.bf16.mxu0 0
    %2618 = vmatpush1.bf16.xpose.msra.mxu0 %v2613
    %2619 = vmatprep.subr.bf16.mxu0 0
    %2620 = vmatpush1.bf16.xpose.msra.mxu0 0
    %2621 = vmatprep.subr.bf16.mxu0 0
    %2622 = vmatpush1.bf16.xpose.msra.mxu0 0
    %2623 = vmatprep.subr.bf16.mxu0 0
    %2624 = vmatpush1.bf16.xpose.msra.mxu0 0
    %2625 = vmatprep.subr.bf16.mxu0 0
    %2626 = vmatpush1.bf16.xpose.msra.mxu0 0
    %2627 = vmatprep.subr.bf16.mxu0 0
    %2628 = vmatpush1.bf16.xpose.msra.mxu0 0
    %2629 = vmatprep.subr.bf16.mxu0 0
    %2630 = vmatpush1.bf16.xpose.msra.mxu0 0
    %2631 = vmatprep.subr.bf16.mxu0 0
    %2632 = vmatpush1.bf16.xpose.msra.mxu0 0
    %2633 = vmatprep.subr.bf16.mxu0 0
    %2634 = vmatpush1.bf16.xpose.msra.mxu0 0
    %2635 = vmatprep.subr.bf16.mxu0 0
    %2636 = vmatpush1.bf16.xpose.msra.mxu0 0
    %2637 = vmatprep.subr.bf16.mxu0 0
    %2638 = vmatpush1.bf16.xpose.msra.mxu0 0
    %2639 = vmatprep.subr.bf16.mxu0 0
    %2640 = vmatpush1.bf16.xpose.msra.mxu0 0
    %2641 = vmatprep.subr.bf16.mxu0 0
    %2642 = vmatpush1.bf16.xpose.msra.mxu0 0
    %2643 = vmatprep.subr.bf16.mxu0 0
    %2644 = vmatpush1.bf16.xpose.msra.mxu0 0
    %2645 = vmatprep.subr.bf16.mxu0 0
    %2646 = vmatpush1.bf16.xpose.msra.mxu0 0
    %2647 = vmatprep.mubr.bf16.mxu0 0
    %2648 = vmatmul.mubr.bf16.gmra.mrb[0].mxu0 %v2604
    %v2649 = vpop.f32.mrb[0].mxu0
    %v2650 = vadd.f32 %v2253, %v2649
    %v2651 = vpop.f32.mrb[0].mxu0
    %v2652 = vpop.f32.mrb[0].mxu0
    %v2653 = vadd.f32 %v2254, %v2652
    %v2654 = vpop.f32.mrb[0].mxu0
    %2655 = vmatprep.mubr.bf16.mxu0 0
    %2656 = vmatmul.mubr.bf16.gmra.mrb[0].mxu0 %v2607
    %v2657 = vpop.f32.mrb[0].mxu0
    %v2658 = vadd.f32 %v2255, %v2657
    %v2659 = vpop.f32.mrb[0].mxu0
    %v2660 = vpop.f32.mrb[0].mxu0
    %v2661 = vadd.f32 %v2256, %v2660
    %v2662 = vpop.f32.mrb[0].mxu0
    %2663 = vdwg.mxu0
    %v2664 = vsel %vm2319, %v2650, -inf
    %2665 = vmax.xlane.f32.xlu0 %v2664
    %v2666 = vpop.xlane.xlu0 %2665
    %v2667 = vsel %vm2319, %v2653, -inf
    %2668 = vmax.xlane.f32.xlu0 %v2667
    %v2669 = vpop.xlane.xlu0 %2668
    %v2670 = vsel %vm2319, %v2658, -inf
    %2671 = vmax.xlane.f32.xlu0 %v2670
    %v2672 = vpop.xlane.xlu0 %2671
    %v2673 = vsel %vm2319, %v2661, -inf
    %2674 = vmax.xlane.f32.xlu0 %v2673
    %v2675 = vpop.xlane.xlu0 %2674
    %v2676 = vsub.f32 %v2650, %v2666
    %v2677 = vsub.f32 %v2653, %v2669
    %v2678 = vsub.f32 %v2658, %v2672
    %v2679 = vsub.f32 %v2661, %v2675
    %v2680 = vmul.f32 %v2676, 1.442695
    %v2681 = vpow.pop %v2680
    %v2682 = vmul.f32 %v2677, 1.442695
    %v2683 = vpow.pop %v2682
    %v2684 = vmul.f32 %v2678, 1.442695
    %v2685 = vpow.pop %v2684
    %v2686 = vmul.f32 %v2679, 1.442695
    %v2687 = vpow.pop %v2686
    %v2688 = vsel %vm2319, %v2681, 0.0
    %2689 = vadd.xlane.f32.xlu0 %v2688
    %v2690 = vpop.xlane.xlu0 %2689
    %v2691 = vsel %vm2319, %v2683, 0.0
    %2692 = vadd.xlane.f32.xlu0 %v2691
    %v2693 = vpop.xlane.xlu0 %2692
    %v2694 = vsel %vm2319, %v2685, 0.0
    %2695 = vadd.xlane.f32.xlu0 %v2694
    %v2696 = vpop.xlane.xlu0 %2695
    %v2697 = vsel %vm2319, %v2687, 0.0
    %2698 = vadd.xlane.f32.xlu0 %v2697
    %v2699 = vpop.xlane.xlu0 %2698
    %v2700 = vrcp.pop %v2690
    %v2701 = vmul.f32 %v2681, %v2700
    %v2702 = vrcp.pop %v2693
    %v2703 = vmul.f32 %v2683, %v2702
    %v2704 = vrcp.pop %v2696
    %v2705 = vmul.f32 %v2685, %v2704
    %v2706 = vrcp.pop %v2699
    %v2707 = vmul.f32 %v2687, %v2706
    %v2708 = vpack.c.bf16 %v2703, %v2701
    %v2709 = vpack.c.bf16 %v2707, %v2705
    %v2711 = vsel %vm2319, %v2708, 0
    %v2714 = vsel %vm2319, %v2709, 0
    %2716 = vmatprep.subr.bf16.mxu0 0
    %2717 = vmatpush1.bf16.msra.mxu0 %v2242
    %2718 = vmatprep.subr.bf16.mxu0 0
    %2719 = vmatpush1.bf16.msra.mxu0 %v2251
    %2720 = vmatprep.subr.bf16.mxu0 0
    %2721 = vmatpush1.bf16.msra.mxu0 0
    %2722 = vmatprep.subr.bf16.mxu0 0
    %2723 = vmatpush1.bf16.msra.mxu0 0
    %2724 = vmatprep.subr.bf16.mxu0 0
    %2725 = vmatpush1.bf16.msra.mxu0 0
    %2726 = vmatprep.subr.bf16.mxu0 0
    %2727 = vmatpush1.bf16.msra.mxu0 0
    %2728 = vmatprep.subr.bf16.mxu0 0
    %2729 = vmatpush1.bf16.msra.mxu0 0
    %2730 = vmatprep.subr.bf16.mxu0 0
    %2731 = vmatpush1.bf16.msra.mxu0 0
    %2732 = vmatprep.subr.bf16.mxu0 0
    %2733 = vmatpush1.bf16.msra.mxu0 0
    %2734 = vmatprep.subr.bf16.mxu0 0
    %2735 = vmatpush1.bf16.msra.mxu0 0
    %2736 = vmatprep.subr.bf16.mxu0 0
    %2737 = vmatpush1.bf16.msra.mxu0 0
    %2738 = vmatprep.subr.bf16.mxu0 0
    %2739 = vmatpush1.bf16.msra.mxu0 0
    %2740 = vmatprep.subr.bf16.mxu0 0
    %2741 = vmatpush1.bf16.msra.mxu0 0
    %2742 = vmatprep.subr.bf16.mxu0 0
    %2743 = vmatpush1.bf16.msra.mxu0 0
    %2744 = vmatprep.subr.bf16.mxu0 0
    %2745 = vmatpush1.bf16.msra.mxu0 0
    %2746 = vmatprep.subr.bf16.mxu0 0
    %2747 = vmatpush1.bf16.msra.mxu0 0
    %2748 = vmatprep.mubr.bf16.mxu0 0
    %2749 = vmatmul.mubr.bf16.gmra.mrb[0].mxu0 %v2711
    %v2750 = vpop.f32.mrb[0].mxu0
    %v2751 = vadd.f32 0.0, %v2750
    %v2752 = vpop.f32.mrb[0].mxu0
    %v2753 = vpop.f32.mrb[0].mxu0
    %v2754 = vadd.f32 0.0, %v2753
    %v2755 = vpop.f32.mrb[0].mxu0
    %2756 = vmatprep.mubr.bf16.mxu0 0
    %2757 = vmatmul.mubr.bf16.gmra.mrb[0].mxu0 %v2714
    %v2758 = vpop.f32.mrb[0].mxu0
    %v2759 = vadd.f32 0.0, %v2758
    %v2760 = vpop.f32.mrb[0].mxu0
    %v2761 = vpop.f32.mrb[0].mxu0
    %v2762 = vadd.f32 0.0, %v2761
    %v2763 = vpop.f32.mrb[0].mxu0
    %2764 = vdwg.mxu0
    %2767 = vrot.lane.b32.xlu0 %v2236, 64
    %v2768 = vpop.permute.xlu0 %2767
    %2769 = vrot.lane.b32.xlu0 %v2245, 64
    %v2770 = vpop.permute.xlu0 %2769
    %2773 = vrot.lane.b32.xlu0 %v2239, 64
    %v2774 = vpop.permute.xlu0 %2773
    %2775 = vrot.lane.b32.xlu0 %v2248, 64
    %v2776 = vpop.permute.xlu0 %2775
    %v2778 = vsel %vm2257, %v2768, 0
    %v2781 = vsel %vm2257, %v2770, 0
    %v2784 = vsel %vm2257, %v2774, 0
    %v2787 = vsel %vm2257, %v2776, 0
    %2789 = vmatprep.subr.bf16.mxu0 0
    %2790 = vmatpush1.bf16.xpose.msra.mxu0 %v2784
    %2791 = vmatprep.subr.bf16.mxu0 0
    %2792 = vmatpush1.bf16.xpose.msra.mxu0 %v2787
    %2793 = vmatprep.subr.bf16.mxu0 0
    %2794 = vmatpush1.bf16.xpose.msra.mxu0 0
    %2795 = vmatprep.subr.bf16.mxu0 0
    %2796 = vmatpush1.bf16.xpose.msra.mxu0 0
    %2797 = vmatprep.subr.bf16.mxu0 0
    %2798 = vmatpush1.bf16.xpose.msra.mxu0 0
    %2799 = vmatprep.subr.bf16.mxu0 0
    %2800 = vmatpush1.bf16.xpose.msra.mxu0 0
    %2801 = vmatprep.subr.bf16.mxu0 0
    %2802 = vmatpush1.bf16.xpose.msra.mxu0 0
    %2803 = vmatprep.subr.bf16.mxu0 0
    %2804 = vmatpush1.bf16.xpose.msra.mxu0 0
    %2805 = vmatprep.subr.bf16.mxu0 0
    %2806 = vmatpush1.bf16.xpose.msra.mxu0 0
    %2807 = vmatprep.subr.bf16.mxu0 0
    %2808 = vmatpush1.bf16.xpose.msra.mxu0 0
    %2809 = vmatprep.subr.bf16.mxu0 0
    %2810 = vmatpush1.bf16.xpose.msra.mxu0 0
    %2811 = vmatprep.subr.bf16.mxu0 0
    %2812 = vmatpush1.bf16.xpose.msra.mxu0 0
    %2813 = vmatprep.subr.bf16.mxu0 0
    %2814 = vmatpush1.bf16.xpose.msra.mxu0 0
    %2815 = vmatprep.subr.bf16.mxu0 0
    %2816 = vmatpush1.bf16.xpose.msra.mxu0 0
    %2817 = vmatprep.subr.bf16.mxu0 0
    %2818 = vmatpush1.bf16.xpose.msra.mxu0 0
    %2819 = vmatprep.subr.bf16.mxu0 0
    %2820 = vmatpush1.bf16.xpose.msra.mxu0 0
    %2821 = vmatprep.mubr.bf16.mxu0 0
    %2822 = vmatmul.mubr.bf16.gmra.mrb[0].mxu0 %v2778
    %v2823 = vpop.f32.mrb[0].mxu0
    %v2824 = vadd.f32 %v2253, %v2823
    %v2825 = vpop.f32.mrb[0].mxu0
    %v2826 = vpop.f32.mrb[0].mxu0
    %v2827 = vadd.f32 %v2254, %v2826
    %v2828 = vpop.f32.mrb[0].mxu0
    %2829 = vmatprep.mubr.bf16.mxu0 0
    %2830 = vmatmul.mubr.bf16.gmra.mrb[0].mxu0 %v2781
    %v2831 = vpop.f32.mrb[0].mxu0
    %v2832 = vadd.f32 %v2255, %v2831
    %v2833 = vpop.f32.mrb[0].mxu0
    %v2834 = vpop.f32.mrb[0].mxu0
    %v2835 = vadd.f32 %v2256, %v2834
    %v2836 = vpop.f32.mrb[0].mxu0
    %2837 = vdwg.mxu0
    %v2838 = vsel %vm2319, %v2824, -inf
    %2839 = vmax.xlane.f32.xlu0 %v2838
    %v2840 = vpop.xlane.xlu0 %2839
    %v2841 = vsel %vm2319, %v2827, -inf
    %2842 = vmax.xlane.f32.xlu0 %v2841
    %v2843 = vpop.xlane.xlu0 %2842
    %v2844 = vsel %vm2319, %v2832, -inf
    %2845 = vmax.xlane.f32.xlu0 %v2844
    %v2846 = vpop.xlane.xlu0 %2845
    %v2847 = vsel %vm2319, %v2835, -inf
    %2848 = vmax.xlane.f32.xlu0 %v2847
    %v2849 = vpop.xlane.xlu0 %2848
    %v2850 = vsub.f32 %v2824, %v2840
    %v2851 = vsub.f32 %v2827, %v2843
    %v2852 = vsub.f32 %v2832, %v2846
    %v2853 = vsub.f32 %v2835, %v2849
    %v2854 = vmul.f32 %v2850, 1.442695
    %v2855 = vpow.pop %v2854
    %v2856 = vmul.f32 %v2851, 1.442695
    %v2857 = vpow.pop %v2856
    %v2858 = vmul.f32 %v2852, 1.442695
    %v2859 = vpow.pop %v2858
    %v2860 = vmul.f32 %v2853, 1.442695
    %v2861 = vpow.pop %v2860
    %v2862 = vsel %vm2319, %v2855, 0.0
    %2863 = vadd.xlane.f32.xlu0 %v2862
    %v2864 = vpop.xlane.xlu0 %2863
    %v2865 = vsel %vm2319, %v2857, 0.0
    %2866 = vadd.xlane.f32.xlu0 %v2865
    %v2867 = vpop.xlane.xlu0 %2866
    %v2868 = vsel %vm2319, %v2859, 0.0
    %2869 = vadd.xlane.f32.xlu0 %v2868
    %v2870 = vpop.xlane.xlu0 %2869
    %v2871 = vsel %vm2319, %v2861, 0.0
    %2872 = vadd.xlane.f32.xlu0 %v2871
    %v2873 = vpop.xlane.xlu0 %2872
    %v2874 = vrcp.pop %v2864
    %v2875 = vmul.f32 %v2855, %v2874
    %v2876 = vrcp.pop %v2867
    %v2877 = vmul.f32 %v2857, %v2876
    %v2878 = vrcp.pop %v2870
    %v2879 = vmul.f32 %v2859, %v2878
    %v2880 = vrcp.pop %v2873
    %v2881 = vmul.f32 %v2861, %v2880
    %v2882 = vpack.c.bf16 %v2877, %v2875
    %v2883 = vpack.c.bf16 %v2881, %v2879
    %2886 = vrot.lane.b32.xlu0 %v2242, 64
    %v2887 = vpop.permute.xlu0 %2886
    %2888 = vrot.lane.b32.xlu0 %v2251, 64
    %v2889 = vpop.permute.xlu0 %2888
    %v2893 = vsel %vm2319, %v2882, 0
    %v2896 = vsel %vm2319, %v2883, 0
    %2898 = vmatprep.subr.bf16.mxu0 0
    %2899 = vmatpush1.bf16.msra.mxu0 %v2887
    %2900 = vmatprep.subr.bf16.mxu0 0
    %2901 = vmatpush1.bf16.msra.mxu0 %v2889
    %2902 = vmatprep.subr.bf16.mxu0 0
    %2903 = vmatpush1.bf16.msra.mxu0 0
    %2904 = vmatprep.subr.bf16.mxu0 0
    %2905 = vmatpush1.bf16.msra.mxu0 0
    %2906 = vmatprep.subr.bf16.mxu0 0
    %2907 = vmatpush1.bf16.msra.mxu0 0
    %2908 = vmatprep.subr.bf16.mxu0 0
    %2909 = vmatpush1.bf16.msra.mxu0 0
    %2910 = vmatprep.subr.bf16.mxu0 0
    %2911 = vmatpush1.bf16.msra.mxu0 0
    %2912 = vmatprep.subr.bf16.mxu0 0
    %2913 = vmatpush1.bf16.msra.mxu0 0
    %2914 = vmatprep.subr.bf16.mxu0 0
    %2915 = vmatpush1.bf16.msra.mxu0 0
    %2916 = vmatprep.subr.bf16.mxu0 0
    %2917 = vmatpush1.bf16.msra.mxu0 0
    %2918 = vmatprep.subr.bf16.mxu0 0
    %2919 = vmatpush1.bf16.msra.mxu0 0
    %2920 = vmatprep.subr.bf16.mxu0 0
    %2921 = vmatpush1.bf16.msra.mxu0 0
    %2922 = vmatprep.subr.bf16.mxu0 0
    %2923 = vmatpush1.bf16.msra.mxu0 0
    %2924 = vmatprep.subr.bf16.mxu0 0
    %2925 = vmatpush1.bf16.msra.mxu0 0
    %2926 = vmatprep.subr.bf16.mxu0 0
    %2927 = vmatpush1.bf16.msra.mxu0 0
    %2928 = vmatprep.subr.bf16.mxu0 0
    %2929 = vmatpush1.bf16.msra.mxu0 0
    %2930 = vmatprep.mubr.bf16.mxu0 0
    %2931 = vmatmul.mubr.bf16.gmra.mrb[0].mxu0 %v2893
    %v2932 = vpop.f32.mrb[0].mxu0
    %v2933 = vadd.f32 0.0, %v2932
    %v2934 = vpop.f32.mrb[0].mxu0
    %v2935 = vpop.f32.mrb[0].mxu0
    %v2936 = vadd.f32 0.0, %v2935
    %v2937 = vpop.f32.mrb[0].mxu0
    %2938 = vmatprep.mubr.bf16.mxu0 0
    %2939 = vmatmul.mubr.bf16.gmra.mrb[0].mxu0 %v2896
    %v2940 = vpop.f32.mrb[0].mxu0
    %v2941 = vadd.f32 0.0, %v2940
    %v2942 = vpop.f32.mrb[0].mxu0
    %v2943 = vpop.f32.mrb[0].mxu0
    %v2944 = vadd.f32 0.0, %v2943
    %v2945 = vpop.f32.mrb[0].mxu0
    %2946 = vdwg.mxu0
    %v2948 = vsel %vm2257, %v2237, 0
    %v2951 = vsel %vm2257, %v2246, 0
    %v2954 = vsel %vm2257, %v2240, 0
    %v2957 = vsel %vm2257, %v2249, 0
    %2959 = vmatprep.subr.bf16.mxu0 0
    %2960 = vmatpush1.bf16.xpose.msra.mxu0 %v2954
    %2961 = vmatprep.subr.bf16.mxu0 0
    %2962 = vmatpush1.bf16.xpose.msra.mxu0 %v2957
    %2963 = vmatprep.subr.bf16.mxu0 0
    %2964 = vmatpush1.bf16.xpose.msra.mxu0 0
    %2965 = vmatprep.subr.bf16.mxu0 0
    %2966 = vmatpush1.bf16.xpose.msra.mxu0 0
    %2967 = vmatprep.subr.bf16.mxu0 0
    %2968 = vmatpush1.bf16.xpose.msra.mxu0 0
    %2969 = vmatprep.subr.bf16.mxu0 0
    %2970 = vmatpush1.bf16.xpose.msra.mxu0 0
    %2971 = vmatprep.subr.bf16.mxu0 0
    %2972 = vmatpush1.bf16.xpose.msra.mxu0 0
    %2973 = vmatprep.subr.bf16.mxu0 0
    %2974 = vmatpush1.bf16.xpose.msra.mxu0 0
    %2975 = vmatprep.subr.bf16.mxu0 0
    %2976 = vmatpush1.bf16.xpose.msra.mxu0 0
    %2977 = vmatprep.subr.bf16.mxu0 0
    %2978 = vmatpush1.bf16.xpose.msra.mxu0 0
    %2979 = vmatprep.subr.bf16.mxu0 0
    %2980 = vmatpush1.bf16.xpose.msra.mxu0 0
    %2981 = vmatprep.subr.bf16.mxu0 0
    %2982 = vmatpush1.bf16.xpose.msra.mxu0 0
    %2983 = vmatprep.subr.bf16.mxu0 0
    %2984 = vmatpush1.bf16.xpose.msra.mxu0 0
    %2985 = vmatprep.subr.bf16.mxu0 0
    %2986 = vmatpush1.bf16.xpose.msra.mxu0 0
    %2987 = vmatprep.subr.bf16.mxu0 0
    %2988 = vmatpush1.bf16.xpose.msra.mxu0 0
    %2989 = vmatprep.subr.bf16.mxu0 0
    %2990 = vmatpush1.bf16.xpose.msra.mxu0 0
    %2991 = vmatprep.mubr.bf16.mxu0 0
    %2992 = vmatmul.mubr.bf16.gmra.mrb[0].mxu0 %v2948
    %v2993 = vpop.f32.mrb[0].mxu0
    %v2994 = vadd.f32 %v2253, %v2993
    %v2995 = vpop.f32.mrb[0].mxu0
    %v2996 = vpop.f32.mrb[0].mxu0
    %v2997 = vadd.f32 %v2254, %v2996
    %v2998 = vpop.f32.mrb[0].mxu0
    %2999 = vmatprep.mubr.bf16.mxu0 0
    %3000 = vmatmul.mubr.bf16.gmra.mrb[0].mxu0 %v2951
    %v3001 = vpop.f32.mrb[0].mxu0
    %v3002 = vadd.f32 %v2255, %v3001
    %v3003 = vpop.f32.mrb[0].mxu0
    %v3004 = vpop.f32.mrb[0].mxu0
    %v3005 = vadd.f32 %v2256, %v3004
    %v3006 = vpop.f32.mrb[0].mxu0
    %3007 = vdwg.mxu0
    %v3008 = vsel %vm2319, %v2994, -inf
    %3009 = vmax.xlane.f32.xlu0 %v3008
    %v3010 = vpop.xlane.xlu0 %3009
    %v3011 = vsel %vm2319, %v2997, -inf
    %3012 = vmax.xlane.f32.xlu0 %v3011
    %v3013 = vpop.xlane.xlu0 %3012
    %v3014 = vsel %vm2319, %v3002, -inf
    %3015 = vmax.xlane.f32.xlu0 %v3014
    %v3016 = vpop.xlane.xlu0 %3015
    %v3017 = vsel %vm2319, %v3005, -inf
    %3018 = vmax.xlane.f32.xlu0 %v3017
    %v3019 = vpop.xlane.xlu0 %3018
    %v3020 = vsub.f32 %v2994, %v3010
    %v3021 = vsub.f32 %v2997, %v3013
    %v3022 = vsub.f32 %v3002, %v3016
    %v3023 = vsub.f32 %v3005, %v3019
    %v3024 = vmul.f32 %v3020, 1.442695
    %v3025 = vpow.pop %v3024
    %v3026 = vmul.f32 %v3021, 1.442695
    %v3027 = vpow.pop %v3026
    %v3028 = vmul.f32 %v3022, 1.442695
    %v3029 = vpow.pop %v3028
    %v3030 = vmul.f32 %v3023, 1.442695
    %v3031 = vpow.pop %v3030
    %v3032 = vsel %vm2319, %v3025, 0.0
    %3033 = vadd.xlane.f32.xlu0 %v3032
    %v3034 = vpop.xlane.xlu0 %3033
    %v3035 = vsel %vm2319, %v3027, 0.0
    %3036 = vadd.xlane.f32.xlu0 %v3035
    %v3037 = vpop.xlane.xlu0 %3036
    %v3038 = vsel %vm2319, %v3029, 0.0
    %3039 = vadd.xlane.f32.xlu0 %v3038
    %v3040 = vpop.xlane.xlu0 %3039
    %v3041 = vsel %vm2319, %v3031, 0.0
    %3042 = vadd.xlane.f32.xlu0 %v3041
    %v3043 = vpop.xlane.xlu0 %3042
    %v3044 = vrcp.pop %v3034
    %v3045 = vmul.f32 %v3025, %v3044
    %v3046 = vrcp.pop %v3037
    %v3047 = vmul.f32 %v3027, %v3046
    %v3048 = vrcp.pop %v3040
    %v3049 = vmul.f32 %v3029, %v3048
    %v3050 = vrcp.pop %v3043
    %v3051 = vmul.f32 %v3031, %v3050
    %v3052 = vpack.c.bf16 %v3047, %v3045
    %v3053 = vpack.c.bf16 %v3051, %v3049
    %v3055 = vsel %vm2319, %v3052, 0
    %v3058 = vsel %vm2319, %v3053, 0
    %3060 = vmatprep.subr.bf16.mxu0 0
    %3061 = vmatpush1.bf16.msra.mxu0 %v2243
    %3062 = vmatprep.subr.bf16.mxu0 0
    %3063 = vmatpush1.bf16.msra.mxu0 %v2252
    %3064 = vmatprep.subr.bf16.mxu0 0
    %3065 = vmatpush1.bf16.msra.mxu0 0
    %3066 = vmatprep.subr.bf16.mxu0 0
    %3067 = vmatpush1.bf16.msra.mxu0 0
    %3068 = vmatprep.subr.bf16.mxu0 0
    %3069 = vmatpush1.bf16.msra.mxu0 0
    %3070 = vmatprep.subr.bf16.mxu0 0
    %3071 = vmatpush1.bf16.msra.mxu0 0
    %3072 = vmatprep.subr.bf16.mxu0 0
    %3073 = vmatpush1.bf16.msra.mxu0 0
    %3074 = vmatprep.subr.bf16.mxu0 0
    %3075 = vmatpush1.bf16.msra.mxu0 0
    %3076 = vmatprep.subr.bf16.mxu0 0
    %3077 = vmatpush1.bf16.msra.mxu0 0
    %3078 = vmatprep.subr.bf16.mxu0 0
    %3079 = vmatpush1.bf16.msra.mxu0 0
    %3080 = vmatprep.subr.bf16.mxu0 0
    %3081 = vmatpush1.bf16.msra.mxu0 0
    %3082 = vmatprep.subr.bf16.mxu0 0
    %3083 = vmatpush1.bf16.msra.mxu0 0
    %3084 = vmatprep.subr.bf16.mxu0 0
    %3085 = vmatpush1.bf16.msra.mxu0 0
    %3086 = vmatprep.subr.bf16.mxu0 0
    %3087 = vmatpush1.bf16.msra.mxu0 0
    %3088 = vmatprep.subr.bf16.mxu0 0
    %3089 = vmatpush1.bf16.msra.mxu0 0
    %3090 = vmatprep.subr.bf16.mxu0 0
    %3091 = vmatpush1.bf16.msra.mxu0 0
    %3092 = vmatprep.mubr.bf16.mxu0 0
    %3093 = vmatmul.mubr.bf16.gmra.mrb[0].mxu0 %v3055
    %v3094 = vpop.f32.mrb[0].mxu0
    %v3095 = vadd.f32 0.0, %v3094
    %v3096 = vpop.f32.mrb[0].mxu0
    %v3097 = vpop.f32.mrb[0].mxu0
    %v3098 = vadd.f32 0.0, %v3097
    %v3099 = vpop.f32.mrb[0].mxu0
    %3100 = vmatprep.mubr.bf16.mxu0 0
    %3101 = vmatmul.mubr.bf16.gmra.mrb[0].mxu0 %v3058
    %v3102 = vpop.f32.mrb[0].mxu0
    %v3103 = vadd.f32 0.0, %v3102
    %v3104 = vpop.f32.mrb[0].mxu0
    %v3105 = vpop.f32.mrb[0].mxu0
    %v3106 = vadd.f32 0.0, %v3105
    %v3107 = vpop.f32.mrb[0].mxu0
    %3108 = vdwg.mxu0
    %3111 = vrot.lane.b32.xlu0 %v2237, 64
    %v3112 = vpop.permute.xlu0 %3111
    %3113 = vrot.lane.b32.xlu0 %v2246, 64
    %v3114 = vpop.permute.xlu0 %3113
    %3117 = vrot.lane.b32.xlu0 %v2240, 64
    %v3118 = vpop.permute.xlu0 %3117
    %3119 = vrot.lane.b32.xlu0 %v2249, 64
    %v3120 = vpop.permute.xlu0 %3119
    %v3122 = vsel %vm2257, %v3112, 0
    %v3125 = vsel %vm2257, %v3114, 0
    %v3128 = vsel %vm2257, %v3118, 0
    %v3131 = vsel %vm2257, %v3120, 0
    %3133 = vmatprep.subr.bf16.mxu0 0
    %3134 = vmatpush1.bf16.xpose.msra.mxu0 %v3128
    %3135 = vmatprep.subr.bf16.mxu0 0
    %3136 = vmatpush1.bf16.xpose.msra.mxu0 %v3131
    %3137 = vmatprep.subr.bf16.mxu0 0
    %3138 = vmatpush1.bf16.xpose.msra.mxu0 0
    %3139 = vmatprep.subr.bf16.mxu0 0
    %3140 = vmatpush1.bf16.xpose.msra.mxu0 0
    %3141 = vmatprep.subr.bf16.mxu0 0
    %3142 = vmatpush1.bf16.xpose.msra.mxu0 0
    %3143 = vmatprep.subr.bf16.mxu0 0
    %3144 = vmatpush1.bf16.xpose.msra.mxu0 0
    %3145 = vmatprep.subr.bf16.mxu0 0
    %3146 = vmatpush1.bf16.xpose.msra.mxu0 0
    %3147 = vmatprep.subr.bf16.mxu0 0
    %3148 = vmatpush1.bf16.xpose.msra.mxu0 0
    %3149 = vmatprep.subr.bf16.mxu0 0
    %3150 = vmatpush1.bf16.xpose.msra.mxu0 0
    %3151 = vmatprep.subr.bf16.mxu0 0
    %3152 = vmatpush1.bf16.xpose.msra.mxu0 0
    %3153 = vmatprep.subr.bf16.mxu0 0
    %3154 = vmatpush1.bf16.xpose.msra.mxu0 0
    %3155 = vmatprep.subr.bf16.mxu0 0
    %3156 = vmatpush1.bf16.xpose.msra.mxu0 0
    %3157 = vmatprep.subr.bf16.mxu0 0
    %3158 = vmatpush1.bf16.xpose.msra.mxu0 0
    %3159 = vmatprep.subr.bf16.mxu0 0
    %3160 = vmatpush1.bf16.xpose.msra.mxu0 0
    %3161 = vmatprep.subr.bf16.mxu0 0
    %3162 = vmatpush1.bf16.xpose.msra.mxu0 0
    %3163 = vmatprep.subr.bf16.mxu0 0
    %3164 = vmatpush1.bf16.xpose.msra.mxu0 0
    %3165 = vmatprep.mubr.bf16.mxu0 0
    %3166 = vmatmul.mubr.bf16.gmra.mrb[0].mxu0 %v3122
    %v3167 = vpop.f32.mrb[0].mxu0
    %v3168 = vadd.f32 %v2253, %v3167
    %v3169 = vpop.f32.mrb[0].mxu0
    %v3170 = vpop.f32.mrb[0].mxu0
    %v3171 = vadd.f32 %v2254, %v3170
    %v3172 = vpop.f32.mrb[0].mxu0
    %3173 = vmatprep.mubr.bf16.mxu0 0
    %3174 = vmatmul.mubr.bf16.gmra.mrb[0].mxu0 %v3125
    %v3175 = vpop.f32.mrb[0].mxu0
    %v3176 = vadd.f32 %v2255, %v3175
    %v3177 = vpop.f32.mrb[0].mxu0
    %v3178 = vpop.f32.mrb[0].mxu0
    %v3179 = vadd.f32 %v2256, %v3178
    %v3180 = vpop.f32.mrb[0].mxu0
    %3181 = vdwg.mxu0
    %v3182 = vsel %vm2319, %v3168, -inf
    %3183 = vmax.xlane.f32.xlu0 %v3182
    %v3184 = vpop.xlane.xlu0 %3183
    %v3185 = vsel %vm2319, %v3171, -inf
    %3186 = vmax.xlane.f32.xlu0 %v3185
    %v3187 = vpop.xlane.xlu0 %3186
    %v3188 = vsel %vm2319, %v3176, -inf
    %3189 = vmax.xlane.f32.xlu0 %v3188
    %v3190 = vpop.xlane.xlu0 %3189
    %v3191 = vsel %vm2319, %v3179, -inf
    %3192 = vmax.xlane.f32.xlu0 %v3191
    %v3193 = vpop.xlane.xlu0 %3192
    %v3194 = vsub.f32 %v3168, %v3184
    %v3195 = vsub.f32 %v3171, %v3187
    %v3196 = vsub.f32 %v3176, %v3190
    %v3197 = vsub.f32 %v3179, %v3193
    %v3198 = vmul.f32 %v3194, 1.442695
    %v3199 = vpow.pop %v3198
    %v3200 = vmul.f32 %v3195, 1.442695
    %v3201 = vpow.pop %v3200
    %v3202 = vmul.f32 %v3196, 1.442695
    %v3203 = vpow.pop %v3202
    %v3204 = vmul.f32 %v3197, 1.442695
    %v3205 = vpow.pop %v3204
    %v3206 = vsel %vm2319, %v3199, 0.0
    %3207 = vadd.xlane.f32.xlu0 %v3206
    %v3208 = vpop.xlane.xlu0 %3207
    %v3209 = vsel %vm2319, %v3201, 0.0
    %3210 = vadd.xlane.f32.xlu0 %v3209
    %v3211 = vpop.xlane.xlu0 %3210
    %v3212 = vsel %vm2319, %v3203, 0.0
    %3213 = vadd.xlane.f32.xlu0 %v3212
    %v3214 = vpop.xlane.xlu0 %3213
    %v3215 = vsel %vm2319, %v3205, 0.0
    %3216 = vadd.xlane.f32.xlu0 %v3215
    %v3217 = vpop.xlane.xlu0 %3216
    %v3218 = vrcp.pop %v3208
    %v3219 = vmul.f32 %v3199, %v3218
    %v3220 = vrcp.pop %v3211
    %v3221 = vmul.f32 %v3201, %v3220
    %v3222 = vrcp.pop %v3214
    %v3223 = vmul.f32 %v3203, %v3222
    %v3224 = vrcp.pop %v3217
    %v3225 = vmul.f32 %v3205, %v3224
    %v3226 = vpack.c.bf16 %v3221, %v3219
    %v3227 = vpack.c.bf16 %v3225, %v3223
    %3230 = vrot.lane.b32.xlu0 %v2243, 64
    %v3231 = vpop.permute.xlu0 %3230
    %3232 = vrot.lane.b32.xlu0 %v2252, 64
    %v3233 = vpop.permute.xlu0 %3232
    %v3237 = vsel %vm2319, %v3226, 0
    %v3240 = vsel %vm2319, %v3227, 0
    %3242 = vmatprep.subr.bf16.mxu0 0
    %3243 = vmatpush1.bf16.msra.mxu0 %v3231
    %3244 = vmatprep.subr.bf16.mxu0 0
    %3245 = vmatpush1.bf16.msra.mxu0 %v3233
    %3246 = vmatprep.subr.bf16.mxu0 0
    %3247 = vmatpush1.bf16.msra.mxu0 0
    %3248 = vmatprep.subr.bf16.mxu0 0
    %3249 = vmatpush1.bf16.msra.mxu0 0
    %3250 = vmatprep.subr.bf16.mxu0 0
    %3251 = vmatpush1.bf16.msra.mxu0 0
    %3252 = vmatprep.subr.bf16.mxu0 0
    %3253 = vmatpush1.bf16.msra.mxu0 0
    %3254 = vmatprep.subr.bf16.mxu0 0
    %3255 = vmatpush1.bf16.msra.mxu0 0
    %3256 = vmatprep.subr.bf16.mxu0 0
    %3257 = vmatpush1.bf16.msra.mxu0 0
    %3258 = vmatprep.subr.bf16.mxu0 0
    %3259 = vmatpush1.bf16.msra.mxu0 0
    %3260 = vmatprep.subr.bf16.mxu0 0
    %3261 = vmatpush1.bf16.msra.mxu0 0
    %3262 = vmatprep.subr.bf16.mxu0 0
    %3263 = vmatpush1.bf16.msra.mxu0 0
    %3264 = vmatprep.subr.bf16.mxu0 0
    %3265 = vmatpush1.bf16.msra.mxu0 0
    %3266 = vmatprep.subr.bf16.mxu0 0
    %3267 = vmatpush1.bf16.msra.mxu0 0
    %3268 = vmatprep.subr.bf16.mxu0 0
    %3269 = vmatpush1.bf16.msra.mxu0 0
    %3270 = vmatprep.subr.bf16.mxu0 0
    %3271 = vmatpush1.bf16.msra.mxu0 0
    %3272 = vmatprep.subr.bf16.mxu0 0
    %3273 = vmatpush1.bf16.msra.mxu0 0
    %3274 = vmatprep.mubr.bf16.mxu0 0
    %3275 = vmatmul.mubr.bf16.gmra.mrb[0].mxu0 %v3237
    %v3276 = vpop.f32.mrb[0].mxu0
    %v3277 = vadd.f32 0.0, %v3276
    %v3278 = vpop.f32.mrb[0].mxu0
    %v3279 = vpop.f32.mrb[0].mxu0
    %v3280 = vadd.f32 0.0, %v3279
    %v3281 = vpop.f32.mrb[0].mxu0
    %3282 = vmatprep.mubr.bf16.mxu0 0
    %3283 = vmatmul.mubr.bf16.gmra.mrb[0].mxu0 %v3240
    %v3284 = vpop.f32.mrb[0].mxu0
    %v3285 = vadd.f32 0.0, %v3284
    %v3286 = vpop.f32.mrb[0].mxu0
    %v3287 = vpop.f32.mrb[0].mxu0
    %v3288 = vadd.f32 0.0, %v3287
    %v3289 = vpop.f32.mrb[0].mxu0
    %3290 = vdwg.mxu0
    %3295 = vrot.lane.b32.xlu0 %v2589, 64
    %v3296 = vpop.permute.xlu0 %3295
    %3297 = vrot.lane.b32.xlu0 %v2592, 64
    %v3298 = vpop.permute.xlu0 %3297
    %3299 = vrot.lane.b32.xlu0 %v2597, 64
    %v3300 = vpop.permute.xlu0 %3299
    %3301 = vrot.lane.b32.xlu0 %v2600, 64
    %v3302 = vpop.permute.xlu0 %3301
    %3311 = vrot.lane.b32.xlu0 %v2933, 64
    %v3312 = vpop.permute.xlu0 %3311
    %3313 = vrot.lane.b32.xlu0 %v2936, 64
    %v3314 = vpop.permute.xlu0 %3313
    %3315 = vrot.lane.b32.xlu0 %v2941, 64
    %v3316 = vpop.permute.xlu0 %3315
    %3317 = vrot.lane.b32.xlu0 %v2944, 64
    %v3318 = vpop.permute.xlu0 %3317
    %3327 = vrot.lane.b32.xlu0 %v3277, 64
    %v3328 = vpop.permute.xlu0 %3327
    %3329 = vrot.lane.b32.xlu0 %v3280, 64
    %v3330 = vpop.permute.xlu0 %3329
    %3331 = vrot.lane.b32.xlu0 %v3285, 64
    %v3332 = vpop.permute.xlu0 %3331
    %3333 = vrot.lane.b32.xlu0 %v3288, 64
    %v3334 = vpop.permute.xlu0 %3333
    %v3339 = vsel %vm2257, %v2407, %v3296
    %v3340 = vsel %vm2257, %v2410, %v3298
    %v3341 = vsel %vm2257, %v2415, %v3300
    %v3342 = vsel %vm2257, %v2418, %v3302
    %v3343 = vsel %vm2257, %v2751, %v3312
    %v3344 = vsel %vm2257, %v2754, %v3314
    %v3345 = vsel %vm2257, %v2759, %v3316
    %v3346 = vsel %vm2257, %v2762, %v3318
    %v3347 = vsel %vm2257, %v3095, %v3328
    %v3348 = vsel %vm2257, %v3098, %v3330
    %v3349 = vsel %vm2257, %v3103, %v3332
    %v3350 = vsel %vm2257, %v3106, %v3334
    %v3351 = vpack.c.bf16 %v3340, %v3339
    %v3352 = vpack.c.bf16 %v3344, %v3343
    %v3353 = vpack.c.bf16 %v3348, %v3347
    %v3354 = vpack.c.bf16 %v3342, %v3341
    %v3355 = vpack.c.bf16 %v3346, %v3345
    %v3356 = vpack.c.bf16 %v3350, %v3349
    %v3357 = vld [vmem:[#allocation11] sm:$0xff]
    %v3358 = vld [vmem:[#allocation11 + $0x8] sm:$0xf]
    %v3359 = vld [vmem:[#allocation11 + $0xc] sm:$0xff]
    %v3360 = vld [vmem:[#allocation11 + $0x14] sm:$0xf]
    %v3361 = vld [vmem:[#allocation11 + $0x18] sm:$0xff]
    %v3362 = vld [vmem:[#allocation11 + $0x20] sm:$0xf]
    %v3363 = vld [vmem:[#allocation11 + $0x24] sm:$0xff]
    %v3364 = vld [vmem:[#allocation11 + $0x2c] sm:$0xf]
    %v3365 = vld [vmem:[#allocation11 + $0x30] sm:$0xff]
    %v3366 = vld [vmem:[#allocation11 + $0x38] sm:$0xf]
    %v3367 = vld [vmem:[#allocation11 + $0x3c] sm:$0xff]
    %v3368 = vld [vmem:[#allocation11 + $0x44] sm:$0xf]
    %v3369 = vld [vmem:[#allocation11 + $0x48] sm:$0xff]
    %v3370 = vld [vmem:[#allocation11 + $0x50] sm:$0xf]
    %v3371 = vld [vmem:[#allocation11 + $0x54] sm:$0xff]
    %v3372 = vld [vmem:[#allocation11 + $0x5c] sm:$0xf]
    %v3373 = vld [vmem:[#allocation11 + $0x60] sm:$0xff]
    %v3374 = vld [vmem:[#allocation11 + $0x68] sm:$0xf]
    %v3375 = vld [vmem:[#allocation11 + $0x6c] sm:$0xff]
    %v3376 = vld [vmem:[#allocation11 + $0x74] sm:$0xf]
    %v3377 = vld [vmem:[#allocation11 + $0x78] sm:$0xff]
    %v3378 = vld [vmem:[#allocation11 + $0x80] sm:$0xf]
    %v3379 = vld [vmem:[#allocation11 + $0x84] sm:$0xff]
    %v3380 = vld [vmem:[#allocation11 + $0x8c] sm:$0xf]
    %v3381 = vld [vmem:[#allocation11 + $0x90] sm:$0xff]
    %v3382 = vld [vmem:[#allocation11 + $0x98] sm:$0xf]
    %v3383 = vld [vmem:[#allocation11 + $0x9c] sm:$0xff]
    %v3384 = vld [vmem:[#allocation11 + $0xa4] sm:$0xf]
    %v3385 = vld [vmem:[#allocation11 + $0xa8] sm:$0xff]
    %v3386 = vld [vmem:[#allocation11 + $0xb0] sm:$0xf]
    %v3387 = vld [vmem:[#allocation11 + $0xb4] sm:$0xff]
    %v3388 = vld [vmem:[#allocation11 + $0xbc] sm:$0xf]
    %v3389 = vld [vmem:[#allocation11 + $0xc0] sm:$0xff]
    %v3390 = vld [vmem:[#allocation11 + $0xc8] sm:$0xf]
    %v3391 = vld [vmem:[#allocation11 + $0xcc] sm:$0xff]
    %v3392 = vld [vmem:[#allocation11 + $0xd4] sm:$0xf]
    %v3393 = vld [vmem:[#allocation11 + $0xd8] sm:$0xff]
    %v3394 = vld [vmem:[#allocation11 + $0xe0] sm:$0xf]
    %v3395 = vld [vmem:[#allocation11 + $0xe4] sm:$0xff]
    %v3396 = vld [vmem:[#allocation11 + $0xec] sm:$0xf]
    %v3397 = vld [vmem:[#allocation11 + $0xf0] sm:$0xff]
    %v3398 = vld [vmem:[#allocation11 + $0xf8] sm:$0xf]
    %v3399 = vld [vmem:[#allocation11 + $0xfc] sm:$0xff]
    %v3400 = vld [vmem:[#allocation11 + $0x104] sm:$0xf]
    %v3401 = vld [vmem:[#allocation11 + $0x108] sm:$0xff]
    %v3402 = vld [vmem:[#allocation11 + $0x110] sm:$0xf]
    %v3403 = vld [vmem:[#allocation11 + $0x114] sm:$0xff]
    %v3404 = vld [vmem:[#allocation11 + $0x11c] sm:$0xf]
    %v3405 = vld [vmem:[#allocation11 + $0x120] sm:$0xff]
    %v3406 = vld [vmem:[#allocation11 + $0x128] sm:$0xf]
    %v3407 = vld [vmem:[#allocation11 + $0x12c] sm:$0xff]
    %v3408 = vld [vmem:[#allocation11 + $0x134] sm:$0xf]
    %v3409 = vld [vmem:[#allocation11 + $0x138] sm:$0xff]
    %v3410 = vld [vmem:[#allocation11 + $0x140] sm:$0xf]
    %v3411 = vld [vmem:[#allocation11 + $0x144] sm:$0xff]
    %v3412 = vld [vmem:[#allocation11 + $0x14c] sm:$0xf]
    %v3413 = vld [vmem:[#allocation11 + $0x150] sm:$0xff]
    %v3414 = vld [vmem:[#allocation11 + $0x158] sm:$0xf]
    %v3415 = vld [vmem:[#allocation11 + $0x15c] sm:$0xff]
    %v3416 = vld [vmem:[#allocation11 + $0x164] sm:$0xf]
    %v3417 = vld [vmem:[#allocation11 + $0x168] sm:$0xff]
    %v3418 = vld [vmem:[#allocation11 + $0x170] sm:$0xf]
    %v3419 = vld [vmem:[#allocation11 + $0x174] sm:$0xff]
    %v3420 = vld [vmem:[#allocation11 + $0x17c] sm:$0xf]
    %v3421 = vld [vmem:[#allocation11 + $0x180] sm:$0xff]
    %v3422 = vld [vmem:[#allocation11 + $0x188] sm:$0xf]
    %v3423 = vld [vmem:[#allocation11 + $0x18c] sm:$0xff]
    %v3424 = vld [vmem:[#allocation11 + $0x194] sm:$0xf]
    %v3425 = vld [vmem:[#allocation11 + $0x198] sm:$0xff]
    %v3426 = vld [vmem:[#allocation11 + $0x1a0] sm:$0xf]
    %v3427 = vld [vmem:[#allocation11 + $0x1a4] sm:$0xff]
    %v3428 = vld [vmem:[#allocation11 + $0x1ac] sm:$0xf]
    %v3429 = vld [vmem:[#allocation11 + $0x1b0] sm:$0xff]
    %v3430 = vld [vmem:[#allocation11 + $0x1b8] sm:$0xf]
    %v3431 = vld [vmem:[#allocation11 + $0x1bc] sm:$0xff]
    %v3432 = vld [vmem:[#allocation11 + $0x1c4] sm:$0xf]
    %v3433 = vld [vmem:[#allocation11 + $0x1c8] sm:$0xff]
    %v3434 = vld [vmem:[#allocation11 + $0x1d0] sm:$0xf]
    %v3435 = vld [vmem:[#allocation11 + $0x1d4] sm:$0xff]
    %v3436 = vld [vmem:[#allocation11 + $0x1dc] sm:$0xf]
    %v3437 = vld [vmem:[#allocation11 + $0x1e0] sm:$0xff]
    %v3438 = vld [vmem:[#allocation11 + $0x1e8] sm:$0xf]
    %v3439 = vld [vmem:[#allocation11 + $0x1ec] sm:$0xff]
    %v3440 = vld [vmem:[#allocation11 + $0x1f4] sm:$0xf]
    %v3441 = vld [vmem:[#allocation11 + $0x1f8] sm:$0xff]
    %v3442 = vld [vmem:[#allocation11 + $0x200] sm:$0xf]
    %v3443 = vld [vmem:[#allocation11 + $0x204] sm:$0xff]
    %v3444 = vld [vmem:[#allocation11 + $0x20c] sm:$0xf]
    %v3445 = vld [vmem:[#allocation11 + $0x210] sm:$0xff]
    %v3446 = vld [vmem:[#allocation11 + $0x218] sm:$0xf]
    %v3447 = vld [vmem:[#allocation11 + $0x21c] sm:$0xff]
    %v3448 = vld [vmem:[#allocation11 + $0x224] sm:$0xf]
    %v3449 = vld [vmem:[#allocation11 + $0x228] sm:$0xff]
    %v3450 = vld [vmem:[#allocation11 + $0x230] sm:$0xf]
    %v3451 = vld [vmem:[#allocation11 + $0x234] sm:$0xff]
    %v3452 = vld [vmem:[#allocation11 + $0x23c] sm:$0xf]
    %v3453 = vld [vmem:[#allocation13] sm:$0x7]
    %v3455 = vlaneseq
    %v3456 = vshrl.u32 %v3455, 7
    %v3457 = vsub.s32 0, %v3456
    %v3458 = vrot.slane %v3453, %v3457
    %v3459 = vlaneseq
    %v3460 = vshrl.u32 %v3459, 7
    %v3461 = vsub.s32 1, %v3460
    %v3462 = vrot.slane %v3453, %v3461
    %v3463 = vlaneseq
    %v3464 = vshrl.u32 %v3463, 7
    %v3465 = vsub.s32 2, %v3464
    %v3466 = vrot.slane %v3453, %v3465
    %v3566 = vunpack.c.l.b16 %v3357
    %v3567 = vunpack.c.h.b16 %v3357
    %v3568 = vunpack.c.l.b16 %v3358
    %v3569 = vunpack.c.l.b16 %v3359
    %v3570 = vunpack.c.h.b16 %v3359
    %v3571 = vunpack.c.l.b16 %v3360
    %v3572 = vunpack.c.l.b16 %v3361
    %v3573 = vunpack.c.h.b16 %v3361
    %v3574 = vunpack.c.l.b16 %v3362
    %v3575 = vunpack.c.l.b16 %v3363
    %v3576 = vunpack.c.h.b16 %v3363
    %v3577 = vunpack.c.l.b16 %v3364
    %v3578 = vunpack.c.l.b16 %v3365
    %v3579 = vunpack.c.h.b16 %v3365
    %v3580 = vunpack.c.l.b16 %v3366
    %v3581 = vunpack.c.l.b16 %v3367
    %v3582 = vunpack.c.h.b16 %v3367
    %v3583 = vunpack.c.l.b16 %v3368
    %v3584 = vunpack.c.l.b16 %v3369
    %v3585 = vunpack.c.h.b16 %v3369
    %v3586 = vunpack.c.l.b16 %v3370
    %v3587 = vunpack.c.l.b16 %v3371
    %v3588 = vunpack.c.h.b16 %v3371
    %v3589 = vunpack.c.l.b16 %v3372
    %v3590 = vunpack.c.l.b16 %v3373
    %v3591 = vunpack.c.h.b16 %v3373
    %v3592 = vunpack.c.l.b16 %v3374
    %v3593 = vunpack.c.l.b16 %v3375
    %v3594 = vunpack.c.h.b16 %v3375
    %v3595 = vunpack.c.l.b16 %v3376
    %v3596 = vunpack.c.l.b16 %v3377
    %v3597 = vunpack.c.h.b16 %v3377
    %v3598 = vunpack.c.l.b16 %v3378
    %v3599 = vunpack.c.l.b16 %v3379
    %v3600 = vunpack.c.h.b16 %v3379
    %v3601 = vunpack.c.l.b16 %v3380
    %v3602 = vunpack.c.l.b16 %v3381
    %v3603 = vunpack.c.h.b16 %v3381
    %v3604 = vunpack.c.l.b16 %v3382
    %v3605 = vunpack.c.l.b16 %v3383
    %v3606 = vunpack.c.h.b16 %v3383
    %v3607 = vunpack.c.l.b16 %v3384
    %v3608 = vunpack.c.l.b16 %v3385
    %v3609 = vunpack.c.h.b16 %v3385
    %v3610 = vunpack.c.l.b16 %v3386
    %v3611 = vunpack.c.l.b16 %v3387
    %v3612 = vunpack.c.h.b16 %v3387
    %v3613 = vunpack.c.l.b16 %v3388
    %v3614 = vunpack.c.l.b16 %v3389
    %v3615 = vunpack.c.h.b16 %v3389
    %v3616 = vunpack.c.l.b16 %v3390
    %v3617 = vunpack.c.l.b16 %v3391
    %v3618 = vunpack.c.h.b16 %v3391
    %v3619 = vunpack.c.l.b16 %v3392
    %v3620 = vunpack.c.l.b16 %v3393
    %v3621 = vunpack.c.h.b16 %v3393
    %v3622 = vunpack.c.l.b16 %v3394
    %v3623 = vunpack.c.l.b16 %v3395
    %v3624 = vunpack.c.h.b16 %v3395
    %v3625 = vunpack.c.l.b16 %v3396
    %v3626 = vunpack.c.l.b16 %v3397
    %v3627 = vunpack.c.h.b16 %v3397
    %v3628 = vunpack.c.l.b16 %v3398
    %v3629 = vunpack.c.l.b16 %v3399
    %v3630 = vunpack.c.h.b16 %v3399
    %v3631 = vunpack.c.l.b16 %v3400
    %v3632 = vunpack.c.l.b16 %v3401
    %v3633 = vunpack.c.h.b16 %v3401
    %v3634 = vunpack.c.l.b16 %v3402
    %v3635 = vunpack.c.l.b16 %v3403
    %v3636 = vunpack.c.h.b16 %v3403
    %v3637 = vunpack.c.l.b16 %v3404
    %v3638 = vunpack.c.l.b16 %v3405
    %v3639 = vunpack.c.h.b16 %v3405
    %v3640 = vunpack.c.l.b16 %v3406
    %v3641 = vunpack.c.l.b16 %v3407
    %v3642 = vunpack.c.h.b16 %v3407
    %v3643 = vunpack.c.l.b16 %v3408
    %v3644 = vunpack.c.l.b16 %v3409
    %v3645 = vunpack.c.h.b16 %v3409
    %v3646 = vunpack.c.l.b16 %v3410
    %v3647 = vunpack.c.l.b16 %v3411
    %v3648 = vunpack.c.h.b16 %v3411
    %v3649 = vunpack.c.l.b16 %v3412
    %v3650 = vunpack.c.l.b16 %v3413
    %v3651 = vunpack.c.h.b16 %v3413
    %v3652 = vunpack.c.l.b16 %v3414
    %v3653 = vunpack.c.l.b16 %v3415
    %v3654 = vunpack.c.h.b16 %v3415
    %v3655 = vunpack.c.l.b16 %v3416
    %v3656 = vunpack.c.l.b16 %v3417
    %v3657 = vunpack.c.h.b16 %v3417
    %v3658 = vunpack.c.l.b16 %v3418
    %v3659 = vunpack.c.l.b16 %v3419
    %v3660 = vunpack.c.h.b16 %v3419
    %v3661 = vunpack.c.l.b16 %v3420
    %v3662 = vunpack.c.l.b16 %v3421
    %v3663 = vunpack.c.h.b16 %v3421
    %v3664 = vunpack.c.l.b16 %v3422
    %v3665 = vunpack.c.l.b16 %v3423
    %v3666 = vunpack.c.h.b16 %v3423
    %v3667 = vunpack.c.l.b16 %v3424
    %v3668 = vunpack.c.l.b16 %v3425
    %v3669 = vunpack.c.h.b16 %v3425
    %v3670 = vunpack.c.l.b16 %v3426
    %v3671 = vunpack.c.l.b16 %v3427
    %v3672 = vunpack.c.h.b16 %v3427
    %v3673 = vunpack.c.l.b16 %v3428
    %v3674 = vunpack.c.l.b16 %v3429
    %v3675 = vunpack.c.h.b16 %v3429
    %v3676 = vunpack.c.l.b16 %v3430
    %v3677 = vunpack.c.l.b16 %v3431
    %v3678 = vunpack.c.h.b16 %v3431
    %v3679 = vunpack.c.l.b16 %v3432
    %v3680 = vunpack.c.l.b16 %v3433
    %v3681 = vunpack.c.h.b16 %v3433
    %v3682 = vunpack.c.l.b16 %v3434
    %v3683 = vunpack.c.l.b16 %v3435
    %v3684 = vunpack.c.h.b16 %v3435
    %v3685 = vunpack.c.l.b16 %v3436
    %v3686 = vunpack.c.l.b16 %v3437
    %v3687 = vunpack.c.h.b16 %v3437
    %v3688 = vunpack.c.l.b16 %v3438
    %v3689 = vunpack.c.l.b16 %v3439
    %v3690 = vunpack.c.h.b16 %v3439
    %v3691 = vunpack.c.l.b16 %v3440
    %v3692 = vunpack.c.l.b16 %v3441
    %v3693 = vunpack.c.h.b16 %v3441
    %v3694 = vunpack.c.l.b16 %v3442
    %v3695 = vunpack.c.l.b16 %v3443
    %v3696 = vunpack.c.h.b16 %v3443
    %v3697 = vunpack.c.l.b16 %v3444
    %v3698 = vunpack.c.l.b16 %v3445
    %v3699 = vunpack.c.h.b16 %v3445
    %v3700 = vunpack.c.l.b16 %v3446
    %v3701 = vunpack.c.l.b16 %v3447
    %v3702 = vunpack.c.h.b16 %v3447
    %v3703 = vunpack.c.l.b16 %v3448
    %v3704 = vunpack.c.l.b16 %v3449
    %v3705 = vunpack.c.h.b16 %v3449
    %v3706 = vunpack.c.l.b16 %v3450
    %v3707 = vunpack.c.l.b16 %v3451
    %v3708 = vunpack.c.h.b16 %v3451
    %v3709 = vunpack.c.l.b16 %v3452
    %v3710 = vpack.c.b16 %v3569, %v3566
    %v3711 = vpack.c.b16 %v3570, %v3567
    %v3712 = vpack.c.b16 %v3571, %v3568
    %v3713 = vpack.c.b16 %v3575, %v3572
    %v3714 = vpack.c.b16 %v3576, %v3573
    %v3715 = vpack.c.b16 %v3577, %v3574
    %v3716 = vpack.c.b16 %v3581, %v3578
    %v3717 = vpack.c.b16 %v3582, %v3579
    %v3718 = vpack.c.b16 %v3583, %v3580
    %v3719 = vpack.c.b16 %v3587, %v3584
    %v3720 = vpack.c.b16 %v3588, %v3585
    %v3721 = vpack.c.b16 %v3589, %v3586
    %v3722 = vpack.c.b16 %v3593, %v3590
    %v3723 = vpack.c.b16 %v3594, %v3591
    %v3724 = vpack.c.b16 %v3595, %v3592
    %v3725 = vpack.c.b16 %v3599, %v3596
    %v3726 = vpack.c.b16 %v3600, %v3597
    %v3727 = vpack.c.b16 %v3601, %v3598
    %v3728 = vpack.c.b16 %v3605, %v3602
    %v3729 = vpack.c.b16 %v3606, %v3603
    %v3730 = vpack.c.b16 %v3607, %v3604
    %v3731 = vpack.c.b16 %v3611, %v3608
    %v3732 = vpack.c.b16 %v3612, %v3609
    %v3733 = vpack.c.b16 %v3613, %v3610
    %v3734 = vpack.c.b16 %v3617, %v3614
    %v3735 = vpack.c.b16 %v3618, %v3615
    %v3736 = vpack.c.b16 %v3619, %v3616
    %v3737 = vpack.c.b16 %v3623, %v3620
    %v3738 = vpack.c.b16 %v3624, %v3621
    %v3739 = vpack.c.b16 %v3625, %v3622
    %v3740 = vpack.c.b16 %v3629, %v3626
    %v3741 = vpack.c.b16 %v3630, %v3627
    %v3742 = vpack.c.b16 %v3631, %v3628
    %v3743 = vpack.c.b16 %v3635, %v3632
    %v3744 = vpack.c.b16 %v3636, %v3633
    %v3745 = vpack.c.b16 %v3637, %v3634
    %v3746 = vpack.c.b16 %v3641, %v3638
    %v3747 = vpack.c.b16 %v3642, %v3639
    %v3748 = vpack.c.b16 %v3643, %v3640
    %v3749 = vpack.c.b16 %v3647, %v3644
    %v3750 = vpack.c.b16 %v3648, %v3645
    %v3751 = vpack.c.b16 %v3649, %v3646
    %v3752 = vpack.c.b16 %v3653, %v3650
    %v3753 = vpack.c.b16 %v3654, %v3651
    %v3754 = vpack.c.b16 %v3655, %v3652
    %v3755 = vpack.c.b16 %v3659, %v3656
    %v3756 = vpack.c.b16 %v3660, %v3657
    %v3757 = vpack.c.b16 %v3661, %v3658
    %v3758 = vpack.c.b16 %v3665, %v3662
    %v3759 = vpack.c.b16 %v3666, %v3663
    %v3760 = vpack.c.b16 %v3667, %v3664
    %v3761 = vpack.c.b16 %v3671, %v3668
    %v3762 = vpack.c.b16 %v3672, %v3669
    %v3763 = vpack.c.b16 %v3673, %v3670
    %v3764 = vpack.c.b16 %v3677, %v3674
    %v3765 = vpack.c.b16 %v3678, %v3675
    %v3766 = vpack.c.b16 %v3679, %v3676
    %v3767 = vpack.c.b16 %v3683, %v3680
    %v3768 = vpack.c.b16 %v3684, %v3681
    %v3769 = vpack.c.b16 %v3685, %v3682
    %v3770 = vpack.c.b16 %v3689, %v3686
    %v3771 = vpack.c.b16 %v3690, %v3687
    %v3772 = vpack.c.b16 %v3691, %v3688
    %v3773 = vpack.c.b16 %v3695, %v3692
    %v3774 = vpack.c.b16 %v3696, %v3693
    %v3775 = vpack.c.b16 %v3697, %v3694
    %v3776 = vpack.c.b16 %v3701, %v3698
    %v3777 = vpack.c.b16 %v3702, %v3699
    %v3778 = vpack.c.b16 %v3703, %v3700
    %v3779 = vpack.c.b16 %v3707, %v3704
    %v3780 = vpack.c.b16 %v3708, %v3705
    %v3781 = vpack.c.b16 %v3709, %v3706
    %3854 = vmatprep.subr.bf16.mxu0 %v3711
    %3855 = vmatpush1.bf16.msra.mxu0 %v3710
    %3856 = vmatprep.subr.bf16.mxu0 %v3714
    %3857 = vmatpush1.bf16.msra.mxu0 %v3713
    %3858 = vmatprep.subr.bf16.mxu0 %v3717
    %3859 = vmatpush1.bf16.msra.mxu0 %v3716
    %3860 = vmatprep.subr.bf16.mxu0 %v3720
    %3861 = vmatpush1.bf16.msra.mxu0 %v3719
    %3862 = vmatprep.subr.bf16.mxu0 %v3723
    %3863 = vmatpush1.bf16.msra.mxu0 %v3722
    %3864 = vmatprep.subr.bf16.mxu0 %v3726
    %3865 = vmatpush1.bf16.msra.mxu0 %v3725
    %3866 = vmatprep.subr.bf16.mxu0 %v3729
    %3867 = vmatpush1.bf16.msra.mxu0 %v3728
    %3868 = vmatprep.subr.bf16.mxu0 %v3732
    %3869 = vmatpush1.bf16.msra.mxu0 %v3731
    %3870 = vmatprep.subr.bf16.mxu0 %v3735
    %3871 = vmatpush1.bf16.msra.mxu0 %v3734
    %3872 = vmatprep.subr.bf16.mxu0 %v3738
    %3873 = vmatpush1.bf16.msra.mxu0 %v3737
    %3874 = vmatprep.subr.bf16.mxu0 %v3741
    %3875 = vmatpush1.bf16.msra.mxu0 %v3740
    %3876 = vmatprep.subr.bf16.mxu0 %v3744
    %3877 = vmatpush1.bf16.msra.mxu0 %v3743
    %3878 = vmatprep.subr.bf16.mxu0 %v3747
    %3879 = vmatpush1.bf16.msra.mxu0 %v3746
    %3880 = vmatprep.subr.bf16.mxu0 %v3750
    %3881 = vmatpush1.bf16.msra.mxu0 %v3749
    %3882 = vmatprep.subr.bf16.mxu0 %v3753
    %3883 = vmatpush1.bf16.msra.mxu0 %v3752
    %3884 = vmatprep.subr.bf16.mxu0 %v3756
    %3885 = vmatpush1.bf16.msra.mxu0 %v3755
    %3886 = vmatprep.mubr.bf16.mxu0 %v3352
    %3887 = vmatmul.mubr.bf16.gmra.mrb[0].mxu0 %v3351
    %v3888 = vpop.f32.mrb[0].mxu0
    %v3889 = vadd.f32 %v3458, %v3888
    %v3890 = vpop.f32.mrb[0].mxu0
    %v3891 = vadd.f32 %v3462, %v3890
    %v3892 = vpop.f32.mrb[0].mxu0
    %v3893 = vadd.f32 %v3458, %v3892
    %v3894 = vpop.f32.mrb[0].mxu0
    %v3895 = vadd.f32 %v3462, %v3894
    %3896 = vmatprep.mubr.bf16.mxu0 %v3355
    %3897 = vmatmul.mubr.bf16.gmra.mrb[0].mxu0 %v3354
    %v3898 = vpop.f32.mrb[0].mxu0
    %v3899 = vadd.f32 %v3458, %v3898
    %v3900 = vpop.f32.mrb[0].mxu0
    %v3901 = vadd.f32 %v3462, %v3900
    %v3902 = vpop.f32.mrb[0].mxu0
    %v3903 = vadd.f32 %v3458, %v3902
    %v3904 = vpop.f32.mrb[0].mxu0
    %v3905 = vadd.f32 %v3462, %v3904
    %3906 = vdwg.mxu0
    %3907 = vmatprep.subr.bf16.mxu0 %v3759
    %3908 = vmatpush1.bf16.msra.mxu0 %v3758
    %3909 = vmatprep.subr.bf16.mxu0 %v3762
    %3910 = vmatpush1.bf16.msra.mxu0 %v3761
    %3911 = vmatprep.subr.bf16.mxu0 %v3765
    %3912 = vmatpush1.bf16.msra.mxu0 %v3764
    %3913 = vmatprep.subr.bf16.mxu0 %v3768
    %3914 = vmatpush1.bf16.msra.mxu0 %v3767
    %3915 = vmatprep.subr.bf16.mxu0 %v3771
    %3916 = vmatpush1.bf16.msra.mxu0 %v3770
    %3917 = vmatprep.subr.bf16.mxu0 %v3774
    %3918 = vmatpush1.bf16.msra.mxu0 %v3773
    %3919 = vmatprep.subr.bf16.mxu0 %v3777
    %3920 = vmatpush1.bf16.msra.mxu0 %v3776
    %3921 = vmatprep.subr.bf16.mxu0 %v3780
    %3922 = vmatpush1.bf16.msra.mxu0 %v3779
    %3923 = vmatprep.subr.bf16.mxu0 0
    %3924 = vmatpush1.bf16.msra.mxu0 0
    %3925 = vmatprep.subr.bf16.mxu0 0
    %3926 = vmatpush1.bf16.msra.mxu0 0
    %3927 = vmatprep.subr.bf16.mxu0 0
    %3928 = vmatpush1.bf16.msra.mxu0 0
    %3929 = vmatprep.subr.bf16.mxu0 0
    %3930 = vmatpush1.bf16.msra.mxu0 0
    %3931 = vmatprep.subr.bf16.mxu0 0
    %3932 = vmatpush1.bf16.msra.mxu0 0
    %3933 = vmatprep.subr.bf16.mxu0 0
    %3934 = vmatpush1.bf16.msra.mxu0 0
    %3935 = vmatprep.subr.bf16.mxu0 0
    %3936 = vmatpush1.bf16.msra.mxu0 0
    %3937 = vmatprep.subr.bf16.mxu0 0
    %3938 = vmatpush1.bf16.msra.mxu0 0
    %3939 = vmatprep.mubr.bf16.mxu0 0
    %3940 = vmatmul.mubr.bf16.gmra.mrb[0].mxu0 %v3353
    %v3941 = vpop.f32.mrb[0].mxu0
    %v3942 = vadd.f32 %v3889, %v3941
    %v3943 = vpop.f32.mrb[0].mxu0
    %v3944 = vadd.f32 %v3891, %v3943
    %v3945 = vpop.f32.mrb[0].mxu0
    %v3946 = vadd.f32 %v3893, %v3945
    %v3947 = vpop.f32.mrb[0].mxu0
    %v3948 = vadd.f32 %v3895, %v3947
    %3949 = vmatprep.mubr.bf16.mxu0 0
    %3950 = vmatmul.mubr.bf16.gmra.mrb[0].mxu0 %v3356
    %v3951 = vpop.f32.mrb[0].mxu0
    %v3952 = vadd.f32 %v3899, %v3951
    %v3953 = vpop.f32.mrb[0].mxu0
    %v3954 = vadd.f32 %v3901, %v3953
    %v3955 = vpop.f32.mrb[0].mxu0
    %v3956 = vadd.f32 %v3903, %v3955
    %v3957 = vpop.f32.mrb[0].mxu0
    %v3958 = vadd.f32 %v3905, %v3957
    %3959 = vdwg.mxu0
    %3960 = vmatprep.subr.bf16.mxu0 0
    %3961 = vmatpush1.bf16.msra.mxu0 %v3712
    %3962 = vmatprep.subr.bf16.mxu0 0
    %3963 = vmatpush1.bf16.msra.mxu0 %v3715
    %3964 = vmatprep.subr.bf16.mxu0 0
    %3965 = vmatpush1.bf16.msra.mxu0 %v3718
    %3966 = vmatprep.subr.bf16.mxu0 0
    %3967 = vmatpush1.bf16.msra.mxu0 %v3721
    %3968 = vmatprep.subr.bf16.mxu0 0
    %3969 = vmatpush1.bf16.msra.mxu0 %v3724
    %3970 = vmatprep.subr.bf16.mxu0 0
    %3971 = vmatpush1.bf16.msra.mxu0 %v3727
    %3972 = vmatprep.subr.bf16.mxu0 0
    %3973 = vmatpush1.bf16.msra.mxu0 %v3730
    %3974 = vmatprep.subr.bf16.mxu0 0
    %3975 = vmatpush1.bf16.msra.mxu0 %v3733
    %3976 = vmatprep.subr.bf16.mxu0 0
    %3977 = vmatpush1.bf16.msra.mxu0 %v3736
    %3978 = vmatprep.subr.bf16.mxu0 0
    %3979 = vmatpush1.bf16.msra.mxu0 %v3739
    %3980 = vmatprep.subr.bf16.mxu0 0
    %3981 = vmatpush1.bf16.msra.mxu0 %v3742
    %3982 = vmatprep.subr.bf16.mxu0 0
    %3983 = vmatpush1.bf16.msra.mxu0 %v3745
    %3984 = vmatprep.subr.bf16.mxu0 0
    %3985 = vmatpush1.bf16.msra.mxu0 %v3748
    %3986 = vmatprep.subr.bf16.mxu0 0
    %3987 = vmatpush1.bf16.msra.mxu0 %v3751
    %3988 = vmatprep.subr.bf16.mxu0 0
    %3989 = vmatpush1.bf16.msra.mxu0 %v3754
    %3990 = vmatprep.subr.bf16.mxu0 0
    %3991 = vmatpush1.bf16.msra.mxu0 %v3757
    %3992 = vmatprep.mubr.bf16.mxu0 %v3352
    %3993 = vmatmul.mubr.bf16.gmra.mrb[0].mxu0 %v3351
    %v3994 = vpop.f32.mrb[0].mxu0
    %v3995 = vadd.f32 %v3466, %v3994
    %v3996 = vpop.f32.mrb[0].mxu0
    %v3997 = vpop.f32.mrb[0].mxu0
    %v3998 = vadd.f32 %v3466, %v3997
    %v3999 = vpop.f32.mrb[0].mxu0
    %4000 = vmatprep.mubr.bf16.mxu0 %v3355
    %4001 = vmatmul.mubr.bf16.gmra.mrb[0].mxu0 %v3354
    %v4002 = vpop.f32.mrb[0].mxu0
    %v4003 = vadd.f32 %v3466, %v4002
    %v4004 = vpop.f32.mrb[0].mxu0
    %v4005 = vpop.f32.mrb[0].mxu0
    %v4006 = vadd.f32 %v3466, %v4005
    %v4007 = vpop.f32.mrb[0].mxu0
    %4008 = vdwg.mxu0
    %4009 = vmatprep.subr.bf16.mxu0 0
    %4010 = vmatpush1.bf16.msra.mxu0 %v3760
    %4011 = vmatprep.subr.bf16.mxu0 0
    %4012 = vmatpush1.bf16.msra.mxu0 %v3763
    %4013 = vmatprep.subr.bf16.mxu0 0
    %4014 = vmatpush1.bf16.msra.mxu0 %v3766
    %4015 = vmatprep.subr.bf16.mxu0 0
    %4016 = vmatpush1.bf16.msra.mxu0 %v3769
    %4017 = vmatprep.subr.bf16.mxu0 0
    %4018 = vmatpush1.bf16.msra.mxu0 %v3772
    %4019 = vmatprep.subr.bf16.mxu0 0
    %4020 = vmatpush1.bf16.msra.mxu0 %v3775
    %4021 = vmatprep.subr.bf16.mxu0 0
    %4022 = vmatpush1.bf16.msra.mxu0 %v3778
    %4023 = vmatprep.subr.bf16.mxu0 0
    %4024 = vmatpush1.bf16.msra.mxu0 %v3781
    %4025 = vmatprep.subr.bf16.mxu0 0
    %4026 = vmatpush1.bf16.msra.mxu0 0
    %4027 = vmatprep.subr.bf16.mxu0 0
    %4028 = vmatpush1.bf16.msra.mxu0 0
    %4029 = vmatprep.subr.bf16.mxu0 0
    %4030 = vmatpush1.bf16.msra.mxu0 0
    %4031 = vmatprep.subr.bf16.mxu0 0
    %4032 = vmatpush1.bf16.msra.mxu0 0
    %4033 = vmatprep.subr.bf16.mxu0 0
    %4034 = vmatpush1.bf16.msra.mxu0 0
    %4035 = vmatprep.subr.bf16.mxu0 0
    %4036 = vmatpush1.bf16.msra.mxu0 0
    %4037 = vmatprep.subr.bf16.mxu0 0
    %4038 = vmatpush1.bf16.msra.mxu0 0
    %4039 = vmatprep.subr.bf16.mxu0 0
    %4040 = vmatpush1.bf16.msra.mxu0 0
    %4041 = vmatprep.mubr.bf16.mxu0 0
    %4042 = vmatmul.mubr.bf16.gmra.mrb[0].mxu0 %v3353
    %v4043 = vpop.f32.mrb[0].mxu0
    %v4044 = vadd.f32 %v3995, %v4043
    %v4045 = vpop.f32.mrb[0].mxu0
    %v4046 = vpop.f32.mrb[0].mxu0
    %v4047 = vadd.f32 %v3998, %v4046
    %v4048 = vpop.f32.mrb[0].mxu0
    %4049 = vmatprep.mubr.bf16.mxu0 0
    %4050 = vmatmul.mubr.bf16.gmra.mrb[0].mxu0 %v3356
    %v4051 = vpop.f32.mrb[0].mxu0
    %v4052 = vadd.f32 %v4003, %v4051
    %v4053 = vpop.f32.mrb[0].mxu0
    %v4054 = vpop.f32.mrb[0].mxu0
    %v4055 = vadd.f32 %v4006, %v4054
    %v4056 = vpop.f32.mrb[0].mxu0
    %4057 = vdwg.mxu0
    %v4058 = vadd.f32 %v208, %v3942
    %v4059 = vadd.f32 %v209, %v3944
    %v4060 = vadd.f32 %v210, %v4044
    %v4061 = vadd.f32 %v211, %v3946
    %v4062 = vadd.f32 %v212, %v3948
    %v4063 = vadd.f32 %v213, %v4047
    %v4064 = vadd.f32 %v214, %v3952
    %v4065 = vadd.f32 %v215, %v3954
    %v4066 = vadd.f32 %v216, %v4052
    %v4067 = vadd.f32 %v217, %v3956
    %v4068 = vadd.f32 %v218, %v3958
    %v4069 = vadd.f32 %v219, %v4055
    %v4070 = vadd.f32 %v4058, %v4059
    %v4071 = vadd.f32 %v4070, %v4060
    %4072 = vadd.xlane.f32.xlu0 %v4071
    %v4073 = vpop.xlane.xlu0 %4072
    %v4074 = vadd.f32 %v4061, %v4062
    %v4075 = vadd.f32 %v4074, %v4063
    %4076 = vadd.xlane.f32.xlu0 %v4075
    %v4077 = vpop.xlane.xlu0 %4076
    %v4078 = vadd.f32 %v4064, %v4065
    %v4079 = vadd.f32 %v4078, %v4066
    %4080 = vadd.xlane.f32.xlu0 %v4079
    %v4081 = vpop.xlane.xlu0 %4080
    %v4082 = vadd.f32 %v4067, %v4068
    %v4083 = vadd.f32 %v4082, %v4069
    %4084 = vadd.xlane.f32.xlu0 %v4083
    %v4085 = vpop.xlane.xlu0 %4084
    %v4086 = vmul.f32 %v4073, %v236
    %v4087 = vmul.f32 %v4077, %v236
    %v4088 = vmul.f32 %v4081, %v236
    %v4089 = vmul.f32 %v4085, %v236
    %v4090 = vsub.f32 %v4058, %v4086
    %v4091 = vsub.f32 %v4059, %v4086
    %v4092 = vsub.f32 %v4060, %v4086
    %v4093 = vsub.f32 %v4061, %v4087
    %v4094 = vsub.f32 %v4062, %v4087
    %v4095 = vsub.f32 %v4063, %v4087
    %v4096 = vsub.f32 %v4064, %v4088
    %v4097 = vsub.f32 %v4065, %v4088
    %v4098 = vsub.f32 %v4066, %v4088
    %v4099 = vsub.f32 %v4067, %v4089
    %v4100 = vsub.f32 %v4068, %v4089
    %v4101 = vsub.f32 %v4069, %v4089
    %v4102 = vmul.f32 %v4090, %v4090
    %v4103 = vmul.f32 %v4091, %v4091
    %v4104 = vmul.f32 %v4092, %v4092
    %v4105 = vmul.f32 %v4093, %v4093
    %v4106 = vmul.f32 %v4094, %v4094
    %v4107 = vmul.f32 %v4095, %v4095
    %v4108 = vmul.f32 %v4096, %v4096
    %v4109 = vmul.f32 %v4097, %v4097
    %v4110 = vmul.f32 %v4098, %v4098
    %v4111 = vmul.f32 %v4099, %v4099
    %v4112 = vmul.f32 %v4100, %v4100
    %v4113 = vmul.f32 %v4101, %v4101
    %v4114 = vadd.f32 %v4102, %v4103
    %v4115 = vadd.f32 %v4114, %v4104
    %4116 = vadd.xlane.f32.xlu0 %v4115
    %v4117 = vpop.xlane.xlu0 %4116
    %v4118 = vadd.f32 %v4105, %v4106
    %v4119 = vadd.f32 %v4118, %v4107
    %4120 = vadd.xlane.f32.xlu0 %v4119
    %v4121 = vpop.xlane.xlu0 %4120
    %v4122 = vadd.f32 %v4108, %v4109
    %v4123 = vadd.f32 %v4122, %v4110
    %4124 = vadd.xlane.f32.xlu0 %v4123
    %v4125 = vpop.xlane.xlu0 %4124
    %v4126 = vadd.f32 %v4111, %v4112
    %v4127 = vadd.f32 %v4126, %v4113
    %4128 = vadd.xlane.f32.xlu0 %v4127
    %v4129 = vpop.xlane.xlu0 %4128
    %v4130 = vmul.f32 %v4117, %v236
    %v4131 = vmul.f32 %v4121, %v236
    %v4132 = vmul.f32 %v4125, %v236
    %v4133 = vmul.f32 %v4129, %v236
    %v4134 = vadd.f32 %v4130, 1e-05
    %v4135 = vadd.f32 %v4131, 1e-05
    %v4136 = vadd.f32 %v4132, 1e-05
    %v4137 = vadd.f32 %v4133, 1e-05
    %v4138 = vrsqrt.pop %v4134
    %v4139 = vrsqrt.pop %v4135
    %v4140 = vrsqrt.pop %v4136
    %v4141 = vrsqrt.pop %v4137
    %v4142 = vmul.f32 %v4090, %v4138
    %v4143 = vmul.f32 %v4091, %v4138
    %v4144 = vmul.f32 %v4092, %v4138
    %v4145 = vmul.f32 %v4093, %v4139
    %v4146 = vmul.f32 %v4094, %v4139
    %v4147 = vmul.f32 %v4095, %v4139
    %v4148 = vmul.f32 %v4096, %v4140
    %v4149 = vmul.f32 %v4097, %v4140
    %v4150 = vmul.f32 %v4098, %v4140
    %v4151 = vmul.f32 %v4099, %v4141
    %v4152 = vmul.f32 %v4100, %v4141
    %v4153 = vmul.f32 %v4101, %v4141
    %v4154 = vld [vmem:[#allocation14] sm:$0x7]
    %v4156 = vlaneseq
    %v4157 = vshrl.u32 %v4156, 7
    %v4158 = vsub.s32 0, %v4157
    %v4159 = vrot.slane %v4154, %v4158
    %v4160 = vlaneseq
    %v4161 = vshrl.u32 %v4160, 7
    %v4162 = vsub.s32 1, %v4161
    %v4163 = vrot.slane %v4154, %v4162
    %v4164 = vlaneseq
    %v4165 = vshrl.u32 %v4164, 7
    %v4166 = vsub.s32 2, %v4165
    %v4167 = vrot.slane %v4154, %v4166
    %v4171 = vmul.f32 %v4142, %v4159
    %v4172 = vmul.f32 %v4143, %v4163
    %v4173 = vmul.f32 %v4144, %v4167
    %v4174 = vmul.f32 %v4145, %v4159
    %v4175 = vmul.f32 %v4146, %v4163
    %v4176 = vmul.f32 %v4147, %v4167
    %v4177 = vmul.f32 %v4148, %v4159
    %v4178 = vmul.f32 %v4149, %v4163
    %v4179 = vmul.f32 %v4150, %v4167
    %v4180 = vmul.f32 %v4151, %v4159
    %v4181 = vmul.f32 %v4152, %v4163
    %v4182 = vmul.f32 %v4153, %v4167
    %v4183 = vld [vmem:[#allocation16] sm:$0x7]
    %v4185 = vlaneseq
    %v4186 = vshrl.u32 %v4185, 7
    %v4187 = vsub.s32 0, %v4186
    %v4188 = vrot.slane %v4183, %v4187
    %v4189 = vlaneseq
    %v4190 = vshrl.u32 %v4189, 7
    %v4191 = vsub.s32 1, %v4190
    %v4192 = vrot.slane %v4183, %v4191
    %v4193 = vlaneseq
    %v4194 = vshrl.u32 %v4193, 7
    %v4195 = vsub.s32 2, %v4194
    %v4196 = vrot.slane %v4183, %v4195
    %v4200 = vadd.f32 %v4171, %v4188
    %v4201 = vadd.f32 %v4172, %v4192
    %v4202 = vadd.f32 %v4173, %v4196
    %v4203 = vadd.f32 %v4174, %v4188
    %v4204 = vadd.f32 %v4175, %v4192
    %v4205 = vadd.f32 %v4176, %v4196
    %v4206 = vadd.f32 %v4177, %v4188
    %v4207 = vadd.f32 %v4178, %v4192
    %v4208 = vadd.f32 %v4179, %v4196
    %v4209 = vadd.f32 %v4180, %v4188
    %v4210 = vadd.f32 %v4181, %v4192
    %v4211 = vadd.f32 %v4182, %v4196
    %v4212 = vpack.c.bf16 %v4203, %v4200
    %v4213 = vpack.c.bf16 %v4204, %v4201
    %v4214 = vpack.c.bf16 %v4205, %v4202
    %v4215 = vpack.c.bf16 %v4209, %v4206
    %v4216 = vpack.c.bf16 %v4210, %v4207
    %v4217 = vpack.c.bf16 %v4211, %v4208
    %v4218 = vld [vmem:[#allocation17] sm:$0xff]
    %v4219 = vld [vmem:[#allocation17 + $0x8] sm:$0xff]
    %v4220 = vld [vmem:[#allocation17 + $0x10] sm:$0xff]
    %v4221 = vld [vmem:[#allocation17 + $0x18] sm:$0xff]
    %v4222 = vld [vmem:[#allocation17 + $0x20] sm:$0xff]
    %v4223 = vld [vmem:[#allocation17 + $0x28] sm:$0xff]
    %v4224 = vld [vmem:[#allocation17 + $0x30] sm:$0xff]
    %v4225 = vld [vmem:[#allocation17 + $0x38] sm:$0xff]
    %v4226 = vld [vmem:[#allocation17 + $0x40] sm:$0xff]
    %v4227 = vld [vmem:[#allocation17 + $0x48] sm:$0xff]
    %v4228 = vld [vmem:[#allocation17 + $0x50] sm:$0xff]
    %v4229 = vld [vmem:[#allocation17 + $0x58] sm:$0xff]
    %v4230 = vld [vmem:[#allocation17 + $0x60] sm:$0xff]
    %v4231 = vld [vmem:[#allocation17 + $0x68] sm:$0xff]
    %v4232 = vld [vmem:[#allocation17 + $0x70] sm:$0xff]
    %v4233 = vld [vmem:[#allocation17 + $0x78] sm:$0xff]
    %v4234 = vld [vmem:[#allocation17 + $0x80] sm:$0xff]
    %v4235 = vld [vmem:[#allocation17 + $0x88] sm:$0xff]
    %v4236 = vld [vmem:[#allocation17 + $0x90] sm:$0xff]
    %v4237 = vld [vmem:[#allocation17 + $0x98] sm:$0xff]
    %v4238 = vld [vmem:[#allocation17 + $0xa0] sm:$0xff]
    %v4239 = vld [vmem:[#allocation17 + $0xa8] sm:$0xff]
    %v4240 = vld [vmem:[#allocation17 + $0xb0] sm:$0xff]
    %v4241 = vld [vmem:[#allocation17 + $0xb8] sm:$0xff]
    %v4242 = vld [vmem:[#allocation17 + $0xc0] sm:$0xff]
    %v4243 = vld [vmem:[#allocation17 + $0xc8] sm:$0xff]
    %v4244 = vld [vmem:[#allocation17 + $0xd0] sm:$0xff]
    %v4245 = vld [vmem:[#allocation17 + $0xd8] sm:$0xff]
    %v4246 = vld [vmem:[#allocation17 + $0xe0] sm:$0xff]
    %v4247 = vld [vmem:[#allocation17 + $0xe8] sm:$0xff]
    %v4248 = vld [vmem:[#allocation17 + $0xf0] sm:$0xff]
    %v4249 = vld [vmem:[#allocation17 + $0xf8] sm:$0xff]
    %v4250 = vld [vmem:[#allocation17 + $0x100] sm:$0xff]
    %v4251 = vld [vmem:[#allocation17 + $0x108] sm:$0xff]
    %v4252 = vld [vmem:[#allocation17 + $0x110] sm:$0xff]
    %v4253 = vld [vmem:[#allocation17 + $0x118] sm:$0xff]
    %v4254 = vld [vmem:[#allocation17 + $0x120] sm:$0xff]
    %v4255 = vld [vmem:[#allocation17 + $0x128] sm:$0xff]
    %v4256 = vld [vmem:[#allocation17 + $0x130] sm:$0xff]
    %v4257 = vld [vmem:[#allocation17 + $0x138] sm:$0xff]
    %v4258 = vld [vmem:[#allocation17 + $0x140] sm:$0xff]
    %v4259 = vld [vmem:[#allocation17 + $0x148] sm:$0xff]
    %v4260 = vld [vmem:[#allocation17 + $0x150] sm:$0xff]
    %v4261 = vld [vmem:[#allocation17 + $0x158] sm:$0xff]
    %v4262 = vld [vmem:[#allocation17 + $0x160] sm:$0xff]
    %v4263 = vld [vmem:[#allocation17 + $0x168] sm:$0xff]
    %v4264 = vld [vmem:[#allocation17 + $0x170] sm:$0xff]
    %v4265 = vld [vmem:[#allocation17 + $0x178] sm:$0xff]
    %v4266 = vld [vmem:[#allocation17 + $0x180] sm:$0xff]
    %v4267 = vld [vmem:[#allocation17 + $0x188] sm:$0xff]
    %v4268 = vld [vmem:[#allocation17 + $0x190] sm:$0xff]
    %v4269 = vld [vmem:[#allocation17 + $0x198] sm:$0xff]
    %v4270 = vld [vmem:[#allocation17 + $0x1a0] sm:$0xff]
    %v4271 = vld [vmem:[#allocation17 + $0x1a8] sm:$0xff]
    %v4272 = vld [vmem:[#allocation17 + $0x1b0] sm:$0xff]
    %v4273 = vld [vmem:[#allocation17 + $0x1b8] sm:$0xff]
    %v4274 = vld [vmem:[#allocation17 + $0x1c0] sm:$0xff]
    %v4275 = vld [vmem:[#allocation17 + $0x1c8] sm:$0xff]
    %v4276 = vld [vmem:[#allocation17 + $0x1d0] sm:$0xff]
    %v4277 = vld [vmem:[#allocation17 + $0x1d8] sm:$0xff]
    %v4278 = vld [vmem:[#allocation17 + $0x1e0] sm:$0xff]
    %v4279 = vld [vmem:[#allocation17 + $0x1e8] sm:$0xff]
    %v4280 = vld [vmem:[#allocation17 + $0x1f0] sm:$0xff]
    %v4281 = vld [vmem:[#allocation17 + $0x1f8] sm:$0xff]
    %v4282 = vld [vmem:[#allocation17 + $0x200] sm:$0xff]
    %v4283 = vld [vmem:[#allocation17 + $0x208] sm:$0xff]
    %v4284 = vld [vmem:[#allocation17 + $0x210] sm:$0xff]
    %v4285 = vld [vmem:[#allocation17 + $0x218] sm:$0xff]
    %v4286 = vld [vmem:[#allocation17 + $0x220] sm:$0xff]
    %v4287 = vld [vmem:[#allocation17 + $0x228] sm:$0xff]
    %v4288 = vld [vmem:[#allocation17 + $0x230] sm:$0xff]
    %v4289 = vld [vmem:[#allocation17 + $0x238] sm:$0xff]
    %v4290 = vld [vmem:[#allocation17 + $0x240] sm:$0xff]
    %v4291 = vld [vmem:[#allocation17 + $0x248] sm:$0xff]
    %v4292 = vld [vmem:[#allocation17 + $0x250] sm:$0xff]
    %v4293 = vld [vmem:[#allocation17 + $0x258] sm:$0xff]
    %v4294 = vld [vmem:[#allocation17 + $0x260] sm:$0xff]
    %v4295 = vld [vmem:[#allocation17 + $0x268] sm:$0xff]
    %v4296 = vld [vmem:[#allocation17 + $0x270] sm:$0xff]
    %v4297 = vld [vmem:[#allocation17 + $0x278] sm:$0xff]
    %v4298 = vld [vmem:[#allocation17 + $0x280] sm:$0xff]
    %v4299 = vld [vmem:[#allocation17 + $0x288] sm:$0xff]
    %v4300 = vld [vmem:[#allocation17 + $0x290] sm:$0xff]
    %v4301 = vld [vmem:[#allocation17 + $0x298] sm:$0xff]
    %v4302 = vld [vmem:[#allocation17 + $0x2a0] sm:$0xff]
    %v4303 = vld [vmem:[#allocation17 + $0x2a8] sm:$0xff]
    %v4304 = vld [vmem:[#allocation17 + $0x2b0] sm:$0xff]
    %v4305 = vld [vmem:[#allocation17 + $0x2b8] sm:$0xff]
    %v4306 = vld [vmem:[#allocation17 + $0x2c0] sm:$0xff]
    %v4307 = vld [vmem:[#allocation17 + $0x2c8] sm:$0xff]
    %v4308 = vld [vmem:[#allocation17 + $0x2d0] sm:$0xff]
    %v4309 = vld [vmem:[#allocation17 + $0x2d8] sm:$0xff]
    %v4310 = vld [vmem:[#allocation17 + $0x2e0] sm:$0xff]
    %v4311 = vld [vmem:[#allocation17 + $0x2e8] sm:$0xff]
    %v4312 = vld [vmem:[#allocation17 + $0x2f0] sm:$0xff]
    %v4313 = vld [vmem:[#allocation17 + $0x2f8] sm:$0xff]
    %v4314 = vld [vmem:[#allocation17 + $0x300] sm:$0xff]
    %v4315 = vld [vmem:[#allocation17 + $0x308] sm:$0xff]
    %v4316 = vld [vmem:[#allocation17 + $0x310] sm:$0xff]
    %v4317 = vld [vmem:[#allocation17 + $0x318] sm:$0xff]
    %v4318 = vld [vmem:[#allocation17 + $0x320] sm:$0xff]
    %v4319 = vld [vmem:[#allocation17 + $0x328] sm:$0xff]
    %v4320 = vld [vmem:[#allocation17 + $0x330] sm:$0xff]
    %v4321 = vld [vmem:[#allocation17 + $0x338] sm:$0xff]
    %v4322 = vld [vmem:[#allocation17 + $0x340] sm:$0xff]
    %v4323 = vld [vmem:[#allocation17 + $0x348] sm:$0xff]
    %v4324 = vld [vmem:[#allocation17 + $0x350] sm:$0xff]
    %v4325 = vld [vmem:[#allocation17 + $0x358] sm:$0xff]
    %v4326 = vld [vmem:[#allocation17 + $0x360] sm:$0xff]
    %v4327 = vld [vmem:[#allocation17 + $0x368] sm:$0xff]
    %v4328 = vld [vmem:[#allocation17 + $0x370] sm:$0xff]
    %v4329 = vld [vmem:[#allocation17 + $0x378] sm:$0xff]
    %v4330 = vld [vmem:[#allocation17 + $0x380] sm:$0xff]
    %v4331 = vld [vmem:[#allocation17 + $0x388] sm:$0xff]
    %v4332 = vld [vmem:[#allocation17 + $0x390] sm:$0xff]
    %v4333 = vld [vmem:[#allocation17 + $0x398] sm:$0xff]
    %v4334 = vld [vmem:[#allocation17 + $0x3a0] sm:$0xff]
    %v4335 = vld [vmem:[#allocation17 + $0x3a8] sm:$0xff]
    %v4336 = vld [vmem:[#allocation17 + $0x3b0] sm:$0xff]
    %v4337 = vld [vmem:[#allocation17 + $0x3b8] sm:$0xff]
    %v4338 = vld [vmem:[#allocation17 + $0x3c0] sm:$0xff]
    %v4339 = vld [vmem:[#allocation17 + $0x3c8] sm:$0xff]
    %v4340 = vld [vmem:[#allocation17 + $0x3d0] sm:$0xff]
    %v4341 = vld [vmem:[#allocation17 + $0x3d8] sm:$0xff]
    %v4342 = vld [vmem:[#allocation17 + $0x3e0] sm:$0xff]
    %v4343 = vld [vmem:[#allocation17 + $0x3e8] sm:$0xff]
    %v4344 = vld [vmem:[#allocation17 + $0x3f0] sm:$0xff]
    %v4345 = vld [vmem:[#allocation17 + $0x3f8] sm:$0xff]
    %v4346 = vld [vmem:[#allocation17 + $0x400] sm:$0xff]
    %v4347 = vld [vmem:[#allocation17 + $0x408] sm:$0xff]
    %v4348 = vld [vmem:[#allocation17 + $0x410] sm:$0xff]
    %v4349 = vld [vmem:[#allocation17 + $0x418] sm:$0xff]
    %v4350 = vld [vmem:[#allocation17 + $0x420] sm:$0xff]
    %v4351 = vld [vmem:[#allocation17 + $0x428] sm:$0xff]
    %v4352 = vld [vmem:[#allocation17 + $0x430] sm:$0xff]
    %v4353 = vld [vmem:[#allocation17 + $0x438] sm:$0xff]
    %v4354 = vld [vmem:[#allocation17 + $0x440] sm:$0xff]
    %v4355 = vld [vmem:[#allocation17 + $0x448] sm:$0xff]
    %v4356 = vld [vmem:[#allocation17 + $0x450] sm:$0xff]
    %v4357 = vld [vmem:[#allocation17 + $0x458] sm:$0xff]
    %v4358 = vld [vmem:[#allocation17 + $0x460] sm:$0xff]
    %v4359 = vld [vmem:[#allocation17 + $0x468] sm:$0xff]
    %v4360 = vld [vmem:[#allocation17 + $0x470] sm:$0xff]
    %v4361 = vld [vmem:[#allocation17 + $0x478] sm:$0xff]
    %v4362 = vld [vmem:[#allocation17 + $0x480] sm:$0xff]
    %v4363 = vld [vmem:[#allocation17 + $0x488] sm:$0xff]
    %v4364 = vld [vmem:[#allocation17 + $0x490] sm:$0xff]
    %v4365 = vld [vmem:[#allocation17 + $0x498] sm:$0xff]
    %v4366 = vld [vmem:[#allocation17 + $0x4a0] sm:$0xff]
    %v4367 = vld [vmem:[#allocation17 + $0x4a8] sm:$0xff]
    %v4368 = vld [vmem:[#allocation17 + $0x4b0] sm:$0xff]
    %v4369 = vld [vmem:[#allocation17 + $0x4b8] sm:$0xff]
    %v4370 = vld [vmem:[#allocation17 + $0x4c0] sm:$0xff]
    %v4371 = vld [vmem:[#allocation17 + $0x4c8] sm:$0xff]
    %v4372 = vld [vmem:[#allocation17 + $0x4d0] sm:$0xff]
    %v4373 = vld [vmem:[#allocation17 + $0x4d8] sm:$0xff]
    %v4374 = vld [vmem:[#allocation17 + $0x4e0] sm:$0xff]
    %v4375 = vld [vmem:[#allocation17 + $0x4e8] sm:$0xff]
    %v4376 = vld [vmem:[#allocation17 + $0x4f0] sm:$0xff]
    %v4377 = vld [vmem:[#allocation17 + $0x4f8] sm:$0xff]
    %v4378 = vld [vmem:[#allocation17 + $0x500] sm:$0xff]
    %v4379 = vld [vmem:[#allocation17 + $0x508] sm:$0xff]
    %v4380 = vld [vmem:[#allocation17 + $0x510] sm:$0xff]
    %v4381 = vld [vmem:[#allocation17 + $0x518] sm:$0xff]
    %v4382 = vld [vmem:[#allocation17 + $0x520] sm:$0xff]
    %v4383 = vld [vmem:[#allocation17 + $0x528] sm:$0xff]
    %v4384 = vld [vmem:[#allocation17 + $0x530] sm:$0xff]
    %v4385 = vld [vmem:[#allocation17 + $0x538] sm:$0xff]
    %v4386 = vld [vmem:[#allocation17 + $0x540] sm:$0xff]
    %v4387 = vld [vmem:[#allocation17 + $0x548] sm:$0xff]
    %v4388 = vld [vmem:[#allocation17 + $0x550] sm:$0xff]
    %v4389 = vld [vmem:[#allocation17 + $0x558] sm:$0xff]
    %v4390 = vld [vmem:[#allocation17 + $0x560] sm:$0xff]
    %v4391 = vld [vmem:[#allocation17 + $0x568] sm:$0xff]
    %v4392 = vld [vmem:[#allocation17 + $0x570] sm:$0xff]
    %v4393 = vld [vmem:[#allocation17 + $0x578] sm:$0xff]
    %v4394 = vld [vmem:[#allocation17 + $0x580] sm:$0xff]
    %v4395 = vld [vmem:[#allocation17 + $0x588] sm:$0xff]
    %v4396 = vld [vmem:[#allocation17 + $0x590] sm:$0xff]
    %v4397 = vld [vmem:[#allocation17 + $0x598] sm:$0xff]
    %v4398 = vld [vmem:[#allocation17 + $0x5a0] sm:$0xff]
    %v4399 = vld [vmem:[#allocation17 + $0x5a8] sm:$0xff]
    %v4400 = vld [vmem:[#allocation17 + $0x5b0] sm:$0xff]
    %v4401 = vld [vmem:[#allocation17 + $0x5b8] sm:$0xff]
    %v4402 = vld [vmem:[#allocation17 + $0x5c0] sm:$0xff]
    %v4403 = vld [vmem:[#allocation17 + $0x5c8] sm:$0xff]
    %v4404 = vld [vmem:[#allocation17 + $0x5d0] sm:$0xff]
    %v4405 = vld [vmem:[#allocation17 + $0x5d8] sm:$0xff]
    %v4406 = vld [vmem:[#allocation17 + $0x5e0] sm:$0xff]
    %v4407 = vld [vmem:[#allocation17 + $0x5e8] sm:$0xff]
    %v4408 = vld [vmem:[#allocation17 + $0x5f0] sm:$0xff]
    %v4409 = vld [vmem:[#allocation17 + $0x5f8] sm:$0xff]
    %v4410 = vld [vmem:[#allocation17 + $0x600] sm:$0xff]
    %v4411 = vld [vmem:[#allocation17 + $0x608] sm:$0xff]
    %v4412 = vld [vmem:[#allocation17 + $0x610] sm:$0xff]
    %v4413 = vld [vmem:[#allocation17 + $0x618] sm:$0xff]
    %v4414 = vld [vmem:[#allocation17 + $0x620] sm:$0xff]
    %v4415 = vld [vmem:[#allocation17 + $0x628] sm:$0xff]
    %v4416 = vld [vmem:[#allocation17 + $0x630] sm:$0xff]
    %v4417 = vld [vmem:[#allocation17 + $0x638] sm:$0xff]
    %v4418 = vld [vmem:[#allocation17 + $0x640] sm:$0xff]
    %v4419 = vld [vmem:[#allocation17 + $0x648] sm:$0xff]
    %v4420 = vld [vmem:[#allocation17 + $0x650] sm:$0xff]
    %v4421 = vld [vmem:[#allocation17 + $0x658] sm:$0xff]
    %v4422 = vld [vmem:[#allocation17 + $0x660] sm:$0xff]
    %v4423 = vld [vmem:[#allocation17 + $0x668] sm:$0xff]
    %v4424 = vld [vmem:[#allocation17 + $0x670] sm:$0xff]
    %v4425 = vld [vmem:[#allocation17 + $0x678] sm:$0xff]
    %v4426 = vld [vmem:[#allocation17 + $0x680] sm:$0xff]
    %v4427 = vld [vmem:[#allocation17 + $0x688] sm:$0xff]
    %v4428 = vld [vmem:[#allocation17 + $0x690] sm:$0xff]
    %v4429 = vld [vmem:[#allocation17 + $0x698] sm:$0xff]
    %v4430 = vld [vmem:[#allocation17 + $0x6a0] sm:$0xff]
    %v4431 = vld [vmem:[#allocation17 + $0x6a8] sm:$0xff]
    %v4432 = vld [vmem:[#allocation17 + $0x6b0] sm:$0xff]
    %v4433 = vld [vmem:[#allocation17 + $0x6b8] sm:$0xff]
    %v4434 = vld [vmem:[#allocation17 + $0x6c0] sm:$0xff]
    %v4435 = vld [vmem:[#allocation17 + $0x6c8] sm:$0xff]
    %v4436 = vld [vmem:[#allocation17 + $0x6d0] sm:$0xff]
    %v4437 = vld [vmem:[#allocation17 + $0x6d8] sm:$0xff]
    %v4438 = vld [vmem:[#allocation17 + $0x6e0] sm:$0xff]
    %v4439 = vld [vmem:[#allocation17 + $0x6e8] sm:$0xff]
    %v4440 = vld [vmem:[#allocation17 + $0x6f0] sm:$0xff]
    %v4441 = vld [vmem:[#allocation17 + $0x6f8] sm:$0xff]
    %v4442 = vld [vmem:[#allocation17 + $0x700] sm:$0xff]
    %v4443 = vld [vmem:[#allocation17 + $0x708] sm:$0xff]
    %v4444 = vld [vmem:[#allocation17 + $0x710] sm:$0xff]
    %v4445 = vld [vmem:[#allocation17 + $0x718] sm:$0xff]
    %v4446 = vld [vmem:[#allocation17 + $0x720] sm:$0xff]
    %v4447 = vld [vmem:[#allocation17 + $0x728] sm:$0xff]
    %v4448 = vld [vmem:[#allocation17 + $0x730] sm:$0xff]
    %v4449 = vld [vmem:[#allocation17 + $0x738] sm:$0xff]
    %v4450 = vld [vmem:[#allocation17 + $0x740] sm:$0xff]
    %v4451 = vld [vmem:[#allocation17 + $0x748] sm:$0xff]
    %v4452 = vld [vmem:[#allocation17 + $0x750] sm:$0xff]
    %v4453 = vld [vmem:[#allocation17 + $0x758] sm:$0xff]
    %v4454 = vld [vmem:[#allocation17 + $0x760] sm:$0xff]
    %v4455 = vld [vmem:[#allocation17 + $0x768] sm:$0xff]
    %v4456 = vld [vmem:[#allocation17 + $0x770] sm:$0xff]
    %v4457 = vld [vmem:[#allocation17 + $0x778] sm:$0xff]
    %v4458 = vld [vmem:[#allocation17 + $0x780] sm:$0xff]
    %v4459 = vld [vmem:[#allocation17 + $0x788] sm:$0xff]
    %v4460 = vld [vmem:[#allocation17 + $0x790] sm:$0xff]
    %v4461 = vld [vmem:[#allocation17 + $0x798] sm:$0xff]
    %v4462 = vld [vmem:[#allocation17 + $0x7a0] sm:$0xff]
    %v4463 = vld [vmem:[#allocation17 + $0x7a8] sm:$0xff]
    %v4464 = vld [vmem:[#allocation17 + $0x7b0] sm:$0xff]
    %v4465 = vld [vmem:[#allocation17 + $0x7b8] sm:$0xff]
    %v4466 = vld [vmem:[#allocation17 + $0x7c0] sm:$0xff]
    %v4467 = vld [vmem:[#allocation17 + $0x7c8] sm:$0xff]
    %v4468 = vld [vmem:[#allocation17 + $0x7d0] sm:$0xff]
    %v4469 = vld [vmem:[#allocation17 + $0x7d8] sm:$0xff]
    %v4470 = vld [vmem:[#allocation17 + $0x7e0] sm:$0xff]
    %v4471 = vld [vmem:[#allocation17 + $0x7e8] sm:$0xff]
    %v4472 = vld [vmem:[#allocation17 + $0x7f0] sm:$0xff]
    %v4473 = vld [vmem:[#allocation17 + $0x7f8] sm:$0xff]
    %v4474 = vld [vmem:[#allocation17 + $0x800] sm:$0xff]
    %v4475 = vld [vmem:[#allocation17 + $0x808] sm:$0xff]
    %v4476 = vld [vmem:[#allocation17 + $0x810] sm:$0xff]
    %v4477 = vld [vmem:[#allocation17 + $0x818] sm:$0xff]
    %v4478 = vld [vmem:[#allocation17 + $0x820] sm:$0xff]
    %v4479 = vld [vmem:[#allocation17 + $0x828] sm:$0xff]
    %v4480 = vld [vmem:[#allocation17 + $0x830] sm:$0xff]
    %v4481 = vld [vmem:[#allocation17 + $0x838] sm:$0xff]
    %v4482 = vld [vmem:[#allocation17 + $0x840] sm:$0xff]
    %v4483 = vld [vmem:[#allocation17 + $0x848] sm:$0xff]
    %v4484 = vld [vmem:[#allocation17 + $0x850] sm:$0xff]
    %v4485 = vld [vmem:[#allocation17 + $0x858] sm:$0xff]
    %v4486 = vld [vmem:[#allocation17 + $0x860] sm:$0xff]
    %v4487 = vld [vmem:[#allocation17 + $0x868] sm:$0xff]
    %v4488 = vld [vmem:[#allocation17 + $0x870] sm:$0xff]
    %v4489 = vld [vmem:[#allocation17 + $0x878] sm:$0xff]
    %v4490 = vld [vmem:[#allocation17 + $0x880] sm:$0xff]
    %v4491 = vld [vmem:[#allocation17 + $0x888] sm:$0xff]
    %v4492 = vld [vmem:[#allocation17 + $0x890] sm:$0xff]
    %v4493 = vld [vmem:[#allocation17 + $0x898] sm:$0xff]
    %v4494 = vld [vmem:[#allocation17 + $0x8a0] sm:$0xff]
    %v4495 = vld [vmem:[#allocation17 + $0x8a8] sm:$0xff]
    %v4496 = vld [vmem:[#allocation17 + $0x8b0] sm:$0xff]
    %v4497 = vld [vmem:[#allocation17 + $0x8b8] sm:$0xff]
    %v4498 = vld [vmem:[#allocation17 + $0x8c0] sm:$0xff]
    %v4499 = vld [vmem:[#allocation17 + $0x8c8] sm:$0xff]
    %v4500 = vld [vmem:[#allocation17 + $0x8d0] sm:$0xff]
    %v4501 = vld [vmem:[#allocation17 + $0x8d8] sm:$0xff]
    %v4502 = vld [vmem:[#allocation17 + $0x8e0] sm:$0xff]
    %v4503 = vld [vmem:[#allocation17 + $0x8e8] sm:$0xff]
    %v4504 = vld [vmem:[#allocation17 + $0x8f0] sm:$0xff]
    %v4505 = vld [vmem:[#allocation17 + $0x8f8] sm:$0xff]
    %v4506 = vld [vmem:[#allocation19] sm:$0xff]
    %v4507 = vld [vmem:[#allocation19 + $0x8] sm:$0xf]
    %v4510 = vlaneseq
    %v4511 = vshrl.u32 %v4510, 7
    %v4512 = vsub.s32 0, %v4511
    %v4513 = vrot.slane %v4506, %v4512
    %v4514 = vlaneseq
    %v4515 = vshrl.u32 %v4514, 7
    %v4516 = vsub.s32 1, %v4515
    %v4517 = vrot.slane %v4506, %v4516
    %v4518 = vlaneseq
    %v4519 = vshrl.u32 %v4518, 7
    %v4520 = vsub.s32 2, %v4519
    %v4521 = vrot.slane %v4506, %v4520
    %v4522 = vlaneseq
    %v4523 = vshrl.u32 %v4522, 7
    %v4524 = vsub.s32 3, %v4523
    %v4525 = vrot.slane %v4506, %v4524
    %v4526 = vlaneseq
    %v4527 = vshrl.u32 %v4526, 7
    %v4528 = vsub.s32 4, %v4527
    %v4529 = vrot.slane %v4506, %v4528
    %v4530 = vlaneseq
    %v4531 = vshrl.u32 %v4530, 7
    %v4532 = vsub.s32 5, %v4531
    %v4533 = vrot.slane %v4506, %v4532
    %v4534 = vlaneseq
    %v4535 = vshrl.u32 %v4534, 7
    %v4536 = vsub.s32 6, %v4535
    %v4537 = vrot.slane %v4506, %v4536
    %v4538 = vlaneseq
    %v4539 = vshrl.u32 %v4538, 7
    %v4540 = vsub.s32 7, %v4539
    %v4541 = vrot.slane %v4506, %v4540
    %v4542 = vlaneseq
    %v4543 = vshrl.u32 %v4542, 7
    %v4544 = vsub.s32 0, %v4543
    %v4545 = vrot.slane %v4507, %v4544
    %v4546 = vlaneseq
    %v4547 = vshrl.u32 %v4546, 7
    %v4548 = vsub.s32 1, %v4547
    %v4549 = vrot.slane %v4507, %v4548
    %v4550 = vlaneseq
    %v4551 = vshrl.u32 %v4550, 7
    %v4552 = vsub.s32 2, %v4551
    %v4553 = vrot.slane %v4507, %v4552
    %v4554 = vlaneseq
    %v4555 = vshrl.u32 %v4554, 7
    %v4556 = vsub.s32 3, %v4555
    %v4557 = vrot.slane %v4507, %v4556
    %v4858 = vunpack.c.l.b16 %v4218
    %v4859 = vunpack.c.h.b16 %v4218
    %v4860 = vunpack.c.l.b16 %v4219
    %v4861 = vunpack.c.h.b16 %v4219
    %v4862 = vunpack.c.l.b16 %v4220
    %v4863 = vunpack.c.h.b16 %v4220
    %v4864 = vunpack.c.l.b16 %v4221
    %v4865 = vunpack.c.h.b16 %v4221
    %v4866 = vunpack.c.l.b16 %v4222
    %v4867 = vunpack.c.h.b16 %v4222
    %v4868 = vunpack.c.l.b16 %v4223
    %v4869 = vunpack.c.h.b16 %v4223
    %v4870 = vunpack.c.l.b16 %v4224
    %v4871 = vunpack.c.h.b16 %v4224
    %v4872 = vunpack.c.l.b16 %v4225
    %v4873 = vunpack.c.h.b16 %v4225
    %v4874 = vunpack.c.l.b16 %v4226
    %v4875 = vunpack.c.h.b16 %v4226
    %v4876 = vunpack.c.l.b16 %v4227
    %v4877 = vunpack.c.h.b16 %v4227
    %v4878 = vunpack.c.l.b16 %v4228
    %v4879 = vunpack.c.h.b16 %v4228
    %v4880 = vunpack.c.l.b16 %v4229
    %v4881 = vunpack.c.h.b16 %v4229
    %v4882 = vunpack.c.l.b16 %v4230
    %v4883 = vunpack.c.h.b16 %v4230
    %v4884 = vunpack.c.l.b16 %v4231
    %v4885 = vunpack.c.h.b16 %v4231
    %v4886 = vunpack.c.l.b16 %v4232
    %v4887 = vunpack.c.h.b16 %v4232
    %v4888 = vunpack.c.l.b16 %v4233
    %v4889 = vunpack.c.h.b16 %v4233
    %v4890 = vunpack.c.l.b16 %v4234
    %v4891 = vunpack.c.h.b16 %v4234
    %v4892 = vunpack.c.l.b16 %v4235
    %v4893 = vunpack.c.h.b16 %v4235
    %v4894 = vunpack.c.l.b16 %v4236
    %v4895 = vunpack.c.h.b16 %v4236
    %v4896 = vunpack.c.l.b16 %v4237
    %v4897 = vunpack.c.h.b16 %v4237
    %v4898 = vunpack.c.l.b16 %v4238
    %v4899 = vunpack.c.h.b16 %v4238
    %v4900 = vunpack.c.l.b16 %v4239
    %v4901 = vunpack.c.h.b16 %v4239
    %v4902 = vunpack.c.l.b16 %v4240
    %v4903 = vunpack.c.h.b16 %v4240
    %v4904 = vunpack.c.l.b16 %v4241
    %v4905 = vunpack.c.h.b16 %v4241
    %v4906 = vunpack.c.l.b16 %v4242
    %v4907 = vunpack.c.h.b16 %v4242
    %v4908 = vunpack.c.l.b16 %v4243
    %v4909 = vunpack.c.h.b16 %v4243
    %v4910 = vunpack.c.l.b16 %v4244
    %v4911 = vunpack.c.h.b16 %v4244
    %v4912 = vunpack.c.l.b16 %v4245
    %v4913 = vunpack.c.h.b16 %v4245
    %v4914 = vunpack.c.l.b16 %v4246
    %v4915 = vunpack.c.h.b16 %v4246
    %v4916 = vunpack.c.l.b16 %v4247
    %v4917 = vunpack.c.h.b16 %v4247
    %v4918 = vunpack.c.l.b16 %v4248
    %v4919 = vunpack.c.h.b16 %v4248
    %v4920 = vunpack.c.l.b16 %v4249
    %v4921 = vunpack.c.h.b16 %v4249
    %v4922 = vunpack.c.l.b16 %v4250
    %v4923 = vunpack.c.h.b16 %v4250
    %v4924 = vunpack.c.l.b16 %v4251
    %v4925 = vunpack.c.h.b16 %v4251
    %v4926 = vunpack.c.l.b16 %v4252
    %v4927 = vunpack.c.h.b16 %v4252
    %v4928 = vunpack.c.l.b16 %v4253
    %v4929 = vunpack.c.h.b16 %v4253
    %v4930 = vunpack.c.l.b16 %v4254
    %v4931 = vunpack.c.h.b16 %v4254
    %v4932 = vunpack.c.l.b16 %v4255
    %v4933 = vunpack.c.h.b16 %v4255
    %v4934 = vunpack.c.l.b16 %v4256
    %v4935 = vunpack.c.h.b16 %v4256
    %v4936 = vunpack.c.l.b16 %v4257
    %v4937 = vunpack.c.h.b16 %v4257
    %v4938 = vunpack.c.l.b16 %v4258
    %v4939 = vunpack.c.h.b16 %v4258
    %v4940 = vunpack.c.l.b16 %v4259
    %v4941 = vunpack.c.h.b16 %v4259
    %v4942 = vunpack.c.l.b16 %v4260
    %v4943 = vunpack.c.h.b16 %v4260
    %v4944 = vunpack.c.l.b16 %v4261
    %v4945 = vunpack.c.h.b16 %v4261
    %v4946 = vunpack.c.l.b16 %v4262
    %v4947 = vunpack.c.h.b16 %v4262
    %v4948 = vunpack.c.l.b16 %v4263
    %v4949 = vunpack.c.h.b16 %v4263
    %v4950 = vunpack.c.l.b16 %v4264
    %v4951 = vunpack.c.h.b16 %v4264
    %v4952 = vunpack.c.l.b16 %v4265
    %v4953 = vunpack.c.h.b16 %v4265
    %v4954 = vunpack.c.l.b16 %v4266
    %v4955 = vunpack.c.h.b16 %v4266
    %v4956 = vunpack.c.l.b16 %v4267
    %v4957 = vunpack.c.h.b16 %v4267
    %v4958 = vunpack.c.l.b16 %v4268
    %v4959 = vunpack.c.h.b16 %v4268
    %v4960 = vunpack.c.l.b16 %v4269
    %v4961 = vunpack.c.h.b16 %v4269
    %v4962 = vunpack.c.l.b16 %v4270
    %v4963 = vunpack.c.h.b16 %v4270
    %v4964 = vunpack.c.l.b16 %v4271
    %v4965 = vunpack.c.h.b16 %v4271
    %v4966 = vunpack.c.l.b16 %v4272
    %v4967 = vunpack.c.h.b16 %v4272
    %v4968 = vunpack.c.l.b16 %v4273
    %v4969 = vunpack.c.h.b16 %v4273
    %v4970 = vunpack.c.l.b16 %v4274
    %v4971 = vunpack.c.h.b16 %v4274
    %v4972 = vunpack.c.l.b16 %v4275
    %v4973 = vunpack.c.h.b16 %v4275
    %v4974 = vunpack.c.l.b16 %v4276
    %v4975 = vunpack.c.h.b16 %v4276
    %v4976 = vunpack.c.l.b16 %v4277
    %v4977 = vunpack.c.h.b16 %v4277
    %v4978 = vunpack.c.l.b16 %v4278
    %v4979 = vunpack.c.h.b16 %v4278
    %v4980 = vunpack.c.l.b16 %v4279
    %v4981 = vunpack.c.h.b16 %v4279
    %v4982 = vunpack.c.l.b16 %v4280
    %v4983 = vunpack.c.h.b16 %v4280
    %v4984 = vunpack.c.l.b16 %v4281
    %v4985 = vunpack.c.h.b16 %v4281
    %v4986 = vunpack.c.l.b16 %v4282
    %v4987 = vunpack.c.h.b16 %v4282
    %v4988 = vunpack.c.l.b16 %v4283
    %v4989 = vunpack.c.h.b16 %v4283
    %v4990 = vunpack.c.l.b16 %v4284
    %v4991 = vunpack.c.h.b16 %v4284
    %v4992 = vunpack.c.l.b16 %v4285
    %v4993 = vunpack.c.h.b16 %v4285
    %v4994 = vunpack.c.l.b16 %v4286
    %v4995 = vunpack.c.h.b16 %v4286
    %v4996 = vunpack.c.l.b16 %v4287
    %v4997 = vunpack.c.h.b16 %v4287
    %v4998 = vunpack.c.l.b16 %v4288
    %v4999 = vunpack.c.h.b16 %v4288
    %v5000 = vunpack.c.l.b16 %v4289
    %v5001 = vunpack.c.h.b16 %v4289
    %v5002 = vunpack.c.l.b16 %v4290
    %v5003 = vunpack.c.h.b16 %v4290
    %v5004 = vunpack.c.l.b16 %v4291
    %v5005 = vunpack.c.h.b16 %v4291
    %v5006 = vunpack.c.l.b16 %v4292
    %v5007 = vunpack.c.h.b16 %v4292
    %v5008 = vunpack.c.l.b16 %v4293
    %v5009 = vunpack.c.h.b16 %v4293
    %v5010 = vunpack.c.l.b16 %v4294
    %v5011 = vunpack.c.h.b16 %v4294
    %v5012 = vunpack.c.l.b16 %v4295
    %v5013 = vunpack.c.h.b16 %v4295
    %v5014 = vunpack.c.l.b16 %v4296
    %v5015 = vunpack.c.h.b16 %v4296
    %v5016 = vunpack.c.l.b16 %v4297
    %v5017 = vunpack.c.h.b16 %v4297
    %v5018 = vunpack.c.l.b16 %v4298
    %v5019 = vunpack.c.h.b16 %v4298
    %v5020 = vunpack.c.l.b16 %v4299
    %v5021 = vunpack.c.h.b16 %v4299
    %v5022 = vunpack.c.l.b16 %v4300
    %v5023 = vunpack.c.h.b16 %v4300
    %v5024 = vunpack.c.l.b16 %v4301
    %v5025 = vunpack.c.h.b16 %v4301
    %v5026 = vunpack.c.l.b16 %v4302
    %v5027 = vunpack.c.h.b16 %v4302
    %v5028 = vunpack.c.l.b16 %v4303
    %v5029 = vunpack.c.h.b16 %v4303
    %v5030 = vunpack.c.l.b16 %v4304
    %v5031 = vunpack.c.h.b16 %v4304
    %v5032 = vunpack.c.l.b16 %v4305
    %v5033 = vunpack.c.h.b16 %v4305
    %v5034 = vunpack.c.l.b16 %v4306
    %v5035 = vunpack.c.h.b16 %v4306
    %v5036 = vunpack.c.l.b16 %v4307
    %v5037 = vunpack.c.h.b16 %v4307
    %v5038 = vunpack.c.l.b16 %v4308
    %v5039 = vunpack.c.h.b16 %v4308
    %v5040 = vunpack.c.l.b16 %v4309
    %v5041 = vunpack.c.h.b16 %v4309
    %v5042 = vunpack.c.l.b16 %v4310
    %v5043 = vunpack.c.h.b16 %v4310
    %v5044 = vunpack.c.l.b16 %v4311
    %v5045 = vunpack.c.h.b16 %v4311
    %v5046 = vunpack.c.l.b16 %v4312
    %v5047 = vunpack.c.h.b16 %v4312
    %v5048 = vunpack.c.l.b16 %v4313
    %v5049 = vunpack.c.h.b16 %v4313
    %v5050 = vunpack.c.l.b16 %v4314
    %v5051 = vunpack.c.h.b16 %v4314
    %v5052 = vunpack.c.l.b16 %v4315
    %v5053 = vunpack.c.h.b16 %v4315
    %v5054 = vunpack.c.l.b16 %v4316
    %v5055 = vunpack.c.h.b16 %v4316
    %v5056 = vunpack.c.l.b16 %v4317
    %v5057 = vunpack.c.h.b16 %v4317
    %v5058 = vunpack.c.l.b16 %v4318
    %v5059 = vunpack.c.h.b16 %v4318
    %v5060 = vunpack.c.l.b16 %v4319
    %v5061 = vunpack.c.h.b16 %v4319
    %v5062 = vunpack.c.l.b16 %v4320
    %v5063 = vunpack.c.h.b16 %v4320
    %v5064 = vunpack.c.l.b16 %v4321
    %v5065 = vunpack.c.h.b16 %v4321
    %v5066 = vunpack.c.l.b16 %v4322
    %v5067 = vunpack.c.h.b16 %v4322
    %v5068 = vunpack.c.l.b16 %v4323
    %v5069 = vunpack.c.h.b16 %v4323
    %v5070 = vunpack.c.l.b16 %v4324
    %v5071 = vunpack.c.h.b16 %v4324
    %v5072 = vunpack.c.l.b16 %v4325
    %v5073 = vunpack.c.h.b16 %v4325
    %v5074 = vunpack.c.l.b16 %v4326
    %v5075 = vunpack.c.h.b16 %v4326
    %v5076 = vunpack.c.l.b16 %v4327
    %v5077 = vunpack.c.h.b16 %v4327
    %v5078 = vunpack.c.l.b16 %v4328
    %v5079 = vunpack.c.h.b16 %v4328
    %v5080 = vunpack.c.l.b16 %v4329
    %v5081 = vunpack.c.h.b16 %v4329
    %v5082 = vunpack.c.l.b16 %v4330
    %v5083 = vunpack.c.h.b16 %v4330
    %v5084 = vunpack.c.l.b16 %v4331
    %v5085 = vunpack.c.h.b16 %v4331
    %v5086 = vunpack.c.l.b16 %v4332
    %v5087 = vunpack.c.h.b16 %v4332
    %v5088 = vunpack.c.l.b16 %v4333
    %v5089 = vunpack.c.h.b16 %v4333
    %v5090 = vunpack.c.l.b16 %v4334
    %v5091 = vunpack.c.h.b16 %v4334
    %v5092 = vunpack.c.l.b16 %v4335
    %v5093 = vunpack.c.h.b16 %v4335
    %v5094 = vunpack.c.l.b16 %v4336
    %v5095 = vunpack.c.h.b16 %v4336
    %v5096 = vunpack.c.l.b16 %v4337
    %v5097 = vunpack.c.h.b16 %v4337
    %v5098 = vunpack.c.l.b16 %v4338
    %v5099 = vunpack.c.h.b16 %v4338
    %v5100 = vunpack.c.l.b16 %v4339
    %v5101 = vunpack.c.h.b16 %v4339
    %v5102 = vunpack.c.l.b16 %v4340
    %v5103 = vunpack.c.h.b16 %v4340
    %v5104 = vunpack.c.l.b16 %v4341
    %v5105 = vunpack.c.h.b16 %v4341
    %v5106 = vunpack.c.l.b16 %v4342
    %v5107 = vunpack.c.h.b16 %v4342
    %v5108 = vunpack.c.l.b16 %v4343
    %v5109 = vunpack.c.h.b16 %v4343
    %v5110 = vunpack.c.l.b16 %v4344
    %v5111 = vunpack.c.h.b16 %v4344
    %v5112 = vunpack.c.l.b16 %v4345
    %v5113 = vunpack.c.h.b16 %v4345
    %v5114 = vunpack.c.l.b16 %v4346
    %v5115 = vunpack.c.h.b16 %v4346
    %v5116 = vunpack.c.l.b16 %v4347
    %v5117 = vunpack.c.h.b16 %v4347
    %v5118 = vunpack.c.l.b16 %v4348
    %v5119 = vunpack.c.h.b16 %v4348
    %v5120 = vunpack.c.l.b16 %v4349
    %v5121 = vunpack.c.h.b16 %v4349
    %v5122 = vunpack.c.l.b16 %v4350
    %v5123 = vunpack.c.h.b16 %v4350
    %v5124 = vunpack.c.l.b16 %v4351
    %v5125 = vunpack.c.h.b16 %v4351
    %v5126 = vunpack.c.l.b16 %v4352
    %v5127 = vunpack.c.h.b16 %v4352
    %v5128 = vunpack.c.l.b16 %v4353
    %v5129 = vunpack.c.h.b16 %v4353
    %v5130 = vunpack.c.l.b16 %v4354
    %v5131 = vunpack.c.h.b16 %v4354
    %v5132 = vunpack.c.l.b16 %v4355
    %v5133 = vunpack.c.h.b16 %v4355
    %v5134 = vunpack.c.l.b16 %v4356
    %v5135 = vunpack.c.h.b16 %v4356
    %v5136 = vunpack.c.l.b16 %v4357
    %v5137 = vunpack.c.h.b16 %v4357
    %v5138 = vunpack.c.l.b16 %v4358
    %v5139 = vunpack.c.h.b16 %v4358
    %v5140 = vunpack.c.l.b16 %v4359
    %v5141 = vunpack.c.h.b16 %v4359
    %v5142 = vunpack.c.l.b16 %v4360
    %v5143 = vunpack.c.h.b16 %v4360
    %v5144 = vunpack.c.l.b16 %v4361
    %v5145 = vunpack.c.h.b16 %v4361
    %v5146 = vunpack.c.l.b16 %v4362
    %v5147 = vunpack.c.h.b16 %v4362
    %v5148 = vunpack.c.l.b16 %v4363
    %v5149 = vunpack.c.h.b16 %v4363
    %v5150 = vunpack.c.l.b16 %v4364
    %v5151 = vunpack.c.h.b16 %v4364
    %v5152 = vunpack.c.l.b16 %v4365
    %v5153 = vunpack.c.h.b16 %v4365
    %v5154 = vunpack.c.l.b16 %v4366
    %v5155 = vunpack.c.h.b16 %v4366
    %v5156 = vunpack.c.l.b16 %v4367
    %v5157 = vunpack.c.h.b16 %v4367
    %v5158 = vunpack.c.l.b16 %v4368
    %v5159 = vunpack.c.h.b16 %v4368
    %v5160 = vunpack.c.l.b16 %v4369
    %v5161 = vunpack.c.h.b16 %v4369
    %v5162 = vunpack.c.l.b16 %v4370
    %v5163 = vunpack.c.h.b16 %v4370
    %v5164 = vunpack.c.l.b16 %v4371
    %v5165 = vunpack.c.h.b16 %v4371
    %v5166 = vunpack.c.l.b16 %v4372
    %v5167 = vunpack.c.h.b16 %v4372
    %v5168 = vunpack.c.l.b16 %v4373
    %v5169 = vunpack.c.h.b16 %v4373
    %v5170 = vunpack.c.l.b16 %v4374
    %v5171 = vunpack.c.h.b16 %v4374
    %v5172 = vunpack.c.l.b16 %v4375
    %v5173 = vunpack.c.h.b16 %v4375
    %v5174 = vunpack.c.l.b16 %v4376
    %v5175 = vunpack.c.h.b16 %v4376
    %v5176 = vunpack.c.l.b16 %v4377
    %v5177 = vunpack.c.h.b16 %v4377
    %v5178 = vunpack.c.l.b16 %v4378
    %v5179 = vunpack.c.h.b16 %v4378
    %v5180 = vunpack.c.l.b16 %v4379
    %v5181 = vunpack.c.h.b16 %v4379
    %v5182 = vunpack.c.l.b16 %v4380
    %v5183 = vunpack.c.h.b16 %v4380
    %v5184 = vunpack.c.l.b16 %v4381
    %v5185 = vunpack.c.h.b16 %v4381
    %v5186 = vunpack.c.l.b16 %v4382
    %v5187 = vunpack.c.h.b16 %v4382
    %v5188 = vunpack.c.l.b16 %v4383
    %v5189 = vunpack.c.h.b16 %v4383
    %v5190 = vunpack.c.l.b16 %v4384
    %v5191 = vunpack.c.h.b16 %v4384
    %v5192 = vunpack.c.l.b16 %v4385
    %v5193 = vunpack.c.h.b16 %v4385
    %v5194 = vunpack.c.l.b16 %v4386
    %v5195 = vunpack.c.h.b16 %v4386
    %v5196 = vunpack.c.l.b16 %v4387
    %v5197 = vunpack.c.h.b16 %v4387
    %v5198 = vunpack.c.l.b16 %v4388
    %v5199 = vunpack.c.h.b16 %v4388
    %v5200 = vunpack.c.l.b16 %v4389
    %v5201 = vunpack.c.h.b16 %v4389
    %v5202 = vunpack.c.l.b16 %v4390
    %v5203 = vunpack.c.h.b16 %v4390
    %v5204 = vunpack.c.l.b16 %v4391
    %v5205 = vunpack.c.h.b16 %v4391
    %v5206 = vunpack.c.l.b16 %v4392
    %v5207 = vunpack.c.h.b16 %v4392
    %v5208 = vunpack.c.l.b16 %v4393
    %v5209 = vunpack.c.h.b16 %v4393
    %v5210 = vunpack.c.l.b16 %v4394
    %v5211 = vunpack.c.h.b16 %v4394
    %v5212 = vunpack.c.l.b16 %v4395
    %v5213 = vunpack.c.h.b16 %v4395
    %v5214 = vunpack.c.l.b16 %v4396
    %v5215 = vunpack.c.h.b16 %v4396
    %v5216 = vunpack.c.l.b16 %v4397
    %v5217 = vunpack.c.h.b16 %v4397
    %v5218 = vunpack.c.l.b16 %v4398
    %v5219 = vunpack.c.h.b16 %v4398
    %v5220 = vunpack.c.l.b16 %v4399
    %v5221 = vunpack.c.h.b16 %v4399
    %v5222 = vunpack.c.l.b16 %v4400
    %v5223 = vunpack.c.h.b16 %v4400
    %v5224 = vunpack.c.l.b16 %v4401
    %v5225 = vunpack.c.h.b16 %v4401
    %v5226 = vunpack.c.l.b16 %v4402
    %v5227 = vunpack.c.h.b16 %v4402
    %v5228 = vunpack.c.l.b16 %v4403
    %v5229 = vunpack.c.h.b16 %v4403
    %v5230 = vunpack.c.l.b16 %v4404
    %v5231 = vunpack.c.h.b16 %v4404
    %v5232 = vunpack.c.l.b16 %v4405
    %v5233 = vunpack.c.h.b16 %v4405
    %v5234 = vunpack.c.l.b16 %v4406
    %v5235 = vunpack.c.h.b16 %v4406
    %v5236 = vunpack.c.l.b16 %v4407
    %v5237 = vunpack.c.h.b16 %v4407
    %v5238 = vunpack.c.l.b16 %v4408
    %v5239 = vunpack.c.h.b16 %v4408
    %v5240 = vunpack.c.l.b16 %v4409
    %v5241 = vunpack.c.h.b16 %v4409
    %v5242 = vunpack.c.l.b16 %v4410
    %v5243 = vunpack.c.h.b16 %v4410
    %v5244 = vunpack.c.l.b16 %v4411
    %v5245 = vunpack.c.h.b16 %v4411
    %v5246 = vunpack.c.l.b16 %v4412
    %v5247 = vunpack.c.h.b16 %v4412
    %v5248 = vunpack.c.l.b16 %v4413
    %v5249 = vunpack.c.h.b16 %v4413
    %v5250 = vunpack.c.l.b16 %v4414
    %v5251 = vunpack.c.h.b16 %v4414
    %v5252 = vunpack.c.l.b16 %v4415
    %v5253 = vunpack.c.h.b16 %v4415
    %v5254 = vunpack.c.l.b16 %v4416
    %v5255 = vunpack.c.h.b16 %v4416
    %v5256 = vunpack.c.l.b16 %v4417
    %v5257 = vunpack.c.h.b16 %v4417
    %v5258 = vunpack.c.l.b16 %v4418
    %v5259 = vunpack.c.h.b16 %v4418
    %v5260 = vunpack.c.l.b16 %v4419
    %v5261 = vunpack.c.h.b16 %v4419
    %v5262 = vunpack.c.l.b16 %v4420
    %v5263 = vunpack.c.h.b16 %v4420
    %v5264 = vunpack.c.l.b16 %v4421
    %v5265 = vunpack.c.h.b16 %v4421
    %v5266 = vunpack.c.l.b16 %v4422
    %v5267 = vunpack.c.h.b16 %v4422
    %v5268 = vunpack.c.l.b16 %v4423
    %v5269 = vunpack.c.h.b16 %v4423
    %v5270 = vunpack.c.l.b16 %v4424
    %v5271 = vunpack.c.h.b16 %v4424
    %v5272 = vunpack.c.l.b16 %v4425
    %v5273 = vunpack.c.h.b16 %v4425
    %v5274 = vunpack.c.l.b16 %v4426
    %v5275 = vunpack.c.h.b16 %v4426
    %v5276 = vunpack.c.l.b16 %v4427
    %v5277 = vunpack.c.h.b16 %v4427
    %v5278 = vunpack.c.l.b16 %v4428
    %v5279 = vunpack.c.h.b16 %v4428
    %v5280 = vunpack.c.l.b16 %v4429
    %v5281 = vunpack.c.h.b16 %v4429
    %v5282 = vunpack.c.l.b16 %v4430
    %v5283 = vunpack.c.h.b16 %v4430
    %v5284 = vunpack.c.l.b16 %v4431
    %v5285 = vunpack.c.h.b16 %v4431
    %v5286 = vunpack.c.l.b16 %v4432
    %v5287 = vunpack.c.h.b16 %v4432
    %v5288 = vunpack.c.l.b16 %v4433
    %v5289 = vunpack.c.h.b16 %v4433
    %v5290 = vunpack.c.l.b16 %v4434
    %v5291 = vunpack.c.h.b16 %v4434
    %v5292 = vunpack.c.l.b16 %v4435
    %v5293 = vunpack.c.h.b16 %v4435
    %v5294 = vunpack.c.l.b16 %v4436
    %v5295 = vunpack.c.h.b16 %v4436
    %v5296 = vunpack.c.l.b16 %v4437
    %v5297 = vunpack.c.h.b16 %v4437
    %v5298 = vunpack.c.l.b16 %v4438
    %v5299 = vunpack.c.h.b16 %v4438
    %v5300 = vunpack.c.l.b16 %v4439
    %v5301 = vunpack.c.h.b16 %v4439
    %v5302 = vunpack.c.l.b16 %v4440
    %v5303 = vunpack.c.h.b16 %v4440
    %v5304 = vunpack.c.l.b16 %v4441
    %v5305 = vunpack.c.h.b16 %v4441
    %v5306 = vunpack.c.l.b16 %v4442
    %v5307 = vunpack.c.h.b16 %v4442
    %v5308 = vunpack.c.l.b16 %v4443
    %v5309 = vunpack.c.h.b16 %v4443
    %v5310 = vunpack.c.l.b16 %v4444
    %v5311 = vunpack.c.h.b16 %v4444
    %v5312 = vunpack.c.l.b16 %v4445
    %v5313 = vunpack.c.h.b16 %v4445
    %v5314 = vunpack.c.l.b16 %v4446
    %v5315 = vunpack.c.h.b16 %v4446
    %v5316 = vunpack.c.l.b16 %v4447
    %v5317 = vunpack.c.h.b16 %v4447
    %v5318 = vunpack.c.l.b16 %v4448
    %v5319 = vunpack.c.h.b16 %v4448
    %v5320 = vunpack.c.l.b16 %v4449
    %v5321 = vunpack.c.h.b16 %v4449
    %v5322 = vunpack.c.l.b16 %v4450
    %v5323 = vunpack.c.h.b16 %v4450
    %v5324 = vunpack.c.l.b16 %v4451
    %v5325 = vunpack.c.h.b16 %v4451
    %v5326 = vunpack.c.l.b16 %v4452
    %v5327 = vunpack.c.h.b16 %v4452
    %v5328 = vunpack.c.l.b16 %v4453
    %v5329 = vunpack.c.h.b16 %v4453
    %v5330 = vunpack.c.l.b16 %v4454
    %v5331 = vunpack.c.h.b16 %v4454
    %v5332 = vunpack.c.l.b16 %v4455
    %v5333 = vunpack.c.h.b16 %v4455
    %v5334 = vunpack.c.l.b16 %v4456
    %v5335 = vunpack.c.h.b16 %v4456
    %v5336 = vunpack.c.l.b16 %v4457
    %v5337 = vunpack.c.h.b16 %v4457
    %v5338 = vunpack.c.l.b16 %v4458
    %v5339 = vunpack.c.h.b16 %v4458
    %v5340 = vunpack.c.l.b16 %v4459
    %v5341 = vunpack.c.h.b16 %v4459
    %v5342 = vunpack.c.l.b16 %v4460
    %v5343 = vunpack.c.h.b16 %v4460
    %v5344 = vunpack.c.l.b16 %v4461
    %v5345 = vunpack.c.h.b16 %v4461
    %v5346 = vunpack.c.l.b16 %v4462
    %v5347 = vunpack.c.h.b16 %v4462
    %v5348 = vunpack.c.l.b16 %v4463
    %v5349 = vunpack.c.h.b16 %v4463
    %v5350 = vunpack.c.l.b16 %v4464
    %v5351 = vunpack.c.h.b16 %v4464
    %v5352 = vunpack.c.l.b16 %v4465
    %v5353 = vunpack.c.h.b16 %v4465
    %v5354 = vunpack.c.l.b16 %v4466
    %v5355 = vunpack.c.h.b16 %v4466
    %v5356 = vunpack.c.l.b16 %v4467
    %v5357 = vunpack.c.h.b16 %v4467
    %v5358 = vunpack.c.l.b16 %v4468
    %v5359 = vunpack.c.h.b16 %v4468
    %v5360 = vunpack.c.l.b16 %v4469
    %v5361 = vunpack.c.h.b16 %v4469
    %v5362 = vunpack.c.l.b16 %v4470
    %v5363 = vunpack.c.h.b16 %v4470
    %v5364 = vunpack.c.l.b16 %v4471
    %v5365 = vunpack.c.h.b16 %v4471
    %v5366 = vunpack.c.l.b16 %v4472
    %v5367 = vunpack.c.h.b16 %v4472
    %v5368 = vunpack.c.l.b16 %v4473
    %v5369 = vunpack.c.h.b16 %v4473
    %v5370 = vunpack.c.l.b16 %v4474
    %v5371 = vunpack.c.h.b16 %v4474
    %v5372 = vunpack.c.l.b16 %v4475
    %v5373 = vunpack.c.h.b16 %v4475
    %v5374 = vunpack.c.l.b16 %v4476
    %v5375 = vunpack.c.h.b16 %v4476
    %v5376 = vunpack.c.l.b16 %v4477
    %v5377 = vunpack.c.h.b16 %v4477
    %v5378 = vunpack.c.l.b16 %v4478
    %v5379 = vunpack.c.h.b16 %v4478
    %v5380 = vunpack.c.l.b16 %v4479
    %v5381 = vunpack.c.h.b16 %v4479
    %v5382 = vunpack.c.l.b16 %v4480
    %v5383 = vunpack.c.h.b16 %v4480
    %v5384 = vunpack.c.l.b16 %v4481
    %v5385 = vunpack.c.h.b16 %v4481
    %v5386 = vunpack.c.l.b16 %v4482
    %v5387 = vunpack.c.h.b16 %v4482
    %v5388 = vunpack.c.l.b16 %v4483
    %v5389 = vunpack.c.h.b16 %v4483
    %v5390 = vunpack.c.l.b16 %v4484
    %v5391 = vunpack.c.h.b16 %v4484
    %v5392 = vunpack.c.l.b16 %v4485
    %v5393 = vunpack.c.h.b16 %v4485
    %v5394 = vunpack.c.l.b16 %v4486
    %v5395 = vunpack.c.h.b16 %v4486
    %v5396 = vunpack.c.l.b16 %v4487
    %v5397 = vunpack.c.h.b16 %v4487
    %v5398 = vunpack.c.l.b16 %v4488
    %v5399 = vunpack.c.h.b16 %v4488
    %v5400 = vunpack.c.l.b16 %v4489
    %v5401 = vunpack.c.h.b16 %v4489
    %v5402 = vunpack.c.l.b16 %v4490
    %v5403 = vunpack.c.h.b16 %v4490
    %v5404 = vunpack.c.l.b16 %v4491
    %v5405 = vunpack.c.h.b16 %v4491
    %v5406 = vunpack.c.l.b16 %v4492
    %v5407 = vunpack.c.h.b16 %v4492
    %v5408 = vunpack.c.l.b16 %v4493
    %v5409 = vunpack.c.h.b16 %v4493
    %v5410 = vunpack.c.l.b16 %v4494
    %v5411 = vunpack.c.h.b16 %v4494
    %v5412 = vunpack.c.l.b16 %v4495
    %v5413 = vunpack.c.h.b16 %v4495
    %v5414 = vunpack.c.l.b16 %v4496
    %v5415 = vunpack.c.h.b16 %v4496
    %v5416 = vunpack.c.l.b16 %v4497
    %v5417 = vunpack.c.h.b16 %v4497
    %v5418 = vunpack.c.l.b16 %v4498
    %v5419 = vunpack.c.h.b16 %v4498
    %v5420 = vunpack.c.l.b16 %v4499
    %v5421 = vunpack.c.h.b16 %v4499
    %v5422 = vunpack.c.l.b16 %v4500
    %v5423 = vunpack.c.h.b16 %v4500
    %v5424 = vunpack.c.l.b16 %v4501
    %v5425 = vunpack.c.h.b16 %v4501
    %v5426 = vunpack.c.l.b16 %v4502
    %v5427 = vunpack.c.h.b16 %v4502
    %v5428 = vunpack.c.l.b16 %v4503
    %v5429 = vunpack.c.h.b16 %v4503
    %v5430 = vunpack.c.l.b16 %v4504
    %v5431 = vunpack.c.h.b16 %v4504
    %v5432 = vunpack.c.l.b16 %v4505
    %v5433 = vunpack.c.h.b16 %v4505
    %v5434 = vpack.c.b16 %v4870, %v4858
    %v5435 = vpack.c.b16 %v4871, %v4859
    %v5436 = vpack.c.b16 %v4872, %v4860
    %v5437 = vpack.c.b16 %v4873, %v4861
    %v5438 = vpack.c.b16 %v4874, %v4862
    %v5439 = vpack.c.b16 %v4875, %v4863
    %v5440 = vpack.c.b16 %v4876, %v4864
    %v5441 = vpack.c.b16 %v4877, %v4865
    %v5442 = vpack.c.b16 %v4878, %v4866
    %v5443 = vpack.c.b16 %v4879, %v4867
    %v5444 = vpack.c.b16 %v4880, %v4868
    %v5445 = vpack.c.b16 %v4881, %v4869
    %v5446 = vpack.c.b16 %v4894, %v4882
    %v5447 = vpack.c.b16 %v4895, %v4883
    %v5448 = vpack.c.b16 %v4896, %v4884
    %v5449 = vpack.c.b16 %v4897, %v4885
    %v5450 = vpack.c.b16 %v4898, %v4886
    %v5451 = vpack.c.b16 %v4899, %v4887
    %v5452 = vpack.c.b16 %v4900, %v4888
    %v5453 = vpack.c.b16 %v4901, %v4889
    %v5454 = vpack.c.b16 %v4902, %v4890
    %v5455 = vpack.c.b16 %v4903, %v4891
    %v5456 = vpack.c.b16 %v4904, %v4892
    %v5457 = vpack.c.b16 %v4905, %v4893
    %v5458 = vpack.c.b16 %v4918, %v4906
    %v5459 = vpack.c.b16 %v4919, %v4907
    %v5460 = vpack.c.b16 %v4920, %v4908
    %v5461 = vpack.c.b16 %v4921, %v4909
    %v5462 = vpack.c.b16 %v4922, %v4910
    %v5463 = vpack.c.b16 %v4923, %v4911
    %v5464 = vpack.c.b16 %v4924, %v4912
    %v5465 = vpack.c.b16 %v4925, %v4913
    %v5466 = vpack.c.b16 %v4926, %v4914
    %v5467 = vpack.c.b16 %v4927, %v4915
    %v5468 = vpack.c.b16 %v4928, %v4916
    %v5469 = vpack.c.b16 %v4929, %v4917
    %v5470 = vpack.c.b16 %v4942, %v4930
    %v5471 = vpack.c.b16 %v4943, %v4931
    %v5472 = vpack.c.b16 %v4944, %v4932
    %v5473 = vpack.c.b16 %v4945, %v4933
    %v5474 = vpack.c.b16 %v4946, %v4934
    %v5475 = vpack.c.b16 %v4947, %v4935
    %v5476 = vpack.c.b16 %v4948, %v4936
    %v5477 = vpack.c.b16 %v4949, %v4937
    %v5478 = vpack.c.b16 %v4950, %v4938
    %v5479 = vpack.c.b16 %v4951, %v4939
    %v5480 = vpack.c.b16 %v4952, %v4940
    %v5481 = vpack.c.b16 %v4953, %v4941
    %v5482 = vpack.c.b16 %v4966, %v4954
    %v5483 = vpack.c.b16 %v4967, %v4955
    %v5484 = vpack.c.b16 %v4968, %v4956
    %v5485 = vpack.c.b16 %v4969, %v4957
    %v5486 = vpack.c.b16 %v4970, %v4958
    %v5487 = vpack.c.b16 %v4971, %v4959
    %v5488 = vpack.c.b16 %v4972, %v4960
    %v5489 = vpack.c.b16 %v4973, %v4961
    %v5490 = vpack.c.b16 %v4974, %v4962
    %v5491 = vpack.c.b16 %v4975, %v4963
    %v5492 = vpack.c.b16 %v4976, %v4964
    %v5493 = vpack.c.b16 %v4977, %v4965
    %v5494 = vpack.c.b16 %v4990, %v4978
    %v5495 = vpack.c.b16 %v4991, %v4979
    %v5496 = vpack.c.b16 %v4992, %v4980
    %v5497 = vpack.c.b16 %v4993, %v4981
    %v5498 = vpack.c.b16 %v4994, %v4982
    %v5499 = vpack.c.b16 %v4995, %v4983
    %v5500 = vpack.c.b16 %v4996, %v4984
    %v5501 = vpack.c.b16 %v4997, %v4985
    %v5502 = vpack.c.b16 %v4998, %v4986
    %v5503 = vpack.c.b16 %v4999, %v4987
    %v5504 = vpack.c.b16 %v5000, %v4988
    %v5505 = vpack.c.b16 %v5001, %v4989
    %v5506 = vpack.c.b16 %v5014, %v5002
    %v5507 = vpack.c.b16 %v5015, %v5003
    %v5508 = vpack.c.b16 %v5016, %v5004
    %v5509 = vpack.c.b16 %v5017, %v5005
    %v5510 = vpack.c.b16 %v5018, %v5006
    %v5511 = vpack.c.b16 %v5019, %v5007
    %v5512 = vpack.c.b16 %v5020, %v5008
    %v5513 = vpack.c.b16 %v5021, %v5009
    %v5514 = vpack.c.b16 %v5022, %v5010
    %v5515 = vpack.c.b16 %v5023, %v5011
    %v5516 = vpack.c.b16 %v5024, %v5012
    %v5517 = vpack.c.b16 %v5025, %v5013
    %v5518 = vpack.c.b16 %v5038, %v5026
    %v5519 = vpack.c.b16 %v5039, %v5027
    %v5520 = vpack.c.b16 %v5040, %v5028
    %v5521 = vpack.c.b16 %v5041, %v5029
    %v5522 = vpack.c.b16 %v5042, %v5030
    %v5523 = vpack.c.b16 %v5043, %v5031
    %v5524 = vpack.c.b16 %v5044, %v5032
    %v5525 = vpack.c.b16 %v5045, %v5033
    %v5526 = vpack.c.b16 %v5046, %v5034
    %v5527 = vpack.c.b16 %v5047, %v5035
    %v5528 = vpack.c.b16 %v5048, %v5036
    %v5529 = vpack.c.b16 %v5049, %v5037
    %v5530 = vpack.c.b16 %v5062, %v5050
    %v5531 = vpack.c.b16 %v5063, %v5051
    %v5532 = vpack.c.b16 %v5064, %v5052
    %v5533 = vpack.c.b16 %v5065, %v5053
    %v5534 = vpack.c.b16 %v5066, %v5054
    %v5535 = vpack.c.b16 %v5067, %v5055
    %v5536 = vpack.c.b16 %v5068, %v5056
    %v5537 = vpack.c.b16 %v5069, %v5057
    %v5538 = vpack.c.b16 %v5070, %v5058
    %v5539 = vpack.c.b16 %v5071, %v5059
    %v5540 = vpack.c.b16 %v5072, %v5060
    %v5541 = vpack.c.b16 %v5073, %v5061
    %v5542 = vpack.c.b16 %v5086, %v5074
    %v5543 = vpack.c.b16 %v5087, %v5075
    %v5544 = vpack.c.b16 %v5088, %v5076
    %v5545 = vpack.c.b16 %v5089, %v5077
    %v5546 = vpack.c.b16 %v5090, %v5078
    %v5547 = vpack.c.b16 %v5091, %v5079
    %v5548 = vpack.c.b16 %v5092, %v5080
    %v5549 = vpack.c.b16 %v5093, %v5081
    %v5550 = vpack.c.b16 %v5094, %v5082
    %v5551 = vpack.c.b16 %v5095, %v5083
    %v5552 = vpack.c.b16 %v5096, %v5084
    %v5553 = vpack.c.b16 %v5097, %v5085
    %v5554 = vpack.c.b16 %v5110, %v5098
    %v5555 = vpack.c.b16 %v5111, %v5099
    %v5556 = vpack.c.b16 %v5112, %v5100
    %v5557 = vpack.c.b16 %v5113, %v5101
    %v5558 = vpack.c.b16 %v5114, %v5102
    %v5559 = vpack.c.b16 %v5115, %v5103
    %v5560 = vpack.c.b16 %v5116, %v5104
    %v5561 = vpack.c.b16 %v5117, %v5105
    %v5562 = vpack.c.b16 %v5118, %v5106
    %v5563 = vpack.c.b16 %v5119, %v5107
    %v5564 = vpack.c.b16 %v5120, %v5108
    %v5565 = vpack.c.b16 %v5121, %v5109
    %v5566 = vpack.c.b16 %v5134, %v5122
    %v5567 = vpack.c.b16 %v5135, %v5123
    %v5568 = vpack.c.b16 %v5136, %v5124
    %v5569 = vpack.c.b16 %v5137, %v5125
    %v5570 = vpack.c.b16 %v5138, %v5126
    %v5571 = vpack.c.b16 %v5139, %v5127
    %v5572 = vpack.c.b16 %v5140, %v5128
    %v5573 = vpack.c.b16 %v5141, %v5129
    %v5574 = vpack.c.b16 %v5142, %v5130
    %v5575 = vpack.c.b16 %v5143, %v5131
    %v5576 = vpack.c.b16 %v5144, %v5132
    %v5577 = vpack.c.b16 %v5145, %v5133
    %v5578 = vpack.c.b16 %v5158, %v5146
    %v5579 = vpack.c.b16 %v5159, %v5147
    %v5580 = vpack.c.b16 %v5160, %v5148
    %v5581 = vpack.c.b16 %v5161, %v5149
    %v5582 = vpack.c.b16 %v5162, %v5150
    %v5583 = vpack.c.b16 %v5163, %v5151
    %v5584 = vpack.c.b16 %v5164, %v5152
    %v5585 = vpack.c.b16 %v5165, %v5153
    %v5586 = vpack.c.b16 %v5166, %v5154
    %v5587 = vpack.c.b16 %v5167, %v5155
    %v5588 = vpack.c.b16 %v5168, %v5156
    %v5589 = vpack.c.b16 %v5169, %v5157
    %v5590 = vpack.c.b16 %v5182, %v5170
    %v5591 = vpack.c.b16 %v5183, %v5171
    %v5592 = vpack.c.b16 %v5184, %v5172
    %v5593 = vpack.c.b16 %v5185, %v5173
    %v5594 = vpack.c.b16 %v5186, %v5174
    %v5595 = vpack.c.b16 %v5187, %v5175
    %v5596 = vpack.c.b16 %v5188, %v5176
    %v5597 = vpack.c.b16 %v5189, %v5177
    %v5598 = vpack.c.b16 %v5190, %v5178
    %v5599 = vpack.c.b16 %v5191, %v5179
    %v5600 = vpack.c.b16 %v5192, %v5180
    %v5601 = vpack.c.b16 %v5193, %v5181
    %v5602 = vpack.c.b16 %v5206, %v5194
    %v5603 = vpack.c.b16 %v5207, %v5195
    %v5604 = vpack.c.b16 %v5208, %v5196
    %v5605 = vpack.c.b16 %v5209, %v5197
    %v5606 = vpack.c.b16 %v5210, %v5198
    %v5607 = vpack.c.b16 %v5211, %v5199
    %v5608 = vpack.c.b16 %v5212, %v5200
    %v5609 = vpack.c.b16 %v5213, %v5201
    %v5610 = vpack.c.b16 %v5214, %v5202
    %v5611 = vpack.c.b16 %v5215, %v5203
    %v5612 = vpack.c.b16 %v5216, %v5204
    %v5613 = vpack.c.b16 %v5217, %v5205
    %v5614 = vpack.c.b16 %v5230, %v5218
    %v5615 = vpack.c.b16 %v5231, %v5219
    %v5616 = vpack.c.b16 %v5232, %v5220
    %v5617 = vpack.c.b16 %v5233, %v5221
    %v5618 = vpack.c.b16 %v5234, %v5222
    %v5619 = vpack.c.b16 %v5235, %v5223
    %v5620 = vpack.c.b16 %v5236, %v5224
    %v5621 = vpack.c.b16 %v5237, %v5225
    %v5622 = vpack.c.b16 %v5238, %v5226
    %v5623 = vpack.c.b16 %v5239, %v5227
    %v5624 = vpack.c.b16 %v5240, %v5228
    %v5625 = vpack.c.b16 %v5241, %v5229
    %v5626 = vpack.c.b16 %v5254, %v5242
    %v5627 = vpack.c.b16 %v5255, %v5243
    %v5628 = vpack.c.b16 %v5256, %v5244
    %v5629 = vpack.c.b16 %v5257, %v5245
    %v5630 = vpack.c.b16 %v5258, %v5246
    %v5631 = vpack.c.b16 %v5259, %v5247
    %v5632 = vpack.c.b16 %v5260, %v5248
    %v5633 = vpack.c.b16 %v5261, %v5249
    %v5634 = vpack.c.b16 %v5262, %v5250
    %v5635 = vpack.c.b16 %v5263, %v5251
    %v5636 = vpack.c.b16 %v5264, %v5252
    %v5637 = vpack.c.b16 %v5265, %v5253
    %v5638 = vpack.c.b16 %v5278, %v5266
    %v5639 = vpack.c.b16 %v5279, %v5267
    %v5640 = vpack.c.b16 %v5280, %v5268
    %v5641 = vpack.c.b16 %v5281, %v5269
    %v5642 = vpack.c.b16 %v5282, %v5270
    %v5643 = vpack.c.b16 %v5283, %v5271
    %v5644 = vpack.c.b16 %v5284, %v5272
    %v5645 = vpack.c.b16 %v5285, %v5273
    %v5646 = vpack.c.b16 %v5286, %v5274
    %v5647 = vpack.c.b16 %v5287, %v5275
    %v5648 = vpack.c.b16 %v5288, %v5276
    %v5649 = vpack.c.b16 %v5289, %v5277
    %v5650 = vpack.c.b16 %v5302, %v5290
    %v5651 = vpack.c.b16 %v5303, %v5291
    %v5652 = vpack.c.b16 %v5304, %v5292
    %v5653 = vpack.c.b16 %v5305, %v5293
    %v5654 = vpack.c.b16 %v5306, %v5294
    %v5655 = vpack.c.b16 %v5307, %v5295
    %v5656 = vpack.c.b16 %v5308, %v5296
    %v5657 = vpack.c.b16 %v5309, %v5297
    %v5658 = vpack.c.b16 %v5310, %v5298
    %v5659 = vpack.c.b16 %v5311, %v5299
    %v5660 = vpack.c.b16 %v5312, %v5300
    %v5661 = vpack.c.b16 %v5313, %v5301
    %v5662 = vpack.c.b16 %v5326, %v5314
    %v5663 = vpack.c.b16 %v5327, %v5315
    %v5664 = vpack.c.b16 %v5328, %v5316
    %v5665 = vpack.c.b16 %v5329, %v5317
    %v5666 = vpack.c.b16 %v5330, %v5318
    %v5667 = vpack.c.b16 %v5331, %v5319
    %v5668 = vpack.c.b16 %v5332, %v5320
    %v5669 = vpack.c.b16 %v5333, %v5321
    %v5670 = vpack.c.b16 %v5334, %v5322
    %v5671 = vpack.c.b16 %v5335, %v5323
    %v5672 = vpack.c.b16 %v5336, %v5324
    %v5673 = vpack.c.b16 %v5337, %v5325
    %v5674 = vpack.c.b16 %v5350, %v5338
    %v5675 = vpack.c.b16 %v5351, %v5339
    %v5676 = vpack.c.b16 %v5352, %v5340
    %v5677 = vpack.c.b16 %v5353, %v5341
    %v5678 = vpack.c.b16 %v5354, %v5342
    %v5679 = vpack.c.b16 %v5355, %v5343
    %v5680 = vpack.c.b16 %v5356, %v5344
    %v5681 = vpack.c.b16 %v5357, %v5345
    %v5682 = vpack.c.b16 %v5358, %v5346
    %v5683 = vpack.c.b16 %v5359, %v5347
    %v5684 = vpack.c.b16 %v5360, %v5348
    %v5685 = vpack.c.b16 %v5361, %v5349
    %v5686 = vpack.c.b16 %v5374, %v5362
    %v5687 = vpack.c.b16 %v5375, %v5363
    %v5688 = vpack.c.b16 %v5376, %v5364
    %v5689 = vpack.c.b16 %v5377, %v5365
    %v5690 = vpack.c.b16 %v5378, %v5366
    %v5691 = vpack.c.b16 %v5379, %v5367
    %v5692 = vpack.c.b16 %v5380, %v5368
    %v5693 = vpack.c.b16 %v5381, %v5369
    %v5694 = vpack.c.b16 %v5382, %v5370
    %v5695 = vpack.c.b16 %v5383, %v5371
    %v5696 = vpack.c.b16 %v5384, %v5372
    %v5697 = vpack.c.b16 %v5385, %v5373
    %v5698 = vpack.c.b16 %v5398, %v5386
    %v5699 = vpack.c.b16 %v5399, %v5387
    %v5700 = vpack.c.b16 %v5400, %v5388
    %v5701 = vpack.c.b16 %v5401, %v5389
    %v5702 = vpack.c.b16 %v5402, %v5390
    %v5703 = vpack.c.b16 %v5403, %v5391
    %v5704 = vpack.c.b16 %v5404, %v5392
    %v5705 = vpack.c.b16 %v5405, %v5393
    %v5706 = vpack.c.b16 %v5406, %v5394
    %v5707 = vpack.c.b16 %v5407, %v5395
    %v5708 = vpack.c.b16 %v5408, %v5396
    %v5709 = vpack.c.b16 %v5409, %v5397
    %v5710 = vpack.c.b16 %v5422, %v5410
    %v5711 = vpack.c.b16 %v5423, %v5411
    %v5712 = vpack.c.b16 %v5424, %v5412
    %v5713 = vpack.c.b16 %v5425, %v5413
    %v5714 = vpack.c.b16 %v5426, %v5414
    %v5715 = vpack.c.b16 %v5427, %v5415
    %v5716 = vpack.c.b16 %v5428, %v5416
    %v5717 = vpack.c.b16 %v5429, %v5417
    %v5718 = vpack.c.b16 %v5430, %v5418
    %v5719 = vpack.c.b16 %v5431, %v5419
    %v5720 = vpack.c.b16 %v5432, %v5420
    %v5721 = vpack.c.b16 %v5433, %v5421
    %6010 = vmatprep.subr.bf16.mxu0 %v5435
    %6011 = vmatpush1.bf16.msra.mxu0 %v5434
    %6012 = vmatprep.subr.bf16.mxu0 %v5447
    %6013 = vmatpush1.bf16.msra.mxu0 %v5446
    %6014 = vmatprep.subr.bf16.mxu0 %v5459
    %6015 = vmatpush1.bf16.msra.mxu0 %v5458
    %6016 = vmatprep.subr.bf16.mxu0 %v5471
    %6017 = vmatpush1.bf16.msra.mxu0 %v5470
    %6018 = vmatprep.subr.bf16.mxu0 %v5483
    %6019 = vmatpush1.bf16.msra.mxu0 %v5482
    %6020 = vmatprep.subr.bf16.mxu0 %v5495
    %6021 = vmatpush1.bf16.msra.mxu0 %v5494
    %6022 = vmatprep.subr.bf16.mxu0 %v5507
    %6023 = vmatpush1.bf16.msra.mxu0 %v5506
    %6024 = vmatprep.subr.bf16.mxu0 %v5519
    %6025 = vmatpush1.bf16.msra.mxu0 %v5518
    %6026 = vmatprep.subr.bf16.mxu0 %v5531
    %6027 = vmatpush1.bf16.msra.mxu0 %v5530
    %6028 = vmatprep.subr.bf16.mxu0 %v5543
    %6029 = vmatpush1.bf16.msra.mxu0 %v5542
    %6030 = vmatprep.subr.bf16.mxu0 %v5555
    %6031 = vmatpush1.bf16.msra.mxu0 %v5554
    %6032 = vmatprep.subr.bf16.mxu0 %v5567
    %6033 = vmatpush1.bf16.msra.mxu0 %v5566
    %6034 = vmatprep.subr.bf16.mxu0 %v5579
    %6035 = vmatpush1.bf16.msra.mxu0 %v5578
    %6036 = vmatprep.subr.bf16.mxu0 %v5591
    %6037 = vmatpush1.bf16.msra.mxu0 %v5590
    %6038 = vmatprep.subr.bf16.mxu0 %v5603
    %6039 = vmatpush1.bf16.msra.mxu0 %v5602
    %6040 = vmatprep.subr.bf16.mxu0 %v5615
    %6041 = vmatpush1.bf16.msra.mxu0 %v5614
    %6042 = vmatprep.mubr.bf16.mxu0 %v4213
    %6043 = vmatmul.mubr.bf16.gmra.mrb[0].mxu0 %v4212
    %v6044 = vpop.f32.mrb[0].mxu0
    %v6045 = vadd.f32 %v4513, %v6044
    %v6046 = vpop.f32.mrb[0].mxu0
    %v6047 = vadd.f32 %v4517, %v6046
    %v6048 = vpop.f32.mrb[0].mxu0
    %v6049 = vadd.f32 %v4513, %v6048
    %v6050 = vpop.f32.mrb[0].mxu0
    %v6051 = vadd.f32 %v4517, %v6050
    %6052 = vmatprep.mubr.bf16.mxu0 %v4216
    %6053 = vmatmul.mubr.bf16.gmra.mrb[0].mxu0 %v4215
    %v6054 = vpop.f32.mrb[0].mxu0
    %v6055 = vadd.f32 %v4513, %v6054
    %v6056 = vpop.f32.mrb[0].mxu0
    %v6057 = vadd.f32 %v4517, %v6056
    %v6058 = vpop.f32.mrb[0].mxu0
    %v6059 = vadd.f32 %v4513, %v6058
    %v6060 = vpop.f32.mrb[0].mxu0
    %v6061 = vadd.f32 %v4517, %v6060
    %6062 = vdwg.mxu0
    %6063 = vmatprep.subr.bf16.mxu0 %v5627
    %6064 = vmatpush1.bf16.msra.mxu0 %v5626
    %6065 = vmatprep.subr.bf16.mxu0 %v5639
    %6066 = vmatpush1.bf16.msra.mxu0 %v5638
    %6067 = vmatprep.subr.bf16.mxu0 %v5651
    %6068 = vmatpush1.bf16.msra.mxu0 %v5650
    %6069 = vmatprep.subr.bf16.mxu0 %v5663
    %6070 = vmatpush1.bf16.msra.mxu0 %v5662
    %6071 = vmatprep.subr.bf16.mxu0 %v5675
    %6072 = vmatpush1.bf16.msra.mxu0 %v5674
    %6073 = vmatprep.subr.bf16.mxu0 %v5687
    %6074 = vmatpush1.bf16.msra.mxu0 %v5686
    %6075 = vmatprep.subr.bf16.mxu0 %v5699
    %6076 = vmatpush1.bf16.msra.mxu0 %v5698
    %6077 = vmatprep.subr.bf16.mxu0 %v5711
    %6078 = vmatpush1.bf16.msra.mxu0 %v5710
    %6079 = vmatprep.subr.bf16.mxu0 0
    %6080 = vmatpush1.bf16.msra.mxu0 0
    %6081 = vmatprep.subr.bf16.mxu0 0
    %6082 = vmatpush1.bf16.msra.mxu0 0
    %6083 = vmatprep.subr.bf16.mxu0 0
    %6084 = vmatpush1.bf16.msra.mxu0 0
    %6085 = vmatprep.subr.bf16.mxu0 0
    %6086 = vmatpush1.bf16.msra.mxu0 0
    %6087 = vmatprep.subr.bf16.mxu0 0
    %6088 = vmatpush1.bf16.msra.mxu0 0
    %6089 = vmatprep.subr.bf16.mxu0 0
    %6090 = vmatpush1.bf16.msra.mxu0 0
    %6091 = vmatprep.subr.bf16.mxu0 0
    %6092 = vmatpush1.bf16.msra.mxu0 0
    %6093 = vmatprep.subr.bf16.mxu0 0
    %6094 = vmatpush1.bf16.msra.mxu0 0
    %6095 = vmatprep.mubr.bf16.mxu0 0
    %6096 = vmatmul.mubr.bf16.gmra.mrb[0].mxu0 %v4214
    %v6097 = vpop.f32.mrb[0].mxu0
    %v6098 = vadd.f32 %v6045, %v6097
    %v6099 = vpop.f32.mrb[0].mxu0
    %v6100 = vadd.f32 %v6047, %v6099
    %v6101 = vpop.f32.mrb[0].mxu0
    %v6102 = vadd.f32 %v6049, %v6101
    %v6103 = vpop.f32.mrb[0].mxu0
    %v6104 = vadd.f32 %v6051, %v6103
    %6105 = vmatprep.mubr.bf16.mxu0 0
    %6106 = vmatmul.mubr.bf16.gmra.mrb[0].mxu0 %v4217
    %v6107 = vpop.f32.mrb[0].mxu0
    %v6108 = vadd.f32 %v6055, %v6107
    %v6109 = vpop.f32.mrb[0].mxu0
    %v6110 = vadd.f32 %v6057, %v6109
    %v6111 = vpop.f32.mrb[0].mxu0
    %v6112 = vadd.f32 %v6059, %v6111
    %v6113 = vpop.f32.mrb[0].mxu0
    %v6114 = vadd.f32 %v6061, %v6113
    %6115 = vdwg.mxu0
    %6116 = vmatprep.subr.bf16.mxu0 %v5437
    %6117 = vmatpush1.bf16.msra.mxu0 %v5436
    %6118 = vmatprep.subr.bf16.mxu0 %v5449
    %6119 = vmatpush1.bf16.msra.mxu0 %v5448
    %6120 = vmatprep.subr.bf16.mxu0 %v5461
    %6121 = vmatpush1.bf16.msra.mxu0 %v5460
    %6122 = vmatprep.subr.bf16.mxu0 %v5473
    %6123 = vmatpush1.bf16.msra.mxu0 %v5472
    %6124 = vmatprep.subr.bf16.mxu0 %v5485
    %6125 = vmatpush1.bf16.msra.mxu0 %v5484
    %6126 = vmatprep.subr.bf16.mxu0 %v5497
    %6127 = vmatpush1.bf16.msra.mxu0 %v5496
    %6128 = vmatprep.subr.bf16.mxu0 %v5509
    %6129 = vmatpush1.bf16.msra.mxu0 %v5508
    %6130 = vmatprep.subr.bf16.mxu0 %v5521
    %6131 = vmatpush1.bf16.msra.mxu0 %v5520
    %6132 = vmatprep.subr.bf16.mxu0 %v5533
    %6133 = vmatpush1.bf16.msra.mxu0 %v5532
    %6134 = vmatprep.subr.bf16.mxu0 %v5545
    %6135 = vmatpush1.bf16.msra.mxu0 %v5544
    %6136 = vmatprep.subr.bf16.mxu0 %v5557
    %6137 = vmatpush1.bf16.msra.mxu0 %v5556
    %6138 = vmatprep.subr.bf16.mxu0 %v5569
    %6139 = vmatpush1.bf16.msra.mxu0 %v5568
    %6140 = vmatprep.subr.bf16.mxu0 %v5581
    %6141 = vmatpush1.bf16.msra.mxu0 %v5580
    %6142 = vmatprep.subr.bf16.mxu0 %v5593
    %6143 = vmatpush1.bf16.msra.mxu0 %v5592
    %6144 = vmatprep.subr.bf16.mxu0 %v5605
    %6145 = vmatpush1.bf16.msra.mxu0 %v5604
    %6146 = vmatprep.subr.bf16.mxu0 %v5617
    %6147 = vmatpush1.bf16.msra.mxu0 %v5616
    %6148 = vmatprep.mubr.bf16.mxu0 %v4213
    %6149 = vmatmul.mubr.bf16.gmra.mrb[0].mxu0 %v4212
    %v6150 = vpop.f32.mrb[0].mxu0
    %v6151 = vadd.f32 %v4521, %v6150
    %v6152 = vpop.f32.mrb[0].mxu0
    %v6153 = vadd.f32 %v4525, %v6152
    %v6154 = vpop.f32.mrb[0].mxu0
    %v6155 = vadd.f32 %v4521, %v6154
    %v6156 = vpop.f32.mrb[0].mxu0
    %v6157 = vadd.f32 %v4525, %v6156
    %6158 = vmatprep.mubr.bf16.mxu0 %v4216
    %6159 = vmatmul.mubr.bf16.gmra.mrb[0].mxu0 %v4215
    %v6160 = vpop.f32.mrb[0].mxu0
    %v6161 = vadd.f32 %v4521, %v6160
    %v6162 = vpop.f32.mrb[0].mxu0
    %v6163 = vadd.f32 %v4525, %v6162
    %v6164 = vpop.f32.mrb[0].mxu0
    %v6165 = vadd.f32 %v4521, %v6164
    %v6166 = vpop.f32.mrb[0].mxu0
    %v6167 = vadd.f32 %v4525, %v6166
    %6168 = vdwg.mxu0
    %6169 = vmatprep.subr.bf16.mxu0 %v5629
    %6170 = vmatpush1.bf16.msra.mxu0 %v5628
    %6171 = vmatprep.subr.bf16.mxu0 %v5641
    %6172 = vmatpush1.bf16.msra.mxu0 %v5640
    %6173 = vmatprep.subr.bf16.mxu0 %v5653
    %6174 = vmatpush1.bf16.msra.mxu0 %v5652
    %6175 = vmatprep.subr.bf16.mxu0 %v5665
    %6176 = vmatpush1.bf16.msra.mxu0 %v5664
    %6177 = vmatprep.subr.bf16.mxu0 %v5677
    %6178 = vmatpush1.bf16.msra.mxu0 %v5676
    %6179 = vmatprep.subr.bf16.mxu0 %v5689
    %6180 = vmatpush1.bf16.msra.mxu0 %v5688
    %6181 = vmatprep.subr.bf16.mxu0 %v5701
    %6182 = vmatpush1.bf16.msra.mxu0 %v5700
    %6183 = vmatprep.subr.bf16.mxu0 %v5713
    %6184 = vmatpush1.bf16.msra.mxu0 %v5712
    %6185 = vmatprep.subr.bf16.mxu0 0
    %6186 = vmatpush1.bf16.msra.mxu0 0
    %6187 = vmatprep.subr.bf16.mxu0 0
    %6188 = vmatpush1.bf16.msra.mxu0 0
    %6189 = vmatprep.subr.bf16.mxu0 0
    %6190 = vmatpush1.bf16.msra.mxu0 0
    %6191 = vmatprep.subr.bf16.mxu0 0
    %6192 = vmatpush1.bf16.msra.mxu0 0
    %6193 = vmatprep.subr.bf16.mxu0 0
    %6194 = vmatpush1.bf16.msra.mxu0 0
    %6195 = vmatprep.subr.bf16.mxu0 0
    %6196 = vmatpush1.bf16.msra.mxu0 0
    %6197 = vmatprep.subr.bf16.mxu0 0
    %6198 = vmatpush1.bf16.msra.mxu0 0
    %6199 = vmatprep.subr.bf16.mxu0 0
    %6200 = vmatpush1.bf16.msra.mxu0 0
    %6201 = vmatprep.mubr.bf16.mxu0 0
    %6202 = vmatmul.mubr.bf16.gmra.mrb[0].mxu0 %v4214
    %v6203 = vpop.f32.mrb[0].mxu0
    %v6204 = vadd.f32 %v6151, %v6203
    %v6205 = vpop.f32.mrb[0].mxu0
    %v6206 = vadd.f32 %v6153, %v6205
    %v6207 = vpop.f32.mrb[0].mxu0
    %v6208 = vadd.f32 %v6155, %v6207
    %v6209 = vpop.f32.mrb[0].mxu0
    %v6210 = vadd.f32 %v6157, %v6209
    %6211 = vmatprep.mubr.bf16.mxu0 0
    %6212 = vmatmul.mubr.bf16.gmra.mrb[0].mxu0 %v4217
    %v6213 = vpop.f32.mrb[0].mxu0
    %v6214 = vadd.f32 %v6161, %v6213
    %v6215 = vpop.f32.mrb[0].mxu0
    %v6216 = vadd.f32 %v6163, %v6215
    %v6217 = vpop.f32.mrb[0].mxu0
    %v6218 = vadd.f32 %v6165, %v6217
    %v6219 = vpop.f32.mrb[0].mxu0
    %v6220 = vadd.f32 %v6167, %v6219
    %6221 = vdwg.mxu0
    %6222 = vmatprep.subr.bf16.mxu0 %v5439
    %6223 = vmatpush1.bf16.msra.mxu0 %v5438
    %6224 = vmatprep.subr.bf16.mxu0 %v5451
    %6225 = vmatpush1.bf16.msra.mxu0 %v5450
    %6226 = vmatprep.subr.bf16.mxu0 %v5463
    %6227 = vmatpush1.bf16.msra.mxu0 %v5462
    %6228 = vmatprep.subr.bf16.mxu0 %v5475
    %6229 = vmatpush1.bf16.msra.mxu0 %v5474
    %6230 = vmatprep.subr.bf16.mxu0 %v5487
    %6231 = vmatpush1.bf16.msra.mxu0 %v5486
    %6232 = vmatprep.subr.bf16.mxu0 %v5499
    %6233 = vmatpush1.bf16.msra.mxu0 %v5498
    %6234 = vmatprep.subr.bf16.mxu0 %v5511
    %6235 = vmatpush1.bf16.msra.mxu0 %v5510
    %6236 = vmatprep.subr.bf16.mxu0 %v5523
    %6237 = vmatpush1.bf16.msra.mxu0 %v5522
    %6238 = vmatprep.subr.bf16.mxu0 %v5535
    %6239 = vmatpush1.bf16.msra.mxu0 %v5534
    %6240 = vmatprep.subr.bf16.mxu0 %v5547
    %6241 = vmatpush1.bf16.msra.mxu0 %v5546
    %6242 = vmatprep.subr.bf16.mxu0 %v5559
    %6243 = vmatpush1.bf16.msra.mxu0 %v5558
    %6244 = vmatprep.subr.bf16.mxu0 %v5571
    %6245 = vmatpush1.bf16.msra.mxu0 %v5570
    %6246 = vmatprep.subr.bf16.mxu0 %v5583
    %6247 = vmatpush1.bf16.msra.mxu0 %v5582
    %6248 = vmatprep.subr.bf16.mxu0 %v5595
    %6249 = vmatpush1.bf16.msra.mxu0 %v5594
    %6250 = vmatprep.subr.bf16.mxu0 %v5607
    %6251 = vmatpush1.bf16.msra.mxu0 %v5606
    %6252 = vmatprep.subr.bf16.mxu0 %v5619
    %6253 = vmatpush1.bf16.msra.mxu0 %v5618
    %6254 = vmatprep.mubr.bf16.mxu0 %v4213
    %6255 = vmatmul.mubr.bf16.gmra.mrb[0].mxu0 %v4212
    %v6256 = vpop.f32.mrb[0].mxu0
    %v6257 = vadd.f32 %v4529, %v6256
    %v6258 = vpop.f32.mrb[0].mxu0
    %v6259 = vadd.f32 %v4533, %v6258
    %v6260 = vpop.f32.mrb[0].mxu0
    %v6261 = vadd.f32 %v4529, %v6260
    %v6262 = vpop.f32.mrb[0].mxu0
    %v6263 = vadd.f32 %v4533, %v6262
    %6264 = vmatprep.mubr.bf16.mxu0 %v4216
    %6265 = vmatmul.mubr.bf16.gmra.mrb[0].mxu0 %v4215
    %v6266 = vpop.f32.mrb[0].mxu0
    %v6267 = vadd.f32 %v4529, %v6266
    %v6268 = vpop.f32.mrb[0].mxu0
    %v6269 = vadd.f32 %v4533, %v6268
    %v6270 = vpop.f32.mrb[0].mxu0
    %v6271 = vadd.f32 %v4529, %v6270
    %v6272 = vpop.f32.mrb[0].mxu0
    %v6273 = vadd.f32 %v4533, %v6272
    %6274 = vdwg.mxu0
    %6275 = vmatprep.subr.bf16.mxu0 %v5631
    %6276 = vmatpush1.bf16.msra.mxu0 %v5630
    %6277 = vmatprep.subr.bf16.mxu0 %v5643
    %6278 = vmatpush1.bf16.msra.mxu0 %v5642
    %6279 = vmatprep.subr.bf16.mxu0 %v5655
    %6280 = vmatpush1.bf16.msra.mxu0 %v5654
    %6281 = vmatprep.subr.bf16.mxu0 %v5667
    %6282 = vmatpush1.bf16.msra.mxu0 %v5666
    %6283 = vmatprep.subr.bf16.mxu0 %v5679
    %6284 = vmatpush1.bf16.msra.mxu0 %v5678
    %6285 = vmatprep.subr.bf16.mxu0 %v5691
    %6286 = vmatpush1.bf16.msra.mxu0 %v5690
    %6287 = vmatprep.subr.bf16.mxu0 %v5703
    %6288 = vmatpush1.bf16.msra.mxu0 %v5702
    %6289 = vmatprep.subr.bf16.mxu0 %v5715
    %6290 = vmatpush1.bf16.msra.mxu0 %v5714
    %6291 = vmatprep.subr.bf16.mxu0 0
    %6292 = vmatpush1.bf16.msra.mxu0 0
    %6293 = vmatprep.subr.bf16.mxu0 0
    %6294 = vmatpush1.bf16.msra.mxu0 0
    %6295 = vmatprep.subr.bf16.mxu0 0
    %6296 = vmatpush1.bf16.msra.mxu0 0
    %6297 = vmatprep.subr.bf16.mxu0 0
    %6298 = vmatpush1.bf16.msra.mxu0 0
    %6299 = vmatprep.subr.bf16.mxu0 0
    %6300 = vmatpush1.bf16.msra.mxu0 0
    %6301 = vmatprep.subr.bf16.mxu0 0
    %6302 = vmatpush1.bf16.msra.mxu0 0
    %6303 = vmatprep.subr.bf16.mxu0 0
    %6304 = vmatpush1.bf16.msra.mxu0 0
    %6305 = vmatprep.subr.bf16.mxu0 0
    %6306 = vmatpush1.bf16.msra.mxu0 0
    %6307 = vmatprep.mubr.bf16.mxu0 0
    %6308 = vmatmul.mubr.bf16.gmra.mrb[0].mxu0 %v4214
    %v6309 = vpop.f32.mrb[0].mxu0
    %v6310 = vadd.f32 %v6257, %v6309
    %v6311 = vpop.f32.mrb[0].mxu0
    %v6312 = vadd.f32 %v6259, %v6311
    %v6313 = vpop.f32.mrb[0].mxu0
    %v6314 = vadd.f32 %v6261, %v6313
    %v6315 = vpop.f32.mrb[0].mxu0
    %v6316 = vadd.f32 %v6263, %v6315
    %6317 = vmatprep.mubr.bf16.mxu0 0
    %6318 = vmatmul.mubr.bf16.gmra.mrb[0].mxu0 %v4217
    %v6319 = vpop.f32.mrb[0].mxu0
    %v6320 = vadd.f32 %v6267, %v6319
    %v6321 = vpop.f32.mrb[0].mxu0
    %v6322 = vadd.f32 %v6269, %v6321
    %v6323 = vpop.f32.mrb[0].mxu0
    %v6324 = vadd.f32 %v6271, %v6323
    %v6325 = vpop.f32.mrb[0].mxu0
    %v6326 = vadd.f32 %v6273, %v6325
    %6327 = vdwg.mxu0
    %6328 = vmatprep.subr.bf16.mxu0 %v5441
    %6329 = vmatpush1.bf16.msra.mxu0 %v5440
    %6330 = vmatprep.subr.bf16.mxu0 %v5453
    %6331 = vmatpush1.bf16.msra.mxu0 %v5452
    %6332 = vmatprep.subr.bf16.mxu0 %v5465
    %6333 = vmatpush1.bf16.msra.mxu0 %v5464
    %6334 = vmatprep.subr.bf16.mxu0 %v5477
    %6335 = vmatpush1.bf16.msra.mxu0 %v5476
    %6336 = vmatprep.subr.bf16.mxu0 %v5489
    %6337 = vmatpush1.bf16.msra.mxu0 %v5488
    %6338 = vmatprep.subr.bf16.mxu0 %v5501
    %6339 = vmatpush1.bf16.msra.mxu0 %v5500
    %6340 = vmatprep.subr.bf16.mxu0 %v5513
    %6341 = vmatpush1.bf16.msra.mxu0 %v5512
    %6342 = vmatprep.subr.bf16.mxu0 %v5525
    %6343 = vmatpush1.bf16.msra.mxu0 %v5524
    %6344 = vmatprep.subr.bf16.mxu0 %v5537
    %6345 = vmatpush1.bf16.msra.mxu0 %v5536
    %6346 = vmatprep.subr.bf16.mxu0 %v5549
    %6347 = vmatpush1.bf16.msra.mxu0 %v5548
    %6348 = vmatprep.subr.bf16.mxu0 %v5561
    %6349 = vmatpush1.bf16.msra.mxu0 %v5560
    %6350 = vmatprep.subr.bf16.mxu0 %v5573
    %6351 = vmatpush1.bf16.msra.mxu0 %v5572
    %6352 = vmatprep.subr.bf16.mxu0 %v5585
    %6353 = vmatpush1.bf16.msra.mxu0 %v5584
    %6354 = vmatprep.subr.bf16.mxu0 %v5597
    %6355 = vmatpush1.bf16.msra.mxu0 %v5596
    %6356 = vmatprep.subr.bf16.mxu0 %v5609
    %6357 = vmatpush1.bf16.msra.mxu0 %v5608
    %6358 = vmatprep.subr.bf16.mxu0 %v5621
    %6359 = vmatpush1.bf16.msra.mxu0 %v5620
    %6360 = vmatprep.mubr.bf16.mxu0 %v4213
    %6361 = vmatmul.mubr.bf16.gmra.mrb[0].mxu0 %v4212
    %v6362 = vpop.f32.mrb[0].mxu0
    %v6363 = vadd.f32 %v4537, %v6362
    %v6364 = vpop.f32.mrb[0].mxu0
    %v6365 = vadd.f32 %v4541, %v6364
    %v6366 = vpop.f32.mrb[0].mxu0
    %v6367 = vadd.f32 %v4537, %v6366
    %v6368 = vpop.f32.mrb[0].mxu0
    %v6369 = vadd.f32 %v4541, %v6368
    %6370 = vmatprep.mubr.bf16.mxu0 %v4216
    %6371 = vmatmul.mubr.bf16.gmra.mrb[0].mxu0 %v4215
    %v6372 = vpop.f32.mrb[0].mxu0
    %v6373 = vadd.f32 %v4537, %v6372
    %v6374 = vpop.f32.mrb[0].mxu0
    %v6375 = vadd.f32 %v4541, %v6374
    %v6376 = vpop.f32.mrb[0].mxu0
    %v6377 = vadd.f32 %v4537, %v6376
    %v6378 = vpop.f32.mrb[0].mxu0
    %v6379 = vadd.f32 %v4541, %v6378
    %6380 = vdwg.mxu0
    %6381 = vmatprep.subr.bf16.mxu0 %v5633
    %6382 = vmatpush1.bf16.msra.mxu0 %v5632
    %6383 = vmatprep.subr.bf16.mxu0 %v5645
    %6384 = vmatpush1.bf16.msra.mxu0 %v5644
    %6385 = vmatprep.subr.bf16.mxu0 %v5657
    %6386 = vmatpush1.bf16.msra.mxu0 %v5656
    %6387 = vmatprep.subr.bf16.mxu0 %v5669
    %6388 = vmatpush1.bf16.msra.mxu0 %v5668
    %6389 = vmatprep.subr.bf16.mxu0 %v5681
    %6390 = vmatpush1.bf16.msra.mxu0 %v5680
    %6391 = vmatprep.subr.bf16.mxu0 %v5693
    %6392 = vmatpush1.bf16.msra.mxu0 %v5692
    %6393 = vmatprep.subr.bf16.mxu0 %v5705
    %6394 = vmatpush1.bf16.msra.mxu0 %v5704
    %6395 = vmatprep.subr.bf16.mxu0 %v5717
    %6396 = vmatpush1.bf16.msra.mxu0 %v5716
    %6397 = vmatprep.subr.bf16.mxu0 0
    %6398 = vmatpush1.bf16.msra.mxu0 0
    %6399 = vmatprep.subr.bf16.mxu0 0
    %6400 = vmatpush1.bf16.msra.mxu0 0
    %6401 = vmatprep.subr.bf16.mxu0 0
    %6402 = vmatpush1.bf16.msra.mxu0 0
    %6403 = vmatprep.subr.bf16.mxu0 0
    %6404 = vmatpush1.bf16.msra.mxu0 0
    %6405 = vmatprep.subr.bf16.mxu0 0
    %6406 = vmatpush1.bf16.msra.mxu0 0
    %6407 = vmatprep.subr.bf16.mxu0 0
    %6408 = vmatpush1.bf16.msra.mxu0 0
    %6409 = vmatprep.subr.bf16.mxu0 0
    %6410 = vmatpush1.bf16.msra.mxu0 0
    %6411 = vmatprep.subr.bf16.mxu0 0
    %6412 = vmatpush1.bf16.msra.mxu0 0
    %6413 = vmatprep.mubr.bf16.mxu0 0
    %6414 = vmatmul.mubr.bf16.gmra.mrb[0].mxu0 %v4214
    %v6415 = vpop.f32.mrb[0].mxu0
    %v6416 = vadd.f32 %v6363, %v6415
    %v6417 = vpop.f32.mrb[0].mxu0
    %v6418 = vadd.f32 %v6365, %v6417
    %v6419 = vpop.f32.mrb[0].mxu0
    %v6420 = vadd.f32 %v6367, %v6419
    %v6421 = vpop.f32.mrb[0].mxu0
    %v6422 = vadd.f32 %v6369, %v6421
    %6423 = vmatprep.mubr.bf16.mxu0 0
    %6424 = vmatmul.mubr.bf16.gmra.mrb[0].mxu0 %v4217
    %v6425 = vpop.f32.mrb[0].mxu0
    %v6426 = vadd.f32 %v6373, %v6425
    %v6427 = vpop.f32.mrb[0].mxu0
    %v6428 = vadd.f32 %v6375, %v6427
    %v6429 = vpop.f32.mrb[0].mxu0
    %v6430 = vadd.f32 %v6377, %v6429
    %v6431 = vpop.f32.mrb[0].mxu0
    %v6432 = vadd.f32 %v6379, %v6431
    %6433 = vdwg.mxu0
    %6434 = vmatprep.subr.bf16.mxu0 %v5443
    %6435 = vmatpush1.bf16.msra.mxu0 %v5442
    %6436 = vmatprep.subr.bf16.mxu0 %v5455
    %6437 = vmatpush1.bf16.msra.mxu0 %v5454
    %6438 = vmatprep.subr.bf16.mxu0 %v5467
    %6439 = vmatpush1.bf16.msra.mxu0 %v5466
    %6440 = vmatprep.subr.bf16.mxu0 %v5479
    %6441 = vmatpush1.bf16.msra.mxu0 %v5478
    %6442 = vmatprep.subr.bf16.mxu0 %v5491
    %6443 = vmatpush1.bf16.msra.mxu0 %v5490
    %6444 = vmatprep.subr.bf16.mxu0 %v5503
    %6445 = vmatpush1.bf16.msra.mxu0 %v5502
    %6446 = vmatprep.subr.bf16.mxu0 %v5515
    %6447 = vmatpush1.bf16.msra.mxu0 %v5514
    %6448 = vmatprep.subr.bf16.mxu0 %v5527
    %6449 = vmatpush1.bf16.msra.mxu0 %v5526
    %6450 = vmatprep.subr.bf16.mxu0 %v5539
    %6451 = vmatpush1.bf16.msra.mxu0 %v5538
    %6452 = vmatprep.subr.bf16.mxu0 %v5551
    %6453 = vmatpush1.bf16.msra.mxu0 %v5550
    %6454 = vmatprep.subr.bf16.mxu0 %v5563
    %6455 = vmatpush1.bf16.msra.mxu0 %v5562
    %6456 = vmatprep.subr.bf16.mxu0 %v5575
    %6457 = vmatpush1.bf16.msra.mxu0 %v5574
    %6458 = vmatprep.subr.bf16.mxu0 %v5587
    %6459 = vmatpush1.bf16.msra.mxu0 %v5586
    %6460 = vmatprep.subr.bf16.mxu0 %v5599
    %6461 = vmatpush1.bf16.msra.mxu0 %v5598
    %6462 = vmatprep.subr.bf16.mxu0 %v5611
    %6463 = vmatpush1.bf16.msra.mxu0 %v5610
    %6464 = vmatprep.subr.bf16.mxu0 %v5623
    %6465 = vmatpush1.bf16.msra.mxu0 %v5622
    %6466 = vmatprep.mubr.bf16.mxu0 %v4213
    %6467 = vmatmul.mubr.bf16.gmra.mrb[0].mxu0 %v4212
    %v6468 = vpop.f32.mrb[0].mxu0
    %v6469 = vadd.f32 %v4545, %v6468
    %v6470 = vpop.f32.mrb[0].mxu0
    %v6471 = vadd.f32 %v4549, %v6470
    %v6472 = vpop.f32.mrb[0].mxu0
    %v6473 = vadd.f32 %v4545, %v6472
    %v6474 = vpop.f32.mrb[0].mxu0
    %v6475 = vadd.f32 %v4549, %v6474
    %6476 = vmatprep.mubr.bf16.mxu0 %v4216
    %6477 = vmatmul.mubr.bf16.gmra.mrb[0].mxu0 %v4215
    %v6478 = vpop.f32.mrb[0].mxu0
    %v6479 = vadd.f32 %v4545, %v6478
    %v6480 = vpop.f32.mrb[0].mxu0
    %v6481 = vadd.f32 %v4549, %v6480
    %v6482 = vpop.f32.mrb[0].mxu0
    %v6483 = vadd.f32 %v4545, %v6482
    %v6484 = vpop.f32.mrb[0].mxu0
    %v6485 = vadd.f32 %v4549, %v6484
    %6486 = vdwg.mxu0
    %6487 = vmatprep.subr.bf16.mxu0 %v5635
    %6488 = vmatpush1.bf16.msra.mxu0 %v5634
    %6489 = vmatprep.subr.bf16.mxu0 %v5647
    %6490 = vmatpush1.bf16.msra.mxu0 %v5646
    %6491 = vmatprep.subr.bf16.mxu0 %v5659
    %6492 = vmatpush1.bf16.msra.mxu0 %v5658
    %6493 = vmatprep.subr.bf16.mxu0 %v5671
    %6494 = vmatpush1.bf16.msra.mxu0 %v5670
    %6495 = vmatprep.subr.bf16.mxu0 %v5683
    %6496 = vmatpush1.bf16.msra.mxu0 %v5682
    %6497 = vmatprep.subr.bf16.mxu0 %v5695
    %6498 = vmatpush1.bf16.msra.mxu0 %v5694
    %6499 = vmatprep.subr.bf16.mxu0 %v5707
    %6500 = vmatpush1.bf16.msra.mxu0 %v5706
    %6501 = vmatprep.subr.bf16.mxu0 %v5719
    %6502 = vmatpush1.bf16.msra.mxu0 %v5718
    %6503 = vmatprep.subr.bf16.mxu0 0
    %6504 = vmatpush1.bf16.msra.mxu0 0
    %6505 = vmatprep.subr.bf16.mxu0 0
    %6506 = vmatpush1.bf16.msra.mxu0 0
    %6507 = vmatprep.subr.bf16.mxu0 0
    %6508 = vmatpush1.bf16.msra.mxu0 0
    %6509 = vmatprep.subr.bf16.mxu0 0
    %6510 = vmatpush1.bf16.msra.mxu0 0
    %6511 = vmatprep.subr.bf16.mxu0 0
    %6512 = vmatpush1.bf16.msra.mxu0 0
    %6513 = vmatprep.subr.bf16.mxu0 0
    %6514 = vmatpush1.bf16.msra.mxu0 0
    %6515 = vmatprep.subr.bf16.mxu0 0
    %6516 = vmatpush1.bf16.msra.mxu0 0
    %6517 = vmatprep.subr.bf16.mxu0 0
    %6518 = vmatpush1.bf16.msra.mxu0 0
    %6519 = vmatprep.mubr.bf16.mxu0 0
    %6520 = vmatmul.mubr.bf16.gmra.mrb[0].mxu0 %v4214
    %v6521 = vpop.f32.mrb[0].mxu0
    %v6522 = vadd.f32 %v6469, %v6521
    %v6523 = vpop.f32.mrb[0].mxu0
    %v6524 = vadd.f32 %v6471, %v6523
    %v6525 = vpop.f32.mrb[0].mxu0
    %v6526 = vadd.f32 %v6473, %v6525
    %v6527 = vpop.f32.mrb[0].mxu0
    %v6528 = vadd.f32 %v6475, %v6527
    %6529 = vmatprep.mubr.bf16.mxu0 0
    %6530 = vmatmul.mubr.bf16.gmra.mrb[0].mxu0 %v4217
    %v6531 = vpop.f32.mrb[0].mxu0
    %v6532 = vadd.f32 %v6479, %v6531
    %v6533 = vpop.f32.mrb[0].mxu0
    %v6534 = vadd.f32 %v6481, %v6533
    %v6535 = vpop.f32.mrb[0].mxu0
    %v6536 = vadd.f32 %v6483, %v6535
    %v6537 = vpop.f32.mrb[0].mxu0
    %v6538 = vadd.f32 %v6485, %v6537
    %6539 = vdwg.mxu0
    %6540 = vmatprep.subr.bf16.mxu0 %v5445
    %6541 = vmatpush1.bf16.msra.mxu0 %v5444
    %6542 = vmatprep.subr.bf16.mxu0 %v5457
    %6543 = vmatpush1.bf16.msra.mxu0 %v5456
    %6544 = vmatprep.subr.bf16.mxu0 %v5469
    %6545 = vmatpush1.bf16.msra.mxu0 %v5468
    %6546 = vmatprep.subr.bf16.mxu0 %v5481
    %6547 = vmatpush1.bf16.msra.mxu0 %v5480
    %6548 = vmatprep.subr.bf16.mxu0 %v5493
    %6549 = vmatpush1.bf16.msra.mxu0 %v5492
    %6550 = vmatprep.subr.bf16.mxu0 %v5505
    %6551 = vmatpush1.bf16.msra.mxu0 %v5504
    %6552 = vmatprep.subr.bf16.mxu0 %v5517
    %6553 = vmatpush1.bf16.msra.mxu0 %v5516
    %6554 = vmatprep.subr.bf16.mxu0 %v5529
    %6555 = vmatpush1.bf16.msra.mxu0 %v5528
    %6556 = vmatprep.subr.bf16.mxu0 %v5541
    %6557 = vmatpush1.bf16.msra.mxu0 %v5540
    %6558 = vmatprep.subr.bf16.mxu0 %v5553
    %6559 = vmatpush1.bf16.msra.mxu0 %v5552
    %6560 = vmatprep.subr.bf16.mxu0 %v5565
    %6561 = vmatpush1.bf16.msra.mxu0 %v5564
    %6562 = vmatprep.subr.bf16.mxu0 %v5577
    %6563 = vmatpush1.bf16.msra.mxu0 %v5576
    %6564 = vmatprep.subr.bf16.mxu0 %v5589
    %6565 = vmatpush1.bf16.msra.mxu0 %v5588
    %6566 = vmatprep.subr.bf16.mxu0 %v5601
    %6567 = vmatpush1.bf16.msra.mxu0 %v5600
    %6568 = vmatprep.subr.bf16.mxu0 %v5613
    %6569 = vmatpush1.bf16.msra.mxu0 %v5612
    %6570 = vmatprep.subr.bf16.mxu0 %v5625
    %6571 = vmatpush1.bf16.msra.mxu0 %v5624
    %6572 = vmatprep.mubr.bf16.mxu0 %v4213
    %6573 = vmatmul.mubr.bf16.gmra.mrb[0].mxu0 %v4212
    %v6574 = vpop.f32.mrb[0].mxu0
    %v6575 = vadd.f32 %v4553, %v6574
    %v6576 = vpop.f32.mrb[0].mxu0
    %v6577 = vadd.f32 %v4557, %v6576
    %v6578 = vpop.f32.mrb[0].mxu0
    %v6579 = vadd.f32 %v4553, %v6578
    %v6580 = vpop.f32.mrb[0].mxu0
    %v6581 = vadd.f32 %v4557, %v6580
    %6582 = vmatprep.mubr.bf16.mxu0 %v4216
    %6583 = vmatmul.mubr.bf16.gmra.mrb[0].mxu0 %v4215
    %v6584 = vpop.f32.mrb[0].mxu0
    %v6585 = vadd.f32 %v4553, %v6584
    %v6586 = vpop.f32.mrb[0].mxu0
    %v6587 = vadd.f32 %v4557, %v6586
    %v6588 = vpop.f32.mrb[0].mxu0
    %v6589 = vadd.f32 %v4553, %v6588
    %v6590 = vpop.f32.mrb[0].mxu0
    %v6591 = vadd.f32 %v4557, %v6590
    %6592 = vdwg.mxu0
    %6593 = vmatprep.subr.bf16.mxu0 %v5637
    %6594 = vmatpush1.bf16.msra.mxu0 %v5636
    %6595 = vmatprep.subr.bf16.mxu0 %v5649
    %6596 = vmatpush1.bf16.msra.mxu0 %v5648
    %6597 = vmatprep.subr.bf16.mxu0 %v5661
    %6598 = vmatpush1.bf16.msra.mxu0 %v5660
    %6599 = vmatprep.subr.bf16.mxu0 %v5673
    %6600 = vmatpush1.bf16.msra.mxu0 %v5672
    %6601 = vmatprep.subr.bf16.mxu0 %v5685
    %6602 = vmatpush1.bf16.msra.mxu0 %v5684
    %6603 = vmatprep.subr.bf16.mxu0 %v5697
    %6604 = vmatpush1.bf16.msra.mxu0 %v5696
    %6605 = vmatprep.subr.bf16.mxu0 %v5709
    %6606 = vmatpush1.bf16.msra.mxu0 %v5708
    %6607 = vmatprep.subr.bf16.mxu0 %v5721
    %6608 = vmatpush1.bf16.msra.mxu0 %v5720
    %6609 = vmatprep.subr.bf16.mxu0 0
    %6610 = vmatpush1.bf16.msra.mxu0 0
    %6611 = vmatprep.subr.bf16.mxu0 0
    %6612 = vmatpush1.bf16.msra.mxu0 0
    %6613 = vmatprep.subr.bf16.mxu0 0
    %6614 = vmatpush1.bf16.msra.mxu0 0
    %6615 = vmatprep.subr.bf16.mxu0 0
    %6616 = vmatpush1.bf16.msra.mxu0 0
    %6617 = vmatprep.subr.bf16.mxu0 0
    %6618 = vmatpush1.bf16.msra.mxu0 0
    %6619 = vmatprep.subr.bf16.mxu0 0
    %6620 = vmatpush1.bf16.msra.mxu0 0
    %6621 = vmatprep.subr.bf16.mxu0 0
    %6622 = vmatpush1.bf16.msra.mxu0 0
    %6623 = vmatprep.subr.bf16.mxu0 0
    %6624 = vmatpush1.bf16.msra.mxu0 0
    %6625 = vmatprep.mubr.bf16.mxu0 0
    %6626 = vmatmul.mubr.bf16.gmra.mrb[0].mxu0 %v4214
    %v6627 = vpop.f32.mrb[0].mxu0
    %v6628 = vadd.f32 %v6575, %v6627
    %v6629 = vpop.f32.mrb[0].mxu0
    %v6630 = vadd.f32 %v6577, %v6629
    %v6631 = vpop.f32.mrb[0].mxu0
    %v6632 = vadd.f32 %v6579, %v6631
    %v6633 = vpop.f32.mrb[0].mxu0
    %v6634 = vadd.f32 %v6581, %v6633
    %6635 = vmatprep.mubr.bf16.mxu0 0
    %6636 = vmatmul.mubr.bf16.gmra.mrb[0].mxu0 %v4217
    %v6637 = vpop.f32.mrb[0].mxu0
    %v6638 = vadd.f32 %v6585, %v6637
    %v6639 = vpop.f32.mrb[0].mxu0
    %v6640 = vadd.f32 %v6587, %v6639
    %v6641 = vpop.f32.mrb[0].mxu0
    %v6642 = vadd.f32 %v6589, %v6641
    %v6643 = vpop.f32.mrb[0].mxu0
    %v6644 = vadd.f32 %v6591, %v6643
    %6645 = vdwg.mxu0
    %v6646 = vmax.f32 %v6098, 0.0
    %v6647 = vmax.f32 %v6100, 0.0
    %v6648 = vmax.f32 %v6204, 0.0
    %v6649 = vmax.f32 %v6206, 0.0
    %v6650 = vmax.f32 %v6310, 0.0
    %v6651 = vmax.f32 %v6312, 0.0
    %v6652 = vmax.f32 %v6416, 0.0
    %v6653 = vmax.f32 %v6418, 0.0
    %v6654 = vmax.f32 %v6522, 0.0
    %v6655 = vmax.f32 %v6524, 0.0
    %v6656 = vmax.f32 %v6628, 0.0
    %v6657 = vmax.f32 %v6630, 0.0
    %v6658 = vmax.f32 %v6102, 0.0
    %v6659 = vmax.f32 %v6104, 0.0
    %v6660 = vmax.f32 %v6208, 0.0
    %v6661 = vmax.f32 %v6210, 0.0
    %v6662 = vmax.f32 %v6314, 0.0
    %v6663 = vmax.f32 %v6316, 0.0
    %v6664 = vmax.f32 %v6420, 0.0
    %v6665 = vmax.f32 %v6422, 0.0
    %v6666 = vmax.f32 %v6526, 0.0
    %v6667 = vmax.f32 %v6528, 0.0
    %v6668 = vmax.f32 %v6632, 0.0
    %v6669 = vmax.f32 %v6634, 0.0
    %v6670 = vmax.f32 %v6108, 0.0
    %v6671 = vmax.f32 %v6110, 0.0
    %v6672 = vmax.f32 %v6214, 0.0
    %v6673 = vmax.f32 %v6216, 0.0
    %v6674 = vmax.f32 %v6320, 0.0
    %v6675 = vmax.f32 %v6322, 0.0
    %v6676 = vmax.f32 %v6426, 0.0
    %v6677 = vmax.f32 %v6428, 0.0
    %v6678 = vmax.f32 %v6532, 0.0
    %v6679 = vmax.f32 %v6534, 0.0
    %v6680 = vmax.f32 %v6638, 0.0
    %v6681 = vmax.f32 %v6640, 0.0
    %v6682 = vmax.f32 %v6112, 0.0
    %v6683 = vmax.f32 %v6114, 0.0
    %v6684 = vmax.f32 %v6218, 0.0
    %v6685 = vmax.f32 %v6220, 0.0
    %v6686 = vmax.f32 %v6324, 0.0
    %v6687 = vmax.f32 %v6326, 0.0
    %v6688 = vmax.f32 %v6430, 0.0
    %v6689 = vmax.f32 %v6432, 0.0
    %v6690 = vmax.f32 %v6536, 0.0
    %v6691 = vmax.f32 %v6538, 0.0
    %v6692 = vmax.f32 %v6642, 0.0
    %v6693 = vmax.f32 %v6644, 0.0
    %v6694 = vpack.c.bf16 %v6658, %v6646
    %v6695 = vpack.c.bf16 %v6659, %v6647
    %v6696 = vpack.c.bf16 %v6660, %v6648
    %v6697 = vpack.c.bf16 %v6661, %v6649
    %v6698 = vpack.c.bf16 %v6662, %v6650
    %v6699 = vpack.c.bf16 %v6663, %v6651
    %v6700 = vpack.c.bf16 %v6664, %v6652
    %v6701 = vpack.c.bf16 %v6665, %v6653
    %v6702 = vpack.c.bf16 %v6666, %v6654
    %v6703 = vpack.c.bf16 %v6667, %v6655
    %v6704 = vpack.c.bf16 %v6668, %v6656
    %v6705 = vpack.c.bf16 %v6669, %v6657
    %v6706 = vpack.c.bf16 %v6682, %v6670
    %v6707 = vpack.c.bf16 %v6683, %v6671
    %v6708 = vpack.c.bf16 %v6684, %v6672
    %v6709 = vpack.c.bf16 %v6685, %v6673
    %v6710 = vpack.c.bf16 %v6686, %v6674
    %v6711 = vpack.c.bf16 %v6687, %v6675
    %v6712 = vpack.c.bf16 %v6688, %v6676
    %v6713 = vpack.c.bf16 %v6689, %v6677
    %v6714 = vpack.c.bf16 %v6690, %v6678
    %v6715 = vpack.c.bf16 %v6691, %v6679
    %v6716 = vpack.c.bf16 %v6692, %v6680
    %v6717 = vpack.c.bf16 %v6693, %v6681
    %v6718 = vld [vmem:[#allocation20] sm:$0xff]
    %v6719 = vld [vmem:[#allocation20 + $0x8] sm:$0xf]
    %v6720 = vld [vmem:[#allocation20 + $0xc] sm:$0xff]
    %v6721 = vld [vmem:[#allocation20 + $0x14] sm:$0xf]
    %v6722 = vld [vmem:[#allocation20 + $0x18] sm:$0xff]
    %v6723 = vld [vmem:[#allocation20 + $0x20] sm:$0xf]
    %v6724 = vld [vmem:[#allocation20 + $0x24] sm:$0xff]
    %v6725 = vld [vmem:[#allocation20 + $0x2c] sm:$0xf]
    %v6726 = vld [vmem:[#allocation20 + $0x30] sm:$0xff]
    %v6727 = vld [vmem:[#allocation20 + $0x38] sm:$0xf]
    %v6728 = vld [vmem:[#allocation20 + $0x3c] sm:$0xff]
    %v6729 = vld [vmem:[#allocation20 + $0x44] sm:$0xf]
    %v6730 = vld [vmem:[#allocation20 + $0x48] sm:$0xff]
    %v6731 = vld [vmem:[#allocation20 + $0x50] sm:$0xf]
    %v6732 = vld [vmem:[#allocation20 + $0x54] sm:$0xff]
    %v6733 = vld [vmem:[#allocation20 + $0x5c] sm:$0xf]
    %v6734 = vld [vmem:[#allocation20 + $0x60] sm:$0xff]
    %v6735 = vld [vmem:[#allocation20 + $0x68] sm:$0xf]
    %v6736 = vld [vmem:[#allocation20 + $0x6c] sm:$0xff]
    %v6737 = vld [vmem:[#allocation20 + $0x74] sm:$0xf]
    %v6738 = vld [vmem:[#allocation20 + $0x78] sm:$0xff]
    %v6739 = vld [vmem:[#allocation20 + $0x80] sm:$0xf]
    %v6740 = vld [vmem:[#allocation20 + $0x84] sm:$0xff]
    %v6741 = vld [vmem:[#allocation20 + $0x8c] sm:$0xf]
    %v6742 = vld [vmem:[#allocation20 + $0x90] sm:$0xff]
    %v6743 = vld [vmem:[#allocation20 + $0x98] sm:$0xf]
    %v6744 = vld [vmem:[#allocation20 + $0x9c] sm:$0xff]
    %v6745 = vld [vmem:[#allocation20 + $0xa4] sm:$0xf]
    %v6746 = vld [vmem:[#allocation20 + $0xa8] sm:$0xff]
    %v6747 = vld [vmem:[#allocation20 + $0xb0] sm:$0xf]
    %v6748 = vld [vmem:[#allocation20 + $0xb4] sm:$0xff]
    %v6749 = vld [vmem:[#allocation20 + $0xbc] sm:$0xf]
    %v6750 = vld [vmem:[#allocation20 + $0xc0] sm:$0xff]
    %v6751 = vld [vmem:[#allocation20 + $0xc8] sm:$0xf]
    %v6752 = vld [vmem:[#allocation20 + $0xcc] sm:$0xff]
    %v6753 = vld [vmem:[#allocation20 + $0xd4] sm:$0xf]
    %v6754 = vld [vmem:[#allocation20 + $0xd8] sm:$0xff]
    %v6755 = vld [vmem:[#allocation20 + $0xe0] sm:$0xf]
    %v6756 = vld [vmem:[#allocation20 + $0xe4] sm:$0xff]
    %v6757 = vld [vmem:[#allocation20 + $0xec] sm:$0xf]
    %v6758 = vld [vmem:[#allocation20 + $0xf0] sm:$0xff]
    %v6759 = vld [vmem:[#allocation20 + $0xf8] sm:$0xf]
    %v6760 = vld [vmem:[#allocation20 + $0xfc] sm:$0xff]
    %v6761 = vld [vmem:[#allocation20 + $0x104] sm:$0xf]
    %v6762 = vld [vmem:[#allocation20 + $0x108] sm:$0xff]
    %v6763 = vld [vmem:[#allocation20 + $0x110] sm:$0xf]
    %v6764 = vld [vmem:[#allocation20 + $0x114] sm:$0xff]
    %v6765 = vld [vmem:[#allocation20 + $0x11c] sm:$0xf]
    %v6766 = vld [vmem:[#allocation20 + $0x120] sm:$0xff]
    %v6767 = vld [vmem:[#allocation20 + $0x128] sm:$0xf]
    %v6768 = vld [vmem:[#allocation20 + $0x12c] sm:$0xff]
    %v6769 = vld [vmem:[#allocation20 + $0x134] sm:$0xf]
    %v6770 = vld [vmem:[#allocation20 + $0x138] sm:$0xff]
    %v6771 = vld [vmem:[#allocation20 + $0x140] sm:$0xf]
    %v6772 = vld [vmem:[#allocation20 + $0x144] sm:$0xff]
    %v6773 = vld [vmem:[#allocation20 + $0x14c] sm:$0xf]
    %v6774 = vld [vmem:[#allocation20 + $0x150] sm:$0xff]
    %v6775 = vld [vmem:[#allocation20 + $0x158] sm:$0xf]
    %v6776 = vld [vmem:[#allocation20 + $0x15c] sm:$0xff]
    %v6777 = vld [vmem:[#allocation20 + $0x164] sm:$0xf]
    %v6778 = vld [vmem:[#allocation20 + $0x168] sm:$0xff]
    %v6779 = vld [vmem:[#allocation20 + $0x170] sm:$0xf]
    %v6780 = vld [vmem:[#allocation20 + $0x174] sm:$0xff]
    %v6781 = vld [vmem:[#allocation20 + $0x17c] sm:$0xf]
    %v6782 = vld [vmem:[#allocation20 + $0x180] sm:$0xff]
    %v6783 = vld [vmem:[#allocation20 + $0x188] sm:$0xf]
    %v6784 = vld [vmem:[#allocation20 + $0x18c] sm:$0xff]
    %v6785 = vld [vmem:[#allocation20 + $0x194] sm:$0xf]
    %v6786 = vld [vmem:[#allocation20 + $0x198] sm:$0xff]
    %v6787 = vld [vmem:[#allocation20 + $0x1a0] sm:$0xf]
    %v6788 = vld [vmem:[#allocation20 + $0x1a4] sm:$0xff]
    %v6789 = vld [vmem:[#allocation20 + $0x1ac] sm:$0xf]
    %v6790 = vld [vmem:[#allocation20 + $0x1b0] sm:$0xff]
    %v6791 = vld [vmem:[#allocation20 + $0x1b8] sm:$0xf]
    %v6792 = vld [vmem:[#allocation20 + $0x1bc] sm:$0xff]
    %v6793 = vld [vmem:[#allocation20 + $0x1c4] sm:$0xf]
    %v6794 = vld [vmem:[#allocation20 + $0x1c8] sm:$0xff]
    %v6795 = vld [vmem:[#allocation20 + $0x1d0] sm:$0xf]
    %v6796 = vld [vmem:[#allocation20 + $0x1d4] sm:$0xff]
    %v6797 = vld [vmem:[#allocation20 + $0x1dc] sm:$0xf]
    %v6798 = vld [vmem:[#allocation20 + $0x1e0] sm:$0xff]
    %v6799 = vld [vmem:[#allocation20 + $0x1e8] sm:$0xf]
    %v6800 = vld [vmem:[#allocation20 + $0x1ec] sm:$0xff]
    %v6801 = vld [vmem:[#allocation20 + $0x1f4] sm:$0xf]
    %v6802 = vld [vmem:[#allocation20 + $0x1f8] sm:$0xff]
    %v6803 = vld [vmem:[#allocation20 + $0x200] sm:$0xf]
    %v6804 = vld [vmem:[#allocation20 + $0x204] sm:$0xff]
    %v6805 = vld [vmem:[#allocation20 + $0x20c] sm:$0xf]
    %v6806 = vld [vmem:[#allocation20 + $0x210] sm:$0xff]
    %v6807 = vld [vmem:[#allocation20 + $0x218] sm:$0xf]
    %v6808 = vld [vmem:[#allocation20 + $0x21c] sm:$0xff]
    %v6809 = vld [vmem:[#allocation20 + $0x224] sm:$0xf]
    %v6810 = vld [vmem:[#allocation20 + $0x228] sm:$0xff]
    %v6811 = vld [vmem:[#allocation20 + $0x230] sm:$0xf]
    %v6812 = vld [vmem:[#allocation20 + $0x234] sm:$0xff]
    %v6813 = vld [vmem:[#allocation20 + $0x23c] sm:$0xf]
    %v6814 = vld [vmem:[#allocation20 + $0x240] sm:$0xff]
    %v6815 = vld [vmem:[#allocation20 + $0x248] sm:$0xf]
    %v6816 = vld [vmem:[#allocation20 + $0x24c] sm:$0xff]
    %v6817 = vld [vmem:[#allocation20 + $0x254] sm:$0xf]
    %v6818 = vld [vmem:[#allocation20 + $0x258] sm:$0xff]
    %v6819 = vld [vmem:[#allocation20 + $0x260] sm:$0xf]
    %v6820 = vld [vmem:[#allocation20 + $0x264] sm:$0xff]
    %v6821 = vld [vmem:[#allocation20 + $0x26c] sm:$0xf]
    %v6822 = vld [vmem:[#allocation20 + $0x270] sm:$0xff]
    %v6823 = vld [vmem:[#allocation20 + $0x278] sm:$0xf]
    %v6824 = vld [vmem:[#allocation20 + $0x27c] sm:$0xff]
    %v6825 = vld [vmem:[#allocation20 + $0x284] sm:$0xf]
    %v6826 = vld [vmem:[#allocation20 + $0x288] sm:$0xff]
    %v6827 = vld [vmem:[#allocation20 + $0x290] sm:$0xf]
    %v6828 = vld [vmem:[#allocation20 + $0x294] sm:$0xff]
    %v6829 = vld [vmem:[#allocation20 + $0x29c] sm:$0xf]
    %v6830 = vld [vmem:[#allocation20 + $0x2a0] sm:$0xff]
    %v6831 = vld [vmem:[#allocation20 + $0x2a8] sm:$0xf]
    %v6832 = vld [vmem:[#allocation20 + $0x2ac] sm:$0xff]
    %v6833 = vld [vmem:[#allocation20 + $0x2b4] sm:$0xf]
    %v6834 = vld [vmem:[#allocation20 + $0x2b8] sm:$0xff]
    %v6835 = vld [vmem:[#allocation20 + $0x2c0] sm:$0xf]
    %v6836 = vld [vmem:[#allocation20 + $0x2c4] sm:$0xff]
    %v6837 = vld [vmem:[#allocation20 + $0x2cc] sm:$0xf]
    %v6838 = vld [vmem:[#allocation20 + $0x2d0] sm:$0xff]
    %v6839 = vld [vmem:[#allocation20 + $0x2d8] sm:$0xf]
    %v6840 = vld [vmem:[#allocation20 + $0x2dc] sm:$0xff]
    %v6841 = vld [vmem:[#allocation20 + $0x2e4] sm:$0xf]
    %v6842 = vld [vmem:[#allocation20 + $0x2e8] sm:$0xff]
    %v6843 = vld [vmem:[#allocation20 + $0x2f0] sm:$0xf]
    %v6844 = vld [vmem:[#allocation20 + $0x2f4] sm:$0xff]
    %v6845 = vld [vmem:[#allocation20 + $0x2fc] sm:$0xf]
    %v6846 = vld [vmem:[#allocation20 + $0x300] sm:$0xff]
    %v6847 = vld [vmem:[#allocation20 + $0x308] sm:$0xf]
    %v6848 = vld [vmem:[#allocation20 + $0x30c] sm:$0xff]
    %v6849 = vld [vmem:[#allocation20 + $0x314] sm:$0xf]
    %v6850 = vld [vmem:[#allocation20 + $0x318] sm:$0xff]
    %v6851 = vld [vmem:[#allocation20 + $0x320] sm:$0xf]
    %v6852 = vld [vmem:[#allocation20 + $0x324] sm:$0xff]
    %v6853 = vld [vmem:[#allocation20 + $0x32c] sm:$0xf]
    %v6854 = vld [vmem:[#allocation20 + $0x330] sm:$0xff]
    %v6855 = vld [vmem:[#allocation20 + $0x338] sm:$0xf]
    %v6856 = vld [vmem:[#allocation20 + $0x33c] sm:$0xff]
    %v6857 = vld [vmem:[#allocation20 + $0x344] sm:$0xf]
    %v6858 = vld [vmem:[#allocation20 + $0x348] sm:$0xff]
    %v6859 = vld [vmem:[#allocation20 + $0x350] sm:$0xf]
    %v6860 = vld [vmem:[#allocation20 + $0x354] sm:$0xff]
    %v6861 = vld [vmem:[#allocation20 + $0x35c] sm:$0xf]
    %v6862 = vld [vmem:[#allocation20 + $0x360] sm:$0xff]
    %v6863 = vld [vmem:[#allocation20 + $0x368] sm:$0xf]
    %v6864 = vld [vmem:[#allocation20 + $0x36c] sm:$0xff]
    %v6865 = vld [vmem:[#allocation20 + $0x374] sm:$0xf]
    %v6866 = vld [vmem:[#allocation20 + $0x378] sm:$0xff]
    %v6867 = vld [vmem:[#allocation20 + $0x380] sm:$0xf]
    %v6868 = vld [vmem:[#allocation20 + $0x384] sm:$0xff]
    %v6869 = vld [vmem:[#allocation20 + $0x38c] sm:$0xf]
    %v6870 = vld [vmem:[#allocation20 + $0x390] sm:$0xff]
    %v6871 = vld [vmem:[#allocation20 + $0x398] sm:$0xf]
    %v6872 = vld [vmem:[#allocation20 + $0x39c] sm:$0xff]
    %v6873 = vld [vmem:[#allocation20 + $0x3a4] sm:$0xf]
    %v6874 = vld [vmem:[#allocation20 + $0x3a8] sm:$0xff]
    %v6875 = vld [vmem:[#allocation20 + $0x3b0] sm:$0xf]
    %v6876 = vld [vmem:[#allocation20 + $0x3b4] sm:$0xff]
    %v6877 = vld [vmem:[#allocation20 + $0x3bc] sm:$0xf]
    %v6878 = vld [vmem:[#allocation20 + $0x3c0] sm:$0xff]
    %v6879 = vld [vmem:[#allocation20 + $0x3c8] sm:$0xf]
    %v6880 = vld [vmem:[#allocation20 + $0x3cc] sm:$0xff]
    %v6881 = vld [vmem:[#allocation20 + $0x3d4] sm:$0xf]
    %v6882 = vld [vmem:[#allocation20 + $0x3d8] sm:$0xff]
    %v6883 = vld [vmem:[#allocation20 + $0x3e0] sm:$0xf]
    %v6884 = vld [vmem:[#allocation20 + $0x3e4] sm:$0xff]
    %v6885 = vld [vmem:[#allocation20 + $0x3ec] sm:$0xf]
    %v6886 = vld [vmem:[#allocation20 + $0x3f0] sm:$0xff]
    %v6887 = vld [vmem:[#allocation20 + $0x3f8] sm:$0xf]
    %v6888 = vld [vmem:[#allocation20 + $0x3fc] sm:$0xff]
    %v6889 = vld [vmem:[#allocation20 + $0x404] sm:$0xf]
    %v6890 = vld [vmem:[#allocation20 + $0x408] sm:$0xff]
    %v6891 = vld [vmem:[#allocation20 + $0x410] sm:$0xf]
    %v6892 = vld [vmem:[#allocation20 + $0x414] sm:$0xff]
    %v6893 = vld [vmem:[#allocation20 + $0x41c] sm:$0xf]
    %v6894 = vld [vmem:[#allocation20 + $0x420] sm:$0xff]
    %v6895 = vld [vmem:[#allocation20 + $0x428] sm:$0xf]
    %v6896 = vld [vmem:[#allocation20 + $0x42c] sm:$0xff]
    %v6897 = vld [vmem:[#allocation20 + $0x434] sm:$0xf]
    %v6898 = vld [vmem:[#allocation20 + $0x438] sm:$0xff]
    %v6899 = vld [vmem:[#allocation20 + $0x440] sm:$0xf]
    %v6900 = vld [vmem:[#allocation20 + $0x444] sm:$0xff]
    %v6901 = vld [vmem:[#allocation20 + $0x44c] sm:$0xf]
    %v6902 = vld [vmem:[#allocation20 + $0x450] sm:$0xff]
    %v6903 = vld [vmem:[#allocation20 + $0x458] sm:$0xf]
    %v6904 = vld [vmem:[#allocation20 + $0x45c] sm:$0xff]
    %v6905 = vld [vmem:[#allocation20 + $0x464] sm:$0xf]
    %v6906 = vld [vmem:[#allocation20 + $0x468] sm:$0xff]
    %v6907 = vld [vmem:[#allocation20 + $0x470] sm:$0xf]
    %v6908 = vld [vmem:[#allocation20 + $0x474] sm:$0xff]
    %v6909 = vld [vmem:[#allocation20 + $0x47c] sm:$0xf]
    %v6910 = vld [vmem:[#allocation20 + $0x480] sm:$0xff]
    %v6911 = vld [vmem:[#allocation20 + $0x488] sm:$0xf]
    %v6912 = vld [vmem:[#allocation20 + $0x48c] sm:$0xff]
    %v6913 = vld [vmem:[#allocation20 + $0x494] sm:$0xf]
    %v6914 = vld [vmem:[#allocation20 + $0x498] sm:$0xff]
    %v6915 = vld [vmem:[#allocation20 + $0x4a0] sm:$0xf]
    %v6916 = vld [vmem:[#allocation20 + $0x4a4] sm:$0xff]
    %v6917 = vld [vmem:[#allocation20 + $0x4ac] sm:$0xf]
    %v6918 = vld [vmem:[#allocation20 + $0x4b0] sm:$0xff]
    %v6919 = vld [vmem:[#allocation20 + $0x4b8] sm:$0xf]
    %v6920 = vld [vmem:[#allocation20 + $0x4bc] sm:$0xff]
    %v6921 = vld [vmem:[#allocation20 + $0x4c4] sm:$0xf]
    %v6922 = vld [vmem:[#allocation20 + $0x4c8] sm:$0xff]
    %v6923 = vld [vmem:[#allocation20 + $0x4d0] sm:$0xf]
    %v6924 = vld [vmem:[#allocation20 + $0x4d4] sm:$0xff]
    %v6925 = vld [vmem:[#allocation20 + $0x4dc] sm:$0xf]
    %v6926 = vld [vmem:[#allocation20 + $0x4e0] sm:$0xff]
    %v6927 = vld [vmem:[#allocation20 + $0x4e8] sm:$0xf]
    %v6928 = vld [vmem:[#allocation20 + $0x4ec] sm:$0xff]
    %v6929 = vld [vmem:[#allocation20 + $0x4f4] sm:$0xf]
    %v6930 = vld [vmem:[#allocation20 + $0x4f8] sm:$0xff]
    %v6931 = vld [vmem:[#allocation20 + $0x500] sm:$0xf]
    %v6932 = vld [vmem:[#allocation20 + $0x504] sm:$0xff]
    %v6933 = vld [vmem:[#allocation20 + $0x50c] sm:$0xf]
    %v6934 = vld [vmem:[#allocation20 + $0x510] sm:$0xff]
    %v6935 = vld [vmem:[#allocation20 + $0x518] sm:$0xf]
    %v6936 = vld [vmem:[#allocation20 + $0x51c] sm:$0xff]
    %v6937 = vld [vmem:[#allocation20 + $0x524] sm:$0xf]
    %v6938 = vld [vmem:[#allocation20 + $0x528] sm:$0xff]
    %v6939 = vld [vmem:[#allocation20 + $0x530] sm:$0xf]
    %v6940 = vld [vmem:[#allocation20 + $0x534] sm:$0xff]
    %v6941 = vld [vmem:[#allocation20 + $0x53c] sm:$0xf]
    %v6942 = vld [vmem:[#allocation20 + $0x540] sm:$0xff]
    %v6943 = vld [vmem:[#allocation20 + $0x548] sm:$0xf]
    %v6944 = vld [vmem:[#allocation20 + $0x54c] sm:$0xff]
    %v6945 = vld [vmem:[#allocation20 + $0x554] sm:$0xf]
    %v6946 = vld [vmem:[#allocation20 + $0x558] sm:$0xff]
    %v6947 = vld [vmem:[#allocation20 + $0x560] sm:$0xf]
    %v6948 = vld [vmem:[#allocation20 + $0x564] sm:$0xff]
    %v6949 = vld [vmem:[#allocation20 + $0x56c] sm:$0xf]
    %v6950 = vld [vmem:[#allocation20 + $0x570] sm:$0xff]
    %v6951 = vld [vmem:[#allocation20 + $0x578] sm:$0xf]
    %v6952 = vld [vmem:[#allocation20 + $0x57c] sm:$0xff]
    %v6953 = vld [vmem:[#allocation20 + $0x584] sm:$0xf]
    %v6954 = vld [vmem:[#allocation20 + $0x588] sm:$0xff]
    %v6955 = vld [vmem:[#allocation20 + $0x590] sm:$0xf]
    %v6956 = vld [vmem:[#allocation20 + $0x594] sm:$0xff]
    %v6957 = vld [vmem:[#allocation20 + $0x59c] sm:$0xf]
    %v6958 = vld [vmem:[#allocation20 + $0x5a0] sm:$0xff]
    %v6959 = vld [vmem:[#allocation20 + $0x5a8] sm:$0xf]
    %v6960 = vld [vmem:[#allocation20 + $0x5ac] sm:$0xff]
    %v6961 = vld [vmem:[#allocation20 + $0x5b4] sm:$0xf]
    %v6962 = vld [vmem:[#allocation20 + $0x5b8] sm:$0xff]
    %v6963 = vld [vmem:[#allocation20 + $0x5c0] sm:$0xf]
    %v6964 = vld [vmem:[#allocation20 + $0x5c4] sm:$0xff]
    %v6965 = vld [vmem:[#allocation20 + $0x5cc] sm:$0xf]
    %v6966 = vld [vmem:[#allocation20 + $0x5d0] sm:$0xff]
    %v6967 = vld [vmem:[#allocation20 + $0x5d8] sm:$0xf]
    %v6968 = vld [vmem:[#allocation20 + $0x5dc] sm:$0xff]
    %v6969 = vld [vmem:[#allocation20 + $0x5e4] sm:$0xf]
    %v6970 = vld [vmem:[#allocation20 + $0x5e8] sm:$0xff]
    %v6971 = vld [vmem:[#allocation20 + $0x5f0] sm:$0xf]
    %v6972 = vld [vmem:[#allocation20 + $0x5f4] sm:$0xff]
    %v6973 = vld [vmem:[#allocation20 + $0x5fc] sm:$0xf]
    %v6974 = vld [vmem:[#allocation20 + $0x600] sm:$0xff]
    %v6975 = vld [vmem:[#allocation20 + $0x608] sm:$0xf]
    %v6976 = vld [vmem:[#allocation20 + $0x60c] sm:$0xff]
    %v6977 = vld [vmem:[#allocation20 + $0x614] sm:$0xf]
    %v6978 = vld [vmem:[#allocation20 + $0x618] sm:$0xff]
    %v6979 = vld [vmem:[#allocation20 + $0x620] sm:$0xf]
    %v6980 = vld [vmem:[#allocation20 + $0x624] sm:$0xff]
    %v6981 = vld [vmem:[#allocation20 + $0x62c] sm:$0xf]
    %v6982 = vld [vmem:[#allocation20 + $0x630] sm:$0xff]
    %v6983 = vld [vmem:[#allocation20 + $0x638] sm:$0xf]
    %v6984 = vld [vmem:[#allocation20 + $0x63c] sm:$0xff]
    %v6985 = vld [vmem:[#allocation20 + $0x644] sm:$0xf]
    %v6986 = vld [vmem:[#allocation20 + $0x648] sm:$0xff]
    %v6987 = vld [vmem:[#allocation20 + $0x650] sm:$0xf]
    %v6988 = vld [vmem:[#allocation20 + $0x654] sm:$0xff]
    %v6989 = vld [vmem:[#allocation20 + $0x65c] sm:$0xf]
    %v6990 = vld [vmem:[#allocation20 + $0x660] sm:$0xff]
    %v6991 = vld [vmem:[#allocation20 + $0x668] sm:$0xf]
    %v6992 = vld [vmem:[#allocation20 + $0x66c] sm:$0xff]
    %v6993 = vld [vmem:[#allocation20 + $0x674] sm:$0xf]
    %v6994 = vld [vmem:[#allocation20 + $0x678] sm:$0xff]
    %v6995 = vld [vmem:[#allocation20 + $0x680] sm:$0xf]
    %v6996 = vld [vmem:[#allocation20 + $0x684] sm:$0xff]
    %v6997 = vld [vmem:[#allocation20 + $0x68c] sm:$0xf]
    %v6998 = vld [vmem:[#allocation20 + $0x690] sm:$0xff]
    %v6999 = vld [vmem:[#allocation20 + $0x698] sm:$0xf]
    %v7000 = vld [vmem:[#allocation20 + $0x69c] sm:$0xff]
    %v7001 = vld [vmem:[#allocation20 + $0x6a4] sm:$0xf]
    %v7002 = vld [vmem:[#allocation20 + $0x6a8] sm:$0xff]
    %v7003 = vld [vmem:[#allocation20 + $0x6b0] sm:$0xf]
    %v7004 = vld [vmem:[#allocation20 + $0x6b4] sm:$0xff]
    %v7005 = vld [vmem:[#allocation20 + $0x6bc] sm:$0xf]
    %v7006 = vld [vmem:[#allocation20 + $0x6c0] sm:$0xff]
    %v7007 = vld [vmem:[#allocation20 + $0x6c8] sm:$0xf]
    %v7008 = vld [vmem:[#allocation20 + $0x6cc] sm:$0xff]
    %v7009 = vld [vmem:[#allocation20 + $0x6d4] sm:$0xf]
    %v7010 = vld [vmem:[#allocation20 + $0x6d8] sm:$0xff]
    %v7011 = vld [vmem:[#allocation20 + $0x6e0] sm:$0xf]
    %v7012 = vld [vmem:[#allocation20 + $0x6e4] sm:$0xff]
    %v7013 = vld [vmem:[#allocation20 + $0x6ec] sm:$0xf]
    %v7014 = vld [vmem:[#allocation20 + $0x6f0] sm:$0xff]
    %v7015 = vld [vmem:[#allocation20 + $0x6f8] sm:$0xf]
    %v7016 = vld [vmem:[#allocation20 + $0x6fc] sm:$0xff]
    %v7017 = vld [vmem:[#allocation20 + $0x704] sm:$0xf]
    %v7018 = vld [vmem:[#allocation20 + $0x708] sm:$0xff]
    %v7019 = vld [vmem:[#allocation20 + $0x710] sm:$0xf]
    %v7020 = vld [vmem:[#allocation20 + $0x714] sm:$0xff]
    %v7021 = vld [vmem:[#allocation20 + $0x71c] sm:$0xf]
    %v7022 = vld [vmem:[#allocation20 + $0x720] sm:$0xff]
    %v7023 = vld [vmem:[#allocation20 + $0x728] sm:$0xf]
    %v7024 = vld [vmem:[#allocation20 + $0x72c] sm:$0xff]
    %v7025 = vld [vmem:[#allocation20 + $0x734] sm:$0xf]
    %v7026 = vld [vmem:[#allocation20 + $0x738] sm:$0xff]
    %v7027 = vld [vmem:[#allocation20 + $0x740] sm:$0xf]
    %v7028 = vld [vmem:[#allocation20 + $0x744] sm:$0xff]
    %v7029 = vld [vmem:[#allocation20 + $0x74c] sm:$0xf]
    %v7030 = vld [vmem:[#allocation20 + $0x750] sm:$0xff]
    %v7031 = vld [vmem:[#allocation20 + $0x758] sm:$0xf]
    %v7032 = vld [vmem:[#allocation20 + $0x75c] sm:$0xff]
    %v7033 = vld [vmem:[#allocation20 + $0x764] sm:$0xf]
    %v7034 = vld [vmem:[#allocation20 + $0x768] sm:$0xff]
    %v7035 = vld [vmem:[#allocation20 + $0x770] sm:$0xf]
    %v7036 = vld [vmem:[#allocation20 + $0x774] sm:$0xff]
    %v7037 = vld [vmem:[#allocation20 + $0x77c] sm:$0xf]
    %v7038 = vld [vmem:[#allocation20 + $0x780] sm:$0xff]
    %v7039 = vld [vmem:[#allocation20 + $0x788] sm:$0xf]
    %v7040 = vld [vmem:[#allocation20 + $0x78c] sm:$0xff]
    %v7041 = vld [vmem:[#allocation20 + $0x794] sm:$0xf]
    %v7042 = vld [vmem:[#allocation20 + $0x798] sm:$0xff]
    %v7043 = vld [vmem:[#allocation20 + $0x7a0] sm:$0xf]
    %v7044 = vld [vmem:[#allocation20 + $0x7a4] sm:$0xff]
    %v7045 = vld [vmem:[#allocation20 + $0x7ac] sm:$0xf]
    %v7046 = vld [vmem:[#allocation20 + $0x7b0] sm:$0xff]
    %v7047 = vld [vmem:[#allocation20 + $0x7b8] sm:$0xf]
    %v7048 = vld [vmem:[#allocation20 + $0x7bc] sm:$0xff]
    %v7049 = vld [vmem:[#allocation20 + $0x7c4] sm:$0xf]
    %v7050 = vld [vmem:[#allocation20 + $0x7c8] sm:$0xff]
    %v7051 = vld [vmem:[#allocation20 + $0x7d0] sm:$0xf]
    %v7052 = vld [vmem:[#allocation20 + $0x7d4] sm:$0xff]
    %v7053 = vld [vmem:[#allocation20 + $0x7dc] sm:$0xf]
    %v7054 = vld [vmem:[#allocation20 + $0x7e0] sm:$0xff]
    %v7055 = vld [vmem:[#allocation20 + $0x7e8] sm:$0xf]
    %v7056 = vld [vmem:[#allocation20 + $0x7ec] sm:$0xff]
    %v7057 = vld [vmem:[#allocation20 + $0x7f4] sm:$0xf]
    %v7058 = vld [vmem:[#allocation20 + $0x7f8] sm:$0xff]
    %v7059 = vld [vmem:[#allocation20 + $0x800] sm:$0xf]
    %v7060 = vld [vmem:[#allocation20 + $0x804] sm:$0xff]
    %v7061 = vld [vmem:[#allocation20 + $0x80c] sm:$0xf]
    %v7062 = vld [vmem:[#allocation20 + $0x810] sm:$0xff]
    %v7063 = vld [vmem:[#allocation20 + $0x818] sm:$0xf]
    %v7064 = vld [vmem:[#allocation20 + $0x81c] sm:$0xff]
    %v7065 = vld [vmem:[#allocation20 + $0x824] sm:$0xf]
    %v7066 = vld [vmem:[#allocation20 + $0x828] sm:$0xff]
    %v7067 = vld [vmem:[#allocation20 + $0x830] sm:$0xf]
    %v7068 = vld [vmem:[#allocation20 + $0x834] sm:$0xff]
    %v7069 = vld [vmem:[#allocation20 + $0x83c] sm:$0xf]
    %v7070 = vld [vmem:[#allocation20 + $0x840] sm:$0xff]
    %v7071 = vld [vmem:[#allocation20 + $0x848] sm:$0xf]
    %v7072 = vld [vmem:[#allocation20 + $0x84c] sm:$0xff]
    %v7073 = vld [vmem:[#allocation20 + $0x854] sm:$0xf]
    %v7074 = vld [vmem:[#allocation20 + $0x858] sm:$0xff]
    %v7075 = vld [vmem:[#allocation20 + $0x860] sm:$0xf]
    %v7076 = vld [vmem:[#allocation20 + $0x864] sm:$0xff]
    %v7077 = vld [vmem:[#allocation20 + $0x86c] sm:$0xf]
    %v7078 = vld [vmem:[#allocation20 + $0x870] sm:$0xff]
    %v7079 = vld [vmem:[#allocation20 + $0x878] sm:$0xf]
    %v7080 = vld [vmem:[#allocation20 + $0x87c] sm:$0xff]
    %v7081 = vld [vmem:[#allocation20 + $0x884] sm:$0xf]
    %v7082 = vld [vmem:[#allocation20 + $0x888] sm:$0xff]
    %v7083 = vld [vmem:[#allocation20 + $0x890] sm:$0xf]
    %v7084 = vld [vmem:[#allocation20 + $0x894] sm:$0xff]
    %v7085 = vld [vmem:[#allocation20 + $0x89c] sm:$0xf]
    %v7086 = vld [vmem:[#allocation20 + $0x8a0] sm:$0xff]
    %v7087 = vld [vmem:[#allocation20 + $0x8a8] sm:$0xf]
    %v7088 = vld [vmem:[#allocation20 + $0x8ac] sm:$0xff]
    %v7089 = vld [vmem:[#allocation20 + $0x8b4] sm:$0xf]
    %v7090 = vld [vmem:[#allocation20 + $0x8b8] sm:$0xff]
    %v7091 = vld [vmem:[#allocation20 + $0x8c0] sm:$0xf]
    %v7092 = vld [vmem:[#allocation20 + $0x8c4] sm:$0xff]
    %v7093 = vld [vmem:[#allocation20 + $0x8cc] sm:$0xf]
    %v7094 = vld [vmem:[#allocation20 + $0x8d0] sm:$0xff]
    %v7095 = vld [vmem:[#allocation20 + $0x8d8] sm:$0xf]
    %v7096 = vld [vmem:[#allocation20 + $0x8dc] sm:$0xff]
    %v7097 = vld [vmem:[#allocation20 + $0x8e4] sm:$0xf]
    %v7098 = vld [vmem:[#allocation20 + $0x8e8] sm:$0xff]
    %v7099 = vld [vmem:[#allocation20 + $0x8f0] sm:$0xf]
    %v7100 = vld [vmem:[#allocation20 + $0x8f4] sm:$0xff]
    %v7101 = vld [vmem:[#allocation20 + $0x8fc] sm:$0xf]
    %v7102 = vld [vmem:[#allocation22] sm:$0x7]
    %v7104 = vlaneseq
    %v7105 = vshrl.u32 %v7104, 7
    %v7106 = vsub.s32 0, %v7105
    %v7107 = vrot.slane %v7102, %v7106
    %v7108 = vlaneseq
    %v7109 = vshrl.u32 %v7108, 7
    %v7110 = vsub.s32 1, %v7109
    %v7111 = vrot.slane %v7102, %v7110
    %v7112 = vlaneseq
    %v7113 = vshrl.u32 %v7112, 7
    %v7114 = vsub.s32 2, %v7113
    %v7115 = vrot.slane %v7102, %v7114
    %v7503 = vunpack.c.l.b16 %v6718
    %v7504 = vunpack.c.h.b16 %v6718
    %v7505 = vunpack.c.l.b16 %v6719
    %v7506 = vunpack.c.l.b16 %v6720
    %v7507 = vunpack.c.h.b16 %v6720
    %v7508 = vunpack.c.l.b16 %v6721
    %v7509 = vunpack.c.l.b16 %v6722
    %v7510 = vunpack.c.h.b16 %v6722
    %v7511 = vunpack.c.l.b16 %v6723
    %v7512 = vunpack.c.l.b16 %v6724
    %v7513 = vunpack.c.h.b16 %v6724
    %v7514 = vunpack.c.l.b16 %v6725
    %v7515 = vunpack.c.l.b16 %v6726
    %v7516 = vunpack.c.h.b16 %v6726
    %v7517 = vunpack.c.l.b16 %v6727
    %v7518 = vunpack.c.l.b16 %v6728
    %v7519 = vunpack.c.h.b16 %v6728
    %v7520 = vunpack.c.l.b16 %v6729
    %v7521 = vunpack.c.l.b16 %v6730
    %v7522 = vunpack.c.h.b16 %v6730
    %v7523 = vunpack.c.l.b16 %v6731
    %v7524 = vunpack.c.l.b16 %v6732
    %v7525 = vunpack.c.h.b16 %v6732
    %v7526 = vunpack.c.l.b16 %v6733
    %v7527 = vunpack.c.l.b16 %v6734
    %v7528 = vunpack.c.h.b16 %v6734
    %v7529 = vunpack.c.l.b16 %v6735
    %v7530 = vunpack.c.l.b16 %v6736
    %v7531 = vunpack.c.h.b16 %v6736
    %v7532 = vunpack.c.l.b16 %v6737
    %v7533 = vunpack.c.l.b16 %v6738
    %v7534 = vunpack.c.h.b16 %v6738
    %v7535 = vunpack.c.l.b16 %v6739
    %v7536 = vunpack.c.l.b16 %v6740
    %v7537 = vunpack.c.h.b16 %v6740
    %v7538 = vunpack.c.l.b16 %v6741
    %v7539 = vunpack.c.l.b16 %v6742
    %v7540 = vunpack.c.h.b16 %v6742
    %v7541 = vunpack.c.l.b16 %v6743
    %v7542 = vunpack.c.l.b16 %v6744
    %v7543 = vunpack.c.h.b16 %v6744
    %v7544 = vunpack.c.l.b16 %v6745
    %v7545 = vunpack.c.l.b16 %v6746
    %v7546 = vunpack.c.h.b16 %v6746
    %v7547 = vunpack.c.l.b16 %v6747
    %v7548 = vunpack.c.l.b16 %v6748
    %v7549 = vunpack.c.h.b16 %v6748
    %v7550 = vunpack.c.l.b16 %v6749
    %v7551 = vunpack.c.l.b16 %v6750
    %v7552 = vunpack.c.h.b16 %v6750
    %v7553 = vunpack.c.l.b16 %v6751
    %v7554 = vunpack.c.l.b16 %v6752
    %v7555 = vunpack.c.h.b16 %v6752
    %v7556 = vunpack.c.l.b16 %v6753
    %v7557 = vunpack.c.l.b16 %v6754
    %v7558 = vunpack.c.h.b16 %v6754
    %v7559 = vunpack.c.l.b16 %v6755
    %v7560 = vunpack.c.l.b16 %v6756
    %v7561 = vunpack.c.h.b16 %v6756
    %v7562 = vunpack.c.l.b16 %v6757
    %v7563 = vunpack.c.l.b16 %v6758
    %v7564 = vunpack.c.h.b16 %v6758
    %v7565 = vunpack.c.l.b16 %v6759
    %v7566 = vunpack.c.l.b16 %v6760
    %v7567 = vunpack.c.h.b16 %v6760
    %v7568 = vunpack.c.l.b16 %v6761
    %v7569 = vunpack.c.l.b16 %v6762
    %v7570 = vunpack.c.h.b16 %v6762
    %v7571 = vunpack.c.l.b16 %v6763
    %v7572 = vunpack.c.l.b16 %v6764
    %v7573 = vunpack.c.h.b16 %v6764
    %v7574 = vunpack.c.l.b16 %v6765
    %v7575 = vunpack.c.l.b16 %v6766
    %v7576 = vunpack.c.h.b16 %v6766
    %v7577 = vunpack.c.l.b16 %v6767
    %v7578 = vunpack.c.l.b16 %v6768
    %v7579 = vunpack.c.h.b16 %v6768
    %v7580 = vunpack.c.l.b16 %v6769
    %v7581 = vunpack.c.l.b16 %v6770
    %v7582 = vunpack.c.h.b16 %v6770
    %v7583 = vunpack.c.l.b16 %v6771
    %v7584 = vunpack.c.l.b16 %v6772
    %v7585 = vunpack.c.h.b16 %v6772
    %v7586 = vunpack.c.l.b16 %v6773
    %v7587 = vunpack.c.l.b16 %v6774
    %v7588 = vunpack.c.h.b16 %v6774
    %v7589 = vunpack.c.l.b16 %v6775
    %v7590 = vunpack.c.l.b16 %v6776
    %v7591 = vunpack.c.h.b16 %v6776
    %v7592 = vunpack.c.l.b16 %v6777
    %v7593 = vunpack.c.l.b16 %v6778
    %v7594 = vunpack.c.h.b16 %v6778
    %v7595 = vunpack.c.l.b16 %v6779
    %v7596 = vunpack.c.l.b16 %v6780
    %v7597 = vunpack.c.h.b16 %v6780
    %v7598 = vunpack.c.l.b16 %v6781
    %v7599 = vunpack.c.l.b16 %v6782
    %v7600 = vunpack.c.h.b16 %v6782
    %v7601 = vunpack.c.l.b16 %v6783
    %v7602 = vunpack.c.l.b16 %v6784
    %v7603 = vunpack.c.h.b16 %v6784
    %v7604 = vunpack.c.l.b16 %v6785
    %v7605 = vunpack.c.l.b16 %v6786
    %v7606 = vunpack.c.h.b16 %v6786
    %v7607 = vunpack.c.l.b16 %v6787
    %v7608 = vunpack.c.l.b16 %v6788
    %v7609 = vunpack.c.h.b16 %v6788
    %v7610 = vunpack.c.l.b16 %v6789
    %v7611 = vunpack.c.l.b16 %v6790
    %v7612 = vunpack.c.h.b16 %v6790
    %v7613 = vunpack.c.l.b16 %v6791
    %v7614 = vunpack.c.l.b16 %v6792
    %v7615 = vunpack.c.h.b16 %v6792
    %v7616 = vunpack.c.l.b16 %v6793
    %v7617 = vunpack.c.l.b16 %v6794
    %v7618 = vunpack.c.h.b16 %v6794
    %v7619 = vunpack.c.l.b16 %v6795
    %v7620 = vunpack.c.l.b16 %v6796
    %v7621 = vunpack.c.h.b16 %v6796
    %v7622 = vunpack.c.l.b16 %v6797
    %v7623 = vunpack.c.l.b16 %v6798
    %v7624 = vunpack.c.h.b16 %v6798
    %v7625 = vunpack.c.l.b16 %v6799
    %v7626 = vunpack.c.l.b16 %v6800
    %v7627 = vunpack.c.h.b16 %v6800
    %v7628 = vunpack.c.l.b16 %v6801
    %v7629 = vunpack.c.l.b16 %v6802
    %v7630 = vunpack.c.h.b16 %v6802
    %v7631 = vunpack.c.l.b16 %v6803
    %v7632 = vunpack.c.l.b16 %v6804
    %v7633 = vunpack.c.h.b16 %v6804
    %v7634 = vunpack.c.l.b16 %v6805
    %v7635 = vunpack.c.l.b16 %v6806
    %v7636 = vunpack.c.h.b16 %v6806
    %v7637 = vunpack.c.l.b16 %v6807
    %v7638 = vunpack.c.l.b16 %v6808
    %v7639 = vunpack.c.h.b16 %v6808
    %v7640 = vunpack.c.l.b16 %v6809
    %v7641 = vunpack.c.l.b16 %v6810
    %v7642 = vunpack.c.h.b16 %v6810
    %v7643 = vunpack.c.l.b16 %v6811
    %v7644 = vunpack.c.l.b16 %v6812
    %v7645 = vunpack.c.h.b16 %v6812
    %v7646 = vunpack.c.l.b16 %v6813
    %v7647 = vunpack.c.l.b16 %v6814
    %v7648 = vunpack.c.h.b16 %v6814
    %v7649 = vunpack.c.l.b16 %v6815
    %v7650 = vunpack.c.l.b16 %v6816
    %v7651 = vunpack.c.h.b16 %v6816
    %v7652 = vunpack.c.l.b16 %v6817
    %v7653 = vunpack.c.l.b16 %v6818
    %v7654 = vunpack.c.h.b16 %v6818
    %v7655 = vunpack.c.l.b16 %v6819
    %v7656 = vunpack.c.l.b16 %v6820
    %v7657 = vunpack.c.h.b16 %v6820
    %v7658 = vunpack.c.l.b16 %v6821
    %v7659 = vunpack.c.l.b16 %v6822
    %v7660 = vunpack.c.h.b16 %v6822
    %v7661 = vunpack.c.l.b16 %v6823
    %v7662 = vunpack.c.l.b16 %v6824
    %v7663 = vunpack.c.h.b16 %v6824
    %v7664 = vunpack.c.l.b16 %v6825
    %v7665 = vunpack.c.l.b16 %v6826
    %v7666 = vunpack.c.h.b16 %v6826
    %v7667 = vunpack.c.l.b16 %v6827
    %v7668 = vunpack.c.l.b16 %v6828
    %v7669 = vunpack.c.h.b16 %v6828
    %v7670 = vunpack.c.l.b16 %v6829
    %v7671 = vunpack.c.l.b16 %v6830
    %v7672 = vunpack.c.h.b16 %v6830
    %v7673 = vunpack.c.l.b16 %v6831
    %v7674 = vunpack.c.l.b16 %v6832
    %v7675 = vunpack.c.h.b16 %v6832
    %v7676 = vunpack.c.l.b16 %v6833
    %v7677 = vunpack.c.l.b16 %v6834
    %v7678 = vunpack.c.h.b16 %v6834
    %v7679 = vunpack.c.l.b16 %v6835
    %v7680 = vunpack.c.l.b16 %v6836
    %v7681 = vunpack.c.h.b16 %v6836
    %v7682 = vunpack.c.l.b16 %v6837
    %v7683 = vunpack.c.l.b16 %v6838
    %v7684 = vunpack.c.h.b16 %v6838
    %v7685 = vunpack.c.l.b16 %v6839
    %v7686 = vunpack.c.l.b16 %v6840
    %v7687 = vunpack.c.h.b16 %v6840
    %v7688 = vunpack.c.l.b16 %v6841
    %v7689 = vunpack.c.l.b16 %v6842
    %v7690 = vunpack.c.h.b16 %v6842
    %v7691 = vunpack.c.l.b16 %v6843
    %v7692 = vunpack.c.l.b16 %v6844
    %v7693 = vunpack.c.h.b16 %v6844
    %v7694 = vunpack.c.l.b16 %v6845
    %v7695 = vunpack.c.l.b16 %v6846
    %v7696 = vunpack.c.h.b16 %v6846
    %v7697 = vunpack.c.l.b16 %v6847
    %v7698 = vunpack.c.l.b16 %v6848
    %v7699 = vunpack.c.h.b16 %v6848
    %v7700 = vunpack.c.l.b16 %v6849
    %v7701 = vunpack.c.l.b16 %v6850
    %v7702 = vunpack.c.h.b16 %v6850
    %v7703 = vunpack.c.l.b16 %v6851
    %v7704 = vunpack.c.l.b16 %v6852
    %v7705 = vunpack.c.h.b16 %v6852
    %v7706 = vunpack.c.l.b16 %v6853
    %v7707 = vunpack.c.l.b16 %v6854
    %v7708 = vunpack.c.h.b16 %v6854
    %v7709 = vunpack.c.l.b16 %v6855
    %v7710 = vunpack.c.l.b16 %v6856
    %v7711 = vunpack.c.h.b16 %v6856
    %v7712 = vunpack.c.l.b16 %v6857
    %v7713 = vunpack.c.l.b16 %v6858
    %v7714 = vunpack.c.h.b16 %v6858
    %v7715 = vunpack.c.l.b16 %v6859
    %v7716 = vunpack.c.l.b16 %v6860
    %v7717 = vunpack.c.h.b16 %v6860
    %v7718 = vunpack.c.l.b16 %v6861
    %v7719 = vunpack.c.l.b16 %v6862
    %v7720 = vunpack.c.h.b16 %v6862
    %v7721 = vunpack.c.l.b16 %v6863
    %v7722 = vunpack.c.l.b16 %v6864
    %v7723 = vunpack.c.h.b16 %v6864
    %v7724 = vunpack.c.l.b16 %v6865
    %v7725 = vunpack.c.l.b16 %v6866
    %v7726 = vunpack.c.h.b16 %v6866
    %v7727 = vunpack.c.l.b16 %v6867
    %v7728 = vunpack.c.l.b16 %v6868
    %v7729 = vunpack.c.h.b16 %v6868
    %v7730 = vunpack.c.l.b16 %v6869
    %v7731 = vunpack.c.l.b16 %v6870
    %v7732 = vunpack.c.h.b16 %v6870
    %v7733 = vunpack.c.l.b16 %v6871
    %v7734 = vunpack.c.l.b16 %v6872
    %v7735 = vunpack.c.h.b16 %v6872
    %v7736 = vunpack.c.l.b16 %v6873
    %v7737 = vunpack.c.l.b16 %v6874
    %v7738 = vunpack.c.h.b16 %v6874
    %v7739 = vunpack.c.l.b16 %v6875
    %v7740 = vunpack.c.l.b16 %v6876
    %v7741 = vunpack.c.h.b16 %v6876
    %v7742 = vunpack.c.l.b16 %v6877
    %v7743 = vunpack.c.l.b16 %v6878
    %v7744 = vunpack.c.h.b16 %v6878
    %v7745 = vunpack.c.l.b16 %v6879
    %v7746 = vunpack.c.l.b16 %v6880
    %v7747 = vunpack.c.h.b16 %v6880
    %v7748 = vunpack.c.l.b16 %v6881
    %v7749 = vunpack.c.l.b16 %v6882
    %v7750 = vunpack.c.h.b16 %v6882
    %v7751 = vunpack.c.l.b16 %v6883
    %v7752 = vunpack.c.l.b16 %v6884
    %v7753 = vunpack.c.h.b16 %v6884
    %v7754 = vunpack.c.l.b16 %v6885
    %v7755 = vunpack.c.l.b16 %v6886
    %v7756 = vunpack.c.h.b16 %v6886
    %v7757 = vunpack.c.l.b16 %v6887
    %v7758 = vunpack.c.l.b16 %v6888
    %v7759 = vunpack.c.h.b16 %v6888
    %v7760 = vunpack.c.l.b16 %v6889
    %v7761 = vunpack.c.l.b16 %v6890
    %v7762 = vunpack.c.h.b16 %v6890
    %v7763 = vunpack.c.l.b16 %v6891
    %v7764 = vunpack.c.l.b16 %v6892
    %v7765 = vunpack.c.h.b16 %v6892
    %v7766 = vunpack.c.l.b16 %v6893
    %v7767 = vunpack.c.l.b16 %v6894
    %v7768 = vunpack.c.h.b16 %v6894
    %v7769 = vunpack.c.l.b16 %v6895
    %v7770 = vunpack.c.l.b16 %v6896
    %v7771 = vunpack.c.h.b16 %v6896
    %v7772 = vunpack.c.l.b16 %v6897
    %v7773 = vunpack.c.l.b16 %v6898
    %v7774 = vunpack.c.h.b16 %v6898
    %v7775 = vunpack.c.l.b16 %v6899
    %v7776 = vunpack.c.l.b16 %v6900
    %v7777 = vunpack.c.h.b16 %v6900
    %v7778 = vunpack.c.l.b16 %v6901
    %v7779 = vunpack.c.l.b16 %v6902
    %v7780 = vunpack.c.h.b16 %v6902
    %v7781 = vunpack.c.l.b16 %v6903
    %v7782 = vunpack.c.l.b16 %v6904
    %v7783 = vunpack.c.h.b16 %v6904
    %v7784 = vunpack.c.l.b16 %v6905
    %v7785 = vunpack.c.l.b16 %v6906
    %v7786 = vunpack.c.h.b16 %v6906
    %v7787 = vunpack.c.l.b16 %v6907
    %v7788 = vunpack.c.l.b16 %v6908
    %v7789 = vunpack.c.h.b16 %v6908
    %v7790 = vunpack.c.l.b16 %v6909
    %v7791 = vunpack.c.l.b16 %v6910
    %v7792 = vunpack.c.h.b16 %v6910
    %v7793 = vunpack.c.l.b16 %v6911
    %v7794 = vunpack.c.l.b16 %v6912
    %v7795 = vunpack.c.h.b16 %v6912
    %v7796 = vunpack.c.l.b16 %v6913
    %v7797 = vunpack.c.l.b16 %v6914
    %v7798 = vunpack.c.h.b16 %v6914
    %v7799 = vunpack.c.l.b16 %v6915
    %v7800 = vunpack.c.l.b16 %v6916
    %v7801 = vunpack.c.h.b16 %v6916
    %v7802 = vunpack.c.l.b16 %v6917
    %v7803 = vunpack.c.l.b16 %v6918
    %v7804 = vunpack.c.h.b16 %v6918
    %v7805 = vunpack.c.l.b16 %v6919
    %v7806 = vunpack.c.l.b16 %v6920
    %v7807 = vunpack.c.h.b16 %v6920
    %v7808 = vunpack.c.l.b16 %v6921
    %v7809 = vunpack.c.l.b16 %v6922
    %v7810 = vunpack.c.h.b16 %v6922
    %v7811 = vunpack.c.l.b16 %v6923
    %v7812 = vunpack.c.l.b16 %v6924
    %v7813 = vunpack.c.h.b16 %v6924
    %v7814 = vunpack.c.l.b16 %v6925
    %v7815 = vunpack.c.l.b16 %v6926
    %v7816 = vunpack.c.h.b16 %v6926
    %v7817 = vunpack.c.l.b16 %v6927
    %v7818 = vunpack.c.l.b16 %v6928
    %v7819 = vunpack.c.h.b16 %v6928
    %v7820 = vunpack.c.l.b16 %v6929
    %v7821 = vunpack.c.l.b16 %v6930
    %v7822 = vunpack.c.h.b16 %v6930
    %v7823 = vunpack.c.l.b16 %v6931
    %v7824 = vunpack.c.l.b16 %v6932
    %v7825 = vunpack.c.h.b16 %v6932
    %v7826 = vunpack.c.l.b16 %v6933
    %v7827 = vunpack.c.l.b16 %v6934
    %v7828 = vunpack.c.h.b16 %v6934
    %v7829 = vunpack.c.l.b16 %v6935
    %v7830 = vunpack.c.l.b16 %v6936
    %v7831 = vunpack.c.h.b16 %v6936
    %v7832 = vunpack.c.l.b16 %v6937
    %v7833 = vunpack.c.l.b16 %v6938
    %v7834 = vunpack.c.h.b16 %v6938
    %v7835 = vunpack.c.l.b16 %v6939
    %v7836 = vunpack.c.l.b16 %v6940
    %v7837 = vunpack.c.h.b16 %v6940
    %v7838 = vunpack.c.l.b16 %v6941
    %v7839 = vunpack.c.l.b16 %v6942
    %v7840 = vunpack.c.h.b16 %v6942
    %v7841 = vunpack.c.l.b16 %v6943
    %v7842 = vunpack.c.l.b16 %v6944
    %v7843 = vunpack.c.h.b16 %v6944
    %v7844 = vunpack.c.l.b16 %v6945
    %v7845 = vunpack.c.l.b16 %v6946
    %v7846 = vunpack.c.h.b16 %v6946
    %v7847 = vunpack.c.l.b16 %v6947
    %v7848 = vunpack.c.l.b16 %v6948
    %v7849 = vunpack.c.h.b16 %v6948
    %v7850 = vunpack.c.l.b16 %v6949
    %v7851 = vunpack.c.l.b16 %v6950
    %v7852 = vunpack.c.h.b16 %v6950
    %v7853 = vunpack.c.l.b16 %v6951
    %v7854 = vunpack.c.l.b16 %v6952
    %v7855 = vunpack.c.h.b16 %v6952
    %v7856 = vunpack.c.l.b16 %v6953
    %v7857 = vunpack.c.l.b16 %v6954
    %v7858 = vunpack.c.h.b16 %v6954
    %v7859 = vunpack.c.l.b16 %v6955
    %v7860 = vunpack.c.l.b16 %v6956
    %v7861 = vunpack.c.h.b16 %v6956
    %v7862 = vunpack.c.l.b16 %v6957
    %v7863 = vunpack.c.l.b16 %v6958
    %v7864 = vunpack.c.h.b16 %v6958
    %v7865 = vunpack.c.l.b16 %v6959
    %v7866 = vunpack.c.l.b16 %v6960
    %v7867 = vunpack.c.h.b16 %v6960
    %v7868 = vunpack.c.l.b16 %v6961
    %v7869 = vunpack.c.l.b16 %v6962
    %v7870 = vunpack.c.h.b16 %v6962
    %v7871 = vunpack.c.l.b16 %v6963
    %v7872 = vunpack.c.l.b16 %v6964
    %v7873 = vunpack.c.h.b16 %v6964
    %v7874 = vunpack.c.l.b16 %v6965
    %v7875 = vunpack.c.l.b16 %v6966
    %v7876 = vunpack.c.h.b16 %v6966
    %v7877 = vunpack.c.l.b16 %v6967
    %v7878 = vunpack.c.l.b16 %v6968
    %v7879 = vunpack.c.h.b16 %v6968
    %v7880 = vunpack.c.l.b16 %v6969
    %v7881 = vunpack.c.l.b16 %v6970
    %v7882 = vunpack.c.h.b16 %v6970
    %v7883 = vunpack.c.l.b16 %v6971
    %v7884 = vunpack.c.l.b16 %v6972
    %v7885 = vunpack.c.h.b16 %v6972
    %v7886 = vunpack.c.l.b16 %v6973
    %v7887 = vunpack.c.l.b16 %v6974
    %v7888 = vunpack.c.h.b16 %v6974
    %v7889 = vunpack.c.l.b16 %v6975
    %v7890 = vunpack.c.l.b16 %v6976
    %v7891 = vunpack.c.h.b16 %v6976
    %v7892 = vunpack.c.l.b16 %v6977
    %v7893 = vunpack.c.l.b16 %v6978
    %v7894 = vunpack.c.h.b16 %v6978
    %v7895 = vunpack.c.l.b16 %v6979
    %v7896 = vunpack.c.l.b16 %v6980
    %v7897 = vunpack.c.h.b16 %v6980
    %v7898 = vunpack.c.l.b16 %v6981
    %v7899 = vunpack.c.l.b16 %v6982
    %v7900 = vunpack.c.h.b16 %v6982
    %v7901 = vunpack.c.l.b16 %v6983
    %v7902 = vunpack.c.l.b16 %v6984
    %v7903 = vunpack.c.h.b16 %v6984
    %v7904 = vunpack.c.l.b16 %v6985
    %v7905 = vunpack.c.l.b16 %v6986
    %v7906 = vunpack.c.h.b16 %v6986
    %v7907 = vunpack.c.l.b16 %v6987
    %v7908 = vunpack.c.l.b16 %v6988
    %v7909 = vunpack.c.h.b16 %v6988
    %v7910 = vunpack.c.l.b16 %v6989
    %v7911 = vunpack.c.l.b16 %v6990
    %v7912 = vunpack.c.h.b16 %v6990
    %v7913 = vunpack.c.l.b16 %v6991
    %v7914 = vunpack.c.l.b16 %v6992
    %v7915 = vunpack.c.h.b16 %v6992
    %v7916 = vunpack.c.l.b16 %v6993
    %v7917 = vunpack.c.l.b16 %v6994
    %v7918 = vunpack.c.h.b16 %v6994
    %v7919 = vunpack.c.l.b16 %v6995
    %v7920 = vunpack.c.l.b16 %v6996
    %v7921 = vunpack.c.h.b16 %v6996
    %v7922 = vunpack.c.l.b16 %v6997
    %v7923 = vunpack.c.l.b16 %v6998
    %v7924 = vunpack.c.h.b16 %v6998
    %v7925 = vunpack.c.l.b16 %v6999
    %v7926 = vunpack.c.l.b16 %v7000
    %v7927 = vunpack.c.h.b16 %v7000
    %v7928 = vunpack.c.l.b16 %v7001
    %v7929 = vunpack.c.l.b16 %v7002
    %v7930 = vunpack.c.h.b16 %v7002
    %v7931 = vunpack.c.l.b16 %v7003
    %v7932 = vunpack.c.l.b16 %v7004
    %v7933 = vunpack.c.h.b16 %v7004
    %v7934 = vunpack.c.l.b16 %v7005
    %v7935 = vunpack.c.l.b16 %v7006
    %v7936 = vunpack.c.h.b16 %v7006
    %v7937 = vunpack.c.l.b16 %v7007
    %v7938 = vunpack.c.l.b16 %v7008
    %v7939 = vunpack.c.h.b16 %v7008
    %v7940 = vunpack.c.l.b16 %v7009
    %v7941 = vunpack.c.l.b16 %v7010
    %v7942 = vunpack.c.h.b16 %v7010
    %v7943 = vunpack.c.l.b16 %v7011
    %v7944 = vunpack.c.l.b16 %v7012
    %v7945 = vunpack.c.h.b16 %v7012
    %v7946 = vunpack.c.l.b16 %v7013
    %v7947 = vunpack.c.l.b16 %v7014
    %v7948 = vunpack.c.h.b16 %v7014
    %v7949 = vunpack.c.l.b16 %v7015
    %v7950 = vunpack.c.l.b16 %v7016
    %v7951 = vunpack.c.h.b16 %v7016
    %v7952 = vunpack.c.l.b16 %v7017
    %v7953 = vunpack.c.l.b16 %v7018
    %v7954 = vunpack.c.h.b16 %v7018
    %v7955 = vunpack.c.l.b16 %v7019
    %v7956 = vunpack.c.l.b16 %v7020
    %v7957 = vunpack.c.h.b16 %v7020
    %v7958 = vunpack.c.l.b16 %v7021
    %v7959 = vunpack.c.l.b16 %v7022
    %v7960 = vunpack.c.h.b16 %v7022
    %v7961 = vunpack.c.l.b16 %v7023
    %v7962 = vunpack.c.l.b16 %v7024
    %v7963 = vunpack.c.h.b16 %v7024
    %v7964 = vunpack.c.l.b16 %v7025
    %v7965 = vunpack.c.l.b16 %v7026
    %v7966 = vunpack.c.h.b16 %v7026
    %v7967 = vunpack.c.l.b16 %v7027
    %v7968 = vunpack.c.l.b16 %v7028
    %v7969 = vunpack.c.h.b16 %v7028
    %v7970 = vunpack.c.l.b16 %v7029
    %v7971 = vunpack.c.l.b16 %v7030
    %v7972 = vunpack.c.h.b16 %v7030
    %v7973 = vunpack.c.l.b16 %v7031
    %v7974 = vunpack.c.l.b16 %v7032
    %v7975 = vunpack.c.h.b16 %v7032
    %v7976 = vunpack.c.l.b16 %v7033
    %v7977 = vunpack.c.l.b16 %v7034
    %v7978 = vunpack.c.h.b16 %v7034
    %v7979 = vunpack.c.l.b16 %v7035
    %v7980 = vunpack.c.l.b16 %v7036
    %v7981 = vunpack.c.h.b16 %v7036
    %v7982 = vunpack.c.l.b16 %v7037
    %v7983 = vunpack.c.l.b16 %v7038
    %v7984 = vunpack.c.h.b16 %v7038
    %v7985 = vunpack.c.l.b16 %v7039
    %v7986 = vunpack.c.l.b16 %v7040
    %v7987 = vunpack.c.h.b16 %v7040
    %v7988 = vunpack.c.l.b16 %v7041
    %v7989 = vunpack.c.l.b16 %v7042
    %v7990 = vunpack.c.h.b16 %v7042
    %v7991 = vunpack.c.l.b16 %v7043
    %v7992 = vunpack.c.l.b16 %v7044
    %v7993 = vunpack.c.h.b16 %v7044
    %v7994 = vunpack.c.l.b16 %v7045
    %v7995 = vunpack.c.l.b16 %v7046
    %v7996 = vunpack.c.h.b16 %v7046
    %v7997 = vunpack.c.l.b16 %v7047
    %v7998 = vunpack.c.l.b16 %v7048
    %v7999 = vunpack.c.h.b16 %v7048
    %v8000 = vunpack.c.l.b16 %v7049
    %v8001 = vunpack.c.l.b16 %v7050
    %v8002 = vunpack.c.h.b16 %v7050
    %v8003 = vunpack.c.l.b16 %v7051
    %v8004 = vunpack.c.l.b16 %v7052
    %v8005 = vunpack.c.h.b16 %v7052
    %v8006 = vunpack.c.l.b16 %v7053
    %v8007 = vunpack.c.l.b16 %v7054
    %v8008 = vunpack.c.h.b16 %v7054
    %v8009 = vunpack.c.l.b16 %v7055
    %v8010 = vunpack.c.l.b16 %v7056
    %v8011 = vunpack.c.h.b16 %v7056
    %v8012 = vunpack.c.l.b16 %v7057
    %v8013 = vunpack.c.l.b16 %v7058
    %v8014 = vunpack.c.h.b16 %v7058
    %v8015 = vunpack.c.l.b16 %v7059
    %v8016 = vunpack.c.l.b16 %v7060
    %v8017 = vunpack.c.h.b16 %v7060
    %v8018 = vunpack.c.l.b16 %v7061
    %v8019 = vunpack.c.l.b16 %v7062
    %v8020 = vunpack.c.h.b16 %v7062
    %v8021 = vunpack.c.l.b16 %v7063
    %v8022 = vunpack.c.l.b16 %v7064
    %v8023 = vunpack.c.h.b16 %v7064
    %v8024 = vunpack.c.l.b16 %v7065
    %v8025 = vunpack.c.l.b16 %v7066
    %v8026 = vunpack.c.h.b16 %v7066
    %v8027 = vunpack.c.l.b16 %v7067
    %v8028 = vunpack.c.l.b16 %v7068
    %v8029 = vunpack.c.h.b16 %v7068
    %v8030 = vunpack.c.l.b16 %v7069
    %v8031 = vunpack.c.l.b16 %v7070
    %v8032 = vunpack.c.h.b16 %v7070
    %v8033 = vunpack.c.l.b16 %v7071
    %v8034 = vunpack.c.l.b16 %v7072
    %v8035 = vunpack.c.h.b16 %v7072
    %v8036 = vunpack.c.l.b16 %v7073
    %v8037 = vunpack.c.l.b16 %v7074
    %v8038 = vunpack.c.h.b16 %v7074
    %v8039 = vunpack.c.l.b16 %v7075
    %v8040 = vunpack.c.l.b16 %v7076
    %v8041 = vunpack.c.h.b16 %v7076
    %v8042 = vunpack.c.l.b16 %v7077
    %v8043 = vunpack.c.l.b16 %v7078
    %v8044 = vunpack.c.h.b16 %v7078
    %v8045 = vunpack.c.l.b16 %v7079
    %v8046 = vunpack.c.l.b16 %v7080
    %v8047 = vunpack.c.h.b16 %v7080
    %v8048 = vunpack.c.l.b16 %v7081
    %v8049 = vunpack.c.l.b16 %v7082
    %v8050 = vunpack.c.h.b16 %v7082
    %v8051 = vunpack.c.l.b16 %v7083
    %v8052 = vunpack.c.l.b16 %v7084
    %v8053 = vunpack.c.h.b16 %v7084
    %v8054 = vunpack.c.l.b16 %v7085
    %v8055 = vunpack.c.l.b16 %v7086
    %v8056 = vunpack.c.h.b16 %v7086
    %v8057 = vunpack.c.l.b16 %v7087
    %v8058 = vunpack.c.l.b16 %v7088
    %v8059 = vunpack.c.h.b16 %v7088
    %v8060 = vunpack.c.l.b16 %v7089
    %v8061 = vunpack.c.l.b16 %v7090
    %v8062 = vunpack.c.h.b16 %v7090
    %v8063 = vunpack.c.l.b16 %v7091
    %v8064 = vunpack.c.l.b16 %v7092
    %v8065 = vunpack.c.h.b16 %v7092
    %v8066 = vunpack.c.l.b16 %v7093
    %v8067 = vunpack.c.l.b16 %v7094
    %v8068 = vunpack.c.h.b16 %v7094
    %v8069 = vunpack.c.l.b16 %v7095
    %v8070 = vunpack.c.l.b16 %v7096
    %v8071 = vunpack.c.h.b16 %v7096
    %v8072 = vunpack.c.l.b16 %v7097
    %v8073 = vunpack.c.l.b16 %v7098
    %v8074 = vunpack.c.h.b16 %v7098
    %v8075 = vunpack.c.l.b16 %v7099
    %v8076 = vunpack.c.l.b16 %v7100
    %v8077 = vunpack.c.h.b16 %v7100
    %v8078 = vunpack.c.l.b16 %v7101
    %v8079 = vpack.c.b16 %v7506, %v7503
    %v8080 = vpack.c.b16 %v7507, %v7504
    %v8081 = vpack.c.b16 %v7508, %v7505
    %v8082 = vpack.c.b16 %v7512, %v7509
    %v8083 = vpack.c.b16 %v7513, %v7510
    %v8084 = vpack.c.b16 %v7514, %v7511
    %v8085 = vpack.c.b16 %v7518, %v7515
    %v8086 = vpack.c.b16 %v7519, %v7516
    %v8087 = vpack.c.b16 %v7520, %v7517
    %v8088 = vpack.c.b16 %v7524, %v7521
    %v8089 = vpack.c.b16 %v7525, %v7522
    %v8090 = vpack.c.b16 %v7526, %v7523
    %v8091 = vpack.c.b16 %v7530, %v7527
    %v8092 = vpack.c.b16 %v7531, %v7528
    %v8093 = vpack.c.b16 %v7532, %v7529
    %v8094 = vpack.c.b16 %v7536, %v7533
    %v8095 = vpack.c.b16 %v7537, %v7534
    %v8096 = vpack.c.b16 %v7538, %v7535
    %v8097 = vpack.c.b16 %v7542, %v7539
    %v8098 = vpack.c.b16 %v7543, %v7540
    %v8099 = vpack.c.b16 %v7544, %v7541
    %v8100 = vpack.c.b16 %v7548, %v7545
    %v8101 = vpack.c.b16 %v7549, %v7546
    %v8102 = vpack.c.b16 %v7550, %v7547
    %v8103 = vpack.c.b16 %v7554, %v7551
    %v8104 = vpack.c.b16 %v7555, %v7552
    %v8105 = vpack.c.b16 %v7556, %v7553
    %v8106 = vpack.c.b16 %v7560, %v7557
    %v8107 = vpack.c.b16 %v7561, %v7558
    %v8108 = vpack.c.b16 %v7562, %v7559
    %v8109 = vpack.c.b16 %v7566, %v7563
    %v8110 = vpack.c.b16 %v7567, %v7564
    %v8111 = vpack.c.b16 %v7568, %v7565
    %v8112 = vpack.c.b16 %v7572, %v7569
    %v8113 = vpack.c.b16 %v7573, %v7570
    %v8114 = vpack.c.b16 %v7574, %v7571
    %v8115 = vpack.c.b16 %v7578, %v7575
    %v8116 = vpack.c.b16 %v7579, %v7576
    %v8117 = vpack.c.b16 %v7580, %v7577
    %v8118 = vpack.c.b16 %v7584, %v7581
    %v8119 = vpack.c.b16 %v7585, %v7582
    %v8120 = vpack.c.b16 %v7586, %v7583
    %v8121 = vpack.c.b16 %v7590, %v7587
    %v8122 = vpack.c.b16 %v7591, %v7588
    %v8123 = vpack.c.b16 %v7592, %v7589
    %v8124 = vpack.c.b16 %v7596, %v7593
    %v8125 = vpack.c.b16 %v7597, %v7594
    %v8126 = vpack.c.b16 %v7598, %v7595
    %v8127 = vpack.c.b16 %v7602, %v7599
    %v8128 = vpack.c.b16 %v7603, %v7600
    %v8129 = vpack.c.b16 %v7604, %v7601
    %v8130 = vpack.c.b16 %v7608, %v7605
    %v8131 = vpack.c.b16 %v7609, %v7606
    %v8132 = vpack.c.b16 %v7610, %v7607
    %v8133 = vpack.c.b16 %v7614, %v7611
    %v8134 = vpack.c.b16 %v7615, %v7612
    %v8135 = vpack.c.b16 %v7616, %v7613
    %v8136 = vpack.c.b16 %v7620, %v7617
    %v8137 = vpack.c.b16 %v7621, %v7618
    %v8138 = vpack.c.b16 %v7622, %v7619
    %v8139 = vpack.c.b16 %v7626, %v7623
    %v8140 = vpack.c.b16 %v7627, %v7624
    %v8141 = vpack.c.b16 %v7628, %v7625
    %v8142 = vpack.c.b16 %v7632, %v7629
    %v8143 = vpack.c.b16 %v7633, %v7630
    %v8144 = vpack.c.b16 %v7634, %v7631
    %v8145 = vpack.c.b16 %v7638, %v7635
    %v8146 = vpack.c.b16 %v7639, %v7636
    %v8147 = vpack.c.b16 %v7640, %v7637
    %v8148 = vpack.c.b16 %v7644, %v7641
    %v8149 = vpack.c.b16 %v7645, %v7642
    %v8150 = vpack.c.b16 %v7646, %v7643
    %v8151 = vpack.c.b16 %v7650, %v7647
    %v8152 = vpack.c.b16 %v7651, %v7648
    %v8153 = vpack.c.b16 %v7652, %v7649
    %v8154 = vpack.c.b16 %v7656, %v7653
    %v8155 = vpack.c.b16 %v7657, %v7654
    %v8156 = vpack.c.b16 %v7658, %v7655
    %v8157 = vpack.c.b16 %v7662, %v7659
    %v8158 = vpack.c.b16 %v7663, %v7660
    %v8159 = vpack.c.b16 %v7664, %v7661
    %v8160 = vpack.c.b16 %v7668, %v7665
    %v8161 = vpack.c.b16 %v7669, %v7666
    %v8162 = vpack.c.b16 %v7670, %v7667
    %v8163 = vpack.c.b16 %v7674, %v7671
    %v8164 = vpack.c.b16 %v7675, %v7672
    %v8165 = vpack.c.b16 %v7676, %v7673
    %v8166 = vpack.c.b16 %v7680, %v7677
    %v8167 = vpack.c.b16 %v7681, %v7678
    %v8168 = vpack.c.b16 %v7682, %v7679
    %v8169 = vpack.c.b16 %v7686, %v7683
    %v8170 = vpack.c.b16 %v7687, %v7684
    %v8171 = vpack.c.b16 %v7688, %v7685
    %v8172 = vpack.c.b16 %v7692, %v7689
    %v8173 = vpack.c.b16 %v7693, %v7690
    %v8174 = vpack.c.b16 %v7694, %v7691
    %v8175 = vpack.c.b16 %v7698, %v7695
    %v8176 = vpack.c.b16 %v7699, %v7696
    %v8177 = vpack.c.b16 %v7700, %v7697
    %v8178 = vpack.c.b16 %v7704, %v7701
    %v8179 = vpack.c.b16 %v7705, %v7702
    %v8180 = vpack.c.b16 %v7706, %v7703
    %v8181 = vpack.c.b16 %v7710, %v7707
    %v8182 = vpack.c.b16 %v7711, %v7708
    %v8183 = vpack.c.b16 %v7712, %v7709
    %v8184 = vpack.c.b16 %v7716, %v7713
    %v8185 = vpack.c.b16 %v7717, %v7714
    %v8186 = vpack.c.b16 %v7718, %v7715
    %v8187 = vpack.c.b16 %v7722, %v7719
    %v8188 = vpack.c.b16 %v7723, %v7720
    %v8189 = vpack.c.b16 %v7724, %v7721
    %v8190 = vpack.c.b16 %v7728, %v7725
    %v8191 = vpack.c.b16 %v7729, %v7726
    %v8192 = vpack.c.b16 %v7730, %v7727
    %v8193 = vpack.c.b16 %v7734, %v7731
    %v8194 = vpack.c.b16 %v7735, %v7732
    %v8195 = vpack.c.b16 %v7736, %v7733
    %v8196 = vpack.c.b16 %v7740, %v7737
    %v8197 = vpack.c.b16 %v7741, %v7738
    %v8198 = vpack.c.b16 %v7742, %v7739
    %v8199 = vpack.c.b16 %v7746, %v7743
    %v8200 = vpack.c.b16 %v7747, %v7744
    %v8201 = vpack.c.b16 %v7748, %v7745
    %v8202 = vpack.c.b16 %v7752, %v7749
    %v8203 = vpack.c.b16 %v7753, %v7750
    %v8204 = vpack.c.b16 %v7754, %v7751
    %v8205 = vpack.c.b16 %v7758, %v7755
    %v8206 = vpack.c.b16 %v7759, %v7756
    %v8207 = vpack.c.b16 %v7760, %v7757
    %v8208 = vpack.c.b16 %v7764, %v7761
    %v8209 = vpack.c.b16 %v7765, %v7762
    %v8210 = vpack.c.b16 %v7766, %v7763
    %v8211 = vpack.c.b16 %v7770, %v7767
    %v8212 = vpack.c.b16 %v7771, %v7768
    %v8213 = vpack.c.b16 %v7772, %v7769
    %v8214 = vpack.c.b16 %v7776, %v7773
    %v8215 = vpack.c.b16 %v7777, %v7774
    %v8216 = vpack.c.b16 %v7778, %v7775
    %v8217 = vpack.c.b16 %v7782, %v7779
    %v8218 = vpack.c.b16 %v7783, %v7780
    %v8219 = vpack.c.b16 %v7784, %v7781
    %v8220 = vpack.c.b16 %v7788, %v7785
    %v8221 = vpack.c.b16 %v7789, %v7786
    %v8222 = vpack.c.b16 %v7790, %v7787
    %v8223 = vpack.c.b16 %v7794, %v7791
    %v8224 = vpack.c.b16 %v7795, %v7792
    %v8225 = vpack.c.b16 %v7796, %v7793
    %v8226 = vpack.c.b16 %v7800, %v7797
    %v8227 = vpack.c.b16 %v7801, %v7798
    %v8228 = vpack.c.b16 %v7802, %v7799
    %v8229 = vpack.c.b16 %v7806, %v7803
    %v8230 = vpack.c.b16 %v7807, %v7804
    %v8231 = vpack.c.b16 %v7808, %v7805
    %v8232 = vpack.c.b16 %v7812, %v7809
    %v8233 = vpack.c.b16 %v7813, %v7810
    %v8234 = vpack.c.b16 %v7814, %v7811
    %v8235 = vpack.c.b16 %v7818, %v7815
    %v8236 = vpack.c.b16 %v7819, %v7816
    %v8237 = vpack.c.b16 %v7820, %v7817
    %v8238 = vpack.c.b16 %v7824, %v7821
    %v8239 = vpack.c.b16 %v7825, %v7822
    %v8240 = vpack.c.b16 %v7826, %v7823
    %v8241 = vpack.c.b16 %v7830, %v7827
    %v8242 = vpack.c.b16 %v7831, %v7828
    %v8243 = vpack.c.b16 %v7832, %v7829
    %v8244 = vpack.c.b16 %v7836, %v7833
    %v8245 = vpack.c.b16 %v7837, %v7834
    %v8246 = vpack.c.b16 %v7838, %v7835
    %v8247 = vpack.c.b16 %v7842, %v7839
    %v8248 = vpack.c.b16 %v7843, %v7840
    %v8249 = vpack.c.b16 %v7844, %v7841
    %v8250 = vpack.c.b16 %v7848, %v7845
    %v8251 = vpack.c.b16 %v7849, %v7846
    %v8252 = vpack.c.b16 %v7850, %v7847
    %v8253 = vpack.c.b16 %v7854, %v7851
    %v8254 = vpack.c.b16 %v7855, %v7852
    %v8255 = vpack.c.b16 %v7856, %v7853
    %v8256 = vpack.c.b16 %v7860, %v7857
    %v8257 = vpack.c.b16 %v7861, %v7858
    %v8258 = vpack.c.b16 %v7862, %v7859
    %v8259 = vpack.c.b16 %v7866, %v7863
    %v8260 = vpack.c.b16 %v7867, %v7864
    %v8261 = vpack.c.b16 %v7868, %v7865
    %v8262 = vpack.c.b16 %v7872, %v7869
    %v8263 = vpack.c.b16 %v7873, %v7870
    %v8264 = vpack.c.b16 %v7874, %v7871
    %v8265 = vpack.c.b16 %v7878, %v7875
    %v8266 = vpack.c.b16 %v7879, %v7876
    %v8267 = vpack.c.b16 %v7880, %v7877
    %v8268 = vpack.c.b16 %v7884, %v7881
    %v8269 = vpack.c.b16 %v7885, %v7882
    %v8270 = vpack.c.b16 %v7886, %v7883
    %v8271 = vpack.c.b16 %v7890, %v7887
    %v8272 = vpack.c.b16 %v7891, %v7888
    %v8273 = vpack.c.b16 %v7892, %v7889
    %v8274 = vpack.c.b16 %v7896, %v7893
    %v8275 = vpack.c.b16 %v7897, %v7894
    %v8276 = vpack.c.b16 %v7898, %v7895
    %v8277 = vpack.c.b16 %v7902, %v7899
    %v8278 = vpack.c.b16 %v7903, %v7900
    %v8279 = vpack.c.b16 %v7904, %v7901
    %v8280 = vpack.c.b16 %v7908, %v7905
    %v8281 = vpack.c.b16 %v7909, %v7906
    %v8282 = vpack.c.b16 %v7910, %v7907
    %v8283 = vpack.c.b16 %v7914, %v7911
    %v8284 = vpack.c.b16 %v7915, %v7912
    %v8285 = vpack.c.b16 %v7916, %v7913
    %v8286 = vpack.c.b16 %v7920, %v7917
    %v8287 = vpack.c.b16 %v7921, %v7918
    %v8288 = vpack.c.b16 %v7922, %v7919
    %v8289 = vpack.c.b16 %v7926, %v7923
    %v8290 = vpack.c.b16 %v7927, %v7924
    %v8291 = vpack.c.b16 %v7928, %v7925
    %v8292 = vpack.c.b16 %v7932, %v7929
    %v8293 = vpack.c.b16 %v7933, %v7930
    %v8294 = vpack.c.b16 %v7934, %v7931
    %v8295 = vpack.c.b16 %v7938, %v7935
    %v8296 = vpack.c.b16 %v7939, %v7936
    %v8297 = vpack.c.b16 %v7940, %v7937
    %v8298 = vpack.c.b16 %v7944, %v7941
    %v8299 = vpack.c.b16 %v7945, %v7942
    %v8300 = vpack.c.b16 %v7946, %v7943
    %v8301 = vpack.c.b16 %v7950, %v7947
    %v8302 = vpack.c.b16 %v7951, %v7948
    %v8303 = vpack.c.b16 %v7952, %v7949
    %v8304 = vpack.c.b16 %v7956, %v7953
    %v8305 = vpack.c.b16 %v7957, %v7954
    %v8306 = vpack.c.b16 %v7958, %v7955
    %v8307 = vpack.c.b16 %v7962, %v7959
    %v8308 = vpack.c.b16 %v7963, %v7960
    %v8309 = vpack.c.b16 %v7964, %v7961
    %v8310 = vpack.c.b16 %v7968, %v7965
    %v8311 = vpack.c.b16 %v7969, %v7966
    %v8312 = vpack.c.b16 %v7970, %v7967
    %v8313 = vpack.c.b16 %v7974, %v7971
    %v8314 = vpack.c.b16 %v7975, %v7972
    %v8315 = vpack.c.b16 %v7976, %v7973
    %v8316 = vpack.c.b16 %v7980, %v7977
    %v8317 = vpack.c.b16 %v7981, %v7978
    %v8318 = vpack.c.b16 %v7982, %v7979
    %v8319 = vpack.c.b16 %v7986, %v7983
    %v8320 = vpack.c.b16 %v7987, %v7984
    %v8321 = vpack.c.b16 %v7988, %v7985
    %v8322 = vpack.c.b16 %v7992, %v7989
    %v8323 = vpack.c.b16 %v7993, %v7990
    %v8324 = vpack.c.b16 %v7994, %v7991
    %v8325 = vpack.c.b16 %v7998, %v7995
    %v8326 = vpack.c.b16 %v7999, %v7996
    %v8327 = vpack.c.b16 %v8000, %v7997
    %v8328 = vpack.c.b16 %v8004, %v8001
    %v8329 = vpack.c.b16 %v8005, %v8002
    %v8330 = vpack.c.b16 %v8006, %v8003
    %v8331 = vpack.c.b16 %v8010, %v8007
    %v8332 = vpack.c.b16 %v8011, %v8008
    %v8333 = vpack.c.b16 %v8012, %v8009
    %v8334 = vpack.c.b16 %v8016, %v8013
    %v8335 = vpack.c.b16 %v8017, %v8014
    %v8336 = vpack.c.b16 %v8018, %v8015
    %v8337 = vpack.c.b16 %v8022, %v8019
    %v8338 = vpack.c.b16 %v8023, %v8020
    %v8339 = vpack.c.b16 %v8024, %v8021
    %v8340 = vpack.c.b16 %v8028, %v8025
    %v8341 = vpack.c.b16 %v8029, %v8026
    %v8342 = vpack.c.b16 %v8030, %v8027
    %v8343 = vpack.c.b16 %v8034, %v8031
    %v8344 = vpack.c.b16 %v8035, %v8032
    %v8345 = vpack.c.b16 %v8036, %v8033
    %v8346 = vpack.c.b16 %v8040, %v8037
    %v8347 = vpack.c.b16 %v8041, %v8038
    %v8348 = vpack.c.b16 %v8042, %v8039
    %v8349 = vpack.c.b16 %v8046, %v8043
    %v8350 = vpack.c.b16 %v8047, %v8044
    %v8351 = vpack.c.b16 %v8048, %v8045
    %v8352 = vpack.c.b16 %v8052, %v8049
    %v8353 = vpack.c.b16 %v8053, %v8050
    %v8354 = vpack.c.b16 %v8054, %v8051
    %v8355 = vpack.c.b16 %v8058, %v8055
    %v8356 = vpack.c.b16 %v8059, %v8056
    %v8357 = vpack.c.b16 %v8060, %v8057
    %v8358 = vpack.c.b16 %v8064, %v8061
    %v8359 = vpack.c.b16 %v8065, %v8062
    %v8360 = vpack.c.b16 %v8066, %v8063
    %v8361 = vpack.c.b16 %v8070, %v8067
    %v8362 = vpack.c.b16 %v8071, %v8068
    %v8363 = vpack.c.b16 %v8072, %v8069
    %v8364 = vpack.c.b16 %v8076, %v8073
    %v8365 = vpack.c.b16 %v8077, %v8074
    %v8366 = vpack.c.b16 %v8078, %v8075
    %8655 = vmatprep.subr.bf16.mxu0 %v8080
    %8656 = vmatpush1.bf16.msra.mxu0 %v8079
    %8657 = vmatprep.subr.bf16.mxu0 %v8083
    %8658 = vmatpush1.bf16.msra.mxu0 %v8082
    %8659 = vmatprep.subr.bf16.mxu0 %v8086
    %8660 = vmatpush1.bf16.msra.mxu0 %v8085
    %8661 = vmatprep.subr.bf16.mxu0 %v8089
    %8662 = vmatpush1.bf16.msra.mxu0 %v8088
    %8663 = vmatprep.subr.bf16.mxu0 %v8092
    %8664 = vmatpush1.bf16.msra.mxu0 %v8091
    %8665 = vmatprep.subr.bf16.mxu0 %v8095
    %8666 = vmatpush1.bf16.msra.mxu0 %v8094
    %8667 = vmatprep.subr.bf16.mxu0 %v8098
    %8668 = vmatpush1.bf16.msra.mxu0 %v8097
    %8669 = vmatprep.subr.bf16.mxu0 %v8101
    %8670 = vmatpush1.bf16.msra.mxu0 %v8100
    %8671 = vmatprep.subr.bf16.mxu0 %v8104
    %8672 = vmatpush1.bf16.msra.mxu0 %v8103
    %8673 = vmatprep.subr.bf16.mxu0 %v8107
    %8674 = vmatpush1.bf16.msra.mxu0 %v8106
    %8675 = vmatprep.subr.bf16.mxu0 %v8110
    %8676 = vmatpush1.bf16.msra.mxu0 %v8109
    %8677 = vmatprep.subr.bf16.mxu0 %v8113
    %8678 = vmatpush1.bf16.msra.mxu0 %v8112
    %8679 = vmatprep.subr.bf16.mxu0 %v8116
    %8680 = vmatpush1.bf16.msra.mxu0 %v8115
    %8681 = vmatprep.subr.bf16.mxu0 %v8119
    %8682 = vmatpush1.bf16.msra.mxu0 %v8118
    %8683 = vmatprep.subr.bf16.mxu0 %v8122
    %8684 = vmatpush1.bf16.msra.mxu0 %v8121
    %8685 = vmatprep.subr.bf16.mxu0 %v8125
    %8686 = vmatpush1.bf16.msra.mxu0 %v8124
    %8687 = vmatprep.mubr.bf16.mxu0 %v6695
    %8688 = vmatmul.mubr.bf16.gmra.mrb[0].mxu0 %v6694
    %v8689 = vpop.f32.mrb[0].mxu0
    %v8690 = vadd.f32 %v7107, %v8689
    %v8691 = vpop.f32.mrb[0].mxu0
    %v8692 = vadd.f32 %v7111, %v8691
    %v8693 = vpop.f32.mrb[0].mxu0
    %v8694 = vadd.f32 %v7107, %v8693
    %v8695 = vpop.f32.mrb[0].mxu0
    %v8696 = vadd.f32 %v7111, %v8695
    %8697 = vmatprep.mubr.bf16.mxu0 %v6707
    %8698 = vmatmul.mubr.bf16.gmra.mrb[0].mxu0 %v6706
    %v8699 = vpop.f32.mrb[0].mxu0
    %v8700 = vadd.f32 %v7107, %v8699
    %v8701 = vpop.f32.mrb[0].mxu0
    %v8702 = vadd.f32 %v7111, %v8701
    %v8703 = vpop.f32.mrb[0].mxu0
    %v8704 = vadd.f32 %v7107, %v8703
    %v8705 = vpop.f32.mrb[0].mxu0
    %v8706 = vadd.f32 %v7111, %v8705
    %8707 = vdwg.mxu0
    %8708 = vmatprep.subr.bf16.mxu0 %v8128
    %8709 = vmatpush1.bf16.msra.mxu0 %v8127
    %8710 = vmatprep.subr.bf16.mxu0 %v8131
    %8711 = vmatpush1.bf16.msra.mxu0 %v8130
    %8712 = vmatprep.subr.bf16.mxu0 %v8134
    %8713 = vmatpush1.bf16.msra.mxu0 %v8133
    %8714 = vmatprep.subr.bf16.mxu0 %v8137
    %8715 = vmatpush1.bf16.msra.mxu0 %v8136
    %8716 = vmatprep.subr.bf16.mxu0 %v8140
    %8717 = vmatpush1.bf16.msra.mxu0 %v8139
    %8718 = vmatprep.subr.bf16.mxu0 %v8143
    %8719 = vmatpush1.bf16.msra.mxu0 %v8142
    %8720 = vmatprep.subr.bf16.mxu0 %v8146
    %8721 = vmatpush1.bf16.msra.mxu0 %v8145
    %8722 = vmatprep.subr.bf16.mxu0 %v8149
    %8723 = vmatpush1.bf16.msra.mxu0 %v8148
    %8724 = vmatprep.subr.bf16.mxu0 %v8152
    %8725 = vmatpush1.bf16.msra.mxu0 %v8151
    %8726 = vmatprep.subr.bf16.mxu0 %v8155
    %8727 = vmatpush1.bf16.msra.mxu0 %v8154
    %8728 = vmatprep.subr.bf16.mxu0 %v8158
    %8729 = vmatpush1.bf16.msra.mxu0 %v8157
    %8730 = vmatprep.subr.bf16.mxu0 %v8161
    %8731 = vmatpush1.bf16.msra.mxu0 %v8160
    %8732 = vmatprep.subr.bf16.mxu0 %v8164
    %8733 = vmatpush1.bf16.msra.mxu0 %v8163
    %8734 = vmatprep.subr.bf16.mxu0 %v8167
    %8735 = vmatpush1.bf16.msra.mxu0 %v8166
    %8736 = vmatprep.subr.bf16.mxu0 %v8170
    %8737 = vmatpush1.bf16.msra.mxu0 %v8169
    %8738 = vmatprep.subr.bf16.mxu0 %v8173
    %8739 = vmatpush1.bf16.msra.mxu0 %v8172
    %8740 = vmatprep.mubr.bf16.mxu0 %v6697
    %8741 = vmatmul.mubr.bf16.gmra.mrb[0].mxu0 %v6696
    %v8742 = vpop.f32.mrb[0].mxu0
    %v8743 = vadd.f32 %v8690, %v8742
    %v8744 = vpop.f32.mrb[0].mxu0
    %v8745 = vadd.f32 %v8692, %v8744
    %v8746 = vpop.f32.mrb[0].mxu0
    %v8747 = vadd.f32 %v8694, %v8746
    %v8748 = vpop.f32.mrb[0].mxu0
    %v8749 = vadd.f32 %v8696, %v8748
    %8750 = vmatprep.mubr.bf16.mxu0 %v6709
    %8751 = vmatmul.mubr.bf16.gmra.mrb[0].mxu0 %v6708
    %v8752 = vpop.f32.mrb[0].mxu0
    %v8753 = vadd.f32 %v8700, %v8752
    %v8754 = vpop.f32.mrb[0].mxu0
    %v8755 = vadd.f32 %v8702, %v8754
    %v8756 = vpop.f32.mrb[0].mxu0
    %v8757 = vadd.f32 %v8704, %v8756
    %v8758 = vpop.f32.mrb[0].mxu0
    %v8759 = vadd.f32 %v8706, %v8758
    %8760 = vdwg.mxu0
    %8761 = vmatprep.subr.bf16.mxu0 %v8176
    %8762 = vmatpush1.bf16.msra.mxu0 %v8175
    %8763 = vmatprep.subr.bf16.mxu0 %v8179
    %8764 = vmatpush1.bf16.msra.mxu0 %v8178
    %8765 = vmatprep.subr.bf16.mxu0 %v8182
    %8766 = vmatpush1.bf16.msra.mxu0 %v8181
    %8767 = vmatprep.subr.bf16.mxu0 %v8185
    %8768 = vmatpush1.bf16.msra.mxu0 %v8184
    %8769 = vmatprep.subr.bf16.mxu0 %v8188
    %8770 = vmatpush1.bf16.msra.mxu0 %v8187
    %8771 = vmatprep.subr.bf16.mxu0 %v8191
    %8772 = vmatpush1.bf16.msra.mxu0 %v8190
    %8773 = vmatprep.subr.bf16.mxu0 %v8194
    %8774 = vmatpush1.bf16.msra.mxu0 %v8193
    %8775 = vmatprep.subr.bf16.mxu0 %v8197
    %8776 = vmatpush1.bf16.msra.mxu0 %v8196
    %8777 = vmatprep.subr.bf16.mxu0 %v8200
    %8778 = vmatpush1.bf16.msra.mxu0 %v8199
    %8779 = vmatprep.subr.bf16.mxu0 %v8203
    %8780 = vmatpush1.bf16.msra.mxu0 %v8202
    %8781 = vmatprep.subr.bf16.mxu0 %v8206
    %8782 = vmatpush1.bf16.msra.mxu0 %v8205
    %8783 = vmatprep.subr.bf16.mxu0 %v8209
    %8784 = vmatpush1.bf16.msra.mxu0 %v8208
    %8785 = vmatprep.subr.bf16.mxu0 %v8212
    %8786 = vmatpush1.bf16.msra.mxu0 %v8211
    %8787 = vmatprep.subr.bf16.mxu0 %v8215
    %8788 = vmatpush1.bf16.msra.mxu0 %v8214
    %8789 = vmatprep.subr.bf16.mxu0 %v8218
    %8790 = vmatpush1.bf16.msra.mxu0 %v8217
    %8791 = vmatprep.subr.bf16.mxu0 %v8221
    %8792 = vmatpush1.bf16.msra.mxu0 %v8220
    %8793 = vmatprep.mubr.bf16.mxu0 %v6699
    %8794 = vmatmul.mubr.bf16.gmra.mrb[0].mxu0 %v6698
    %v8795 = vpop.f32.mrb[0].mxu0
    %v8796 = vadd.f32 %v8743, %v8795
    %v8797 = vpop.f32.mrb[0].mxu0
    %v8798 = vadd.f32 %v8745, %v8797
    %v8799 = vpop.f32.mrb[0].mxu0
    %v8800 = vadd.f32 %v8747, %v8799
    %v8801 = vpop.f32.mrb[0].mxu0
    %v8802 = vadd.f32 %v8749, %v8801
    %8803 = vmatprep.mubr.bf16.mxu0 %v6711
    %8804 = vmatmul.mubr.bf16.gmra.mrb[0].mxu0 %v6710
    %v8805 = vpop.f32.mrb[0].mxu0
    %v8806 = vadd.f32 %v8753, %v8805
    %v8807 = vpop.f32.mrb[0].mxu0
    %v8808 = vadd.f32 %v8755, %v8807
    %v8809 = vpop.f32.mrb[0].mxu0
    %v8810 = vadd.f32 %v8757, %v8809
    %v8811 = vpop.f32.mrb[0].mxu0
    %v8812 = vadd.f32 %v8759, %v8811
    %8813 = vdwg.mxu0
    %8814 = vmatprep.subr.bf16.mxu0 %v8224
    %8815 = vmatpush1.bf16.msra.mxu0 %v8223
    %8816 = vmatprep.subr.bf16.mxu0 %v8227
    %8817 = vmatpush1.bf16.msra.mxu0 %v8226
    %8818 = vmatprep.subr.bf16.mxu0 %v8230
    %8819 = vmatpush1.bf16.msra.mxu0 %v8229
    %8820 = vmatprep.subr.bf16.mxu0 %v8233
    %8821 = vmatpush1.bf16.msra.mxu0 %v8232
    %8822 = vmatprep.subr.bf16.mxu0 %v8236
    %8823 = vmatpush1.bf16.msra.mxu0 %v8235
    %8824 = vmatprep.subr.bf16.mxu0 %v8239
    %8825 = vmatpush1.bf16.msra.mxu0 %v8238
    %8826 = vmatprep.subr.bf16.mxu0 %v8242
    %8827 = vmatpush1.bf16.msra.mxu0 %v8241
    %8828 = vmatprep.subr.bf16.mxu0 %v8245
    %8829 = vmatpush1.bf16.msra.mxu0 %v8244
    %8830 = vmatprep.subr.bf16.mxu0 %v8248
    %8831 = vmatpush1.bf16.msra.mxu0 %v8247
    %8832 = vmatprep.subr.bf16.mxu0 %v8251
    %8833 = vmatpush1.bf16.msra.mxu0 %v8250
    %8834 = vmatprep.subr.bf16.mxu0 %v8254
    %8835 = vmatpush1.bf16.msra.mxu0 %v8253
    %8836 = vmatprep.subr.bf16.mxu0 %v8257
    %8837 = vmatpush1.bf16.msra.mxu0 %v8256
    %8838 = vmatprep.subr.bf16.mxu0 %v8260
    %8839 = vmatpush1.bf16.msra.mxu0 %v8259
    %8840 = vmatprep.subr.bf16.mxu0 %v8263
    %8841 = vmatpush1.bf16.msra.mxu0 %v8262
    %8842 = vmatprep.subr.bf16.mxu0 %v8266
    %8843 = vmatpush1.bf16.msra.mxu0 %v8265
    %8844 = vmatprep.subr.bf16.mxu0 %v8269
    %8845 = vmatpush1.bf16.msra.mxu0 %v8268
    %8846 = vmatprep.mubr.bf16.mxu0 %v6701
    %8847 = vmatmul.mubr.bf16.gmra.mrb[0].mxu0 %v6700
    %v8848 = vpop.f32.mrb[0].mxu0
    %v8849 = vadd.f32 %v8796, %v8848
    %v8850 = vpop.f32.mrb[0].mxu0
    %v8851 = vadd.f32 %v8798, %v8850
    %v8852 = vpop.f32.mrb[0].mxu0
    %v8853 = vadd.f32 %v8800, %v8852
    %v8854 = vpop.f32.mrb[0].mxu0
    %v8855 = vadd.f32 %v8802, %v8854
    %8856 = vmatprep.mubr.bf16.mxu0 %v6713
    %8857 = vmatmul.mubr.bf16.gmra.mrb[0].mxu0 %v6712
    %v8858 = vpop.f32.mrb[0].mxu0
    %v8859 = vadd.f32 %v8806, %v8858
    %v8860 = vpop.f32.mrb[0].mxu0
    %v8861 = vadd.f32 %v8808, %v8860
    %v8862 = vpop.f32.mrb[0].mxu0
    %v8863 = vadd.f32 %v8810, %v8862
    %v8864 = vpop.f32.mrb[0].mxu0
    %v8865 = vadd.f32 %v8812, %v8864
    %8866 = vdwg.mxu0
    %8867 = vmatprep.subr.bf16.mxu0 %v8272
    %8868 = vmatpush1.bf16.msra.mxu0 %v8271
    %8869 = vmatprep.subr.bf16.mxu0 %v8275
    %8870 = vmatpush1.bf16.msra.mxu0 %v8274
    %8871 = vmatprep.subr.bf16.mxu0 %v8278
    %8872 = vmatpush1.bf16.msra.mxu0 %v8277
    %8873 = vmatprep.subr.bf16.mxu0 %v8281
    %8874 = vmatpush1.bf16.msra.mxu0 %v8280
    %8875 = vmatprep.subr.bf16.mxu0 %v8284
    %8876 = vmatpush1.bf16.msra.mxu0 %v8283
    %8877 = vmatprep.subr.bf16.mxu0 %v8287
    %8878 = vmatpush1.bf16.msra.mxu0 %v8286
    %8879 = vmatprep.subr.bf16.mxu0 %v8290
    %8880 = vmatpush1.bf16.msra.mxu0 %v8289
    %8881 = vmatprep.subr.bf16.mxu0 %v8293
    %8882 = vmatpush1.bf16.msra.mxu0 %v8292
    %8883 = vmatprep.subr.bf16.mxu0 %v8296
    %8884 = vmatpush1.bf16.msra.mxu0 %v8295
    %8885 = vmatprep.subr.bf16.mxu0 %v8299
    %8886 = vmatpush1.bf16.msra.mxu0 %v8298
    %8887 = vmatprep.subr.bf16.mxu0 %v8302
    %8888 = vmatpush1.bf16.msra.mxu0 %v8301
    %8889 = vmatprep.subr.bf16.mxu0 %v8305
    %8890 = vmatpush1.bf16.msra.mxu0 %v8304
    %8891 = vmatprep.subr.bf16.mxu0 %v8308
    %8892 = vmatpush1.bf16.msra.mxu0 %v8307
    %8893 = vmatprep.subr.bf16.mxu0 %v8311
    %8894 = vmatpush1.bf16.msra.mxu0 %v8310
    %8895 = vmatprep.subr.bf16.mxu0 %v8314
    %8896 = vmatpush1.bf16.msra.mxu0 %v8313
    %8897 = vmatprep.subr.bf16.mxu0 %v8317
    %8898 = vmatpush1.bf16.msra.mxu0 %v8316
    %8899 = vmatprep.mubr.bf16.mxu0 %v6703
    %8900 = vmatmul.mubr.bf16.gmra.mrb[0].mxu0 %v6702
    %v8901 = vpop.f32.mrb[0].mxu0
    %v8902 = vadd.f32 %v8849, %v8901
    %v8903 = vpop.f32.mrb[0].mxu0
    %v8904 = vadd.f32 %v8851, %v8903
    %v8905 = vpop.f32.mrb[0].mxu0
    %v8906 = vadd.f32 %v8853, %v8905
    %v8907 = vpop.f32.mrb[0].mxu0
    %v8908 = vadd.f32 %v8855, %v8907
    %8909 = vmatprep.mubr.bf16.mxu0 %v6715
    %8910 = vmatmul.mubr.bf16.gmra.mrb[0].mxu0 %v6714
    %v8911 = vpop.f32.mrb[0].mxu0
    %v8912 = vadd.f32 %v8859, %v8911
    %v8913 = vpop.f32.mrb[0].mxu0
    %v8914 = vadd.f32 %v8861, %v8913
    %v8915 = vpop.f32.mrb[0].mxu0
    %v8916 = vadd.f32 %v8863, %v8915
    %v8917 = vpop.f32.mrb[0].mxu0
    %v8918 = vadd.f32 %v8865, %v8917
    %8919 = vdwg.mxu0
    %8920 = vmatprep.subr.bf16.mxu0 %v8320
    %8921 = vmatpush1.bf16.msra.mxu0 %v8319
    %8922 = vmatprep.subr.bf16.mxu0 %v8323
    %8923 = vmatpush1.bf16.msra.mxu0 %v8322
    %8924 = vmatprep.subr.bf16.mxu0 %v8326
    %8925 = vmatpush1.bf16.msra.mxu0 %v8325
    %8926 = vmatprep.subr.bf16.mxu0 %v8329
    %8927 = vmatpush1.bf16.msra.mxu0 %v8328
    %8928 = vmatprep.subr.bf16.mxu0 %v8332
    %8929 = vmatpush1.bf16.msra.mxu0 %v8331
    %8930 = vmatprep.subr.bf16.mxu0 %v8335
    %8931 = vmatpush1.bf16.msra.mxu0 %v8334
    %8932 = vmatprep.subr.bf16.mxu0 %v8338
    %8933 = vmatpush1.bf16.msra.mxu0 %v8337
    %8934 = vmatprep.subr.bf16.mxu0 %v8341
    %8935 = vmatpush1.bf16.msra.mxu0 %v8340
    %8936 = vmatprep.subr.bf16.mxu0 %v8344
    %8937 = vmatpush1.bf16.msra.mxu0 %v8343
    %8938 = vmatprep.subr.bf16.mxu0 %v8347
    %8939 = vmatpush1.bf16.msra.mxu0 %v8346
    %8940 = vmatprep.subr.bf16.mxu0 %v8350
    %8941 = vmatpush1.bf16.msra.mxu0 %v8349
    %8942 = vmatprep.subr.bf16.mxu0 %v8353
    %8943 = vmatpush1.bf16.msra.mxu0 %v8352
    %8944 = vmatprep.subr.bf16.mxu0 %v8356
    %8945 = vmatpush1.bf16.msra.mxu0 %v8355
    %8946 = vmatprep.subr.bf16.mxu0 %v8359
    %8947 = vmatpush1.bf16.msra.mxu0 %v8358
    %8948 = vmatprep.subr.bf16.mxu0 %v8362
    %8949 = vmatpush1.bf16.msra.mxu0 %v8361
    %8950 = vmatprep.subr.bf16.mxu0 %v8365
    %8951 = vmatpush1.bf16.msra.mxu0 %v8364
    %8952 = vmatprep.mubr.bf16.mxu0 %v6705
    %8953 = vmatmul.mubr.bf16.gmra.mrb[0].mxu0 %v6704
    %v8954 = vpop.f32.mrb[0].mxu0
    %v8955 = vadd.f32 %v8902, %v8954
    %v8956 = vpop.f32.mrb[0].mxu0
    %v8957 = vadd.f32 %v8904, %v8956
    %v8958 = vpop.f32.mrb[0].mxu0
    %v8959 = vadd.f32 %v8906, %v8958
    %v8960 = vpop.f32.mrb[0].mxu0
    %v8961 = vadd.f32 %v8908, %v8960
    %8962 = vmatprep.mubr.bf16.mxu0 %v6717
    %8963 = vmatmul.mubr.bf16.gmra.mrb[0].mxu0 %v6716
    %v8964 = vpop.f32.mrb[0].mxu0
    %v8965 = vadd.f32 %v8912, %v8964
    %v8966 = vpop.f32.mrb[0].mxu0
    %v8967 = vadd.f32 %v8914, %v8966
    %v8968 = vpop.f32.mrb[0].mxu0
    %v8969 = vadd.f32 %v8916, %v8968
    %v8970 = vpop.f32.mrb[0].mxu0
    %v8971 = vadd.f32 %v8918, %v8970
    %8972 = vdwg.mxu0
    %8973 = vmatprep.subr.bf16.mxu0 0
    %8974 = vmatpush1.bf16.msra.mxu0 %v8081
    %8975 = vmatprep.subr.bf16.mxu0 0
    %8976 = vmatpush1.bf16.msra.mxu0 %v8084
    %8977 = vmatprep.subr.bf16.mxu0 0
    %8978 = vmatpush1.bf16.msra.mxu0 %v8087
    %8979 = vmatprep.subr.bf16.mxu0 0
    %8980 = vmatpush1.bf16.msra.mxu0 %v8090
    %8981 = vmatprep.subr.bf16.mxu0 0
    %8982 = vmatpush1.bf16.msra.mxu0 %v8093
    %8983 = vmatprep.subr.bf16.mxu0 0
    %8984 = vmatpush1.bf16.msra.mxu0 %v8096
    %8985 = vmatprep.subr.bf16.mxu0 0
    %8986 = vmatpush1.bf16.msra.mxu0 %v8099
    %8987 = vmatprep.subr.bf16.mxu0 0
    %8988 = vmatpush1.bf16.msra.mxu0 %v8102
    %8989 = vmatprep.subr.bf16.mxu0 0
    %8990 = vmatpush1.bf16.msra.mxu0 %v8105
    %8991 = vmatprep.subr.bf16.mxu0 0
    %8992 = vmatpush1.bf16.msra.mxu0 %v8108
    %8993 = vmatprep.subr.bf16.mxu0 0
    %8994 = vmatpush1.bf16.msra.mxu0 %v8111
    %8995 = vmatprep.subr.bf16.mxu0 0
    %8996 = vmatpush1.bf16.msra.mxu0 %v8114
    %8997 = vmatprep.subr.bf16.mxu0 0
    %8998 = vmatpush1.bf16.msra.mxu0 %v8117
    %8999 = vmatprep.subr.bf16.mxu0 0
    %9000 = vmatpush1.bf16.msra.mxu0 %v8120
    %9001 = vmatprep.subr.bf16.mxu0 0
    %9002 = vmatpush1.bf16.msra.mxu0 %v8123
    %9003 = vmatprep.subr.bf16.mxu0 0
    %9004 = vmatpush1.bf16.msra.mxu0 %v8126
    %9005 = vmatprep.mubr.bf16.mxu0 %v6695
    %9006 = vmatmul.mubr.bf16.gmra.mrb[0].mxu0 %v6694
    %v9007 = vpop.f32.mrb[0].mxu0
    %v9008 = vadd.f32 %v7115, %v9007
    %v9009 = vpop.f32.mrb[0].mxu0
    %v9010 = vpop.f32.mrb[0].mxu0
    %v9011 = vadd.f32 %v7115, %v9010
    %v9012 = vpop.f32.mrb[0].mxu0
    %9013 = vmatprep.mubr.bf16.mxu0 %v6707
    %9014 = vmatmul.mubr.bf16.gmra.mrb[0].mxu0 %v6706
    %v9015 = vpop.f32.mrb[0].mxu0
    %v9016 = vadd.f32 %v7115, %v9015
    %v9017 = vpop.f32.mrb[0].mxu0
    %v9018 = vpop.f32.mrb[0].mxu0
    %v9019 = vadd.f32 %v7115, %v9018
    %v9020 = vpop.f32.mrb[0].mxu0
    %9021 = vdwg.mxu0
    %9022 = vmatprep.subr.bf16.mxu0 0
    %9023 = vmatpush1.bf16.msra.mxu0 %v8129
    %9024 = vmatprep.subr.bf16.mxu0 0
    %9025 = vmatpush1.bf16.msra.mxu0 %v8132
    %9026 = vmatprep.subr.bf16.mxu0 0
    %9027 = vmatpush1.bf16.msra.mxu0 %v8135
    %9028 = vmatprep.subr.bf16.mxu0 0
    %9029 = vmatpush1.bf16.msra.mxu0 %v8138
    %9030 = vmatprep.subr.bf16.mxu0 0
    %9031 = vmatpush1.bf16.msra.mxu0 %v8141
    %9032 = vmatprep.subr.bf16.mxu0 0
    %9033 = vmatpush1.bf16.msra.mxu0 %v8144
    %9034 = vmatprep.subr.bf16.mxu0 0
    %9035 = vmatpush1.bf16.msra.mxu0 %v8147
    %9036 = vmatprep.subr.bf16.mxu0 0
    %9037 = vmatpush1.bf16.msra.mxu0 %v8150
    %9038 = vmatprep.subr.bf16.mxu0 0
    %9039 = vmatpush1.bf16.msra.mxu0 %v8153
    %9040 = vmatprep.subr.bf16.mxu0 0
    %9041 = vmatpush1.bf16.msra.mxu0 %v8156
    %9042 = vmatprep.subr.bf16.mxu0 0
    %9043 = vmatpush1.bf16.msra.mxu0 %v8159
    %9044 = vmatprep.subr.bf16.mxu0 0
    %9045 = vmatpush1.bf16.msra.mxu0 %v8162
    %9046 = vmatprep.subr.bf16.mxu0 0
    %9047 = vmatpush1.bf16.msra.mxu0 %v8165
    %9048 = vmatprep.subr.bf16.mxu0 0
    %9049 = vmatpush1.bf16.msra.mxu0 %v8168
    %9050 = vmatprep.subr.bf16.mxu0 0
    %9051 = vmatpush1.bf16.msra.mxu0 %v8171
    %9052 = vmatprep.subr.bf16.mxu0 0
    %9053 = vmatpush1.bf16.msra.mxu0 %v8174
    %9054 = vmatprep.mubr.bf16.mxu0 %v6697
    %9055 = vmatmul.mubr.bf16.gmra.mrb[0].mxu0 %v6696
    %v9056 = vpop.f32.mrb[0].mxu0
    %v9057 = vadd.f32 %v9008, %v9056
    %v9058 = vpop.f32.mrb[0].mxu0
    %v9059 = vpop.f32.mrb[0].mxu0
    %v9060 = vadd.f32 %v9011, %v9059
    %v9061 = vpop.f32.mrb[0].mxu0
    %9062 = vmatprep.mubr.bf16.mxu0 %v6709
    %9063 = vmatmul.mubr.bf16.gmra.mrb[0].mxu0 %v6708
    %v9064 = vpop.f32.mrb[0].mxu0
    %v9065 = vadd.f32 %v9016, %v9064
    %v9066 = vpop.f32.mrb[0].mxu0
    %v9067 = vpop.f32.mrb[0].mxu0
    %v9068 = vadd.f32 %v9019, %v9067
    %v9069 = vpop.f32.mrb[0].mxu0
    %9070 = vdwg.mxu0
    %9071 = vmatprep.subr.bf16.mxu0 0
    %9072 = vmatpush1.bf16.msra.mxu0 %v8177
    %9073 = vmatprep.subr.bf16.mxu0 0
    %9074 = vmatpush1.bf16.msra.mxu0 %v8180
    %9075 = vmatprep.subr.bf16.mxu0 0
    %9076 = vmatpush1.bf16.msra.mxu0 %v8183
    %9077 = vmatprep.subr.bf16.mxu0 0
    %9078 = vmatpush1.bf16.msra.mxu0 %v8186
    %9079 = vmatprep.subr.bf16.mxu0 0
    %9080 = vmatpush1.bf16.msra.mxu0 %v8189
    %9081 = vmatprep.subr.bf16.mxu0 0
    %9082 = vmatpush1.bf16.msra.mxu0 %v8192
    %9083 = vmatprep.subr.bf16.mxu0 0
    %9084 = vmatpush1.bf16.msra.mxu0 %v8195
    %9085 = vmatprep.subr.bf16.mxu0 0
    %9086 = vmatpush1.bf16.msra.mxu0 %v8198
    %9087 = vmatprep.subr.bf16.mxu0 0
    %9088 = vmatpush1.bf16.msra.mxu0 %v8201
    %9089 = vmatprep.subr.bf16.mxu0 0
    %9090 = vmatpush1.bf16.msra.mxu0 %v8204
    %9091 = vmatprep.subr.bf16.mxu0 0
    %9092 = vmatpush1.bf16.msra.mxu0 %v8207
    %9093 = vmatprep.subr.bf16.mxu0 0
    %9094 = vmatpush1.bf16.msra.mxu0 %v8210
    %9095 = vmatprep.subr.bf16.mxu0 0
    %9096 = vmatpush1.bf16.msra.mxu0 %v8213
    %9097 = vmatprep.subr.bf16.mxu0 0
    %9098 = vmatpush1.bf16.msra.mxu0 %v8216
    %9099 = vmatprep.subr.bf16.mxu0 0
    %9100 = vmatpush1.bf16.msra.mxu0 %v8219
    %9101 = vmatprep.subr.bf16.mxu0 0
    %9102 = vmatpush1.bf16.msra.mxu0 %v8222
    %9103 = vmatprep.mubr.bf16.mxu0 %v6699
    %9104 = vmatmul.mubr.bf16.gmra.mrb[0].mxu0 %v6698
    %v9105 = vpop.f32.mrb[0].mxu0
    %v9106 = vadd.f32 %v9057, %v9105
    %v9107 = vpop.f32.mrb[0].mxu0
    %v9108 = vpop.f32.mrb[0].mxu0
    %v9109 = vadd.f32 %v9060, %v9108
    %v9110 = vpop.f32.mrb[0].mxu0
    %9111 = vmatprep.mubr.bf16.mxu0 %v6711
    %9112 = vmatmul.mubr.bf16.gmra.mrb[0].mxu0 %v6710
    %v9113 = vpop.f32.mrb[0].mxu0
    %v9114 = vadd.f32 %v9065, %v9113
    %v9115 = vpop.f32.mrb[0].mxu0
    %v9116 = vpop.f32.mrb[0].mxu0
    %v9117 = vadd.f32 %v9068, %v9116
    %v9118 = vpop.f32.mrb[0].mxu0
    %9119 = vdwg.mxu0
    %9120 = vmatprep.subr.bf16.mxu0 0
    %9121 = vmatpush1.bf16.msra.mxu0 %v8225
    %9122 = vmatprep.subr.bf16.mxu0 0
    %9123 = vmatpush1.bf16.msra.mxu0 %v8228
    %9124 = vmatprep.subr.bf16.mxu0 0
    %9125 = vmatpush1.bf16.msra.mxu0 %v8231
    %9126 = vmatprep.subr.bf16.mxu0 0
    %9127 = vmatpush1.bf16.msra.mxu0 %v8234
    %9128 = vmatprep.subr.bf16.mxu0 0
    %9129 = vmatpush1.bf16.msra.mxu0 %v8237
    %9130 = vmatprep.subr.bf16.mxu0 0
    %9131 = vmatpush1.bf16.msra.mxu0 %v8240
    %9132 = vmatprep.subr.bf16.mxu0 0
    %9133 = vmatpush1.bf16.msra.mxu0 %v8243
    %9134 = vmatprep.subr.bf16.mxu0 0
    %9135 = vmatpush1.bf16.msra.mxu0 %v8246
    %9136 = vmatprep.subr.bf16.mxu0 0
    %9137 = vmatpush1.bf16.msra.mxu0 %v8249
    %9138 = vmatprep.subr.bf16.mxu0 0
    %9139 = vmatpush1.bf16.msra.mxu0 %v8252
    %9140 = vmatprep.subr.bf16.mxu0 0
    %9141 = vmatpush1.bf16.msra.mxu0 %v8255
    %9142 = vmatprep.subr.bf16.mxu0 0
    %9143 = vmatpush1.bf16.msra.mxu0 %v8258
    %9144 = vmatprep.subr.bf16.mxu0 0
    %9145 = vmatpush1.bf16.msra.mxu0 %v8261
    %9146 = vmatprep.subr.bf16.mxu0 0
    %9147 = vmatpush1.bf16.msra.mxu0 %v8264
    %9148 = vmatprep.subr.bf16.mxu0 0
    %9149 = vmatpush1.bf16.msra.mxu0 %v8267
    %9150 = vmatprep.subr.bf16.mxu0 0
    %9151 = vmatpush1.bf16.msra.mxu0 %v8270
    %9152 = vmatprep.mubr.bf16.mxu0 %v6701
    %9153 = vmatmul.mubr.bf16.gmra.mrb[0].mxu0 %v6700
    %v9154 = vpop.f32.mrb[0].mxu0
    %v9155 = vadd.f32 %v9106, %v9154
    %v9156 = vpop.f32.mrb[0].mxu0
    %v9157 = vpop.f32.mrb[0].mxu0
    %v9158 = vadd.f32 %v9109, %v9157
    %v9159 = vpop.f32.mrb[0].mxu0
    %9160 = vmatprep.mubr.bf16.mxu0 %v6713
    %9161 = vmatmul.mubr.bf16.gmra.mrb[0].mxu0 %v6712
    %v9162 = vpop.f32.mrb[0].mxu0
    %v9163 = vadd.f32 %v9114, %v9162
    %v9164 = vpop.f32.mrb[0].mxu0
    %v9165 = vpop.f32.mrb[0].mxu0
    %v9166 = vadd.f32 %v9117, %v9165
    %v9167 = vpop.f32.mrb[0].mxu0
    %9168 = vdwg.mxu0
    %9169 = vmatprep.subr.bf16.mxu0 0
    %9170 = vmatpush1.bf16.msra.mxu0 %v8273
    %9171 = vmatprep.subr.bf16.mxu0 0
    %9172 = vmatpush1.bf16.msra.mxu0 %v8276
    %9173 = vmatprep.subr.bf16.mxu0 0
    %9174 = vmatpush1.bf16.msra.mxu0 %v8279
    %9175 = vmatprep.subr.bf16.mxu0 0
    %9176 = vmatpush1.bf16.msra.mxu0 %v8282
    %9177 = vmatprep.subr.bf16.mxu0 0
    %9178 = vmatpush1.bf16.msra.mxu0 %v8285
    %9179 = vmatprep.subr.bf16.mxu0 0
    %9180 = vmatpush1.bf16.msra.mxu0 %v8288
    %9181 = vmatprep.subr.bf16.mxu0 0
    %9182 = vmatpush1.bf16.msra.mxu0 %v8291
    %9183 = vmatprep.subr.bf16.mxu0 0
    %9184 = vmatpush1.bf16.msra.mxu0 %v8294
    %9185 = vmatprep.subr.bf16.mxu0 0
    %9186 = vmatpush1.bf16.msra.mxu0 %v8297
    %9187 = vmatprep.subr.bf16.mxu0 0
    %9188 = vmatpush1.bf16.msra.mxu0 %v8300
    %9189 = vmatprep.subr.bf16.mxu0 0
    %9190 = vmatpush1.bf16.msra.mxu0 %v8303
    %9191 = vmatprep.subr.bf16.mxu0 0
    %9192 = vmatpush1.bf16.msra.mxu0 %v8306
    %9193 = vmatprep.subr.bf16.mxu0 0
    %9194 = vmatpush1.bf16.msra.mxu0 %v8309
    %9195 = vmatprep.subr.bf16.mxu0 0
    %9196 = vmatpush1.bf16.msra.mxu0 %v8312
    %9197 = vmatprep.subr.bf16.mxu0 0
    %9198 = vmatpush1.bf16.msra.mxu0 %v8315
    %9199 = vmatprep.subr.bf16.mxu0 0
    %9200 = vmatpush1.bf16.msra.mxu0 %v8318
    %9201 = vmatprep.mubr.bf16.mxu0 %v6703
    %9202 = vmatmul.mubr.bf16.gmra.mrb[0].mxu0 %v6702
    %v9203 = vpop.f32.mrb[0].mxu0
    %v9204 = vadd.f32 %v9155, %v9203
    %v9205 = vpop.f32.mrb[0].mxu0
    %v9206 = vpop.f32.mrb[0].mxu0
    %v9207 = vadd.f32 %v9158, %v9206
    %v9208 = vpop.f32.mrb[0].mxu0
    %9209 = vmatprep.mubr.bf16.mxu0 %v6715
    %9210 = vmatmul.mubr.bf16.gmra.mrb[0].mxu0 %v6714
    %v9211 = vpop.f32.mrb[0].mxu0
    %v9212 = vadd.f32 %v9163, %v9211
    %v9213 = vpop.f32.mrb[0].mxu0
    %v9214 = vpop.f32.mrb[0].mxu0
    %v9215 = vadd.f32 %v9166, %v9214
    %v9216 = vpop.f32.mrb[0].mxu0
    %9217 = vdwg.mxu0
    %9218 = vmatprep.subr.bf16.mxu0 0
    %9219 = vmatpush1.bf16.msra.mxu0 %v8321
    %9220 = vmatprep.subr.bf16.mxu0 0
    %9221 = vmatpush1.bf16.msra.mxu0 %v8324
    %9222 = vmatprep.subr.bf16.mxu0 0
    %9223 = vmatpush1.bf16.msra.mxu0 %v8327
    %9224 = vmatprep.subr.bf16.mxu0 0
    %9225 = vmatpush1.bf16.msra.mxu0 %v8330
    %9226 = vmatprep.subr.bf16.mxu0 0
    %9227 = vmatpush1.bf16.msra.mxu0 %v8333
    %9228 = vmatprep.subr.bf16.mxu0 0
    %9229 = vmatpush1.bf16.msra.mxu0 %v8336
    %9230 = vmatprep.subr.bf16.mxu0 0
    %9231 = vmatpush1.bf16.msra.mxu0 %v8339
    %9232 = vmatprep.subr.bf16.mxu0 0
    %9233 = vmatpush1.bf16.msra.mxu0 %v8342
    %9234 = vmatprep.subr.bf16.mxu0 0
    %9235 = vmatpush1.bf16.msra.mxu0 %v8345
    %9236 = vmatprep.subr.bf16.mxu0 0
    %9237 = vmatpush1.bf16.msra.mxu0 %v8348
    %9238 = vmatprep.subr.bf16.mxu0 0
    %9239 = vmatpush1.bf16.msra.mxu0 %v8351
    %9240 = vmatprep.subr.bf16.mxu0 0
    %9241 = vmatpush1.bf16.msra.mxu0 %v8354
    %9242 = vmatprep.subr.bf16.mxu0 0
    %9243 = vmatpush1.bf16.msra.mxu0 %v8357
    %9244 = vmatprep.subr.bf16.mxu0 0
    %9245 = vmatpush1.bf16.msra.mxu0 %v8360
    %9246 = vmatprep.subr.bf16.mxu0 0
    %9247 = vmatpush1.bf16.msra.mxu0 %v8363
    %9248 = vmatprep.subr.bf16.mxu0 0
    %9249 = vmatpush1.bf16.msra.mxu0 %v8366
    %9250 = vmatprep.mubr.bf16.mxu0 %v6705
    %9251 = vmatmul.mubr.bf16.gmra.mrb[0].mxu0 %v6704
    %v9252 = vpop.f32.mrb[0].mxu0
    %v9253 = vadd.f32 %v9204, %v9252
    %v9254 = vpop.f32.mrb[0].mxu0
    %v9255 = vpop.f32.mrb[0].mxu0
    %v9256 = vadd.f32 %v9207, %v9255
    %v9257 = vpop.f32.mrb[0].mxu0
    %9258 = vmatprep.mubr.bf16.mxu0 %v6717
    %9259 = vmatmul.mubr.bf16.gmra.mrb[0].mxu0 %v6716
    %v9260 = vpop.f32.mrb[0].mxu0
    %v9261 = vadd.f32 %v9212, %v9260
    %v9262 = vpop.f32.mrb[0].mxu0
    %v9263 = vpop.f32.mrb[0].mxu0
    %v9264 = vadd.f32 %v9215, %v9263
    %v9265 = vpop.f32.mrb[0].mxu0
    %9266 = vdwg.mxu0
    %v9267 = vadd.f32 %v4058, %v8955
    %v9268 = vadd.f32 %v4059, %v8957
    %v9269 = vadd.f32 %v4060, %v9253
    %v9270 = vadd.f32 %v4061, %v8959
    %v9271 = vadd.f32 %v4062, %v8961
    %v9272 = vadd.f32 %v4063, %v9256
    %v9273 = vadd.f32 %v4064, %v8965
    %v9274 = vadd.f32 %v4065, %v8967
    %v9275 = vadd.f32 %v4066, %v9261
    %v9276 = vadd.f32 %v4067, %v8969
    %v9277 = vadd.f32 %v4068, %v8971
    %v9278 = vadd.f32 %v4069, %v9264
    %9279 = vst [vmem:[#allocation23] sm:$0xff] %v9267
    %9280 = vst [vmem:[#allocation23 + $0x8] sm:$0xff] %v9268
    %9281 = vst [vmem:[#allocation23 + $0x10] sm:$0xff] %v9269
    %9282 = vst [vmem:[#allocation23 + $0x18] sm:$0xff] %v9270
    %9283 = vst [vmem:[#allocation23 + $0x20] sm:$0xff] %v9271
    %9284 = vst [vmem:[#allocation23 + $0x28] sm:$0xff] %v9272
    %9285 = vst [vmem:[#allocation23 + $0x30] sm:$0xff] %v9273
    %9286 = vst [vmem:[#allocation23 + $0x38] sm:$0xff] %v9274
    %9287 = vst [vmem:[#allocation23 + $0x40] sm:$0xff] %v9275
    %9288 = vst [vmem:[#allocation23 + $0x48] sm:$0xff] %v9276
    %9289 = vst [vmem:[#allocation23 + $0x50] sm:$0xff] %v9277
    %9290 = vst [vmem:[#allocation23 + $0x58] sm:$0xff] %v9278
    // Predicated region
    $region106: #{block_forward.1} parent=1 // pred_check
      _
    $region107: #{block_forward.1} parent=1 // pred_check_branch
      %9292 = sbr.rel (0) target = $region109
    $region108: #{block_forward.1} parent=1 // pred_region
      %s9294 = ssub.s32 1536, 1536
      %9295 = vsyncadd [#allocation4], %s9294
      %s9296 = sshll.u32 [#allocation23], 4
      %s9297 = int_to_ptr.vmem [resolvable:$true] %s9296
      %9302 = dma.vmem_to_hbm [thread:$0]  %s9297, 1536, %s13, [#allocation4], 384, 384, 24
    $region109: #{block_forward.1} parent=1 // pred_fallthru
      _
    // Predicated region
    $region110: #{block_forward.1} parent=1 // pred_check
      _
    $region111: #{block_forward.1} parent=1 // pred_check_branch
      %9304 = sbr.rel (0) target = $region113
    $region112: #{block_forward.1} parent=1 // pred_region
      %9305 = dma.done [#allocation4], 1536
    $region113: #{block_forward.1} parent=1 // pred_fallthru
      _
    %9306 = vsyncpa [#allocation3], 1
    %9307 = vsyncpa [#allocation6], 1
    %9308 = vsyncpa [#allocation9], 1
    %9309 = vsyncpa [#allocation12], 1
    %9310 = vsyncpa [#allocation15], 1
    %9311 = vsyncpa [#allocation18], 1
    %9312 = vsyncpa [#allocation21], 1
    %9313 = vsyncpa [#allocation4], 1

</llo_original>
